<compile_context>
chip_gen: v7x
topology: tpu7x:2x2x1
jax: 0.10.0
libtpu: 0.0.40
codegen_flags: <defaults>
</compile_context>

<pallas_src>
import numpy as np
import jax
import jax.numpy as jnp
from jax.experimental import pallas as pl
from jax.experimental.pallas import tpu as pltpu


# ----------------------------------------------------------------------------
# Builder: creates the single fused pallas_call, the forward wrapper and the
# master-params -> kernel-params packer.
# ----------------------------------------------------------------------------
def build_anticipation_net(B, H, W, cin, filters, K, pad, st_in, hids,
                           hidden_out, out_dim):
    # 'same' conv geometry (stride 1).  The flat-index tap trick below relies
    # on K == 2*pad + 1: the rightmost valid tap lands exactly on the last
    # column of the padded row and never wraps into the next row.
    assert K == 2 * pad + 1, "flat-index conv tap trick requires K == 2*pad + 1"

    Hp, Wp = H + 2 * pad, W + 2 * pad
    P = Hp * Wp                                # padded-grid pixel rows
    SHIFT = pad * Wp + pad                     # gates-row -> padded-pixel shift
    FRONT = (-SHIFT) % 8                       # front margin: align the h store
    W_START = FRONT + SHIFT                    # 8-aligned interior store offset
    d_max = (K - 1) * Wp + (K - 1)             # largest flat tap shift
    SLAB = ((FRONT + P + d_max + 7) // 8) * 8  # slab rows (multiple of 8)
    TAPS = tuple(kh * Wp + kw for kh in range(K) for kw in range(K))

    c0, c1, c2 = filters
    h0d, h1d, h2d = hids
    CONV_PACK = 2 * (c0 + c1 + c2)
    ST_PACK = 2 * (h0d + h1d + h2d)

    # ---------------- fused kernel (grid over batch) --------------------------
    def fused_kernel(x_ref, h0s_ref, c0r_ref, h1s_ref, c1r_ref, h2s_ref,
                     c2r_ref, mask_ref,
                     w0_ref, b0_ref, w1_ref, b1_ref, w2_ref, b2_ref,
                     st_ref, dh0_ref, dc0_ref, dh1_ref, dc1_ref, dh2_ref,
                     dc2_ref,
                     wd0_ref, bd0_ref, wd1_ref, bd1_ref, wd2_ref, bd2_ref,
                     w1v_ref, w1s_ref, bh1_ref, w2h_ref, bh2_ref,
                     conv_out_ref, dense_out_ref, y_ref,
                     slab0_scr, slab1_scr):
        valid = mask_ref[...] > 0.5                        # (P, 1) bool

        def conv_cell(x_slab, h_slab, c_rows_ref, w_ref, b_ref, cf):
            # One GEMM per cell: the 9 shifted x-tap slices and 9 shifted
            # h-tap slices are lane-concatenated into a single
            # (P, 9*(cx+cf)) patch and contracted (bf16 on MXU, f32 acc)
            # against the row-stacked [Wx; Wh] weight.
            taps = [x_slab[FRONT + d:FRONT + d + P, :] for d in TAPS]
            taps += [h_slab[FRONT + d:FRONT + d + P, :] for d in TAPS]
            patch = jnp.concatenate(taps, axis=1).astype(jnp.bfloat16)
            gates = jnp.dot(patch, w_ref[...].astype(jnp.bfloat16),
                            preferred_element_type=jnp.float32) + b_ref[...]
            i = jax.nn.sigmoid(gates[:, 0 * cf:1 * cf])
            f = jax.nn.sigmoid(gates[:, 1 * cf:2 * cf])
            g = jnp.tanh(gates[:, 2 * cf:3 * cf])
            o = jax.nn.sigmoid(gates[:, 3 * cf:4 * cf])
            c_new = f * c_rows_ref[...] + i * g
            h_new = o * jnp.tanh(c_new)
            # zero the pad-ring rows so h feeds the next conv as zero padding
            return jnp.where(valid, h_new, 0.0), jnp.where(valid, c_new, 0.0)

        def stage(slab_scr, h_new, cf):
            # Only the small margin rows are (re)zeroed (no full-slab zero
            # pass; doing it per step keeps it correct when the "parallel"
            # grid axis is split across TensorCores).  The interior is fully
            # overwritten by the masked h_new.
            slab_scr[0:W_START, :] = jnp.zeros((W_START, cf), jnp.float32)
            slab_scr[W_START + P:SLAB, :] = jnp.zeros(
                (SLAB - W_START - P, cf), jnp.float32)
            slab_scr[W_START:W_START + P, :] = h_new

        # ConvLSTM stack; layer-to-layer activations never leave VMEM.
        h0n, c0n = conv_cell(x_ref, h0s_ref, c0r_ref, w0_ref, b0_ref, c0)
        stage(slab0_scr, h0n, c0)
        h1n, c1n = conv_cell(slab0_scr, h1s_ref, c1r_ref, w1_ref, b1_ref, c1)
        stage(slab1_scr, h1n, c1)
        h2n, c2n = conv_cell(slab1_scr, h2s_ref, c2r_ref, w2_ref, b2_ref, c2)

        # Single lane-dense packed store for all six conv states.
        conv_out_ref[...] = jnp.concatenate(
            [h0n, c0n, h1n, c1n, h2n, c2n], axis=1)

        # Dense LSTM stack (x and h lane-concatenated -> one GEMM per cell).
        def dense_cell(x, h, c, wd_ref, bd_ref, hid):
            xh = jnp.concatenate([x, h], axis=1).astype(jnp.bfloat16)
            gates = jnp.dot(xh, wd_ref[...].astype(jnp.bfloat16),
                            preferred_element_type=jnp.float32) + bd_ref[...]
            i = jax.nn.sigmoid(gates[:, 0 * hid:1 * hid])
            f = jax.nn.sigmoid(gates[:, 1 * hid:2 * hid])
            g = jnp.tanh(gates[:, 2 * hid:3 * hid])
            o = jax.nn.sigmoid(gates[:, 3 * hid:4 * hid])
            c_new = f * c + i * g
            return o * jnp.tanh(c_new), c_new

        sh0, sc0 = dense_cell(st_ref[...], dh0_ref[...], dc0_ref[...],
                              wd0_ref, bd0_ref, h0d)
        sh1, sc1 = dense_cell(sh0, dh1_ref[...], dc1_ref[...],
                              wd1_ref, bd1_ref, h1d)
        sh2, sc2 = dense_cell(sh1, dh2_ref[...], dc2_ref[...],
                              wd2_ref, bd2_ref, h2d)
        dense_out_ref[...] = jnp.concatenate(
            [sh0, sc0, sh1, sc1, sh2, sc2], axis=1)

        # Head: fcn1 over [flatten(hx_2), h_2] without materializing the
        # concat or round-tripping hx_2 through HBM.  The hx_2 part is a
        # per-channel broadcast-MAC against the channel-major, gates-row-
        # scattered fcn1 weight followed by a sublane reduction (pad-ring rows
        # of h2n are already zero).  Dropout p=0 -> identity.
        acc = h2n[:, 0:1] * w1v_ref[0]
        for ch in range(1, c2):
            acc = acc + h2n[:, ch:ch + 1] * w1v_ref[ch]
        hmid = (jnp.sum(acc, axis=0, keepdims=True)
                + jnp.dot(sh2.astype(jnp.bfloat16),
                          w1s_ref[...].astype(jnp.bfloat16),
                          preferred_element_type=jnp.float32)
                + bh1_ref[...])
        hmid = jnp.maximum(hmid, 0.0)
        y_ref[...] = (jnp.dot(hmid.astype(jnp.bfloat16),
                              w2h_ref[...].astype(jnp.bfloat16),
                              preferred_element_type=jnp.float32)
                      + bh2_ref[...])

    # ---------------- specs ----------------------------------------------------
    def bspec3(d1, d2):          # per-batch-row block, batch dim squeezed
        return pl.BlockSpec((None, d1, d2), lambda b: (b, 0, 0))

    def cspec2(d1, d2):          # broadcast (resident) 2-D block
        return pl.BlockSpec((d1, d2), lambda b: (0, 0))

    in_specs = [
        bspec3(SLAB, cin),                                   # x slab
        bspec3(SLAB, c0), bspec3(P, c0),                     # h0 slab, c0 rows
        bspec3(SLAB, c1), bspec3(P, c1),                     # h1 slab, c1 rows
        bspec3(SLAB, c2), bspec3(P, c2),                     # h2 slab, c2 rows
        cspec2(P, 1),                                        # valid mask
        cspec2(9 * (cin + c0), 4 * c0), cspec2(1, 4 * c0),   # conv0 [Wx;Wh], b
        cspec2(9 * (c0 + c1), 4 * c1), cspec2(1, 4 * c1),    # conv1
        cspec2(9 * (c1 + c2), 4 * c2), cspec2(1, 4 * c2),    # conv2
        bspec3(1, st_in),                                    # st_x
        bspec3(1, h0d), bspec3(1, h0d),                      # dense h0, c0
        bspec3(1, h1d), bspec3(1, h1d),                      # dense h1, c1
        bspec3(1, h2d), bspec3(1, h2d),                      # dense h2, c2
        cspec2(st_in + h0d, 4 * h0d), cspec2(1, 4 * h0d),    # lstm0 [Wih;Whh], b
        cspec2(h0d + h1d, 4 * h1d), cspec2(1, 4 * h1d),      # lstm1
        cspec2(h1d + h2d, 4 * h2d), cspec2(1, 4 * h2d),      # lstm2
        pl.BlockSpec((c2, P, hidden_out), lambda b: (0, 0, 0)),  # fcn1 vid (c-major)
        cspec2(h2d, hidden_out), cspec2(1, hidden_out),      # fcn1 st, b
        cspec2(hidden_out, out_dim), cspec2(1, out_dim),     # fcn2 w, b
    ]
    out_specs = (
        bspec3(P, CONV_PACK),
        bspec3(1, ST_PACK),
        bspec3(1, out_dim),
    )
    out_shape = (
        jax.ShapeDtypeStruct((B, P, CONV_PACK), jnp.float32),
        jax.ShapeDtypeStruct((B, 1, ST_PACK), jnp.float32),
        jax.ShapeDtypeStruct((B, 1, out_dim), jnp.float32),
    )

    # ---------------- cost estimate --------------------------------------------
    cins = (cin, c0, c1)
    conv_flops = 2 * B * P * sum(9 * (ci + cf) * 4 * cf
                                 for ci, cf in zip(cins, filters))
    dense_flops = 2 * B * ((st_in + h0d) * 4 * h0d + (h0d + h1d) * 4 * h1d
                           + (h1d + h2d) * 4 * h2d)
    head_flops = 2 * B * (P * c2 * hidden_out + h2d * hidden_out
                          + hidden_out * out_dim)
    transc = 5 * B * (P * (c0 + c1 + c2) + h0d + h1d + h2d)
    w_bytes = 4 * (sum(9 * (ci + cf) * 4 * cf + 4 * cf
                       for ci, cf in zip(cins, filters))
                   + (st_in + h0d) * 4 * h0d + (h0d + h1d) * 4 * h1d
                   + (h1d + h2d) * 4 * h2d + 4 * (h0d + h1d + h2d)
                   + c2 * P * hidden_out + h2d * hidden_out + hidden_out
                   + hidden_out * out_dim + out_dim + P)
    io_bytes = 4 * B * (SLAB * (cin + c0 + c1 + c2) + P * (c0 + c1 + c2)
                        + st_in + 2 * (h0d + h1d + h2d)
                        + P * CONV_PACK + ST_PACK + out_dim)
    cost = pl.CostEstimate(flops=int(conv_flops + dense_flops + head_flops),
                           transcendentals=int(transc),
                           bytes_accessed=int(w_bytes + io_bytes))

    fused_call = pl.pallas_call(
        fused_kernel,
        out_shape=out_shape,
        grid=(B,),
        in_specs=in_specs,
        out_specs=out_specs,
        scratch_shapes=[pltpu.VMEM((SLAB, c0), jnp.float32),
                        pltpu.VMEM((SLAB, c1), jnp.float32)],
        compiler_params=pltpu.CompilerParams(
            dimension_semantics=("parallel",),      # 2-TC batch sharding on v7x
            vmem_limit_bytes=32 * 1024 * 1024),     # explicit, v7x-safe
        cost_estimate=cost,
    )

    # ---------------- wrapper-side layout helpers (transpose-free) -------------
    pp = np.arange(P)
    mask_np = ((pp // Wp < H) & (pp % Wp < W)).astype(np.float32).reshape(P, 1)
    mask = jnp.asarray(mask_np)

    def to_conv_slab(a):
        # (B,H,W,C) -> (B, SLAB, C): FRONT zero rows, symmetric spatial pad
        # (conv placement), back zero margin so every tap slice is in bounds.
        ap = jnp.pad(a, ((0, 0), (pad, pad), (pad, pad), (0, 0)))
        ap = ap.reshape(B, P, a.shape[-1])
        return jnp.pad(ap, ((0, 0), (FRONT, SLAB - FRONT - P), (0, 0)))

    def to_cell_rows(a):
        # (B,H,W,C) -> (B, P, C): gates-row placement (pad bottom/right only).
        ap = jnp.pad(a, ((0, 0), (0, 2 * pad), (0, 2 * pad), (0, 0)))
        return ap.reshape(B, P, a.shape[-1])

    def from_rows(rows, cf):
        # (B, P, C) gates-row placement -> compact NHWC (B,H,W,C).
        return rows.reshape(B, Hp, Wp, cf)[:, :H, :W, :]

    conv_offs = np.cumsum([0, c0, c0, c1, c1, c2, c2])
    st_offs = np.cumsum([0, h0d, h0d, h1d, h1d, h2d, h2d])

    # ---------------- master-params -> kernel-params packer --------------------
    def pack_kernel_params(m):
        kp = {"conv_w": [], "conv_b": [], "lstm_w": [], "lstm_b": []}
        c_prev = cin
        for li, cf in enumerate(filters):
            wx = m[f"conv{li}_wx"].reshape(K * K * c_prev, 4 * cf)
            wh = m[f"conv{li}_wh"].reshape(K * K * cf, 4 * cf)
            kp["conv_w"].append(jnp.concatenate([wx, wh], axis=0))
            kp["conv_b"].append(m[f"conv{li}_b"].reshape(1, 4 * cf))
            c_prev = cf
        for li in range(3):
            kp["lstm_w"].append(jnp.concatenate(
                [m[f"lstm{li}_wih"], m[f"lstm{li}_whh"]], axis=0))
            kp["lstm_b"].append(m[f"lstm{li}_b"].reshape(1, -1))
        # fcn1 vid block: NCHW-flatten rows -> channel-major gates-row scatter.
        w1_vid = m["fcn1_w"][:c2 * H * W].reshape(c2, H, W, hidden_out)
        kp["w1v"] = jnp.pad(
            w1_vid, ((0, 0), (0, Hp - H), (0, Wp - W), (0, 0))
        ).reshape(c2, P, hidden_out)
        kp["w1s"] = m["fcn1_w"][c2 * H * W:]
        kp["bh1"] = m["fcn1_b"].reshape(1, -1)
        kp["w2"] = m["fcn2_w"]
        kp["bh2"] = m["fcn2_b"].reshape(1, -1)
        return kp

    # ---------------- full forward pass ----------------------------------------
    def forward(kp, vid_x, st_x, vid_states, st_states):
        args = [to_conv_slab(vid_x)]
        for l in range(3):
            args.append(to_conv_slab(vid_states[l][0]))
            args.append(to_cell_rows(vid_states[l][1]))
        args.append(mask)
        for l in range(3):
            args += [kp["conv_w"][l], kp["conv_b"][l]]
        args.append(st_x.reshape(B, 1, st_in))
        for l in range(3):
            args.append(st_states[l][0].reshape(B, 1, hids[l]))
            args.append(st_states[l][1].reshape(B, 1, hids[l]))
        for l in range(3):
            args += [kp["lstm_w"][l], kp["lstm_b"][l]]
        args += [kp["w1v"], kp["w1s"], kp["bh1"], kp["w2"], kp["bh2"]]

        conv_packed, dense_packed, y3 = fused_call(*args)

        new_vid = []
        for l, cf in enumerate(filters):
            h_rows = conv_packed[:, :, conv_offs[2 * l]:conv_offs[2 * l + 1]]
            c_rows = conv_packed[:, :, conv_offs[2 * l + 1]:conv_offs[2 * l + 2]]
            new_vid.append([from_rows(h_rows, cf), from_rows(c_rows, cf)])

        dense_flat = dense_packed.reshape(B, ST_PACK)
        new_st = []
        for l in range(3):
            new_st.append([dense_flat[:, st_offs[2 * l]:st_offs[2 * l + 1]],
                           dense_flat[:, st_offs[2 * l + 1]:st_offs[2 * l + 2]]])

        return y3.reshape(B, out_dim), new_vid, new_st

    return forward, pack_kernel_params


# ----------------------------------------------------------------------------
# Deterministic "master" parameter init (HWIO conv weights, (din,4h) dense
# weights, PyTorch-NCHW-flatten fcn1 rows).  Both the kernel packer and the
# pure-JAX reference derive from this single set.
# ----------------------------------------------------------------------------
def make_master_params(key, cin, filters, K, H, W, st_in, hids, hidden_out,
                       out_dim):
    keys = iter(jax.random.split(key, 32))

    def init(shape, scale=0.05):
        return scale * jax.random.normal(next(keys), shape, dtype=jnp.float32)

    m = {}
    c_prev = cin
    for li, cf in enumerate(filters):
        m[f"conv{li}_wx"] = init((K, K, c_prev, 4 * cf))     # HWIO
        m[f"conv{li}_wh"] = init((K, K, cf, 4 * cf))
        m[f"conv{li}_b"] = init((4 * cf,))
        c_prev = cf
    dims = [(st_in, hids[0]), (hids[0], hids[1]), (hids[1], hids[2])]
    for li, (din, dh) in enumerate(dims):
        m[f"lstm{li}_wih"] = init((din, 4 * dh))
        m[f"lstm{li}_whh"] = init((dh, 4 * dh))
        m[f"lstm{li}_b"] = init((4 * dh,))
    c2 = filters[2]
    m["fcn1_w"] = init((c2 * H * W + hids[2], hidden_out))   # NCHW-flatten rows
    m["fcn1_b"] = init((hidden_out,))
    m["fcn2_w"] = init((hidden_out, out_dim))
    m["fcn2_b"] = init((out_dim,))
    return m


# ----------------------------------------------------------------------------
# Pure-JAX reference (NHWC) for the numeric check.
# ----------------------------------------------------------------------------
def reference_forward(m, vid_x, st_x, vid_states, st_states,
                      K, H, W, filters, hids, hidden_out):
    bsz = vid_x.shape[0]

    def conv_nhwc(x, w):
        return jax.lax.conv_general_dilated(
            x, w, window_strides=(1, 1), padding="SAME",
            dimension_numbers=("NHWC", "HWIO", "NHWC"))

    def convlstm(x, state, wx, wh, b, cf):
        h, c = state
        gates = conv_nhwc(x, wx) + conv_nhwc(h, wh) + b.reshape(1, 1, 1, -1)
        i = jax.nn.sigmoid(gates[..., 0 * cf:1 * cf])
        f = jax.nn.sigmoid(gates[..., 1 * cf:2 * cf])
        g = jnp.tanh(gates[..., 2 * cf:3 * cf])
        o = jax.nn.sigmoid(gates[..., 3 * cf:4 * cf])
        c_new = f * c + i * g
        return o * jnp.tanh(c_new), c_new

    def lstmcell(x, state, wih, whh, b, hid):
        h, c = state
        gates = x @ wih + h @ whh + b
        i = jax.nn.sigmoid(gates[:, 0 * hid:1 * hid])
        f = jax.nn.sigmoid(gates[:, 1 * hid:2 * hid])
        g = jnp.tanh(gates[:, 2 * hid:3 * hid])
        o = jax.nn.sigmoid(gates[:, 3 * hid:4 * hid])
        c_new = f * c + i * g
        return o * jnp.tanh(c_new), c_new

    hx0, cx0 = convlstm(vid_x, vid_states[0], m["conv0_wx"], m["conv0_wh"],
                        m["conv0_b"], filters[0])
    hx1, cx1 = convlstm(hx0, vid_states[1], m["conv1_wx"], m["conv1_wh"],
                        m["conv1_b"], filters[1])
    hx2, cx2 = convlstm(hx1, vid_states[2], m["conv2_wx"], m["conv2_wh"],
                        m["conv2_b"], filters[2])
    h0, c0 = lstmcell(st_x, st_states[0], m["lstm0_wih"], m["lstm0_whh"],
                      m["lstm0_b"], hids[0])
    h1, c1 = lstmcell(h0, st_states[1], m["lstm1_wih"], m["lstm1_whh"],
                      m["lstm1_b"], hids[1])
    h2, c2 = lstmcell(h1, st_states[2], m["lstm2_wih"], m["lstm2_whh"],
                      m["lstm2_b"], hids[2])

    c2f = filters[2]
    # fcn1 is defined over the PyTorch NCHW flatten; permute rows to the NHWC
    # flatten used by this reference.
    w1_vid = (m["fcn1_w"][:c2f * H * W]
              .reshape(c2f, H, W, hidden_out)
              .transpose(1, 2, 0, 3)
              .reshape(H * W * c2f, hidden_out))
    w1_st = m["fcn1_w"][c2f * H * W:]
    hmid = jax.nn.relu(hx2.reshape(bsz, -1) @ w1_vid + h2 @ w1_st + m["fcn1_b"])
    y = hmid @ m["fcn2_w"] + m["fcn2_b"]
    return (y, [[hx0, cx0], [hx1, cx1], [hx2, cx2]],
            [[h0, c0], [h1, c1], [h2, c2]])


# ----------------------------------------------------------------------------
if __name__ == "__main__":
    B = 2
    CIN, H, W = 4, 8, 8                 # input_shp_vid = (4, 8, 8)
    FILTERS = (8, 8, 8)                 # no_filters
    K, PAD = 3, 1                       # kernel_size=3, 'same' pad, stride 1
    ST_IN = 8                           # input_shp_st
    HIDS = (16, 16, 16)                 # hidden_0/1/2
    HID_OUT = 32                        # hidden_out
    OUT = 4                             # output_shp

    key = jax.random.PRNGKey(0)
    k_par, k_vid, k_st, k_states = jax.random.split(key, 4)

    master = make_master_params(k_par, CIN, FILTERS, K, H, W, ST_IN, HIDS,
                                HID_OUT, OUT)
    forward, pack_params = build_anticipation_net(B, H, W, CIN, FILTERS, K,
                                                  PAD, ST_IN, HIDS, HID_OUT,
                                                  OUT)
    kparams = pack_params(master)

    vid_x = jax.random.normal(k_vid, (B, H, W, CIN), dtype=jnp.float32)  # NHWC
    st_x = jax.random.normal(k_st, (B, ST_IN), dtype=jnp.float32)

    skeys = iter(jax.random.split(k_states, 16))
    vid_states = [
        (jax.random.normal(next(skeys), (B, H, W, cf), dtype=jnp.float32),
         jax.random.normal(next(skeys), (B, H, W, cf), dtype=jnp.float32))
        for cf in FILTERS
    ]
    st_states = [
        (jax.random.normal(next(skeys), (B, hd), dtype=jnp.float32),
         jax.random.normal(next(skeys), (B, hd), dtype=jnp.float32))
        for hd in HIDS
    ]

    fwd = jax.jit(forward)
    y, new_vid, new_st = fwd(kparams, vid_x, st_x, vid_states, st_states)
    jax.block_until_ready((y, new_vid, new_st))

    # Shape checks.
    assert y.shape == (B, OUT)
    assert new_vid[2][0].shape == (B, H, W, FILTERS[2])
    assert new_st[2][0].shape == (B, HIDS[2])

    # Numeric check against the pure-JAX NHWC reference (tolerance covers the
    # in-kernel bf16 MXU inputs / reduced-precision matmul paths).
    y_ref, vid_ref, st_ref = reference_forward(master, vid_x, st_x, vid_states,
                                               st_states, K, H, W, FILTERS,
                                               HIDS, HID_OUT)

    def close(a, b):
        return np.allclose(np.asarray(a), np.asarray(b), atol=3e-2, rtol=3e-2)

    assert close(y, y_ref)
    for l in range(3):
        assert close(new_vid[l][0], vid_ref[l][0])
        assert close(new_vid[l][1], vid_ref[l][1])
        assert close(new_st[l][0], st_ref[l][0])
        assert close(new_st[l][1], st_ref[l][1])

    print("KERNEL_OK")
</pallas_src>

<mosaic_0001>
module attributes {stable_mosaic.version = 11 : i64} {
  func.func @fused_kernel(%arg0: i32, %arg1: memref<1x128x4xf32, #tpu.memory_space<vmem>>, %arg2: memref<1x128x8xf32, #tpu.memory_space<vmem>>, %arg3: memref<1x100x8xf32, #tpu.memory_space<vmem>>, %arg4: memref<1x128x8xf32, #tpu.memory_space<vmem>>, %arg5: memref<1x100x8xf32, #tpu.memory_space<vmem>>, %arg6: memref<1x128x8xf32, #tpu.memory_space<vmem>>, %arg7: memref<1x100x8xf32, #tpu.memory_space<vmem>>, %arg8: memref<100x1xf32, #tpu.memory_space<vmem>>, %arg9: memref<108x32xf32, #tpu.memory_space<vmem>>, %arg10: memref<1x32xf32, #tpu.memory_space<vmem>>, %arg11: memref<144x32xf32, #tpu.memory_space<vmem>>, %arg12: memref<1x32xf32, #tpu.memory_space<vmem>>, %arg13: memref<144x32xf32, #tpu.memory_space<vmem>>, %arg14: memref<1x32xf32, #tpu.memory_space<vmem>>, %arg15: memref<1x1x8xf32, #tpu.memory_space<vmem>>, %arg16: memref<1x1x16xf32, #tpu.memory_space<vmem>>, %arg17: memref<1x1x16xf32, #tpu.memory_space<vmem>>, %arg18: memref<1x1x16xf32, #tpu.memory_space<vmem>>, %arg19: memref<1x1x16xf32, #tpu.memory_space<vmem>>, %arg20: memref<1x1x16xf32, #tpu.memory_space<vmem>>, %arg21: memref<1x1x16xf32, #tpu.memory_space<vmem>>, %arg22: memref<24x64xf32, #tpu.memory_space<vmem>>, %arg23: memref<1x64xf32, #tpu.memory_space<vmem>>, %arg24: memref<32x64xf32, #tpu.memory_space<vmem>>, %arg25: memref<1x64xf32, #tpu.memory_space<vmem>>, %arg26: memref<32x64xf32, #tpu.memory_space<vmem>>, %arg27: memref<1x64xf32, #tpu.memory_space<vmem>>, %arg28: memref<8x100x32xf32, #tpu.memory_space<vmem>>, %arg29: memref<16x32xf32, #tpu.memory_space<vmem>>, %arg30: memref<1x32xf32, #tpu.memory_space<vmem>>, %arg31: memref<32x4xf32, #tpu.memory_space<vmem>>, %arg32: memref<1x4xf32, #tpu.memory_space<vmem>>, %arg33: memref<1x100x48xf32, #tpu.memory_space<vmem>>, %arg34: memref<1x1x96xf32, #tpu.memory_space<vmem>>, %arg35: memref<1x1x4xf32, #tpu.memory_space<vmem>>, %arg36: memref<128x8xf32, #tpu.memory_space<vmem>>, %arg37: memref<128x8xf32, #tpu.memory_space<vmem>>) attributes {dimension_semantics = [#tpu.dimension_semantics<parallel>], iteration_bounds = array<i64: 2>, scalar_prefetch = 0 : i64, scratch_operands = 2 : i64, tpu.core_type = #tpu.core_type<tc>, window_params = [{transform_indices = @transform_0, window_bounds = array<i64: 1, 128, 4>}, {transform_indices = @transform_1, window_bounds = array<i64: 1, 128, 8>}, {transform_indices = @transform_2, window_bounds = array<i64: 1, 100, 8>}, {transform_indices = @transform_3, window_bounds = array<i64: 1, 128, 8>}, {transform_indices = @transform_4, window_bounds = array<i64: 1, 100, 8>}, {transform_indices = @transform_5, window_bounds = array<i64: 1, 128, 8>}, {transform_indices = @transform_6, window_bounds = array<i64: 1, 100, 8>}, {pipeline_mode = #tpu.pipeline_mode<synchronous>, transform_indices = @transform_7, window_bounds = array<i64: 100, 1>}, {pipeline_mode = #tpu.pipeline_mode<synchronous>, transform_indices = @transform_8, window_bounds = array<i64: 108, 32>}, {pipeline_mode = #tpu.pipeline_mode<synchronous>, transform_indices = @transform_9, window_bounds = array<i64: 1, 32>}, {pipeline_mode = #tpu.pipeline_mode<synchronous>, transform_indices = @transform_10, window_bounds = array<i64: 144, 32>}, {pipeline_mode = #tpu.pipeline_mode<synchronous>, transform_indices = @transform_11, window_bounds = array<i64: 1, 32>}, {pipeline_mode = #tpu.pipeline_mode<synchronous>, transform_indices = @transform_12, window_bounds = array<i64: 144, 32>}, {pipeline_mode = #tpu.pipeline_mode<synchronous>, transform_indices = @transform_13, window_bounds = array<i64: 1, 32>}, {transform_indices = @transform_14, window_bounds = array<i64: 1, 1, 8>}, {transform_indices = @transform_15, window_bounds = array<i64: 1, 1, 16>}, {transform_indices = @transform_16, window_bounds = array<i64: 1, 1, 16>}, {transform_indices = @transform_17, window_bounds = array<i64: 1, 1, 16>}, {transform_indices = @transform_18, window_bounds = array<i64: 1, 1, 16>}, {transform_indices = @transform_19, window_bounds = array<i64: 1, 1, 16>}, {transform_indices = @transform_20, window_bounds = array<i64: 1, 1, 16>}, {pipeline_mode = #tpu.pipeline_mode<synchronous>, transform_indices = @transform_21, window_bounds = array<i64: 24, 64>}, {pipeline_mode = #tpu.pipeline_mode<synchronous>, transform_indices = @transform_22, window_bounds = array<i64: 1, 64>}, {pipeline_mode = #tpu.pipeline_mode<synchronous>, transform_indices = @transform_23, window_bounds = array<i64: 32, 64>}, {pipeline_mode = #tpu.pipeline_mode<synchronous>, transform_indices = @transform_24, window_bounds = array<i64: 1, 64>}, {pipeline_mode = #tpu.pipeline_mode<synchronous>, transform_indices = @transform_25, window_bounds = array<i64: 32, 64>}, {pipeline_mode = #tpu.pipeline_mode<synchronous>, transform_indices = @transform_26, window_bounds = array<i64: 1, 64>}, {pipeline_mode = #tpu.pipeline_mode<synchronous>, transform_indices = @transform_27, window_bounds = array<i64: 8, 100, 32>}, {pipeline_mode = #tpu.pipeline_mode<synchronous>, transform_indices = @transform_28, window_bounds = array<i64: 16, 32>}, {pipeline_mode = #tpu.pipeline_mode<synchronous>, transform_indices = @transform_29, window_bounds = array<i64: 1, 32>}, {pipeline_mode = #tpu.pipeline_mode<synchronous>, transform_indices = @transform_30, window_bounds = array<i64: 32, 4>}, {pipeline_mode = #tpu.pipeline_mode<synchronous>, transform_indices = @transform_31, window_bounds = array<i64: 1, 4>}, {transform_indices = @transform_32, window_bounds = array<i64: 1, 100, 48>}, {transform_indices = @transform_33, window_bounds = array<i64: 1, 1, 96>}, {transform_indices = @transform_34, window_bounds = array<i64: 1, 1, 4>}]} {
    %c0 = arith.constant 0 : index
    %c0_0 = arith.constant 0 : index
    %0 = vector.load %arg8[%c0, %c0_0] : memref<100x1xf32, #tpu.memory_space<vmem>>, vector<100x1xf32>
    %cst = arith.constant 5.000000e-01 : f32
    %1 = vector.broadcast %cst : f32 to vector<100x1xf32>
    %2 = arith.cmpf ogt, %0, %1 : vector<100x1xf32>
    %c0_1 = arith.constant 0 : index
    %c5 = arith.constant 5 : index
    %c0_2 = arith.constant 0 : index
    %3 = vector.load %arg1[%c0_1, %c5, %c0_2] : memref<1x128x4xf32, #tpu.memory_space<vmem>>, vector<1x100x4xf32>
    %4 = vector.shape_cast %3 : vector<1x100x4xf32> to vector<100x4xf32>
    %c0_3 = arith.constant 0 : index
    %c6 = arith.constant 6 : index
    %c0_4 = arith.constant 0 : index
    %5 = vector.load %arg1[%c0_3, %c6, %c0_4] : memref<1x128x4xf32, #tpu.memory_space<vmem>>, vector<1x100x4xf32>
    %6 = vector.shape_cast %5 : vector<1x100x4xf32> to vector<100x4xf32>
    %c0_5 = arith.constant 0 : index
    %c7 = arith.constant 7 : index
    %c0_6 = arith.constant 0 : index
    %7 = vector.load %arg1[%c0_5, %c7, %c0_6] : memref<1x128x4xf32, #tpu.memory_space<vmem>>, vector<1x100x4xf32>
    %8 = vector.shape_cast %7 : vector<1x100x4xf32> to vector<100x4xf32>
    %c0_7 = arith.constant 0 : index
    %c15 = arith.constant 15 : index
    %c0_8 = arith.constant 0 : index
    %9 = vector.load %arg1[%c0_7, %c15, %c0_8] : memref<1x128x4xf32, #tpu.memory_space<vmem>>, vector<1x100x4xf32>
    %10 = vector.shape_cast %9 : vector<1x100x4xf32> to vector<100x4xf32>
    %c0_9 = arith.constant 0 : index
    %c16 = arith.constant 16 : index
    %c0_10 = arith.constant 0 : index
    %11 = vector.load %arg1[%c0_9, %c16, %c0_10] : memref<1x128x4xf32, #tpu.memory_space<vmem>>, vector<1x100x4xf32>
    %12 = vector.shape_cast %11 : vector<1x100x4xf32> to vector<100x4xf32>
    %c0_11 = arith.constant 0 : index
    %c17 = arith.constant 17 : index
    %c0_12 = arith.constant 0 : index
    %13 = vector.load %arg1[%c0_11, %c17, %c0_12] : memref<1x128x4xf32, #tpu.memory_space<vmem>>, vector<1x100x4xf32>
    %14 = vector.shape_cast %13 : vector<1x100x4xf32> to vector<100x4xf32>
    %c0_13 = arith.constant 0 : index
    %c25 = arith.constant 25 : index
    %c0_14 = arith.constant 0 : index
    %15 = vector.load %arg1[%c0_13, %c25, %c0_14] : memref<1x128x4xf32, #tpu.memory_space<vmem>>, vector<1x100x4xf32>
    %16 = vector.shape_cast %15 : vector<1x100x4xf32> to vector<100x4xf32>
    %c0_15 = arith.constant 0 : index
    %c26 = arith.constant 26 : index
    %c0_16 = arith.constant 0 : index
    %17 = vector.load %arg1[%c0_15, %c26, %c0_16] : memref<1x128x4xf32, #tpu.memory_space<vmem>>, vector<1x100x4xf32>
    %18 = vector.shape_cast %17 : vector<1x100x4xf32> to vector<100x4xf32>
    %c0_17 = arith.constant 0 : index
    %c27 = arith.constant 27 : index
    %c0_18 = arith.constant 0 : index
    %19 = vector.load %arg1[%c0_17, %c27, %c0_18] : memref<1x128x4xf32, #tpu.memory_space<vmem>>, vector<1x100x4xf32>
    %20 = vector.shape_cast %19 : vector<1x100x4xf32> to vector<100x4xf32>
    %c0_19 = arith.constant 0 : index
    %c5_20 = arith.constant 5 : index
    %c0_21 = arith.constant 0 : index
    %21 = vector.load %arg2[%c0_19, %c5_20, %c0_21] : memref<1x128x8xf32, #tpu.memory_space<vmem>>, vector<1x100x8xf32>
    %22 = vector.shape_cast %21 : vector<1x100x8xf32> to vector<100x8xf32>
    %c0_22 = arith.constant 0 : index
    %c6_23 = arith.constant 6 : index
    %c0_24 = arith.constant 0 : index
    %23 = vector.load %arg2[%c0_22, %c6_23, %c0_24] : memref<1x128x8xf32, #tpu.memory_space<vmem>>, vector<1x100x8xf32>
    %24 = vector.shape_cast %23 : vector<1x100x8xf32> to vector<100x8xf32>
    %c0_25 = arith.constant 0 : index
    %c7_26 = arith.constant 7 : index
    %c0_27 = arith.constant 0 : index
    %25 = vector.load %arg2[%c0_25, %c7_26, %c0_27] : memref<1x128x8xf32, #tpu.memory_space<vmem>>, vector<1x100x8xf32>
    %26 = vector.shape_cast %25 : vector<1x100x8xf32> to vector<100x8xf32>
    %c0_28 = arith.constant 0 : index
    %c15_29 = arith.constant 15 : index
    %c0_30 = arith.constant 0 : index
    %27 = vector.load %arg2[%c0_28, %c15_29, %c0_30] : memref<1x128x8xf32, #tpu.memory_space<vmem>>, vector<1x100x8xf32>
    %28 = vector.shape_cast %27 : vector<1x100x8xf32> to vector<100x8xf32>
    %c0_31 = arith.constant 0 : index
    %c16_32 = arith.constant 16 : index
    %c0_33 = arith.constant 0 : index
    %29 = vector.load %arg2[%c0_31, %c16_32, %c0_33] : memref<1x128x8xf32, #tpu.memory_space<vmem>>, vector<1x100x8xf32>
    %30 = vector.shape_cast %29 : vector<1x100x8xf32> to vector<100x8xf32>
    %c0_34 = arith.constant 0 : index
    %c17_35 = arith.constant 17 : index
    %c0_36 = arith.constant 0 : index
    %31 = vector.load %arg2[%c0_34, %c17_35, %c0_36] : memref<1x128x8xf32, #tpu.memory_space<vmem>>, vector<1x100x8xf32>
    %32 = vector.shape_cast %31 : vector<1x100x8xf32> to vector<100x8xf32>
    %c0_37 = arith.constant 0 : index
    %c25_38 = arith.constant 25 : index
    %c0_39 = arith.constant 0 : index
    %33 = vector.load %arg2[%c0_37, %c25_38, %c0_39] : memref<1x128x8xf32, #tpu.memory_space<vmem>>, vector<1x100x8xf32>
    %34 = vector.shape_cast %33 : vector<1x100x8xf32> to vector<100x8xf32>
    %c0_40 = arith.constant 0 : index
    %c26_41 = arith.constant 26 : index
    %c0_42 = arith.constant 0 : index
    %35 = vector.load %arg2[%c0_40, %c26_41, %c0_42] : memref<1x128x8xf32, #tpu.memory_space<vmem>>, vector<1x100x8xf32>
    %36 = vector.shape_cast %35 : vector<1x100x8xf32> to vector<100x8xf32>
    %c0_43 = arith.constant 0 : index
    %c27_44 = arith.constant 27 : index
    %c0_45 = arith.constant 0 : index
    %37 = vector.load %arg2[%c0_43, %c27_44, %c0_45] : memref<1x128x8xf32, #tpu.memory_space<vmem>>, vector<1x100x8xf32>
    %38 = vector.shape_cast %37 : vector<1x100x8xf32> to vector<100x8xf32>
    %39 = tpu.concatenate %4, %6, %8, %10, %12, %14, %16, %18, %20, %22, %24, %26, %28, %30, %32, %34 in 1 : vector<100x4xf32>, vector<100x4xf32>, vector<100x4xf32>, vector<100x4xf32>, vector<100x4xf32>, vector<100x4xf32>, vector<100x4xf32>, vector<100x4xf32>, vector<100x4xf32>, vector<100x8xf32>, vector<100x8xf32>, vector<100x8xf32>, vector<100x8xf32>, vector<100x8xf32>, vector<100x8xf32>, vector<100x8xf32> -> vector<100x92xf32>
    %40 = tpu.concatenate %36, %38 in 1 : vector<100x8xf32>, vector<100x8xf32> -> vector<100x16xf32>
    %41 = tpu.concatenate %39, %40 in 1 : vector<100x92xf32>, vector<100x16xf32> -> vector<100x108xf32>
    %42 = arith.truncf %41 : vector<100x108xf32> to vector<100x108xbf16>
    %c0_46 = arith.constant 0 : index
    %c0_47 = arith.constant 0 : index
    %43 = vector.load %arg9[%c0_46, %c0_47] : memref<108x32xf32, #tpu.memory_space<vmem>>, vector<108x32xf32>
    %44 = arith.truncf %43 : vector<108x32xf32> to vector<108x32xbf16>
    %cst_48 = arith.constant dense<0.000000e+00> : vector<100x32xf32>
    %45 = tpu.matmul %42, %44, %cst_48 {dimension_numbers = #tpu.dot_dimension_numbers<[1], [0], [0], [1], [0, 0, 1, 1], [], []>} : vector<100x108xbf16>, vector<108x32xbf16>, vector<100x32xf32> -> vector<100x32xf32>
    %c0_49 = arith.constant 0 : index
    %c0_50 = arith.constant 0 : index
    %46 = vector.load %arg10[%c0_49, %c0_50] : memref<1x32xf32, #tpu.memory_space<vmem>>, vector<1x32xf32>
    %47 = vector.broadcast %46 : vector<1x32xf32> to vector<100x32xf32>
    %48 = arith.addf %45, %47 : vector<100x32xf32>
    %49 = vector.extract_strided_slice %48 {offsets = [0, 0], sizes = [100, 8], strides = [1, 1]} : vector<100x32xf32> to vector<100x8xf32>
    %50 = arith.negf %49 : vector<100x8xf32>
    %51 = math.exp %50 : vector<100x8xf32>
    %cst_51 = arith.constant 1.000000e+00 : f32
    %52 = vector.broadcast %cst_51 : f32 to vector<100x8xf32>
    %53 = arith.addf %52, %51 : vector<100x8xf32>
    %54 = arith.divf %52, %53 : vector<100x8xf32>
    %55 = vector.extract_strided_slice %48 {offsets = [0, 8], sizes = [100, 8], strides = [1, 1]} : vector<100x32xf32> to vector<100x8xf32>
    %56 = arith.negf %55 : vector<100x8xf32>
    %57 = math.exp %56 : vector<100x8xf32>
    %cst_52 = arith.constant 1.000000e+00 : f32
    %58 = vector.broadcast %cst_52 : f32 to vector<100x8xf32>
    %59 = arith.addf %58, %57 : vector<100x8xf32>
    %60 = arith.divf %58, %59 : vector<100x8xf32>
    %61 = vector.extract_strided_slice %48 {offsets = [0, 16], sizes = [100, 8], strides = [1, 1]} : vector<100x32xf32> to vector<100x8xf32>
    %62 = math.tanh %61 : vector<100x8xf32>
    %63 = vector.extract_strided_slice %48 {offsets = [0, 24], sizes = [100, 8], strides = [1, 1]} : vector<100x32xf32> to vector<100x8xf32>
    %64 = arith.negf %63 : vector<100x8xf32>
    %65 = math.exp %64 : vector<100x8xf32>
    %cst_53 = arith.constant 1.000000e+00 : f32
    %66 = vector.broadcast %cst_53 : f32 to vector<100x8xf32>
    %67 = arith.addf %66, %65 : vector<100x8xf32>
    %68 = arith.divf %66, %67 : vector<100x8xf32>
    %c0_54 = arith.constant 0 : index
    %c0_55 = arith.constant 0 : index
    %c0_56 = arith.constant 0 : index
    %69 = vector.load %arg3[%c0_54, %c0_55, %c0_56] : memref<1x100x8xf32, #tpu.memory_space<vmem>>, vector<1x100x8xf32>
    %70 = vector.shape_cast %69 : vector<1x100x8xf32> to vector<100x8xf32>
    %71 = arith.mulf %60, %70 : vector<100x8xf32>
    %72 = arith.mulf %54, %62 : vector<100x8xf32>
    %73 = arith.addf %71, %72 : vector<100x8xf32>
    %74 = math.tanh %73 : vector<100x8xf32>
    %75 = arith.mulf %68, %74 : vector<100x8xf32>
    %cst_57 = arith.constant 0.000000e+00 : f32
    %76 = vector.shape_cast %2 : vector<100x1xi1> to vector<100x1xi1>
    %77 = vector.broadcast %76 : vector<100x1xi1> to vector<100x8xi1>
    %78 = vector.broadcast %cst_57 : f32 to vector<100x8xf32>
    %79 = arith.select %77, %75, %78 : vector<100x8xi1>, vector<100x8xf32>
    %cst_58 = arith.constant 0.000000e+00 : f32
    %80 = vector.shape_cast %2 : vector<100x1xi1> to vector<100x1xi1>
    %81 = vector.broadcast %80 : vector<100x1xi1> to vector<100x8xi1>
    %82 = vector.broadcast %cst_58 : f32 to vector<100x8xf32>
    %83 = arith.select %81, %73, %82 : vector<100x8xi1>, vector<100x8xf32>
    %cst_59 = arith.constant 0.000000e+00 : f32
    %84 = vector.broadcast %cst_59 : f32 to vector<16x8xf32>
    %c0_60 = arith.constant 0 : index
    %c0_61 = arith.constant 0 : index
    %85 = vector.load %arg36[%c0_60, %c0_61] : memref<128x8xf32, #tpu.memory_space<vmem>>, vector<16x8xf32>
    tpu.vector_store %arg36[%c0_60, %c0_61], %84 {strides = array<i32>} : memref<128x8xf32, #tpu.memory_space<vmem>>, vector<16x8xf32>,
    %cst_62 = arith.constant 0.000000e+00 : f32
    %86 = vector.broadcast %cst_62 : f32 to vector<12x8xf32>
    %c116 = arith.constant 116 : index
    %c0_63 = arith.constant 0 : index
    %87 = vector.load %arg36[%c116, %c0_63] : memref<128x8xf32, #tpu.memory_space<vmem>>, vector<12x8xf32>
    tpu.vector_store %arg36[%c116, %c0_63], %86 {strides = array<i32>} : memref<128x8xf32, #tpu.memory_space<vmem>>, vector<12x8xf32>,
    %c16_64 = arith.constant 16 : index
    %c0_65 = arith.constant 0 : index
    %88 = vector.load %arg36[%c16_64, %c0_65] : memref<128x8xf32, #tpu.memory_space<vmem>>, vector<100x8xf32>
    tpu.vector_store %arg36[%c16_64, %c0_65], %79 {strides = array<i32>} : memref<128x8xf32, #tpu.memory_space<vmem>>, vector<100x8xf32>,
    %c5_66 = arith.constant 5 : index
    %c0_67 = arith.constant 0 : index
    %89 = vector.load %arg36[%c5_66, %c0_67] : memref<128x8xf32, #tpu.memory_space<vmem>>, vector<100x8xf32>
    %c6_68 = arith.constant 6 : index
    %c0_69 = arith.constant 0 : index
    %90 = vector.load %arg36[%c6_68, %c0_69] : memref<128x8xf32, #tpu.memory_space<vmem>>, vector<100x8xf32>
    %c7_70 = arith.constant 7 : index
    %c0_71 = arith.constant 0 : index
    %91 = vector.load %arg36[%c7_70, %c0_71] : memref<128x8xf32, #tpu.memory_space<vmem>>, vector<100x8xf32>
    %c15_72 = arith.constant 15 : index
    %c0_73 = arith.constant 0 : index
    %92 = vector.load %arg36[%c15_72, %c0_73] : memref<128x8xf32, #tpu.memory_space<vmem>>, vector<100x8xf32>
    %c16_74 = arith.constant 16 : index
    %c0_75 = arith.constant 0 : index
    %93 = vector.load %arg36[%c16_74, %c0_75] : memref<128x8xf32, #tpu.memory_space<vmem>>, vector<100x8xf32>
    %c17_76 = arith.constant 17 : index
    %c0_77 = arith.constant 0 : index
    %94 = vector.load %arg36[%c17_76, %c0_77] : memref<128x8xf32, #tpu.memory_space<vmem>>, vector<100x8xf32>
    %c25_78 = arith.constant 25 : index
    %c0_79 = arith.constant 0 : index
    %95 = vector.load %arg36[%c25_78, %c0_79] : memref<128x8xf32, #tpu.memory_space<vmem>>, vector<100x8xf32>
    %c26_80 = arith.constant 26 : index
    %c0_81 = arith.constant 0 : index
    %96 = vector.load %arg36[%c26_80, %c0_81] : memref<128x8xf32, #tpu.memory_space<vmem>>, vector<100x8xf32>
    %c27_82 = arith.constant 27 : index
    %c0_83 = arith.constant 0 : index
    %97 = vector.load %arg36[%c27_82, %c0_83] : memref<128x8xf32, #tpu.memory_space<vmem>>, vector<100x8xf32>
    %c0_84 = arith.constant 0 : index
    %c5_85 = arith.constant 5 : index
    %c0_86 = arith.constant 0 : index
    %98 = vector.load %arg4[%c0_84, %c5_85, %c0_86] : memref<1x128x8xf32, #tpu.memory_space<vmem>>, vector<1x100x8xf32>
    %99 = vector.shape_cast %98 : vector<1x100x8xf32> to vector<100x8xf32>
    %c0_87 = arith.constant 0 : index
    %c6_88 = arith.constant 6 : index
    %c0_89 = arith.constant 0 : index
    %100 = vector.load %arg4[%c0_87, %c6_88, %c0_89] : memref<1x128x8xf32, #tpu.memory_space<vmem>>, vector<1x100x8xf32>
    %101 = vector.shape_cast %100 : vector<1x100x8xf32> to vector<100x8xf32>
    %c0_90 = arith.constant 0 : index
    %c7_91 = arith.constant 7 : index
    %c0_92 = arith.constant 0 : index
    %102 = vector.load %arg4[%c0_90, %c7_91, %c0_92] : memref<1x128x8xf32, #tpu.memory_space<vmem>>, vector<1x100x8xf32>
    %103 = vector.shape_cast %102 : vector<1x100x8xf32> to vector<100x8xf32>
    %c0_93 = arith.constant 0 : index
    %c15_94 = arith.constant 15 : index
    %c0_95 = arith.constant 0 : index
    %104 = vector.load %arg4[%c0_93, %c15_94, %c0_95] : memref<1x128x8xf32, #tpu.memory_space<vmem>>, vector<1x100x8xf32>
    %105 = vector.shape_cast %104 : vector<1x100x8xf32> to vector<100x8xf32>
    %c0_96 = arith.constant 0 : index
    %c16_97 = arith.constant 16 : index
    %c0_98 = arith.constant 0 : index
    %106 = vector.load %arg4[%c0_96, %c16_97, %c0_98] : memref<1x128x8xf32, #tpu.memory_space<vmem>>, vector<1x100x8xf32>
    %107 = vector.shape_cast %106 : vector<1x100x8xf32> to vector<100x8xf32>
    %c0_99 = arith.constant 0 : index
    %c17_100 = arith.constant 17 : index
    %c0_101 = arith.constant 0 : index
    %108 = vector.load %arg4[%c0_99, %c17_100, %c0_101] : memref<1x128x8xf32, #tpu.memory_space<vmem>>, vector<1x100x8xf32>
    %109 = vector.shape_cast %108 : vector<1x100x8xf32> to vector<100x8xf32>
    %c0_102 = arith.constant 0 : index
    %c25_103 = arith.constant 25 : index
    %c0_104 = arith.constant 0 : index
    %110 = vector.load %arg4[%c0_102, %c25_103, %c0_104] : memref<1x128x8xf32, #tpu.memory_space<vmem>>, vector<1x100x8xf32>
    %111 = vector.shape_cast %110 : vector<1x100x8xf32> to vector<100x8xf32>
    %c0_105 = arith.constant 0 : index
    %c26_106 = arith.constant 26 : index
    %c0_107 = arith.constant 0 : index
    %112 = vector.load %arg4[%c0_105, %c26_106, %c0_107] : memref<1x128x8xf32, #tpu.memory_space<vmem>>, vector<1x100x8xf32>
    %113 = vector.shape_cast %112 : vector<1x100x8xf32> to vector<100x8xf32>
    %c0_108 = arith.constant 0 : index
    %c27_109 = arith.constant 27 : index
    %c0_110 = arith.constant 0 : index
    %114 = vector.load %arg4[%c0_108, %c27_109, %c0_110] : memref<1x128x8xf32, #tpu.memory_space<vmem>>, vector<1x100x8xf32>
    %115 = vector.shape_cast %114 : vector<1x100x8xf32> to vector<100x8xf32>
    %116 = tpu.concatenate %89, %90, %91, %92, %93, %94, %95, %96, %97, %99, %101, %103, %105, %107, %109, %111 in 1 : vector<100x8xf32>, vector<100x8xf32>, vector<100x8xf32>, vector<100x8xf32>, vector<100x8xf32>, vector<100x8xf32>, vector<100x8xf32>, vector<100x8xf32>, vector<100x8xf32>, vector<100x8xf32>, vector<100x8xf32>, vector<100x8xf32>, vector<100x8xf32>, vector<100x8xf32>, vector<100x8xf32>, vector<100x8xf32> -> vector<100x128xf32>
    %117 = tpu.concatenate %113, %115 in 1 : vector<100x8xf32>, vector<100x8xf32> -> vector<100x16xf32>
    %118 = tpu.concatenate %116, %117 in 1 : vector<100x128xf32>, vector<100x16xf32> -> vector<100x144xf32>
    %119 = arith.truncf %118 : vector<100x144xf32> to vector<100x144xbf16>
    %c0_111 = arith.constant 0 : index
    %c0_112 = arith.constant 0 : index
    %120 = vector.load %arg11[%c0_111, %c0_112] : memref<144x32xf32, #tpu.memory_space<vmem>>, vector<144x32xf32>
    %121 = arith.truncf %120 : vector<144x32xf32> to vector<144x32xbf16>
    %cst_113 = arith.constant dense<0.000000e+00> : vector<100x32xf32>
    %122 = tpu.matmul %119, %121, %cst_113 {dimension_numbers = #tpu.dot_dimension_numbers<[1], [0], [0], [1], [0, 0, 1, 1], [], []>} : vector<100x144xbf16>, vector<144x32xbf16>, vector<100x32xf32> -> vector<100x32xf32>
    %c0_114 = arith.constant 0 : index
    %c0_115 = arith.constant 0 : index
    %123 = vector.load %arg12[%c0_114, %c0_115] : memref<1x32xf32, #tpu.memory_space<vmem>>, vector<1x32xf32>
    %124 = vector.broadcast %123 : vector<1x32xf32> to vector<100x32xf32>
    %125 = arith.addf %122, %124 : vector<100x32xf32>
    %126 = vector.extract_strided_slice %125 {offsets = [0, 0], sizes = [100, 8], strides = [1, 1]} : vector<100x32xf32> to vector<100x8xf32>
    %127 = arith.negf %126 : vector<100x8xf32>
    %128 = math.exp %127 : vector<100x8xf32>
    %cst_116 = arith.constant 1.000000e+00 : f32
    %129 = vector.broadcast %cst_116 : f32 to vector<100x8xf32>
    %130 = arith.addf %129, %128 : vector<100x8xf32>
    %131 = arith.divf %129, %130 : vector<100x8xf32>
    %132 = vector.extract_strided_slice %125 {offsets = [0, 8], sizes = [100, 8], strides = [1, 1]} : vector<100x32xf32> to vector<100x8xf32>
    %133 = arith.negf %132 : vector<100x8xf32>
    %134 = math.exp %133 : vector<100x8xf32>
    %cst_117 = arith.constant 1.000000e+00 : f32
    %135 = vector.broadcast %cst_117 : f32 to vector<100x8xf32>
    %136 = arith.addf %135, %134 : vector<100x8xf32>
    %137 = arith.divf %135, %136 : vector<100x8xf32>
    %138 = vector.extract_strided_slice %125 {offsets = [0, 16], sizes = [100, 8], strides = [1, 1]} : vector<100x32xf32> to vector<100x8xf32>
    %139 = math.tanh %138 : vector<100x8xf32>
    %140 = vector.extract_strided_slice %125 {offsets = [0, 24], sizes = [100, 8], strides = [1, 1]} : vector<100x32xf32> to vector<100x8xf32>
    %141 = arith.negf %140 : vector<100x8xf32>
    %142 = math.exp %141 : vector<100x8xf32>
    %cst_118 = arith.constant 1.000000e+00 : f32
    %143 = vector.broadcast %cst_118 : f32 to vector<100x8xf32>
    %144 = arith.addf %143, %142 : vector<100x8xf32>
    %145 = arith.divf %143, %144 : vector<100x8xf32>
    %c0_119 = arith.constant 0 : index
    %c0_120 = arith.constant 0 : index
    %c0_121 = arith.constant 0 : index
    %146 = vector.load %arg5[%c0_119, %c0_120, %c0_121] : memref<1x100x8xf32, #tpu.memory_space<vmem>>, vector<1x100x8xf32>
    %147 = vector.shape_cast %146 : vector<1x100x8xf32> to vector<100x8xf32>
    %148 = arith.mulf %137, %147 : vector<100x8xf32>
    %149 = arith.mulf %131, %139 : vector<100x8xf32>
    %150 = arith.addf %148, %149 : vector<100x8xf32>
    %151 = math.tanh %150 : vector<100x8xf32>
    %152 = arith.mulf %145, %151 : vector<100x8xf32>
    %cst_122 = arith.constant 0.000000e+00 : f32
    %153 = vector.shape_cast %2 : vector<100x1xi1> to vector<100x1xi1>
    %154 = vector.broadcast %153 : vector<100x1xi1> to vector<100x8xi1>
    %155 = vector.broadcast %cst_122 : f32 to vector<100x8xf32>
    %156 = arith.select %154, %152, %155 : vector<100x8xi1>, vector<100x8xf32>
    %cst_123 = arith.constant 0.000000e+00 : f32
    %157 = vector.shape_cast %2 : vector<100x1xi1> to vector<100x1xi1>
    %158 = vector.broadcast %157 : vector<100x1xi1> to vector<100x8xi1>
    %159 = vector.broadcast %cst_123 : f32 to vector<100x8xf32>
    %160 = arith.select %158, %150, %159 : vector<100x8xi1>, vector<100x8xf32>
    %cst_124 = arith.constant 0.000000e+00 : f32
    %161 = vector.broadcast %cst_124 : f32 to vector<16x8xf32>
    %c0_125 = arith.constant 0 : index
    %c0_126 = arith.constant 0 : index
    %162 = vector.load %arg37[%c0_125, %c0_126] : memref<128x8xf32, #tpu.memory_space<vmem>>, vector<16x8xf32>
    tpu.vector_store %arg37[%c0_125, %c0_126], %161 {strides = array<i32>} : memref<128x8xf32, #tpu.memory_space<vmem>>, vector<16x8xf32>,
    %cst_127 = arith.constant 0.000000e+00 : f32
    %163 = vector.broadcast %cst_127 : f32 to vector<12x8xf32>
    %c116_128 = arith.constant 116 : index
    %c0_129 = arith.constant 0 : index
    %164 = vector.load %arg37[%c116_128, %c0_129] : memref<128x8xf32, #tpu.memory_space<vmem>>, vector<12x8xf32>
    tpu.vector_store %arg37[%c116_128, %c0_129], %163 {strides = array<i32>} : memref<128x8xf32, #tpu.memory_space<vmem>>, vector<12x8xf32>,
    %c16_130 = arith.constant 16 : index
    %c0_131 = arith.constant 0 : index
    %165 = vector.load %arg37[%c16_130, %c0_131] : memref<128x8xf32, #tpu.memory_space<vmem>>, vector<100x8xf32>
    tpu.vector_store %arg37[%c16_130, %c0_131], %156 {strides = array<i32>} : memref<128x8xf32, #tpu.memory_space<vmem>>, vector<100x8xf32>,
    %c5_132 = arith.constant 5 : index
    %c0_133 = arith.constant 0 : index
    %166 = vector.load %arg37[%c5_132, %c0_133] : memref<128x8xf32, #tpu.memory_space<vmem>>, vector<100x8xf32>
    %c6_134 = arith.constant 6 : index
    %c0_135 = arith.constant 0 : index
    %167 = vector.load %arg37[%c6_134, %c0_135] : memref<128x8xf32, #tpu.memory_space<vmem>>, vector<100x8xf32>
    %c7_136 = arith.constant 7 : index
    %c0_137 = arith.constant 0 : index
    %168 = vector.load %arg37[%c7_136, %c0_137] : memref<128x8xf32, #tpu.memory_space<vmem>>, vector<100x8xf32>
    %c15_138 = arith.constant 15 : index
    %c0_139 = arith.constant 0 : index
    %169 = vector.load %arg37[%c15_138, %c0_139] : memref<128x8xf32, #tpu.memory_space<vmem>>, vector<100x8xf32>
    %c16_140 = arith.constant 16 : index
    %c0_141 = arith.constant 0 : index
    %170 = vector.load %arg37[%c16_140, %c0_141] : memref<128x8xf32, #tpu.memory_space<vmem>>, vector<100x8xf32>
    %c17_142 = arith.constant 17 : index
    %c0_143 = arith.constant 0 : index
    %171 = vector.load %arg37[%c17_142, %c0_143] : memref<128x8xf32, #tpu.memory_space<vmem>>, vector<100x8xf32>
    %c25_144 = arith.constant 25 : index
    %c0_145 = arith.constant 0 : index
    %172 = vector.load %arg37[%c25_144, %c0_145] : memref<128x8xf32, #tpu.memory_space<vmem>>, vector<100x8xf32>
    %c26_146 = arith.constant 26 : index
    %c0_147 = arith.constant 0 : index
    %173 = vector.load %arg37[%c26_146, %c0_147] : memref<128x8xf32, #tpu.memory_space<vmem>>, vector<100x8xf32>
    %c27_148 = arith.constant 27 : index
    %c0_149 = arith.constant 0 : index
    %174 = vector.load %arg37[%c27_148, %c0_149] : memref<128x8xf32, #tpu.memory_space<vmem>>, vector<100x8xf32>
    %c0_150 = arith.constant 0 : index
    %c5_151 = arith.constant 5 : index
    %c0_152 = arith.constant 0 : index
    %175 = vector.load %arg6[%c0_150, %c5_151, %c0_152] : memref<1x128x8xf32, #tpu.memory_space<vmem>>, vector<1x100x8xf32>
    %176 = vector.shape_cast %175 : vector<1x100x8xf32> to vector<100x8xf32>
    %c0_153 = arith.constant 0 : index
    %c6_154 = arith.constant 6 : index
    %c0_155 = arith.constant 0 : index
    %177 = vector.load %arg6[%c0_153, %c6_154, %c0_155] : memref<1x128x8xf32, #tpu.memory_space<vmem>>, vector<1x100x8xf32>
    %178 = vector.shape_cast %177 : vector<1x100x8xf32> to vector<100x8xf32>
    %c0_156 = arith.constant 0 : index
    %c7_157 = arith.constant 7 : index
    %c0_158 = arith.constant 0 : index
    %179 = vector.load %arg6[%c0_156, %c7_157, %c0_158] : memref<1x128x8xf32, #tpu.memory_space<vmem>>, vector<1x100x8xf32>
    %180 = vector.shape_cast %179 : vector<1x100x8xf32> to vector<100x8xf32>
    %c0_159 = arith.constant 0 : index
    %c15_160 = arith.constant 15 : index
    %c0_161 = arith.constant 0 : index
    %181 = vector.load %arg6[%c0_159, %c15_160, %c0_161] : memref<1x128x8xf32, #tpu.memory_space<vmem>>, vector<1x100x8xf32>
    %182 = vector.shape_cast %181 : vector<1x100x8xf32> to vector<100x8xf32>
    %c0_162 = arith.constant 0 : index
    %c16_163 = arith.constant 16 : index
    %c0_164 = arith.constant 0 : index
    %183 = vector.load %arg6[%c0_162, %c16_163, %c0_164] : memref<1x128x8xf32, #tpu.memory_space<vmem>>, vector<1x100x8xf32>
    %184 = vector.shape_cast %183 : vector<1x100x8xf32> to vector<100x8xf32>
    %c0_165 = arith.constant 0 : index
    %c17_166 = arith.constant 17 : index
    %c0_167 = arith.constant 0 : index
    %185 = vector.load %arg6[%c0_165, %c17_166, %c0_167] : memref<1x128x8xf32, #tpu.memory_space<vmem>>, vector<1x100x8xf32>
    %186 = vector.shape_cast %185 : vector<1x100x8xf32> to vector<100x8xf32>
    %c0_168 = arith.constant 0 : index
    %c25_169 = arith.constant 25 : index
    %c0_170 = arith.constant 0 : index
    %187 = vector.load %arg6[%c0_168, %c25_169, %c0_170] : memref<1x128x8xf32, #tpu.memory_space<vmem>>, vector<1x100x8xf32>
    %188 = vector.shape_cast %187 : vector<1x100x8xf32> to vector<100x8xf32>
    %c0_171 = arith.constant 0 : index
    %c26_172 = arith.constant 26 : index
    %c0_173 = arith.constant 0 : index
    %189 = vector.load %arg6[%c0_171, %c26_172, %c0_173] : memref<1x128x8xf32, #tpu.memory_space<vmem>>, vector<1x100x8xf32>
    %190 = vector.shape_cast %189 : vector<1x100x8xf32> to vector<100x8xf32>
    %c0_174 = arith.constant 0 : index
    %c27_175 = arith.constant 27 : index
    %c0_176 = arith.constant 0 : index
    %191 = vector.load %arg6[%c0_174, %c27_175, %c0_176] : memref<1x128x8xf32, #tpu.memory_space<vmem>>, vector<1x100x8xf32>
    %192 = vector.shape_cast %191 : vector<1x100x8xf32> to vector<100x8xf32>
    %193 = tpu.concatenate %166, %167, %168, %169, %170, %171, %172, %173, %174, %176, %178, %180, %182, %184, %186, %188 in 1 : vector<100x8xf32>, vector<100x8xf32>, vector<100x8xf32>, vector<100x8xf32>, vector<100x8xf32>, vector<100x8xf32>, vector<100x8xf32>, vector<100x8xf32>, vector<100x8xf32>, vector<100x8xf32>, vector<100x8xf32>, vector<100x8xf32>, vector<100x8xf32>, vector<100x8xf32>, vector<100x8xf32>, vector<100x8xf32> -> vector<100x128xf32>
    %194 = tpu.concatenate %190, %192 in 1 : vector<100x8xf32>, vector<100x8xf32> -> vector<100x16xf32>
    %195 = tpu.concatenate %193, %194 in 1 : vector<100x128xf32>, vector<100x16xf32> -> vector<100x144xf32>
    %196 = arith.truncf %195 : vector<100x144xf32> to vector<100x144xbf16>
    %c0_177 = arith.constant 0 : index
    %c0_178 = arith.constant 0 : index
    %197 = vector.load %arg13[%c0_177, %c0_178] : memref<144x32xf32, #tpu.memory_space<vmem>>, vector<144x32xf32>
    %198 = arith.truncf %197 : vector<144x32xf32> to vector<144x32xbf16>
    %cst_179 = arith.constant dense<0.000000e+00> : vector<100x32xf32>
    %199 = tpu.matmul %196, %198, %cst_179 {dimension_numbers = #tpu.dot_dimension_numbers<[1], [0], [0], [1], [0, 0, 1, 1], [], []>} : vector<100x144xbf16>, vector<144x32xbf16>, vector<100x32xf32> -> vector<100x32xf32>
    %c0_180 = arith.constant 0 : index
    %c0_181 = arith.constant 0 : index
    %200 = vector.load %arg14[%c0_180, %c0_181] : memref<1x32xf32, #tpu.memory_space<vmem>>, vector<1x32xf32>
    %201 = vector.broadcast %200 : vector<1x32xf32> to vector<100x32xf32>
    %202 = arith.addf %199, %201 : vector<100x32xf32>
    %203 = vector.extract_strided_slice %202 {offsets = [0, 0], sizes = [100, 8], strides = [1, 1]} : vector<100x32xf32> to vector<100x8xf32>
    %204 = arith.negf %203 : vector<100x8xf32>
    %205 = math.exp %204 : vector<100x8xf32>
    %cst_182 = arith.constant 1.000000e+00 : f32
    %206 = vector.broadcast %cst_182 : f32 to vector<100x8xf32>
    %207 = arith.addf %206, %205 : vector<100x8xf32>
    %208 = arith.divf %206, %207 : vector<100x8xf32>
    %209 = vector.extract_strided_slice %202 {offsets = [0, 8], sizes = [100, 8], strides = [1, 1]} : vector<100x32xf32> to vector<100x8xf32>
    %210 = arith.negf %209 : vector<100x8xf32>
    %211 = math.exp %210 : vector<100x8xf32>
    %cst_183 = arith.constant 1.000000e+00 : f32
    %212 = vector.broadcast %cst_183 : f32 to vector<100x8xf32>
    %213 = arith.addf %212, %211 : vector<100x8xf32>
    %214 = arith.divf %212, %213 : vector<100x8xf32>
    %215 = vector.extract_strided_slice %202 {offsets = [0, 16], sizes = [100, 8], strides = [1, 1]} : vector<100x32xf32> to vector<100x8xf32>
    %216 = math.tanh %215 : vector<100x8xf32>
    %217 = vector.extract_strided_slice %202 {offsets = [0, 24], sizes = [100, 8], strides = [1, 1]} : vector<100x32xf32> to vector<100x8xf32>
    %218 = arith.negf %217 : vector<100x8xf32>
    %219 = math.exp %218 : vector<100x8xf32>
    %cst_184 = arith.constant 1.000000e+00 : f32
    %220 = vector.broadcast %cst_184 : f32 to vector<100x8xf32>
    %221 = arith.addf %220, %219 : vector<100x8xf32>
    %222 = arith.divf %220, %221 : vector<100x8xf32>
    %c0_185 = arith.constant 0 : index
    %c0_186 = arith.constant 0 : index
    %c0_187 = arith.constant 0 : index
    %223 = vector.load %arg7[%c0_185, %c0_186, %c0_187] : memref<1x100x8xf32, #tpu.memory_space<vmem>>, vector<1x100x8xf32>
    %224 = vector.shape_cast %223 : vector<1x100x8xf32> to vector<100x8xf32>
    %225 = arith.mulf %214, %224 : vector<100x8xf32>
    %226 = arith.mulf %208, %216 : vector<100x8xf32>
    %227 = arith.addf %225, %226 : vector<100x8xf32>
    %228 = math.tanh %227 : vector<100x8xf32>
    %229 = arith.mulf %222, %228 : vector<100x8xf32>
    %cst_188 = arith.constant 0.000000e+00 : f32
    %230 = vector.shape_cast %2 : vector<100x1xi1> to vector<100x1xi1>
    %231 = vector.broadcast %230 : vector<100x1xi1> to vector<100x8xi1>
    %232 = vector.broadcast %cst_188 : f32 to vector<100x8xf32>
    %233 = arith.select %231, %229, %232 : vector<100x8xi1>, vector<100x8xf32>
    %cst_189 = arith.constant 0.000000e+00 : f32
    %234 = vector.shape_cast %2 : vector<100x1xi1> to vector<100x1xi1>
    %235 = vector.broadcast %234 : vector<100x1xi1> to vector<100x8xi1>
    %236 = vector.broadcast %cst_189 : f32 to vector<100x8xf32>
    %237 = arith.select %235, %227, %236 : vector<100x8xi1>, vector<100x8xf32>
    %238 = tpu.concatenate %79, %83, %156, %160, %233, %237 in 1 : vector<100x8xf32>, vector<100x8xf32>, vector<100x8xf32>, vector<100x8xf32>, vector<100x8xf32>, vector<100x8xf32> -> vector<100x48xf32>
    %c0_190 = arith.constant 0 : index
    %c0_191 = arith.constant 0 : index
    %c0_192 = arith.constant 0 : index
    %239 = vector.load %arg33[%c0_190, %c0_191, %c0_192] : memref<1x100x48xf32, #tpu.memory_space<vmem>>, vector<1x100x48xf32>
    %240 = vector.shape_cast %239 : vector<1x100x48xf32> to vector<100x48xf32>
    %241 = vector.shape_cast %238 : vector<100x48xf32> to vector<1x100x48xf32>
    tpu.vector_store %arg33[%c0_190, %c0_191, %c0_192], %241 {strides = array<i32>} : memref<1x100x48xf32, #tpu.memory_space<vmem>>, vector<1x100x48xf32>,
    %c0_193 = arith.constant 0 : index
    %c0_194 = arith.constant 0 : index
    %c0_195 = arith.constant 0 : index
    %242 = vector.load %arg15[%c0_193, %c0_194, %c0_195] : memref<1x1x8xf32, #tpu.memory_space<vmem>>, vector<1x1x8xf32>
    %243 = vector.shape_cast %242 : vector<1x1x8xf32> to vector<1x8xf32>
    %c0_196 = arith.constant 0 : index
    %c0_197 = arith.constant 0 : index
    %c0_198 = arith.constant 0 : index
    %244 = vector.load %arg16[%c0_196, %c0_197, %c0_198] : memref<1x1x16xf32, #tpu.memory_space<vmem>>, vector<1x1x16xf32>
    %245 = vector.shape_cast %244 : vector<1x1x16xf32> to vector<1x16xf32>
    %c0_199 = arith.constant 0 : index
    %c0_200 = arith.constant 0 : index
    %c0_201 = arith.constant 0 : index
    %246 = vector.load %arg17[%c0_199, %c0_200, %c0_201] : memref<1x1x16xf32, #tpu.memory_space<vmem>>, vector<1x1x16xf32>
    %247 = vector.shape_cast %246 : vector<1x1x16xf32> to vector<1x16xf32>
    %248 = tpu.concatenate %243, %245 in 1 : vector<1x8xf32>, vector<1x16xf32> -> vector<1x24xf32>
    %249 = arith.truncf %248 : vector<1x24xf32> to vector<1x24xbf16>
    %c0_202 = arith.constant 0 : index
    %c0_203 = arith.constant 0 : index
    %250 = vector.load %arg22[%c0_202, %c0_203] : memref<24x64xf32, #tpu.memory_space<vmem>>, vector<24x64xf32>
    %251 = arith.truncf %250 : vector<24x64xf32> to vector<24x64xbf16>
    %cst_204 = arith.constant dense<0.000000e+00> : vector<1x64xf32>
    %252 = tpu.matmul %249, %251, %cst_204 {dimension_numbers = #tpu.dot_dimension_numbers<[1], [0], [0], [1], [0, 0, 1, 1], [], []>} : vector<1x24xbf16>, vector<24x64xbf16>, vector<1x64xf32> -> vector<1x64xf32>
    %c0_205 = arith.constant 0 : index
    %c0_206 = arith.constant 0 : index
    %253 = vector.load %arg23[%c0_205, %c0_206] : memref<1x64xf32, #tpu.memory_space<vmem>>, vector<1x64xf32>
    %254 = arith.addf %252, %253 : vector<1x64xf32>
    %255 = vector.extract_strided_slice %254 {offsets = [0, 0], sizes = [1, 16], strides = [1, 1]} : vector<1x64xf32> to vector<1x16xf32>
    %256 = arith.negf %255 : vector<1x16xf32>
    %257 = math.exp %256 : vector<1x16xf32>
    %cst_207 = arith.constant 1.000000e+00 : f32
    %258 = vector.broadcast %cst_207 : f32 to vector<1x16xf32>
    %259 = arith.addf %258, %257 : vector<1x16xf32>
    %260 = arith.divf %258, %259 : vector<1x16xf32>
    %261 = vector.extract_strided_slice %254 {offsets = [0, 16], sizes = [1, 16], strides = [1, 1]} : vector<1x64xf32> to vector<1x16xf32>
    %262 = arith.negf %261 : vector<1x16xf32>
    %263 = math.exp %262 : vector<1x16xf32>
    %cst_208 = arith.constant 1.000000e+00 : f32
    %264 = vector.broadcast %cst_208 : f32 to vector<1x16xf32>
    %265 = arith.addf %264, %263 : vector<1x16xf32>
    %266 = arith.divf %264, %265 : vector<1x16xf32>
    %267 = vector.extract_strided_slice %254 {offsets = [0, 32], sizes = [1, 16], strides = [1, 1]} : vector<1x64xf32> to vector<1x16xf32>
    %268 = math.tanh %267 : vector<1x16xf32>
    %269 = vector.extract_strided_slice %254 {offsets = [0, 48], sizes = [1, 16], strides = [1, 1]} : vector<1x64xf32> to vector<1x16xf32>
    %270 = arith.negf %269 : vector<1x16xf32>
    %271 = math.exp %270 : vector<1x16xf32>
    %cst_209 = arith.constant 1.000000e+00 : f32
    %272 = vector.broadcast %cst_209 : f32 to vector<1x16xf32>
    %273 = arith.addf %272, %271 : vector<1x16xf32>
    %274 = arith.divf %272, %273 : vector<1x16xf32>
    %275 = arith.mulf %266, %247 : vector<1x16xf32>
    %276 = arith.mulf %260, %268 : vector<1x16xf32>
    %277 = arith.addf %275, %276 : vector<1x16xf32>
    %278 = math.tanh %277 : vector<1x16xf32>
    %279 = arith.mulf %274, %278 : vector<1x16xf32>
    %c0_210 = arith.constant 0 : index
    %c0_211 = arith.constant 0 : index
    %c0_212 = arith.constant 0 : index
    %280 = vector.load %arg18[%c0_210, %c0_211, %c0_212] : memref<1x1x16xf32, #tpu.memory_space<vmem>>, vector<1x1x16xf32>
    %281 = vector.shape_cast %280 : vector<1x1x16xf32> to vector<1x16xf32>
    %c0_213 = arith.constant 0 : index
    %c0_214 = arith.constant 0 : index
    %c0_215 = arith.constant 0 : index
    %282 = vector.load %arg19[%c0_213, %c0_214, %c0_215] : memref<1x1x16xf32, #tpu.memory_space<vmem>>, vector<1x1x16xf32>
    %283 = vector.shape_cast %282 : vector<1x1x16xf32> to vector<1x16xf32>
    %284 = tpu.concatenate %279, %281 in 1 : vector<1x16xf32>, vector<1x16xf32> -> vector<1x32xf32>
    %285 = arith.truncf %284 : vector<1x32xf32> to vector<1x32xbf16>
    %c0_216 = arith.constant 0 : index
    %c0_217 = arith.constant 0 : index
    %286 = vector.load %arg24[%c0_216, %c0_217] : memref<32x64xf32, #tpu.memory_space<vmem>>, vector<32x64xf32>
    %287 = arith.truncf %286 : vector<32x64xf32> to vector<32x64xbf16>
    %cst_218 = arith.constant dense<0.000000e+00> : vector<1x64xf32>
    %288 = tpu.matmul %285, %287, %cst_218 {dimension_numbers = #tpu.dot_dimension_numbers<[1], [0], [0], [1], [0, 0, 1, 1], [], []>} : vector<1x32xbf16>, vector<32x64xbf16>, vector<1x64xf32> -> vector<1x64xf32>
    %c0_219 = arith.constant 0 : index
    %c0_220 = arith.constant 0 : index
    %289 = vector.load %arg25[%c0_219, %c0_220] : memref<1x64xf32, #tpu.memory_space<vmem>>, vector<1x64xf32>
    %290 = arith.addf %288, %289 : vector<1x64xf32>
    %291 = vector.extract_strided_slice %290 {offsets = [0, 0], sizes = [1, 16], strides = [1, 1]} : vector<1x64xf32> to vector<1x16xf32>
    %292 = arith.negf %291 : vector<1x16xf32>
    %293 = math.exp %292 : vector<1x16xf32>
    %cst_221 = arith.constant 1.000000e+00 : f32
    %294 = vector.broadcast %cst_221 : f32 to vector<1x16xf32>
    %295 = arith.addf %294, %293 : vector<1x16xf32>
    %296 = arith.divf %294, %295 : vector<1x16xf32>
    %297 = vector.extract_strided_slice %290 {offsets = [0, 16], sizes = [1, 16], strides = [1, 1]} : vector<1x64xf32> to vector<1x16xf32>
    %298 = arith.negf %297 : vector<1x16xf32>
    %299 = math.exp %298 : vector<1x16xf32>
    %cst_222 = arith.constant 1.000000e+00 : f32
    %300 = vector.broadcast %cst_222 : f32 to vector<1x16xf32>
    %301 = arith.addf %300, %299 : vector<1x16xf32>
    %302 = arith.divf %300, %301 : vector<1x16xf32>
    %303 = vector.extract_strided_slice %290 {offsets = [0, 32], sizes = [1, 16], strides = [1, 1]} : vector<1x64xf32> to vector<1x16xf32>
    %304 = math.tanh %303 : vector<1x16xf32>
    %305 = vector.extract_strided_slice %290 {offsets = [0, 48], sizes = [1, 16], strides = [1, 1]} : vector<1x64xf32> to vector<1x16xf32>
    %306 = arith.negf %305 : vector<1x16xf32>
    %307 = math.exp %306 : vector<1x16xf32>
    %cst_223 = arith.constant 1.000000e+00 : f32
    %308 = vector.broadcast %cst_223 : f32 to vector<1x16xf32>
    %309 = arith.addf %308, %307 : vector<1x16xf32>
    %310 = arith.divf %308, %309 : vector<1x16xf32>
    %311 = arith.mulf %302, %283 : vector<1x16xf32>
    %312 = arith.mulf %296, %304 : vector<1x16xf32>
    %313 = arith.addf %311, %312 : vector<1x16xf32>
    %314 = math.tanh %313 : vector<1x16xf32>
    %315 = arith.mulf %310, %314 : vector<1x16xf32>
    %c0_224 = arith.constant 0 : index
    %c0_225 = arith.constant 0 : index
    %c0_226 = arith.constant 0 : index
    %316 = vector.load %arg20[%c0_224, %c0_225, %c0_226] : memref<1x1x16xf32, #tpu.memory_space<vmem>>, vector<1x1x16xf32>
    %317 = vector.shape_cast %316 : vector<1x1x16xf32> to vector<1x16xf32>
    %c0_227 = arith.constant 0 : index
    %c0_228 = arith.constant 0 : index
    %c0_229 = arith.constant 0 : index
    %318 = vector.load %arg21[%c0_227, %c0_228, %c0_229] : memref<1x1x16xf32, #tpu.memory_space<vmem>>, vector<1x1x16xf32>
    %319 = vector.shape_cast %318 : vector<1x1x16xf32> to vector<1x16xf32>
    %320 = tpu.concatenate %315, %317 in 1 : vector<1x16xf32>, vector<1x16xf32> -> vector<1x32xf32>
    %321 = arith.truncf %320 : vector<1x32xf32> to vector<1x32xbf16>
    %c0_230 = arith.constant 0 : index
    %c0_231 = arith.constant 0 : index
    %322 = vector.load %arg26[%c0_230, %c0_231] : memref<32x64xf32, #tpu.memory_space<vmem>>, vector<32x64xf32>
    %323 = arith.truncf %322 : vector<32x64xf32> to vector<32x64xbf16>
    %cst_232 = arith.constant dense<0.000000e+00> : vector<1x64xf32>
    %324 = tpu.matmul %321, %323, %cst_232 {dimension_numbers = #tpu.dot_dimension_numbers<[1], [0], [0], [1], [0, 0, 1, 1], [], []>} : vector<1x32xbf16>, vector<32x64xbf16>, vector<1x64xf32> -> vector<1x64xf32>
    %c0_233 = arith.constant 0 : index
    %c0_234 = arith.constant 0 : index
    %325 = vector.load %arg27[%c0_233, %c0_234] : memref<1x64xf32, #tpu.memory_space<vmem>>, vector<1x64xf32>
    %326 = arith.addf %324, %325 : vector<1x64xf32>
    %327 = vector.extract_strided_slice %326 {offsets = [0, 0], sizes = [1, 16], strides = [1, 1]} : vector<1x64xf32> to vector<1x16xf32>
    %328 = arith.negf %327 : vector<1x16xf32>
    %329 = math.exp %328 : vector<1x16xf32>
    %cst_235 = arith.constant 1.000000e+00 : f32
    %330 = vector.broadcast %cst_235 : f32 to vector<1x16xf32>
    %331 = arith.addf %330, %329 : vector<1x16xf32>
    %332 = arith.divf %330, %331 : vector<1x16xf32>
    %333 = vector.extract_strided_slice %326 {offsets = [0, 16], sizes = [1, 16], strides = [1, 1]} : vector<1x64xf32> to vector<1x16xf32>
    %334 = arith.negf %333 : vector<1x16xf32>
    %335 = math.exp %334 : vector<1x16xf32>
    %cst_236 = arith.constant 1.000000e+00 : f32
    %336 = vector.broadcast %cst_236 : f32 to vector<1x16xf32>
    %337 = arith.addf %336, %335 : vector<1x16xf32>
    %338 = arith.divf %336, %337 : vector<1x16xf32>
    %339 = vector.extract_strided_slice %326 {offsets = [0, 32], sizes = [1, 16], strides = [1, 1]} : vector<1x64xf32> to vector<1x16xf32>
    %340 = math.tanh %339 : vector<1x16xf32>
    %341 = vector.extract_strided_slice %326 {offsets = [0, 48], sizes = [1, 16], strides = [1, 1]} : vector<1x64xf32> to vector<1x16xf32>
    %342 = arith.negf %341 : vector<1x16xf32>
    %343 = math.exp %342 : vector<1x16xf32>
    %cst_237 = arith.constant 1.000000e+00 : f32
    %344 = vector.broadcast %cst_237 : f32 to vector<1x16xf32>
    %345 = arith.addf %344, %343 : vector<1x16xf32>
    %346 = arith.divf %344, %345 : vector<1x16xf32>
    %347 = arith.mulf %338, %319 : vector<1x16xf32>
    %348 = arith.mulf %332, %340 : vector<1x16xf32>
    %349 = arith.addf %347, %348 : vector<1x16xf32>
    %350 = math.tanh %349 : vector<1x16xf32>
    %351 = arith.mulf %346, %350 : vector<1x16xf32>
    %352 = tpu.concatenate %279, %277, %315, %313, %351, %349 in 1 : vector<1x16xf32>, vector<1x16xf32>, vector<1x16xf32>, vector<1x16xf32>, vector<1x16xf32>, vector<1x16xf32> -> vector<1x96xf32>
    %c0_238 = arith.constant 0 : index
    %c0_239 = arith.constant 0 : index
    %c0_240 = arith.constant 0 : index
    %353 = vector.load %arg34[%c0_238, %c0_239, %c0_240] : memref<1x1x96xf32, #tpu.memory_space<vmem>>, vector<1x1x96xf32>
    %354 = vector.shape_cast %353 : vector<1x1x96xf32> to vector<1x96xf32>
    %355 = vector.shape_cast %352 : vector<1x96xf32> to vector<1x1x96xf32>
    tpu.vector_store %arg34[%c0_238, %c0_239, %c0_240], %355 {strides = array<i32>} : memref<1x1x96xf32, #tpu.memory_space<vmem>>, vector<1x1x96xf32>,
    %356 = vector.extract_strided_slice %233 {offsets = [0, 0], sizes = [100, 1], strides = [1, 1]} : vector<100x8xf32> to vector<100x1xf32>
    %c0_241 = arith.constant 0 : index
    %c0_242 = arith.constant 0 : index
    %c0_243 = arith.constant 0 : index
    %357 = vector.load %arg28[%c0_241, %c0_242, %c0_243] : memref<8x100x32xf32, #tpu.memory_space<vmem>>, vector<1x100x32xf32>
    %358 = vector.shape_cast %357 : vector<1x100x32xf32> to vector<100x32xf32>
    %359 = vector.broadcast %356 : vector<100x1xf32> to vector<100x32xf32>
    %360 = arith.mulf %359, %358 : vector<100x32xf32>
    %361 = vector.extract_strided_slice %233 {offsets = [0, 1], sizes = [100, 1], strides = [1, 1]} : vector<100x8xf32> to vector<100x1xf32>
    %c1 = arith.constant 1 : index
    %c0_244 = arith.constant 0 : index
    %c0_245 = arith.constant 0 : index
    %362 = vector.load %arg28[%c1, %c0_244, %c0_245] : memref<8x100x32xf32, #tpu.memory_space<vmem>>, vector<1x100x32xf32>
    %363 = vector.shape_cast %362 : vector<1x100x32xf32> to vector<100x32xf32>
    %364 = vector.broadcast %361 : vector<100x1xf32> to vector<100x32xf32>
    %365 = arith.mulf %364, %363 : vector<100x32xf32>
    %366 = arith.addf %360, %365 : vector<100x32xf32>
    %367 = vector.extract_strided_slice %233 {offsets = [0, 2], sizes = [100, 1], strides = [1, 1]} : vector<100x8xf32> to vector<100x1xf32>
    %c2 = arith.constant 2 : index
    %c0_246 = arith.constant 0 : index
    %c0_247 = arith.constant 0 : index
    %368 = vector.load %arg28[%c2, %c0_246, %c0_247] : memref<8x100x32xf32, #tpu.memory_space<vmem>>, vector<1x100x32xf32>
    %369 = vector.shape_cast %368 : vector<1x100x32xf32> to vector<100x32xf32>
    %370 = vector.broadcast %367 : vector<100x1xf32> to vector<100x32xf32>
    %371 = arith.mulf %370, %369 : vector<100x32xf32>
    %372 = arith.addf %366, %371 : vector<100x32xf32>
    %373 = vector.extract_strided_slice %233 {offsets = [0, 3], sizes = [100, 1], strides = [1, 1]} : vector<100x8xf32> to vector<100x1xf32>
    %c3 = arith.constant 3 : index
    %c0_248 = arith.constant 0 : index
    %c0_249 = arith.constant 0 : index
    %374 = vector.load %arg28[%c3, %c0_248, %c0_249] : memref<8x100x32xf32, #tpu.memory_space<vmem>>, vector<1x100x32xf32>
    %375 = vector.shape_cast %374 : vector<1x100x32xf32> to vector<100x32xf32>
    %376 = vector.broadcast %373 : vector<100x1xf32> to vector<100x32xf32>
    %377 = arith.mulf %376, %375 : vector<100x32xf32>
    %378 = arith.addf %372, %377 : vector<100x32xf32>
    %379 = vector.extract_strided_slice %233 {offsets = [0, 4], sizes = [100, 1], strides = [1, 1]} : vector<100x8xf32> to vector<100x1xf32>
    %c4 = arith.constant 4 : index
    %c0_250 = arith.constant 0 : index
    %c0_251 = arith.constant 0 : index
    %380 = vector.load %arg28[%c4, %c0_250, %c0_251] : memref<8x100x32xf32, #tpu.memory_space<vmem>>, vector<1x100x32xf32>
    %381 = vector.shape_cast %380 : vector<1x100x32xf32> to vector<100x32xf32>
    %382 = vector.broadcast %379 : vector<100x1xf32> to vector<100x32xf32>
    %383 = arith.mulf %382, %381 : vector<100x32xf32>
    %384 = arith.addf %378, %383 : vector<100x32xf32>
    %385 = vector.extract_strided_slice %233 {offsets = [0, 5], sizes = [100, 1], strides = [1, 1]} : vector<100x8xf32> to vector<100x1xf32>
    %c5_252 = arith.constant 5 : index
    %c0_253 = arith.constant 0 : index
    %c0_254 = arith.constant 0 : index
    %386 = vector.load %arg28[%c5_252, %c0_253, %c0_254] : memref<8x100x32xf32, #tpu.memory_space<vmem>>, vector<1x100x32xf32>
    %387 = vector.shape_cast %386 : vector<1x100x32xf32> to vector<100x32xf32>
    %388 = vector.broadcast %385 : vector<100x1xf32> to vector<100x32xf32>
    %389 = arith.mulf %388, %387 : vector<100x32xf32>
    %390 = arith.addf %384, %389 : vector<100x32xf32>
    %391 = vector.extract_strided_slice %233 {offsets = [0, 6], sizes = [100, 1], strides = [1, 1]} : vector<100x8xf32> to vector<100x1xf32>
    %c6_255 = arith.constant 6 : index
    %c0_256 = arith.constant 0 : index
    %c0_257 = arith.constant 0 : index
    %392 = vector.load %arg28[%c6_255, %c0_256, %c0_257] : memref<8x100x32xf32, #tpu.memory_space<vmem>>, vector<1x100x32xf32>
    %393 = vector.shape_cast %392 : vector<1x100x32xf32> to vector<100x32xf32>
    %394 = vector.broadcast %391 : vector<100x1xf32> to vector<100x32xf32>
    %395 = arith.mulf %394, %393 : vector<100x32xf32>
    %396 = arith.addf %390, %395 : vector<100x32xf32>
    %397 = vector.extract_strided_slice %233 {offsets = [0, 7], sizes = [100, 1], strides = [1, 1]} : vector<100x8xf32> to vector<100x1xf32>
    %c7_258 = arith.constant 7 : index
    %c0_259 = arith.constant 0 : index
    %c0_260 = arith.constant 0 : index
    %398 = vector.load %arg28[%c7_258, %c0_259, %c0_260] : memref<8x100x32xf32, #tpu.memory_space<vmem>>, vector<1x100x32xf32>
    %399 = vector.shape_cast %398 : vector<1x100x32xf32> to vector<100x32xf32>
    %400 = vector.broadcast %397 : vector<100x1xf32> to vector<100x32xf32>
    %401 = arith.mulf %400, %399 : vector<100x32xf32>
    %402 = arith.addf %396, %401 : vector<100x32xf32>
    %cst_261 = arith.constant dense<0.000000e+00> : vector<32xf32>
    %403 = vector.multi_reduction <add>, %402, %cst_261 [0] : vector<100x32xf32> to vector<32xf32>
    %404 = vector.shape_cast %403 : vector<32xf32> to vector<1x32xf32>
    %405 = arith.truncf %351 : vector<1x16xf32> to vector<1x16xbf16>
    %c0_262 = arith.constant 0 : index
    %c0_263 = arith.constant 0 : index
    %406 = vector.load %arg29[%c0_262, %c0_263] : memref<16x32xf32, #tpu.memory_space<vmem>>, vector<16x32xf32>
    %407 = arith.truncf %406 : vector<16x32xf32> to vector<16x32xbf16>
    %cst_264 = arith.constant dense<0.000000e+00> : vector<1x32xf32>
    %408 = tpu.matmul %405, %407, %cst_264 {dimension_numbers = #tpu.dot_dimension_numbers<[1], [0], [0], [1], [0, 0, 1, 1], [], []>} : vector<1x16xbf16>, vector<16x32xbf16>, vector<1x32xf32> -> vector<1x32xf32>
    %409 = arith.addf %404, %408 : vector<1x32xf32>
    %c0_265 = arith.constant 0 : index
    %c0_266 = arith.constant 0 : index
    %410 = vector.load %arg30[%c0_265, %c0_266] : memref<1x32xf32, #tpu.memory_space<vmem>>, vector<1x32xf32>
    %411 = arith.addf %409, %410 : vector<1x32xf32>
    %cst_267 = arith.constant 0.000000e+00 : f32
    %412 = vector.broadcast %cst_267 : f32 to vector<1x32xf32>
    %413 = arith.maximumf %411, %412 : vector<1x32xf32>
    %414 = arith.truncf %413 : vector<1x32xf32> to vector<1x32xbf16>
    %c0_268 = arith.constant 0 : index
    %c0_269 = arith.constant 0 : index
    %415 = vector.load %arg31[%c0_268, %c0_269] : memref<32x4xf32, #tpu.memory_space<vmem>>, vector<32x4xf32>
    %416 = arith.truncf %415 : vector<32x4xf32> to vector<32x4xbf16>
    %cst_270 = arith.constant dense<0.000000e+00> : vector<1x4xf32>
    %417 = tpu.matmul %414, %416, %cst_270 {dimension_numbers = #tpu.dot_dimension_numbers<[1], [0], [0], [1], [0, 0, 1, 1], [], []>} : vector<1x32xbf16>, vector<32x4xbf16>, vector<1x4xf32> -> vector<1x4xf32>
    %c0_271 = arith.constant 0 : index
    %c0_272 = arith.constant 0 : index
    %418 = vector.load %arg32[%c0_271, %c0_272] : memref<1x4xf32, #tpu.memory_space<vmem>>, vector<1x4xf32>
    %419 = arith.addf %417, %418 : vector<1x4xf32>
    %c0_273 = arith.constant 0 : index
    %c0_274 = arith.constant 0 : index
    %c0_275 = arith.constant 0 : index
    %420 = vector.load %arg35[%c0_273, %c0_274, %c0_275] : memref<1x1x4xf32, #tpu.memory_space<vmem>>, vector<1x1x4xf32>
    %421 = vector.shape_cast %420 : vector<1x1x4xf32> to vector<1x4xf32>
    %422 = vector.shape_cast %419 : vector<1x4xf32> to vector<1x1x4xf32>
    tpu.vector_store %arg35[%c0_273, %c0_274, %c0_275], %422 {strides = array<i32>} : memref<1x1x4xf32, #tpu.memory_space<vmem>>, vector<1x1x4xf32>,
    return
  }
  func.func @transform_0(%arg0: i32) -> (i32, i32, i32) {
    %c0_i32 = arith.constant 0 : i32
    %c0_i32_0 = arith.constant 0 : i32
    %c0_i32_1 = arith.constant 0 : i32
    return %arg0, %c0_i32, %c0_i32_0 : i32, i32, i32
  }
  func.func @transform_1(%arg0: i32) -> (i32, i32, i32) {
    %c0_i32 = arith.constant 0 : i32
    %c0_i32_0 = arith.constant 0 : i32
    %c0_i32_1 = arith.constant 0 : i32
    return %arg0, %c0_i32, %c0_i32_0 : i32, i32, i32
  }
  func.func @transform_2(%arg0: i32) -> (i32, i32, i32) {
    %c0_i32 = arith.constant 0 : i32
    %c0_i32_0 = arith.constant 0 : i32
    %c0_i32_1 = arith.constant 0 : i32
    return %arg0, %c0_i32, %c0_i32_0 : i32, i32, i32
  }
  func.func @transform_3(%arg0: i32) -> (i32, i32, i32) {
    %c0_i32 = arith.constant 0 : i32
    %c0_i32_0 = arith.constant 0 : i32
    %c0_i32_1 = arith.constant 0 : i32
    return %arg0, %c0_i32, %c0_i32_0 : i32, i32, i32
  }
  func.func @transform_4(%arg0: i32) -> (i32, i32, i32) {
    %c0_i32 = arith.constant 0 : i32
    %c0_i32_0 = arith.constant 0 : i32
    %c0_i32_1 = arith.constant 0 : i32
    return %arg0, %c0_i32, %c0_i32_0 : i32, i32, i32
  }
  func.func @transform_5(%arg0: i32) -> (i32, i32, i32) {
    %c0_i32 = arith.constant 0 : i32
    %c0_i32_0 = arith.constant 0 : i32
    %c0_i32_1 = arith.constant 0 : i32
    return %arg0, %c0_i32, %c0_i32_0 : i32, i32, i32
  }
  func.func @transform_6(%arg0: i32) -> (i32, i32, i32) {
    %c0_i32 = arith.constant 0 : i32
    %c0_i32_0 = arith.constant 0 : i32
    %c0_i32_1 = arith.constant 0 : i32
    return %arg0, %c0_i32, %c0_i32_0 : i32, i32, i32
  }
  func.func @transform_7(%arg0: i32) -> (i32, i32) {
    %c0_i32 = arith.constant 0 : i32
    %c0_i32_0 = arith.constant 0 : i32
    %c0_i32_1 = arith.constant 0 : i32
    return %c0_i32, %c0_i32_0 : i32, i32
  }
  func.func @transform_8(%arg0: i32) -> (i32, i32) {
    %c0_i32 = arith.constant 0 : i32
    %c0_i32_0 = arith.constant 0 : i32
    %c0_i32_1 = arith.constant 0 : i32
    return %c0_i32, %c0_i32_0 : i32, i32
  }
  func.func @transform_9(%arg0: i32) -> (i32, i32) {
    %c0_i32 = arith.constant 0 : i32
    %c0_i32_0 = arith.constant 0 : i32
    %c0_i32_1 = arith.constant 0 : i32
    return %c0_i32, %c0_i32_0 : i32, i32
  }
  func.func @transform_10(%arg0: i32) -> (i32, i32) {
    %c0_i32 = arith.constant 0 : i32
    %c0_i32_0 = arith.constant 0 : i32
    %c0_i32_1 = arith.constant 0 : i32
    return %c0_i32, %c0_i32_0 : i32, i32
  }
  func.func @transform_11(%arg0: i32) -> (i32, i32) {
    %c0_i32 = arith.constant 0 : i32
    %c0_i32_0 = arith.constant 0 : i32
    %c0_i32_1 = arith.constant 0 : i32
    return %c0_i32, %c0_i32_0 : i32, i32
  }
  func.func @transform_12(%arg0: i32) -> (i32, i32) {
    %c0_i32 = arith.constant 0 : i32
    %c0_i32_0 = arith.constant 0 : i32
    %c0_i32_1 = arith.constant 0 : i32
    return %c0_i32, %c0_i32_0 : i32, i32
  }
  func.func @transform_13(%arg0: i32) -> (i32, i32) {
    %c0_i32 = arith.constant 0 : i32
    %c0_i32_0 = arith.constant 0 : i32
    %c0_i32_1 = arith.constant 0 : i32
    return %c0_i32, %c0_i32_0 : i32, i32
  }
  func.func @transform_14(%arg0: i32) -> (i32, i32, i32) {
    %c0_i32 = arith.constant 0 : i32
    %c0_i32_0 = arith.constant 0 : i32
    %c0_i32_1 = arith.constant 0 : i32
    return %arg0, %c0_i32, %c0_i32_0 : i32, i32, i32
  }
  func.func @transform_15(%arg0: i32) -> (i32, i32, i32) {
    %c0_i32 = arith.constant 0 : i32
    %c0_i32_0 = arith.constant 0 : i32
    %c0_i32_1 = arith.constant 0 : i32
    return %arg0, %c0_i32, %c0_i32_0 : i32, i32, i32
  }
  func.func @transform_16(%arg0: i32) -> (i32, i32, i32) {
    %c0_i32 = arith.constant 0 : i32
    %c0_i32_0 = arith.constant 0 : i32
    %c0_i32_1 = arith.constant 0 : i32
    return %arg0, %c0_i32, %c0_i32_0 : i32, i32, i32
  }
  func.func @transform_17(%arg0: i32) -> (i32, i32, i32) {
    %c0_i32 = arith.constant 0 : i32
    %c0_i32_0 = arith.constant 0 : i32
    %c0_i32_1 = arith.constant 0 : i32
    return %arg0, %c0_i32, %c0_i32_0 : i32, i32, i32
  }
  func.func @transform_18(%arg0: i32) -> (i32, i32, i32) {
    %c0_i32 = arith.constant 0 : i32
    %c0_i32_0 = arith.constant 0 : i32
    %c0_i32_1 = arith.constant 0 : i32
    return %arg0, %c0_i32, %c0_i32_0 : i32, i32, i32
  }
  func.func @transform_19(%arg0: i32) -> (i32, i32, i32) {
    %c0_i32 = arith.constant 0 : i32
    %c0_i32_0 = arith.constant 0 : i32
    %c0_i32_1 = arith.constant 0 : i32
    return %arg0, %c0_i32, %c0_i32_0 : i32, i32, i32
  }
  func.func @transform_20(%arg0: i32) -> (i32, i32, i32) {
    %c0_i32 = arith.constant 0 : i32
    %c0_i32_0 = arith.constant 0 : i32
    %c0_i32_1 = arith.constant 0 : i32
    return %arg0, %c0_i32, %c0_i32_0 : i32, i32, i32
  }
  func.func @transform_21(%arg0: i32) -> (i32, i32) {
    %c0_i32 = arith.constant 0 : i32
    %c0_i32_0 = arith.constant 0 : i32
    %c0_i32_1 = arith.constant 0 : i32
    return %c0_i32, %c0_i32_0 : i32, i32
  }
  func.func @transform_22(%arg0: i32) -> (i32, i32) {
    %c0_i32 = arith.constant 0 : i32
    %c0_i32_0 = arith.constant 0 : i32
    %c0_i32_1 = arith.constant 0 : i32
    return %c0_i32, %c0_i32_0 : i32, i32
  }
  func.func @transform_23(%arg0: i32) -> (i32, i32) {
    %c0_i32 = arith.constant 0 : i32
    %c0_i32_0 = arith.constant 0 : i32
    %c0_i32_1 = arith.constant 0 : i32
    return %c0_i32, %c0_i32_0 : i32, i32
  }
  func.func @transform_24(%arg0: i32) -> (i32, i32) {
    %c0_i32 = arith.constant 0 : i32
    %c0_i32_0 = arith.constant 0 : i32
    %c0_i32_1 = arith.constant 0 : i32
    return %c0_i32, %c0_i32_0 : i32, i32
  }
  func.func @transform_25(%arg0: i32) -> (i32, i32) {
    %c0_i32 = arith.constant 0 : i32
    %c0_i32_0 = arith.constant 0 : i32
    %c0_i32_1 = arith.constant 0 : i32
    return %c0_i32, %c0_i32_0 : i32, i32
  }
  func.func @transform_26(%arg0: i32) -> (i32, i32) {
    %c0_i32 = arith.constant 0 : i32
    %c0_i32_0 = arith.constant 0 : i32
    %c0_i32_1 = arith.constant 0 : i32
    return %c0_i32, %c0_i32_0 : i32, i32
  }
  func.func @transform_27(%arg0: i32) -> (i32, i32, i32) {
    %c0_i32 = arith.constant 0 : i32
    %c0_i32_0 = arith.constant 0 : i32
    %c0_i32_1 = arith.constant 0 : i32
    %c0_i32_2 = arith.constant 0 : i32
    return %c0_i32, %c0_i32_0, %c0_i32_1 : i32, i32, i32
  }
  func.func @transform_28(%arg0: i32) -> (i32, i32) {
    %c0_i32 = arith.constant 0 : i32
    %c0_i32_0 = arith.constant 0 : i32
    %c0_i32_1 = arith.constant 0 : i32
    return %c0_i32, %c0_i32_0 : i32, i32
  }
  func.func @transform_29(%arg0: i32) -> (i32, i32) {
    %c0_i32 = arith.constant 0 : i32
    %c0_i32_0 = arith.constant 0 : i32
    %c0_i32_1 = arith.constant 0 : i32
    return %c0_i32, %c0_i32_0 : i32, i32
  }
  func.func @transform_30(%arg0: i32) -> (i32, i32) {
    %c0_i32 = arith.constant 0 : i32
    %c0_i32_0 = arith.constant 0 : i32
    %c0_i32_1 = arith.constant 0 : i32
    return %c0_i32, %c0_i32_0 : i32, i32
  }
  func.func @transform_31(%arg0: i32) -> (i32, i32) {
    %c0_i32 = arith.constant 0 : i32
    %c0_i32_0 = arith.constant 0 : i32
    %c0_i32_1 = arith.constant 0 : i32
    return %c0_i32, %c0_i32_0 : i32, i32
  }
  func.func @transform_32(%arg0: i32) -> (i32, i32, i32) {
    %c0_i32 = arith.constant 0 : i32
    %c0_i32_0 = arith.constant 0 : i32
    %c0_i32_1 = arith.constant 0 : i32
    return %arg0, %c0_i32, %c0_i32_0 : i32, i32, i32
  }
  func.func @transform_33(%arg0: i32) -> (i32, i32, i32) {
    %c0_i32 = arith.constant 0 : i32
    %c0_i32_0 = arith.constant 0 : i32
    %c0_i32_1 = arith.constant 0 : i32
    return %arg0, %c0_i32, %c0_i32_0 : i32, i32, i32
  }
  func.func @transform_34(%arg0: i32) -> (i32, i32, i32) {
    %c0_i32 = arith.constant 0 : i32
    %c0_i32_0 = arith.constant 0 : i32
    %c0_i32_1 = arith.constant 0 : i32
    return %arg0, %c0_i32, %c0_i32_0 : i32, i32, i32
  }
}

</mosaic_0001>

<llo_original>
// kernel: forward.1
$region0: #{forward.1}
  #allocation0 [shape = 'u32[]', space=smem, size = 0x4, offset = 0x4, fixed_abs, tag = 'smem constant byte address 0x4 - core index']
  #allocation1 [shape = 'u32[144,128]{1,0:T(1,128)}', space=vmem, size = 0x12000, scoped, tag = 'internal scratch']
  #allocation2 [shape = 'f32[128,8]{1,0:T(8,128)}', space=vmem, size = 0x10000, scoped, tag = 'scratch operand']
  #allocation3 [shape = 'f32[128,8]{1,0:T(8,128)}', space=vmem, size = 0x10000, scoped, tag = 'scratch operand']
  %s0 = inlined_call_operand.smem [shape: u32[35], index: -1, kind: input, shape index: {}]
  %s1 = sld [smem:[%s0]]
  %s2 = scalar_lea.smem %s0, 1
  %s3 = sld [smem:[%s2]]
  %s4 = scalar_lea.smem %s0, 2
  %s5 = sld [smem:[%s4]]
  %s6 = scalar_lea.smem %s0, 3
  %s7 = sld [smem:[%s6]]
  %s8 = scalar_lea.smem %s0, 4
  %s9 = sld [smem:[%s8]]
  %s10 = scalar_lea.smem %s0, 5
  %s11 = sld [smem:[%s10]]
  %s12 = scalar_lea.smem %s0, 6
  %s13 = sld [smem:[%s12]]
  %s14 = scalar_lea.smem %s0, 7
  %s15 = sld [smem:[%s14]]
  %s16 = scalar_lea.smem %s0, 8
  %s17 = sld [smem:[%s16]]
  %s18 = scalar_lea.smem %s0, 9
  %s19 = sld [smem:[%s18]]
  %s20 = scalar_lea.smem %s0, 10
  %s21 = sld [smem:[%s20]]
  %s22 = scalar_lea.smem %s0, 11
  %s23 = sld [smem:[%s22]]
  %s24 = scalar_lea.smem %s0, 12
  %s25 = sld [smem:[%s24]]
  %s26 = scalar_lea.smem %s0, 13
  %s27 = sld [smem:[%s26]]
  %s28 = scalar_lea.smem %s0, 14
  %s29 = sld [smem:[%s28]]
  %s30 = scalar_lea.smem %s0, 15
  %s31 = sld [smem:[%s30]]
  %s32 = scalar_lea.smem %s0, 16
  %s33 = sld [smem:[%s32]]
  %s34 = scalar_lea.smem %s0, 17
  %s35 = sld [smem:[%s34]]
  %s36 = scalar_lea.smem %s0, 18
  %s37 = sld [smem:[%s36]]
  %s38 = scalar_lea.smem %s0, 19
  %s39 = sld [smem:[%s38]]
  %s40 = scalar_lea.smem %s0, 20
  %s41 = sld [smem:[%s40]]
  %s42 = scalar_lea.smem %s0, 21
  %s43 = sld [smem:[%s42]]
  %s44 = scalar_lea.smem %s0, 22
  %s45 = sld [smem:[%s44]]
  %s46 = scalar_lea.smem %s0, 23
  %s47 = sld [smem:[%s46]]
  %s48 = scalar_lea.smem %s0, 24
  %s49 = sld [smem:[%s48]]
  %s50 = scalar_lea.smem %s0, 25
  %s51 = sld [smem:[%s50]]
  %s52 = scalar_lea.smem %s0, 26
  %s53 = sld [smem:[%s52]]
  %s54 = scalar_lea.smem %s0, 27
  %s55 = sld [smem:[%s54]]
  %s56 = scalar_lea.smem %s0, 28
  %s57 = sld [smem:[%s56]]
  %s58 = scalar_lea.smem %s0, 29
  %s59 = sld [smem:[%s58]]
  %s60 = scalar_lea.smem %s0, 30
  %s61 = sld [smem:[%s60]]
  %s62 = scalar_lea.smem %s0, 31
  %s63 = sld [smem:[%s62]]
  %s64 = scalar_lea.smem %s0, 32
  %s65 = sld [smem:[%s64]]
  %s66 = scalar_lea.smem %s0, 33
  %s67 = sld [smem:[%s66]]
  %s68 = scalar_lea.smem %s0, 34
  %s69 = sld [smem:[%s68]]
  %70 = xla_tuple %s65, %s67, %s69
  %s71 = sld [smem:[#allocation0]]
  $region177: #{forward.1} parent=0
    _
  %s73 = ssub.s32 1, %s71
  %s74 = scalar_select 0, %s73, %s71
  $region1: #{forward.1} parent=0
    #allocation4 [shape = 'u8[1024]{0}', space=vmem, size = 0x400, scoped, tag = 'output window, operand 2']
    #allocation5 [shape = 's32[2]{0}', space=sflag, size = 0x8, scoped, tag = 'scoped memory for forward.1']
    %75 = vsyncpa [#allocation5], 0
    %s76 = scalar_lea.sflag [#allocation5], 1
    %77 = vsyncpa %s76, 0
    loop: start=0, step=1, limit=4
    $region2: #{forward.1} parent=1 // loop_pre_header
      _
    $region3: #{forward.1} parent=1 // loop_header
      %s79 = sphi 0, %s83
      %p80 = scmp.ge.s32.totalorder %s79, 4
      %s89 = sphi 0, %s91
      %s92 = sphi 0, %s89
      %s93 = sphi 0, %s92
      %s109 = sphi 0, %s93
      %s115 = sphi 0, %s117
      %s118 = sphi 0, %s115
      %s119 = sphi 0, %s118
      %s135 = sphi 0, %s119
      %s141 = sphi 0, %s143
      %s144 = sphi 0, %s141
      %s145 = sphi 0, %s144
      %s161 = sphi 0, %s145
      %s167 = sphi 0, %s169
      %s170 = sphi 0, %s167
      %s171 = sphi 0, %s170
      %s187 = sphi 0, %s171
      %s193 = sphi 0, %s195
      %s196 = sphi 0, %s193
      %s197 = sphi 0, %s196
      %s213 = sphi 0, %s197
      %s219 = sphi 0, %s221
      %s222 = sphi 0, %s219
      %s223 = sphi 0, %s222
      %s239 = sphi 0, %s223
      %s245 = sphi 0, %s247
      %s248 = sphi 0, %s245
      %s249 = sphi 0, %s248
      %s265 = sphi 0, %s249
      %s269 = sphi 0, %s269
      %s271 = sphi 0, %s269
      %s272 = sphi 0, %s271
      %s286 = sphi 0, %s272
      %s290 = sphi 0, %s290
      %s292 = sphi 0, %s290
      %s293 = sphi 0, %s292
      %s307 = sphi 0, %s293
      %s311 = sphi 0, %s311
      %s313 = sphi 0, %s311
      %s314 = sphi 0, %s313
      %s328 = sphi 0, %s314
      %s332 = sphi 0, %s332
      %s334 = sphi 0, %s332
      %s335 = sphi 0, %s334
      %s349 = sphi 0, %s335
      %s353 = sphi 0, %s353
      %s355 = sphi 0, %s353
      %s356 = sphi 0, %s355
      %s370 = sphi 0, %s356
      %s374 = sphi 0, %s374
      %s376 = sphi 0, %s374
      %s377 = sphi 0, %s376
      %s391 = sphi 0, %s377
      %s395 = sphi 0, %s395
      %s397 = sphi 0, %s395
      %s398 = sphi 0, %s397
      %s412 = sphi 0, %s398
      %s418 = sphi 0, %s420
      %s421 = sphi 0, %s418
      %s422 = sphi 0, %s421
      %s438 = sphi 0, %s422
      %s444 = sphi 0, %s446
      %s447 = sphi 0, %s444
      %s448 = sphi 0, %s447
      %s464 = sphi 0, %s448
      %s470 = sphi 0, %s472
      %s473 = sphi 0, %s470
      %s474 = sphi 0, %s473
      %s490 = sphi 0, %s474
      %s496 = sphi 0, %s498
      %s499 = sphi 0, %s496
      %s500 = sphi 0, %s499
      %s516 = sphi 0, %s500
      %s522 = sphi 0, %s524
      %s525 = sphi 0, %s522
      %s526 = sphi 0, %s525
      %s542 = sphi 0, %s526
      %s548 = sphi 0, %s550
      %s551 = sphi 0, %s548
      %s552 = sphi 0, %s551
      %s568 = sphi 0, %s552
      %s574 = sphi 0, %s576
      %s577 = sphi 0, %s574
      %s578 = sphi 0, %s577
      %s594 = sphi 0, %s578
      %s598 = sphi 0, %s598
      %s600 = sphi 0, %s598
      %s601 = sphi 0, %s600
      %s615 = sphi 0, %s601
      %s619 = sphi 0, %s619
      %s621 = sphi 0, %s619
      %s622 = sphi 0, %s621
      %s636 = sphi 0, %s622
      %s640 = sphi 0, %s640
      %s642 = sphi 0, %s640
      %s643 = sphi 0, %s642
      %s657 = sphi 0, %s643
      %s661 = sphi 0, %s661
      %s663 = sphi 0, %s661
      %s664 = sphi 0, %s663
      %s678 = sphi 0, %s664
      %s682 = sphi 0, %s682
      %s684 = sphi 0, %s682
      %s685 = sphi 0, %s684
      %s699 = sphi 0, %s685
      %s703 = sphi 0, %s703
      %s705 = sphi 0, %s703
      %s706 = sphi 0, %s705
      %s720 = sphi 0, %s706
      %s724 = sphi 0, %s724
      %s726 = sphi 0, %s724
      %s727 = sphi 0, %s726
      %s741 = sphi 0, %s727
      %s745 = sphi 0, %s745
      %s747 = sphi 0, %s745
      %s748 = sphi 0, %s747
      %s762 = sphi 0, %s748
      %s766 = sphi 0, %s766
      %s768 = sphi 0, %s766
      %s769 = sphi 0, %s768
      %s783 = sphi 0, %s769
      %s787 = sphi 0, %s787
      %s789 = sphi 0, %s787
      %s790 = sphi 0, %s789
      %s804 = sphi 0, %s790
      %s808 = sphi 0, %s808
      %s810 = sphi 0, %s808
      %s811 = sphi 0, %s810
      %s825 = sphi 0, %s811
      %s831 = sphi 0, %s833
      %s834 = sphi 0, %s831
      %s835 = sphi 0, %s834
      %s851 = sphi 0, %s835
      %s857 = sphi 0, %s859
      %s860 = sphi 0, %s857
      %s861 = sphi 0, %s860
      %s877 = sphi 0, %s861
      %s883 = sphi 0, %s885
      %s886 = sphi 0, %s883
      %s887 = sphi 0, %s886
      %s903 = sphi 0, %s887
    $region4: #{forward.1} parent=1 // loop_header_branch
      %82 = sbr.rel (%p80) target = $region8
    $region5: #{forward.1} parent=1 // loop_body
      %s84 = ssub.s32 %s79, 1
      %s85 = ssub.s32 %s79, 2
      %s86 = sadd.s32 %s79, 1
      %s87 = ssub.s32 %s79, %s86
      %p88 = scmp.eq.s32.totalorder %s87, 0
      %s90 = sadd.s32 %s89, 1
      %s91 = scalar_select %p88, %s89, %s90
      %p94 = pneg %p88
      %p95 = scmp.eq.s32.totalorder %s79, 1
      %p96 = por %p94, %p95
      %p97 = scmp.ne.s32.totalorder %s89, %s92
      %p98 = scmp.eq.s32.totalorder %s79, 0
      %p99 = por %p97, %p98
      %p100 = scmp.ne.s32.totalorder %s89, %s92
      %p101 = scmp.eq.s32.totalorder %s84, 1
      %p102 = por %p100, %p101
      %p103 = scmp.ne.s32.totalorder %s92, %s93
      %p104 = scmp.eq.s32.totalorder %s84, 0
      %p105 = por %p103, %p104
      %p106 = scmp.ne.s32.totalorder %s92, %s93
      %p107 = scmp.eq.s32.totalorder %s85, 1
      %p108 = por %p106, %p107
      %p110 = scmp.ne.s32.totalorder %s93, %s109
      %p111 = scmp.eq.s32.totalorder %s85, 0
      %p112 = por %p110, %p111
      %s113 = ssub.s32 %s79, %s86
      %p114 = scmp.eq.s32.totalorder %s113, 0
      %s116 = sadd.s32 %s115, 1
      %s117 = scalar_select %p114, %s115, %s116
      %p120 = pneg %p114
      %p121 = scmp.eq.s32.totalorder %s79, 1
      %p122 = por %p120, %p121
      %p123 = scmp.ne.s32.totalorder %s115, %s118
      %p124 = scmp.eq.s32.totalorder %s79, 0
      %p125 = por %p123, %p124
      %p126 = scmp.ne.s32.totalorder %s115, %s118
      %p127 = scmp.eq.s32.totalorder %s84, 1
      %p128 = por %p126, %p127
      %p129 = scmp.ne.s32.totalorder %s118, %s119
      %p130 = scmp.eq.s32.totalorder %s84, 0
      %p131 = por %p129, %p130
      %p132 = scmp.ne.s32.totalorder %s118, %s119
      %p133 = scmp.eq.s32.totalorder %s85, 1
      %p134 = por %p132, %p133
      %p136 = scmp.ne.s32.totalorder %s119, %s135
      %p137 = scmp.eq.s32.totalorder %s85, 0
      %p138 = por %p136, %p137
      %s139 = ssub.s32 %s79, %s86
      %p140 = scmp.eq.s32.totalorder %s139, 0
      %s142 = sadd.s32 %s141, 1
      %s143 = scalar_select %p140, %s141, %s142
      %p146 = pneg %p140
      %p147 = scmp.eq.s32.totalorder %s79, 1
      %p148 = por %p146, %p147
      %p149 = scmp.ne.s32.totalorder %s141, %s144
      %p150 = scmp.eq.s32.totalorder %s79, 0
      %p151 = por %p149, %p150
      %p152 = scmp.ne.s32.totalorder %s141, %s144
      %p153 = scmp.eq.s32.totalorder %s84, 1
      %p154 = por %p152, %p153
      %p155 = scmp.ne.s32.totalorder %s144, %s145
      %p156 = scmp.eq.s32.totalorder %s84, 0
      %p157 = por %p155, %p156
      %p158 = scmp.ne.s32.totalorder %s144, %s145
      %p159 = scmp.eq.s32.totalorder %s85, 1
      %p160 = por %p158, %p159
      %p162 = scmp.ne.s32.totalorder %s145, %s161
      %p163 = scmp.eq.s32.totalorder %s85, 0
      %p164 = por %p162, %p163
      %s165 = ssub.s32 %s79, %s86
      %p166 = scmp.eq.s32.totalorder %s165, 0
      %s168 = sadd.s32 %s167, 1
      %s169 = scalar_select %p166, %s167, %s168
      %p172 = pneg %p166
      %p173 = scmp.eq.s32.totalorder %s79, 1
      %p174 = por %p172, %p173
      %p175 = scmp.ne.s32.totalorder %s167, %s170
      %p176 = scmp.eq.s32.totalorder %s79, 0
      %p177 = por %p175, %p176
      %p178 = scmp.ne.s32.totalorder %s167, %s170
      %p179 = scmp.eq.s32.totalorder %s84, 1
      %p180 = por %p178, %p179
      %p181 = scmp.ne.s32.totalorder %s170, %s171
      %p182 = scmp.eq.s32.totalorder %s84, 0
      %p183 = por %p181, %p182
      %p184 = scmp.ne.s32.totalorder %s170, %s171
      %p185 = scmp.eq.s32.totalorder %s85, 1
      %p186 = por %p184, %p185
      %p188 = scmp.ne.s32.totalorder %s171, %s187
      %p189 = scmp.eq.s32.totalorder %s85, 0
      %p190 = por %p188, %p189
      %s191 = ssub.s32 %s79, %s86
      %p192 = scmp.eq.s32.totalorder %s191, 0
      %s194 = sadd.s32 %s193, 1
      %s195 = scalar_select %p192, %s193, %s194
      %p198 = pneg %p192
      %p199 = scmp.eq.s32.totalorder %s79, 1
      %p200 = por %p198, %p199
      %p201 = scmp.ne.s32.totalorder %s193, %s196
      %p202 = scmp.eq.s32.totalorder %s79, 0
      %p203 = por %p201, %p202
      %p204 = scmp.ne.s32.totalorder %s193, %s196
      %p205 = scmp.eq.s32.totalorder %s84, 1
      %p206 = por %p204, %p205
      %p207 = scmp.ne.s32.totalorder %s196, %s197
      %p208 = scmp.eq.s32.totalorder %s84, 0
      %p209 = por %p207, %p208
      %p210 = scmp.ne.s32.totalorder %s196, %s197
      %p211 = scmp.eq.s32.totalorder %s85, 1
      %p212 = por %p210, %p211
      %p214 = scmp.ne.s32.totalorder %s197, %s213
      %p215 = scmp.eq.s32.totalorder %s85, 0
      %p216 = por %p214, %p215
      %s217 = ssub.s32 %s79, %s86
      %p218 = scmp.eq.s32.totalorder %s217, 0
      %s220 = sadd.s32 %s219, 1
      %s221 = scalar_select %p218, %s219, %s220
      %p224 = pneg %p218
      %p225 = scmp.eq.s32.totalorder %s79, 1
      %p226 = por %p224, %p225
      %p227 = scmp.ne.s32.totalorder %s219, %s222
      %p228 = scmp.eq.s32.totalorder %s79, 0
      %p229 = por %p227, %p228
      %p230 = scmp.ne.s32.totalorder %s219, %s222
      %p231 = scmp.eq.s32.totalorder %s84, 1
      %p232 = por %p230, %p231
      %p233 = scmp.ne.s32.totalorder %s222, %s223
      %p234 = scmp.eq.s32.totalorder %s84, 0
      %p235 = por %p233, %p234
      %p236 = scmp.ne.s32.totalorder %s222, %s223
      %p237 = scmp.eq.s32.totalorder %s85, 1
      %p238 = por %p236, %p237
      %p240 = scmp.ne.s32.totalorder %s223, %s239
      %p241 = scmp.eq.s32.totalorder %s85, 0
      %p242 = por %p240, %p241
      %s243 = ssub.s32 %s79, %s86
      %p244 = scmp.eq.s32.totalorder %s243, 0
      %s246 = sadd.s32 %s245, 1
      %s247 = scalar_select %p244, %s245, %s246
      %p250 = pneg %p244
      %p251 = scmp.eq.s32.totalorder %s79, 1
      %p252 = por %p250, %p251
      %p253 = scmp.ne.s32.totalorder %s245, %s248
      %p254 = scmp.eq.s32.totalorder %s79, 0
      %p255 = por %p253, %p254
      %p256 = scmp.ne.s32.totalorder %s245, %s248
      %p257 = scmp.eq.s32.totalorder %s84, 1
      %p258 = por %p256, %p257
      %p259 = scmp.ne.s32.totalorder %s248, %s249
      %p260 = scmp.eq.s32.totalorder %s84, 0
      %p261 = por %p259, %p260
      %p262 = scmp.ne.s32.totalorder %s248, %s249
      %p263 = scmp.eq.s32.totalorder %s85, 1
      %p264 = por %p262, %p263
      %p266 = scmp.ne.s32.totalorder %s249, %s265
      %p267 = scmp.eq.s32.totalorder %s85, 0
      %p268 = por %p266, %p267
      %s270 = sadd.s32 %s269, 1
      %p273 = scmp.eq.s32.totalorder %s79, 1
      %p274 = scmp.ne.s32.totalorder %s269, %s271
      %p275 = scmp.eq.s32.totalorder %s79, 0
      %p276 = por %p274, %p275
      %p277 = scmp.ne.s32.totalorder %s269, %s271
      %p278 = scmp.eq.s32.totalorder %s84, 1
      %p279 = por %p277, %p278
      %p280 = scmp.ne.s32.totalorder %s271, %s272
      %p281 = scmp.eq.s32.totalorder %s84, 0
      %p282 = por %p280, %p281
      %p283 = scmp.ne.s32.totalorder %s271, %s272
      %p284 = scmp.eq.s32.totalorder %s85, 1
      %p285 = por %p283, %p284
      %p287 = scmp.ne.s32.totalorder %s272, %s286
      %p288 = scmp.eq.s32.totalorder %s85, 0
      %p289 = por %p287, %p288
      %s291 = sadd.s32 %s290, 1
      %p294 = scmp.eq.s32.totalorder %s79, 1
      %p295 = scmp.ne.s32.totalorder %s290, %s292
      %p296 = scmp.eq.s32.totalorder %s79, 0
      %p297 = por %p295, %p296
      %p298 = scmp.ne.s32.totalorder %s290, %s292
      %p299 = scmp.eq.s32.totalorder %s84, 1
      %p300 = por %p298, %p299
      %p301 = scmp.ne.s32.totalorder %s292, %s293
      %p302 = scmp.eq.s32.totalorder %s84, 0
      %p303 = por %p301, %p302
      %p304 = scmp.ne.s32.totalorder %s292, %s293
      %p305 = scmp.eq.s32.totalorder %s85, 1
      %p306 = por %p304, %p305
      %p308 = scmp.ne.s32.totalorder %s293, %s307
      %p309 = scmp.eq.s32.totalorder %s85, 0
      %p310 = por %p308, %p309
      %s312 = sadd.s32 %s311, 1
      %p315 = scmp.eq.s32.totalorder %s79, 1
      %p316 = scmp.ne.s32.totalorder %s311, %s313
      %p317 = scmp.eq.s32.totalorder %s79, 0
      %p318 = por %p316, %p317
      %p319 = scmp.ne.s32.totalorder %s311, %s313
      %p320 = scmp.eq.s32.totalorder %s84, 1
      %p321 = por %p319, %p320
      %p322 = scmp.ne.s32.totalorder %s313, %s314
      %p323 = scmp.eq.s32.totalorder %s84, 0
      %p324 = por %p322, %p323
      %p325 = scmp.ne.s32.totalorder %s313, %s314
      %p326 = scmp.eq.s32.totalorder %s85, 1
      %p327 = por %p325, %p326
      %p329 = scmp.ne.s32.totalorder %s314, %s328
      %p330 = scmp.eq.s32.totalorder %s85, 0
      %p331 = por %p329, %p330
      %s333 = sadd.s32 %s332, 1
      %p336 = scmp.eq.s32.totalorder %s79, 1
      %p337 = scmp.ne.s32.totalorder %s332, %s334
      %p338 = scmp.eq.s32.totalorder %s79, 0
      %p339 = por %p337, %p338
      %p340 = scmp.ne.s32.totalorder %s332, %s334
      %p341 = scmp.eq.s32.totalorder %s84, 1
      %p342 = por %p340, %p341
      %p343 = scmp.ne.s32.totalorder %s334, %s335
      %p344 = scmp.eq.s32.totalorder %s84, 0
      %p345 = por %p343, %p344
      %p346 = scmp.ne.s32.totalorder %s334, %s335
      %p347 = scmp.eq.s32.totalorder %s85, 1
      %p348 = por %p346, %p347
      %p350 = scmp.ne.s32.totalorder %s335, %s349
      %p351 = scmp.eq.s32.totalorder %s85, 0
      %p352 = por %p350, %p351
      %s354 = sadd.s32 %s353, 1
      %p357 = scmp.eq.s32.totalorder %s79, 1
      %p358 = scmp.ne.s32.totalorder %s353, %s355
      %p359 = scmp.eq.s32.totalorder %s79, 0
      %p360 = por %p358, %p359
      %p361 = scmp.ne.s32.totalorder %s353, %s355
      %p362 = scmp.eq.s32.totalorder %s84, 1
      %p363 = por %p361, %p362
      %p364 = scmp.ne.s32.totalorder %s355, %s356
      %p365 = scmp.eq.s32.totalorder %s84, 0
      %p366 = por %p364, %p365
      %p367 = scmp.ne.s32.totalorder %s355, %s356
      %p368 = scmp.eq.s32.totalorder %s85, 1
      %p369 = por %p367, %p368
      %p371 = scmp.ne.s32.totalorder %s356, %s370
      %p372 = scmp.eq.s32.totalorder %s85, 0
      %p373 = por %p371, %p372
      %s375 = sadd.s32 %s374, 1
      %p378 = scmp.eq.s32.totalorder %s79, 1
      %p379 = scmp.ne.s32.totalorder %s374, %s376
      %p380 = scmp.eq.s32.totalorder %s79, 0
      %p381 = por %p379, %p380
      %p382 = scmp.ne.s32.totalorder %s374, %s376
      %p383 = scmp.eq.s32.totalorder %s84, 1
      %p384 = por %p382, %p383
      %p385 = scmp.ne.s32.totalorder %s376, %s377
      %p386 = scmp.eq.s32.totalorder %s84, 0
      %p387 = por %p385, %p386
      %p388 = scmp.ne.s32.totalorder %s376, %s377
      %p389 = scmp.eq.s32.totalorder %s85, 1
      %p390 = por %p388, %p389
      %p392 = scmp.ne.s32.totalorder %s377, %s391
      %p393 = scmp.eq.s32.totalorder %s85, 0
      %p394 = por %p392, %p393
      %s396 = sadd.s32 %s395, 1
      %p399 = scmp.eq.s32.totalorder %s79, 1
      %p400 = scmp.ne.s32.totalorder %s395, %s397
      %p401 = scmp.eq.s32.totalorder %s79, 0
      %p402 = por %p400, %p401
      %p403 = scmp.ne.s32.totalorder %s395, %s397
      %p404 = scmp.eq.s32.totalorder %s84, 1
      %p405 = por %p403, %p404
      %p406 = scmp.ne.s32.totalorder %s397, %s398
      %p407 = scmp.eq.s32.totalorder %s84, 0
      %p408 = por %p406, %p407
      %p409 = scmp.ne.s32.totalorder %s397, %s398
      %p410 = scmp.eq.s32.totalorder %s85, 1
      %p411 = por %p409, %p410
      %p413 = scmp.ne.s32.totalorder %s398, %s412
      %p414 = scmp.eq.s32.totalorder %s85, 0
      %p415 = por %p413, %p414
      %s416 = ssub.s32 %s79, %s86
      %p417 = scmp.eq.s32.totalorder %s416, 0
      %s419 = sadd.s32 %s418, 1
      %s420 = scalar_select %p417, %s418, %s419
      %p423 = pneg %p417
      %p424 = scmp.eq.s32.totalorder %s79, 1
      %p425 = por %p423, %p424
      %p426 = scmp.ne.s32.totalorder %s418, %s421
      %p427 = scmp.eq.s32.totalorder %s79, 0
      %p428 = por %p426, %p427
      %p429 = scmp.ne.s32.totalorder %s418, %s421
      %p430 = scmp.eq.s32.totalorder %s84, 1
      %p431 = por %p429, %p430
      %p432 = scmp.ne.s32.totalorder %s421, %s422
      %p433 = scmp.eq.s32.totalorder %s84, 0
      %p434 = por %p432, %p433
      %p435 = scmp.ne.s32.totalorder %s421, %s422
      %p436 = scmp.eq.s32.totalorder %s85, 1
      %p437 = por %p435, %p436
      %p439 = scmp.ne.s32.totalorder %s422, %s438
      %p440 = scmp.eq.s32.totalorder %s85, 0
      %p441 = por %p439, %p440
      %s442 = ssub.s32 %s79, %s86
      %p443 = scmp.eq.s32.totalorder %s442, 0
      %s445 = sadd.s32 %s444, 1
      %s446 = scalar_select %p443, %s444, %s445
      %p449 = pneg %p443
      %p450 = scmp.eq.s32.totalorder %s79, 1
      %p451 = por %p449, %p450
      %p452 = scmp.ne.s32.totalorder %s444, %s447
      %p453 = scmp.eq.s32.totalorder %s79, 0
      %p454 = por %p452, %p453
      %p455 = scmp.ne.s32.totalorder %s444, %s447
      %p456 = scmp.eq.s32.totalorder %s84, 1
      %p457 = por %p455, %p456
      %p458 = scmp.ne.s32.totalorder %s447, %s448
      %p459 = scmp.eq.s32.totalorder %s84, 0
      %p460 = por %p458, %p459
      %p461 = scmp.ne.s32.totalorder %s447, %s448
      %p462 = scmp.eq.s32.totalorder %s85, 1
      %p463 = por %p461, %p462
      %p465 = scmp.ne.s32.totalorder %s448, %s464
      %p466 = scmp.eq.s32.totalorder %s85, 0
      %p467 = por %p465, %p466
      %s468 = ssub.s32 %s79, %s86
      %p469 = scmp.eq.s32.totalorder %s468, 0
      %s471 = sadd.s32 %s470, 1
      %s472 = scalar_select %p469, %s470, %s471
      %p475 = pneg %p469
      %p476 = scmp.eq.s32.totalorder %s79, 1
      %p477 = por %p475, %p476
      %p478 = scmp.ne.s32.totalorder %s470, %s473
      %p479 = scmp.eq.s32.totalorder %s79, 0
      %p480 = por %p478, %p479
      %p481 = scmp.ne.s32.totalorder %s470, %s473
      %p482 = scmp.eq.s32.totalorder %s84, 1
      %p483 = por %p481, %p482
      %p484 = scmp.ne.s32.totalorder %s473, %s474
      %p485 = scmp.eq.s32.totalorder %s84, 0
      %p486 = por %p484, %p485
      %p487 = scmp.ne.s32.totalorder %s473, %s474
      %p488 = scmp.eq.s32.totalorder %s85, 1
      %p489 = por %p487, %p488
      %p491 = scmp.ne.s32.totalorder %s474, %s490
      %p492 = scmp.eq.s32.totalorder %s85, 0
      %p493 = por %p491, %p492
      %s494 = ssub.s32 %s79, %s86
      %p495 = scmp.eq.s32.totalorder %s494, 0
      %s497 = sadd.s32 %s496, 1
      %s498 = scalar_select %p495, %s496, %s497
      %p501 = pneg %p495
      %p502 = scmp.eq.s32.totalorder %s79, 1
      %p503 = por %p501, %p502
      %p504 = scmp.ne.s32.totalorder %s496, %s499
      %p505 = scmp.eq.s32.totalorder %s79, 0
      %p506 = por %p504, %p505
      %p507 = scmp.ne.s32.totalorder %s496, %s499
      %p508 = scmp.eq.s32.totalorder %s84, 1
      %p509 = por %p507, %p508
      %p510 = scmp.ne.s32.totalorder %s499, %s500
      %p511 = scmp.eq.s32.totalorder %s84, 0
      %p512 = por %p510, %p511
      %p513 = scmp.ne.s32.totalorder %s499, %s500
      %p514 = scmp.eq.s32.totalorder %s85, 1
      %p515 = por %p513, %p514
      %p517 = scmp.ne.s32.totalorder %s500, %s516
      %p518 = scmp.eq.s32.totalorder %s85, 0
      %p519 = por %p517, %p518
      %s520 = ssub.s32 %s79, %s86
      %p521 = scmp.eq.s32.totalorder %s520, 0
      %s523 = sadd.s32 %s522, 1
      %s524 = scalar_select %p521, %s522, %s523
      %p527 = pneg %p521
      %p528 = scmp.eq.s32.totalorder %s79, 1
      %p529 = por %p527, %p528
      %p530 = scmp.ne.s32.totalorder %s522, %s525
      %p531 = scmp.eq.s32.totalorder %s79, 0
      %p532 = por %p530, %p531
      %p533 = scmp.ne.s32.totalorder %s522, %s525
      %p534 = scmp.eq.s32.totalorder %s84, 1
      %p535 = por %p533, %p534
      %p536 = scmp.ne.s32.totalorder %s525, %s526
      %p537 = scmp.eq.s32.totalorder %s84, 0
      %p538 = por %p536, %p537
      %p539 = scmp.ne.s32.totalorder %s525, %s526
      %p540 = scmp.eq.s32.totalorder %s85, 1
      %p541 = por %p539, %p540
      %p543 = scmp.ne.s32.totalorder %s526, %s542
      %p544 = scmp.eq.s32.totalorder %s85, 0
      %p545 = por %p543, %p544
      %s546 = ssub.s32 %s79, %s86
      %p547 = scmp.eq.s32.totalorder %s546, 0
      %s549 = sadd.s32 %s548, 1
      %s550 = scalar_select %p547, %s548, %s549
      %p553 = pneg %p547
      %p554 = scmp.eq.s32.totalorder %s79, 1
      %p555 = por %p553, %p554
      %p556 = scmp.ne.s32.totalorder %s548, %s551
      %p557 = scmp.eq.s32.totalorder %s79, 0
      %p558 = por %p556, %p557
      %p559 = scmp.ne.s32.totalorder %s548, %s551
      %p560 = scmp.eq.s32.totalorder %s84, 1
      %p561 = por %p559, %p560
      %p562 = scmp.ne.s32.totalorder %s551, %s552
      %p563 = scmp.eq.s32.totalorder %s84, 0
      %p564 = por %p562, %p563
      %p565 = scmp.ne.s32.totalorder %s551, %s552
      %p566 = scmp.eq.s32.totalorder %s85, 1
      %p567 = por %p565, %p566
      %p569 = scmp.ne.s32.totalorder %s552, %s568
      %p570 = scmp.eq.s32.totalorder %s85, 0
      %p571 = por %p569, %p570
      %s572 = ssub.s32 %s79, %s86
      %p573 = scmp.eq.s32.totalorder %s572, 0
      %s575 = sadd.s32 %s574, 1
      %s576 = scalar_select %p573, %s574, %s575
      %p579 = pneg %p573
      %p580 = scmp.eq.s32.totalorder %s79, 1
      %p581 = por %p579, %p580
      %p582 = scmp.ne.s32.totalorder %s574, %s577
      %p583 = scmp.eq.s32.totalorder %s79, 0
      %p584 = por %p582, %p583
      %p585 = scmp.ne.s32.totalorder %s574, %s577
      %p586 = scmp.eq.s32.totalorder %s84, 1
      %p587 = por %p585, %p586
      %p588 = scmp.ne.s32.totalorder %s577, %s578
      %p589 = scmp.eq.s32.totalorder %s84, 0
      %p590 = por %p588, %p589
      %p591 = scmp.ne.s32.totalorder %s577, %s578
      %p592 = scmp.eq.s32.totalorder %s85, 1
      %p593 = por %p591, %p592
      %p595 = scmp.ne.s32.totalorder %s578, %s594
      %p596 = scmp.eq.s32.totalorder %s85, 0
      %p597 = por %p595, %p596
      %s599 = sadd.s32 %s598, 1
      %p602 = scmp.eq.s32.totalorder %s79, 1
      %p603 = scmp.ne.s32.totalorder %s598, %s600
      %p604 = scmp.eq.s32.totalorder %s79, 0
      %p605 = por %p603, %p604
      %p606 = scmp.ne.s32.totalorder %s598, %s600
      %p607 = scmp.eq.s32.totalorder %s84, 1
      %p608 = por %p606, %p607
      %p609 = scmp.ne.s32.totalorder %s600, %s601
      %p610 = scmp.eq.s32.totalorder %s84, 0
      %p611 = por %p609, %p610
      %p612 = scmp.ne.s32.totalorder %s600, %s601
      %p613 = scmp.eq.s32.totalorder %s85, 1
      %p614 = por %p612, %p613
      %p616 = scmp.ne.s32.totalorder %s601, %s615
      %p617 = scmp.eq.s32.totalorder %s85, 0
      %p618 = por %p616, %p617
      %s620 = sadd.s32 %s619, 1
      %p623 = scmp.eq.s32.totalorder %s79, 1
      %p624 = scmp.ne.s32.totalorder %s619, %s621
      %p625 = scmp.eq.s32.totalorder %s79, 0
      %p626 = por %p624, %p625
      %p627 = scmp.ne.s32.totalorder %s619, %s621
      %p628 = scmp.eq.s32.totalorder %s84, 1
      %p629 = por %p627, %p628
      %p630 = scmp.ne.s32.totalorder %s621, %s622
      %p631 = scmp.eq.s32.totalorder %s84, 0
      %p632 = por %p630, %p631
      %p633 = scmp.ne.s32.totalorder %s621, %s622
      %p634 = scmp.eq.s32.totalorder %s85, 1
      %p635 = por %p633, %p634
      %p637 = scmp.ne.s32.totalorder %s622, %s636
      %p638 = scmp.eq.s32.totalorder %s85, 0
      %p639 = por %p637, %p638
      %s641 = sadd.s32 %s640, 1
      %p644 = scmp.eq.s32.totalorder %s79, 1
      %p645 = scmp.ne.s32.totalorder %s640, %s642
      %p646 = scmp.eq.s32.totalorder %s79, 0
      %p647 = por %p645, %p646
      %p648 = scmp.ne.s32.totalorder %s640, %s642
      %p649 = scmp.eq.s32.totalorder %s84, 1
      %p650 = por %p648, %p649
      %p651 = scmp.ne.s32.totalorder %s642, %s643
      %p652 = scmp.eq.s32.totalorder %s84, 0
      %p653 = por %p651, %p652
      %p654 = scmp.ne.s32.totalorder %s642, %s643
      %p655 = scmp.eq.s32.totalorder %s85, 1
      %p656 = por %p654, %p655
      %p658 = scmp.ne.s32.totalorder %s643, %s657
      %p659 = scmp.eq.s32.totalorder %s85, 0
      %p660 = por %p658, %p659
      %s662 = sadd.s32 %s661, 1
      %p665 = scmp.eq.s32.totalorder %s79, 1
      %p666 = scmp.ne.s32.totalorder %s661, %s663
      %p667 = scmp.eq.s32.totalorder %s79, 0
      %p668 = por %p666, %p667
      %p669 = scmp.ne.s32.totalorder %s661, %s663
      %p670 = scmp.eq.s32.totalorder %s84, 1
      %p671 = por %p669, %p670
      %p672 = scmp.ne.s32.totalorder %s663, %s664
      %p673 = scmp.eq.s32.totalorder %s84, 0
      %p674 = por %p672, %p673
      %p675 = scmp.ne.s32.totalorder %s663, %s664
      %p676 = scmp.eq.s32.totalorder %s85, 1
      %p677 = por %p675, %p676
      %p679 = scmp.ne.s32.totalorder %s664, %s678
      %p680 = scmp.eq.s32.totalorder %s85, 0
      %p681 = por %p679, %p680
      %s683 = sadd.s32 %s682, 1
      %p686 = scmp.eq.s32.totalorder %s79, 1
      %p687 = scmp.ne.s32.totalorder %s682, %s684
      %p688 = scmp.eq.s32.totalorder %s79, 0
      %p689 = por %p687, %p688
      %p690 = scmp.ne.s32.totalorder %s682, %s684
      %p691 = scmp.eq.s32.totalorder %s84, 1
      %p692 = por %p690, %p691
      %p693 = scmp.ne.s32.totalorder %s684, %s685
      %p694 = scmp.eq.s32.totalorder %s84, 0
      %p695 = por %p693, %p694
      %p696 = scmp.ne.s32.totalorder %s684, %s685
      %p697 = scmp.eq.s32.totalorder %s85, 1
      %p698 = por %p696, %p697
      %p700 = scmp.ne.s32.totalorder %s685, %s699
      %p701 = scmp.eq.s32.totalorder %s85, 0
      %p702 = por %p700, %p701
      %s704 = sadd.s32 %s703, 1
      %p707 = scmp.eq.s32.totalorder %s79, 1
      %p708 = scmp.ne.s32.totalorder %s703, %s705
      %p709 = scmp.eq.s32.totalorder %s79, 0
      %p710 = por %p708, %p709
      %p711 = scmp.ne.s32.totalorder %s703, %s705
      %p712 = scmp.eq.s32.totalorder %s84, 1
      %p713 = por %p711, %p712
      %p714 = scmp.ne.s32.totalorder %s705, %s706
      %p715 = scmp.eq.s32.totalorder %s84, 0
      %p716 = por %p714, %p715
      %p717 = scmp.ne.s32.totalorder %s705, %s706
      %p718 = scmp.eq.s32.totalorder %s85, 1
      %p719 = por %p717, %p718
      %p721 = scmp.ne.s32.totalorder %s706, %s720
      %p722 = scmp.eq.s32.totalorder %s85, 0
      %p723 = por %p721, %p722
      %s725 = sadd.s32 %s724, 1
      %p728 = scmp.eq.s32.totalorder %s79, 1
      %p729 = scmp.ne.s32.totalorder %s724, %s726
      %p730 = scmp.eq.s32.totalorder %s79, 0
      %p731 = por %p729, %p730
      %p732 = scmp.ne.s32.totalorder %s724, %s726
      %p733 = scmp.eq.s32.totalorder %s84, 1
      %p734 = por %p732, %p733
      %p735 = scmp.ne.s32.totalorder %s726, %s727
      %p736 = scmp.eq.s32.totalorder %s84, 0
      %p737 = por %p735, %p736
      %p738 = scmp.ne.s32.totalorder %s726, %s727
      %p739 = scmp.eq.s32.totalorder %s85, 1
      %p740 = por %p738, %p739
      %p742 = scmp.ne.s32.totalorder %s727, %s741
      %p743 = scmp.eq.s32.totalorder %s85, 0
      %p744 = por %p742, %p743
      %s746 = sadd.s32 %s745, 1
      %p749 = scmp.eq.s32.totalorder %s79, 1
      %p750 = scmp.ne.s32.totalorder %s745, %s747
      %p751 = scmp.eq.s32.totalorder %s79, 0
      %p752 = por %p750, %p751
      %p753 = scmp.ne.s32.totalorder %s745, %s747
      %p754 = scmp.eq.s32.totalorder %s84, 1
      %p755 = por %p753, %p754
      %p756 = scmp.ne.s32.totalorder %s747, %s748
      %p757 = scmp.eq.s32.totalorder %s84, 0
      %p758 = por %p756, %p757
      %p759 = scmp.ne.s32.totalorder %s747, %s748
      %p760 = scmp.eq.s32.totalorder %s85, 1
      %p761 = por %p759, %p760
      %p763 = scmp.ne.s32.totalorder %s748, %s762
      %p764 = scmp.eq.s32.totalorder %s85, 0
      %p765 = por %p763, %p764
      %s767 = sadd.s32 %s766, 1
      %p770 = scmp.eq.s32.totalorder %s79, 1
      %p771 = scmp.ne.s32.totalorder %s766, %s768
      %p772 = scmp.eq.s32.totalorder %s79, 0
      %p773 = por %p771, %p772
      %p774 = scmp.ne.s32.totalorder %s766, %s768
      %p775 = scmp.eq.s32.totalorder %s84, 1
      %p776 = por %p774, %p775
      %p777 = scmp.ne.s32.totalorder %s768, %s769
      %p778 = scmp.eq.s32.totalorder %s84, 0
      %p779 = por %p777, %p778
      %p780 = scmp.ne.s32.totalorder %s768, %s769
      %p781 = scmp.eq.s32.totalorder %s85, 1
      %p782 = por %p780, %p781
      %p784 = scmp.ne.s32.totalorder %s769, %s783
      %p785 = scmp.eq.s32.totalorder %s85, 0
      %p786 = por %p784, %p785
      %s788 = sadd.s32 %s787, 1
      %p791 = scmp.eq.s32.totalorder %s79, 1
      %p792 = scmp.ne.s32.totalorder %s787, %s789
      %p793 = scmp.eq.s32.totalorder %s79, 0
      %p794 = por %p792, %p793
      %p795 = scmp.ne.s32.totalorder %s787, %s789
      %p796 = scmp.eq.s32.totalorder %s84, 1
      %p797 = por %p795, %p796
      %p798 = scmp.ne.s32.totalorder %s789, %s790
      %p799 = scmp.eq.s32.totalorder %s84, 0
      %p800 = por %p798, %p799
      %p801 = scmp.ne.s32.totalorder %s789, %s790
      %p802 = scmp.eq.s32.totalorder %s85, 1
      %p803 = por %p801, %p802
      %p805 = scmp.ne.s32.totalorder %s790, %s804
      %p806 = scmp.eq.s32.totalorder %s85, 0
      %p807 = por %p805, %p806
      %s809 = sadd.s32 %s808, 1
      %p812 = scmp.eq.s32.totalorder %s79, 1
      %p813 = scmp.ne.s32.totalorder %s808, %s810
      %p814 = scmp.eq.s32.totalorder %s79, 0
      %p815 = por %p813, %p814
      %p816 = scmp.ne.s32.totalorder %s808, %s810
      %p817 = scmp.eq.s32.totalorder %s84, 1
      %p818 = por %p816, %p817
      %p819 = scmp.ne.s32.totalorder %s810, %s811
      %p820 = scmp.eq.s32.totalorder %s84, 0
      %p821 = por %p819, %p820
      %p822 = scmp.ne.s32.totalorder %s810, %s811
      %p823 = scmp.eq.s32.totalorder %s85, 1
      %p824 = por %p822, %p823
      %p826 = scmp.ne.s32.totalorder %s811, %s825
      %p827 = scmp.eq.s32.totalorder %s85, 0
      %p828 = por %p826, %p827
      %s829 = ssub.s32 %s79, %s86
      %p830 = scmp.eq.s32.totalorder %s829, 0
      %s832 = sadd.s32 %s831, 1
      %s833 = scalar_select %p830, %s831, %s832
      %p836 = pneg %p830
      %p837 = scmp.eq.s32.totalorder %s79, 1
      %p838 = por %p836, %p837
      %p839 = scmp.ne.s32.totalorder %s831, %s834
      %p840 = scmp.eq.s32.totalorder %s79, 0
      %p841 = por %p839, %p840
      %p842 = scmp.ne.s32.totalorder %s831, %s834
      %p843 = scmp.eq.s32.totalorder %s84, 1
      %p844 = por %p842, %p843
      %p845 = scmp.ne.s32.totalorder %s834, %s835
      %p846 = scmp.eq.s32.totalorder %s84, 0
      %p847 = por %p845, %p846
      %p848 = scmp.ne.s32.totalorder %s834, %s835
      %p849 = scmp.eq.s32.totalorder %s85, 1
      %p850 = por %p848, %p849
      %p852 = scmp.ne.s32.totalorder %s835, %s851
      %p853 = scmp.eq.s32.totalorder %s85, 0
      %p854 = por %p852, %p853
      %s855 = ssub.s32 %s79, %s86
      %p856 = scmp.eq.s32.totalorder %s855, 0
      %s858 = sadd.s32 %s857, 1
      %s859 = scalar_select %p856, %s857, %s858
      %p862 = pneg %p856
      %p863 = scmp.eq.s32.totalorder %s79, 1
      %p864 = por %p862, %p863
      %p865 = scmp.ne.s32.totalorder %s857, %s860
      %p866 = scmp.eq.s32.totalorder %s79, 0
      %p867 = por %p865, %p866
      %p868 = scmp.ne.s32.totalorder %s857, %s860
      %p869 = scmp.eq.s32.totalorder %s84, 1
      %p870 = por %p868, %p869
      %p871 = scmp.ne.s32.totalorder %s860, %s861
      %p872 = scmp.eq.s32.totalorder %s84, 0
      %p873 = por %p871, %p872
      %p874 = scmp.ne.s32.totalorder %s860, %s861
      %p875 = scmp.eq.s32.totalorder %s85, 1
      %p876 = por %p874, %p875
      %p878 = scmp.ne.s32.totalorder %s861, %s877
      %p879 = scmp.eq.s32.totalorder %s85, 0
      %p880 = por %p878, %p879
      %s881 = ssub.s32 %s79, %s86
      %p882 = scmp.eq.s32.totalorder %s881, 0
      %s884 = sadd.s32 %s883, 1
      %s885 = scalar_select %p882, %s883, %s884
      %p888 = pneg %p882
      %p889 = scmp.eq.s32.totalorder %s79, 1
      %p890 = por %p888, %p889
      %p891 = scmp.ne.s32.totalorder %s883, %s886
      %p892 = scmp.eq.s32.totalorder %s79, 0
      %p893 = por %p891, %p892
      %p894 = scmp.ne.s32.totalorder %s883, %s886
      %p895 = scmp.eq.s32.totalorder %s84, 1
      %p896 = por %p894, %p895
      %p897 = scmp.ne.s32.totalorder %s886, %s887
      %p898 = scmp.eq.s32.totalorder %s84, 0
      %p899 = por %p897, %p898
      %p900 = scmp.ne.s32.totalorder %s886, %s887
      %p901 = scmp.eq.s32.totalorder %s85, 1
      %p902 = por %p900, %p901
      %p904 = scmp.ne.s32.totalorder %s887, %s903
      %p905 = scmp.eq.s32.totalorder %s85, 0
      %p906 = por %p904, %p905
      %p907 = scmp.le.s32.totalorder 1, %s79
      %p908 = scmp.lt.s32.totalorder %s79, 3
      %p909 = pnand %p907, %p908
      %p910 = pneg %p909
      // Predicated region
      $region9: #{forward.1} parent=5 // pred_check
        _
      $region10: #{forward.1} parent=5 // pred_check_branch
        %912 = sbr.rel (%p909) target = $region12
      $region11: #{forward.1} parent=5 // pred_region
        %s913 = ssub.s32 %s79, 1
        // Predicated region
        $region13: #{forward.1} parent=11 // pred_check
          %p914 = pneg %p282
        $region14: #{forward.1} parent=11 // pred_check_branch
          %916 = sbr.rel (%p914) target = $region16
        $region15: #{forward.1} parent=11 // pred_region
          _
        $region16: #{forward.1} parent=11 // pred_fallthru
          _
        // Predicated region
        $region17: #{forward.1} parent=11 // pred_check
          %p917 = pneg %p303
        $region18: #{forward.1} parent=11 // pred_check_branch
          %919 = sbr.rel (%p917) target = $region20
        $region19: #{forward.1} parent=11 // pred_region
          _
        $region20: #{forward.1} parent=11 // pred_fallthru
          _
        // Predicated region
        $region21: #{forward.1} parent=11 // pred_check
          %p920 = pneg %p324
        $region22: #{forward.1} parent=11 // pred_check_branch
          %922 = sbr.rel (%p920) target = $region24
        $region23: #{forward.1} parent=11 // pred_region
          _
        $region24: #{forward.1} parent=11 // pred_fallthru
          _
        // Predicated region
        $region25: #{forward.1} parent=11 // pred_check
          %p923 = pneg %p345
        $region26: #{forward.1} parent=11 // pred_check_branch
          %925 = sbr.rel (%p923) target = $region28
        $region27: #{forward.1} parent=11 // pred_region
          _
        $region28: #{forward.1} parent=11 // pred_fallthru
          _
        // Predicated region
        $region29: #{forward.1} parent=11 // pred_check
          %p926 = pneg %p366
        $region30: #{forward.1} parent=11 // pred_check_branch
          %928 = sbr.rel (%p926) target = $region32
        $region31: #{forward.1} parent=11 // pred_region
          _
        $region32: #{forward.1} parent=11 // pred_fallthru
          _
        // Predicated region
        $region33: #{forward.1} parent=11 // pred_check
          %p929 = pneg %p387
        $region34: #{forward.1} parent=11 // pred_check_branch
          %931 = sbr.rel (%p929) target = $region36
        $region35: #{forward.1} parent=11 // pred_region
          _
        $region36: #{forward.1} parent=11 // pred_fallthru
          _
        // Predicated region
        $region37: #{forward.1} parent=11 // pred_check
          %p932 = pneg %p408
        $region38: #{forward.1} parent=11 // pred_check_branch
          %934 = sbr.rel (%p932) target = $region40
        $region39: #{forward.1} parent=11 // pred_region
          _
        $region40: #{forward.1} parent=11 // pred_fallthru
          _
        // Predicated region
        $region41: #{forward.1} parent=11 // pred_check
          %p935 = pneg %p611
        $region42: #{forward.1} parent=11 // pred_check_branch
          %937 = sbr.rel (%p935) target = $region44
        $region43: #{forward.1} parent=11 // pred_region
          _
        $region44: #{forward.1} parent=11 // pred_fallthru
          _
        // Predicated region
        $region45: #{forward.1} parent=11 // pred_check
          %p938 = pneg %p632
        $region46: #{forward.1} parent=11 // pred_check_branch
          %940 = sbr.rel (%p938) target = $region48
        $region47: #{forward.1} parent=11 // pred_region
          _
        $region48: #{forward.1} parent=11 // pred_fallthru
          _
        // Predicated region
        $region49: #{forward.1} parent=11 // pred_check
          %p941 = pneg %p653
        $region50: #{forward.1} parent=11 // pred_check_branch
          %943 = sbr.rel (%p941) target = $region52
        $region51: #{forward.1} parent=11 // pred_region
          _
        $region52: #{forward.1} parent=11 // pred_fallthru
          _
        // Predicated region
        $region53: #{forward.1} parent=11 // pred_check
          %p944 = pneg %p674
        $region54: #{forward.1} parent=11 // pred_check_branch
          %946 = sbr.rel (%p944) target = $region56
        $region55: #{forward.1} parent=11 // pred_region
          _
        $region56: #{forward.1} parent=11 // pred_fallthru
          _
        // Predicated region
        $region57: #{forward.1} parent=11 // pred_check
          %p947 = pneg %p695
        $region58: #{forward.1} parent=11 // pred_check_branch
          %949 = sbr.rel (%p947) target = $region60
        $region59: #{forward.1} parent=11 // pred_region
          _
        $region60: #{forward.1} parent=11 // pred_fallthru
          _
        // Predicated region
        $region61: #{forward.1} parent=11 // pred_check
          %p950 = pneg %p716
        $region62: #{forward.1} parent=11 // pred_check_branch
          %952 = sbr.rel (%p950) target = $region64
        $region63: #{forward.1} parent=11 // pred_region
          _
        $region64: #{forward.1} parent=11 // pred_fallthru
          _
        // Predicated region
        $region65: #{forward.1} parent=11 // pred_check
          %p953 = pneg %p737
        $region66: #{forward.1} parent=11 // pred_check_branch
          %955 = sbr.rel (%p953) target = $region68
        $region67: #{forward.1} parent=11 // pred_region
          _
        $region68: #{forward.1} parent=11 // pred_fallthru
          _
        // Predicated region
        $region69: #{forward.1} parent=11 // pred_check
          %p956 = pneg %p758
        $region70: #{forward.1} parent=11 // pred_check_branch
          %958 = sbr.rel (%p956) target = $region72
        $region71: #{forward.1} parent=11 // pred_region
          _
        $region72: #{forward.1} parent=11 // pred_fallthru
          _
        // Predicated region
        $region73: #{forward.1} parent=11 // pred_check
          %p959 = pneg %p779
        $region74: #{forward.1} parent=11 // pred_check_branch
          %961 = sbr.rel (%p959) target = $region76
        $region75: #{forward.1} parent=11 // pred_region
          _
        $region76: #{forward.1} parent=11 // pred_fallthru
          _
        // Predicated region
        $region77: #{forward.1} parent=11 // pred_check
          %p962 = pneg %p800
        $region78: #{forward.1} parent=11 // pred_check_branch
          %964 = sbr.rel (%p962) target = $region80
        $region79: #{forward.1} parent=11 // pred_region
          _
        $region80: #{forward.1} parent=11 // pred_fallthru
          _
        // Predicated region
        $region81: #{forward.1} parent=11 // pred_check
          %p965 = pneg %p821
        $region82: #{forward.1} parent=11 // pred_check_branch
          %967 = sbr.rel (%p965) target = $region84
        $region83: #{forward.1} parent=11 // pred_region
          _
        $region84: #{forward.1} parent=11 // pred_fallthru
          _
      $region12: #{forward.1} parent=5 // pred_fallthru
        _
      %p968 = scmp.lt.s32.totalorder %s79, 2
      // Predicated region
      $region85: #{forward.1} parent=5 // pred_check
        %p969 = pneg %p968
      $region86: #{forward.1} parent=5 // pred_check_branch
        %971 = sbr.rel (%p969) target = $region88
      $region87: #{forward.1} parent=5 // pred_region
        // Predicated region
        $region89: #{forward.1} parent=87 // pred_check
          %p972 = pneg %p99
        $region90: #{forward.1} parent=87 // pred_check_branch
          %974 = sbr.rel (%p972) target = $region92
        $region91: #{forward.1} parent=87 // pred_region
          %p975 = scmp.lt.s32.totalorder %s79, 1
          %s976 = scalar_select %p975, %s79, 1
          %s977 = smul.addr %s976, 16
          %s978 = smul.addr %s977, 8
          %s979 = scalar_lea.vmem %s1, %s978
        $region92: #{forward.1} parent=87 // pred_fallthru
          _
        // Predicated region
        $region93: #{forward.1} parent=87 // pred_check
          %p980 = pneg %p125
        $region94: #{forward.1} parent=87 // pred_check_branch
          %982 = sbr.rel (%p980) target = $region96
        $region95: #{forward.1} parent=87 // pred_region
          %p983 = scmp.lt.s32.totalorder %s79, 1
          %s984 = scalar_select %p983, %s79, 1
          %s985 = smul.addr %s984, 16
          %s986 = smul.addr %s985, 8
          %s987 = scalar_lea.vmem %s3, %s986
        $region96: #{forward.1} parent=87 // pred_fallthru
          _
        // Predicated region
        $region97: #{forward.1} parent=87 // pred_check
          %p988 = pneg %p151
        $region98: #{forward.1} parent=87 // pred_check_branch
          %990 = sbr.rel (%p988) target = $region100
        $region99: #{forward.1} parent=87 // pred_region
          %p991 = scmp.lt.s32.totalorder %s79, 1
          %s992 = scalar_select %p991, %s79, 1
          %s993 = smul.addr %s992, 13
          %s994 = smul.addr %s993, 8
          %s995 = scalar_lea.vmem %s5, %s994
        $region100: #{forward.1} parent=87 // pred_fallthru
          _
        // Predicated region
        $region101: #{forward.1} parent=87 // pred_check
          %p996 = pneg %p177
        $region102: #{forward.1} parent=87 // pred_check_branch
          %998 = sbr.rel (%p996) target = $region104
        $region103: #{forward.1} parent=87 // pred_region
          %p999 = scmp.lt.s32.totalorder %s79, 1
          %s1000 = scalar_select %p999, %s79, 1
          %s1001 = smul.addr %s1000, 16
          %s1002 = smul.addr %s1001, 8
          %s1003 = scalar_lea.vmem %s7, %s1002
        $region104: #{forward.1} parent=87 // pred_fallthru
          _
        // Predicated region
        $region105: #{forward.1} parent=87 // pred_check
          %p1004 = pneg %p203
        $region106: #{forward.1} parent=87 // pred_check_branch
          %1006 = sbr.rel (%p1004) target = $region108
        $region107: #{forward.1} parent=87 // pred_region
          %p1007 = scmp.lt.s32.totalorder %s79, 1
          %s1008 = scalar_select %p1007, %s79, 1
          %s1009 = smul.addr %s1008, 13
          %s1010 = smul.addr %s1009, 8
          %s1011 = scalar_lea.vmem %s9, %s1010
        $region108: #{forward.1} parent=87 // pred_fallthru
          _
        // Predicated region
        $region109: #{forward.1} parent=87 // pred_check
          %p1012 = pneg %p229
        $region110: #{forward.1} parent=87 // pred_check_branch
          %1014 = sbr.rel (%p1012) target = $region112
        $region111: #{forward.1} parent=87 // pred_region
          %p1015 = scmp.lt.s32.totalorder %s79, 1
          %s1016 = scalar_select %p1015, %s79, 1
          %s1017 = smul.addr %s1016, 16
          %s1018 = smul.addr %s1017, 8
          %s1019 = scalar_lea.vmem %s11, %s1018
        $region112: #{forward.1} parent=87 // pred_fallthru
          _
        // Predicated region
        $region113: #{forward.1} parent=87 // pred_check
          %p1020 = pneg %p255
        $region114: #{forward.1} parent=87 // pred_check_branch
          %1022 = sbr.rel (%p1020) target = $region116
        $region115: #{forward.1} parent=87 // pred_region
          %p1023 = scmp.lt.s32.totalorder %s79, 1
          %s1024 = scalar_select %p1023, %s79, 1
          %s1025 = smul.addr %s1024, 13
          %s1026 = smul.addr %s1025, 8
          %s1027 = scalar_lea.vmem %s13, %s1026
        $region116: #{forward.1} parent=87 // pred_fallthru
          _
        // Predicated region
        $region117: #{forward.1} parent=87 // pred_check
          %p1028 = pneg %p428
        $region118: #{forward.1} parent=87 // pred_check_branch
          %1030 = sbr.rel (%p1028) target = $region120
        $region119: #{forward.1} parent=87 // pred_region
          %p1031 = scmp.lt.s32.totalorder %s79, 1
          %s1032 = scalar_select %p1031, %s79, 1
          %s1033 = scalar_lea.vmem %s29, %s1032
        $region120: #{forward.1} parent=87 // pred_fallthru
          _
        // Predicated region
        $region121: #{forward.1} parent=87 // pred_check
          %p1034 = pneg %p454
        $region122: #{forward.1} parent=87 // pred_check_branch
          %1036 = sbr.rel (%p1034) target = $region124
        $region123: #{forward.1} parent=87 // pred_region
          %p1037 = scmp.lt.s32.totalorder %s79, 1
          %s1038 = scalar_select %p1037, %s79, 1
          %s1039 = scalar_lea.vmem %s31, %s1038
        $region124: #{forward.1} parent=87 // pred_fallthru
          _
        // Predicated region
        $region125: #{forward.1} parent=87 // pred_check
          %p1040 = pneg %p480
        $region126: #{forward.1} parent=87 // pred_check_branch
          %1042 = sbr.rel (%p1040) target = $region128
        $region127: #{forward.1} parent=87 // pred_region
          %p1043 = scmp.lt.s32.totalorder %s79, 1
          %s1044 = scalar_select %p1043, %s79, 1
          %s1045 = scalar_lea.vmem %s33, %s1044
        $region128: #{forward.1} parent=87 // pred_fallthru
          _
        // Predicated region
        $region129: #{forward.1} parent=87 // pred_check
          %p1046 = pneg %p506
        $region130: #{forward.1} parent=87 // pred_check_branch
          %1048 = sbr.rel (%p1046) target = $region132
        $region131: #{forward.1} parent=87 // pred_region
          %p1049 = scmp.lt.s32.totalorder %s79, 1
          %s1050 = scalar_select %p1049, %s79, 1
          %s1051 = scalar_lea.vmem %s35, %s1050
        $region132: #{forward.1} parent=87 // pred_fallthru
          _
        // Predicated region
        $region133: #{forward.1} parent=87 // pred_check
          %p1052 = pneg %p532
        $region134: #{forward.1} parent=87 // pred_check_branch
          %1054 = sbr.rel (%p1052) target = $region136
        $region135: #{forward.1} parent=87 // pred_region
          %p1055 = scmp.lt.s32.totalorder %s79, 1
          %s1056 = scalar_select %p1055, %s79, 1
          %s1057 = scalar_lea.vmem %s37, %s1056
        $region136: #{forward.1} parent=87 // pred_fallthru
          _
        // Predicated region
        $region137: #{forward.1} parent=87 // pred_check
          %p1058 = pneg %p558
        $region138: #{forward.1} parent=87 // pred_check_branch
          %1060 = sbr.rel (%p1058) target = $region140
        $region139: #{forward.1} parent=87 // pred_region
          %p1061 = scmp.lt.s32.totalorder %s79, 1
          %s1062 = scalar_select %p1061, %s79, 1
          %s1063 = scalar_lea.vmem %s39, %s1062
        $region140: #{forward.1} parent=87 // pred_fallthru
          _
        // Predicated region
        $region141: #{forward.1} parent=87 // pred_check
          %p1064 = pneg %p584
        $region142: #{forward.1} parent=87 // pred_check_branch
          %1066 = sbr.rel (%p1064) target = $region144
        $region143: #{forward.1} parent=87 // pred_region
          %p1067 = scmp.lt.s32.totalorder %s79, 1
          %s1068 = scalar_select %p1067, %s79, 1
          %s1069 = scalar_lea.vmem %s41, %s1068
        $region144: #{forward.1} parent=87 // pred_fallthru
          _
      $region88: #{forward.1} parent=5 // pred_fallthru
        _
      %p1070 = scmp.le.s32.totalorder 1, %s79
      %p1071 = scmp.lt.s32.totalorder %s79, 3
      %p1072 = pnand %p1070, %p1071
      %p1073 = pneg %p1072
      // Predicated region
      $region145: #{forward.1} parent=5 // pred_check
        _
      $region146: #{forward.1} parent=5 // pred_check_branch
        %1075 = sbr.rel (%p1072) target = $region148
      $region147: #{forward.1} parent=5 // pred_region
        %s1076 = ssub.s32 %s79, 1
        %p1077 = scmp.lt.s32.totalorder %s84, 1
        %s1078 = scalar_select %p1077, %s84, 1
        %s1079 = smul.addr %s1078, 16
        %s1080 = smul.addr %s1079, 8
        %s1081 = scalar_lea.vmem %s1, %s1080
        %p1082 = pneg %p105
        %p1083 = pneg %p102
        %p1084 = scmp.lt.s32.totalorder %s84, 1
        %s1085 = scalar_select %p1084, %s84, 1
        %s1086 = smul.addr %s1085, 16
        %s1087 = smul.addr %s1086, 8
        %s1088 = scalar_lea.vmem %s3, %s1087
        %p1089 = pneg %p131
        %p1090 = pneg %p128
        %p1091 = scmp.lt.s32.totalorder %s84, 1
        %s1092 = scalar_select %p1091, %s84, 1
        %s1093 = smul.addr %s1092, 13
        %s1094 = smul.addr %s1093, 8
        %s1095 = scalar_lea.vmem %s5, %s1094
        %p1096 = pneg %p157
        %p1097 = pneg %p154
        %p1098 = scmp.lt.s32.totalorder %s84, 1
        %s1099 = scalar_select %p1098, %s84, 1
        %s1100 = smul.addr %s1099, 16
        %s1101 = smul.addr %s1100, 8
        %s1102 = scalar_lea.vmem %s7, %s1101
        %p1103 = pneg %p183
        %p1104 = pneg %p180
        %p1105 = scmp.lt.s32.totalorder %s84, 1
        %s1106 = scalar_select %p1105, %s84, 1
        %s1107 = smul.addr %s1106, 13
        %s1108 = smul.addr %s1107, 8
        %s1109 = scalar_lea.vmem %s9, %s1108
        %p1110 = pneg %p209
        %p1111 = pneg %p206
        %p1112 = scmp.lt.s32.totalorder %s84, 1
        %s1113 = scalar_select %p1112, %s84, 1
        %s1114 = smul.addr %s1113, 16
        %s1115 = smul.addr %s1114, 8
        %s1116 = scalar_lea.vmem %s11, %s1115
        %p1117 = pneg %p235
        %p1118 = pneg %p232
        %p1119 = scmp.lt.s32.totalorder %s84, 1
        %s1120 = scalar_select %p1119, %s84, 1
        %s1121 = smul.addr %s1120, 13
        %s1122 = smul.addr %s1121, 8
        %s1123 = scalar_lea.vmem %s13, %s1122
        %p1124 = pneg %p261
        %p1125 = pneg %p258
        %p1126 = pneg %p282
        %p1127 = pneg %p279
        %p1128 = pneg %p303
        %p1129 = pneg %p300
        %p1130 = pneg %p324
        %p1131 = pneg %p321
        %p1132 = pneg %p345
        %p1133 = pneg %p342
        %p1134 = pneg %p366
        %p1135 = pneg %p363
        %p1136 = pneg %p387
        %p1137 = pneg %p384
        %p1138 = pneg %p408
        %p1139 = pneg %p405
        %p1140 = scmp.lt.s32.totalorder %s84, 1
        %s1141 = scalar_select %p1140, %s84, 1
        %s1142 = scalar_lea.vmem %s29, %s1141
        %p1143 = pneg %p434
        %p1144 = pneg %p431
        %p1145 = scmp.lt.s32.totalorder %s84, 1
        %s1146 = scalar_select %p1145, %s84, 1
        %s1147 = scalar_lea.vmem %s31, %s1146
        %p1148 = pneg %p460
        %p1149 = pneg %p457
        %p1150 = scmp.lt.s32.totalorder %s84, 1
        %s1151 = scalar_select %p1150, %s84, 1
        %s1152 = scalar_lea.vmem %s33, %s1151
        %p1153 = pneg %p486
        %p1154 = pneg %p483
        %p1155 = scmp.lt.s32.totalorder %s84, 1
        %s1156 = scalar_select %p1155, %s84, 1
        %s1157 = scalar_lea.vmem %s35, %s1156
        %p1158 = pneg %p512
        %p1159 = pneg %p509
        %p1160 = scmp.lt.s32.totalorder %s84, 1
        %s1161 = scalar_select %p1160, %s84, 1
        %s1162 = scalar_lea.vmem %s37, %s1161
        %p1163 = pneg %p538
        %p1164 = pneg %p535
        %p1165 = scmp.lt.s32.totalorder %s84, 1
        %s1166 = scalar_select %p1165, %s84, 1
        %s1167 = scalar_lea.vmem %s39, %s1166
        %p1168 = pneg %p564
        %p1169 = pneg %p561
        %p1170 = scmp.lt.s32.totalorder %s84, 1
        %s1171 = scalar_select %p1170, %s84, 1
        %s1172 = scalar_lea.vmem %s41, %s1171
        %p1173 = pneg %p590
        %p1174 = pneg %p587
        %p1175 = pneg %p611
        %p1176 = pneg %p608
        %p1177 = pneg %p632
        %p1178 = pneg %p629
        %p1179 = pneg %p653
        %p1180 = pneg %p650
        %p1181 = pneg %p674
        %p1182 = pneg %p671
        %p1183 = pneg %p695
        %p1184 = pneg %p692
        %p1185 = pneg %p716
        %p1186 = pneg %p713
        %p1187 = pneg %p737
        %p1188 = pneg %p734
        %p1189 = pneg %p758
        %p1190 = pneg %p755
        %p1191 = pneg %p779
        %p1192 = pneg %p776
        %p1193 = pneg %p800
        %p1194 = pneg %p797
        %p1195 = pneg %p821
        %p1196 = pneg %p818
        %p1197 = pneg %p847
        %p1198 = pneg %p844
        %p1199 = scmp.lt.s32.totalorder %s84, 1
        %s1200 = scalar_select %p1199, %s84, 1
        %s1201 = smul.addr %s1200, 13
        %s1202 = smul.addr %s1201, 8
        %s1203 = scalar_lea.vmem %s65, %s1202
        %p1204 = pneg %p873
        %p1205 = pneg %p870
        %p1206 = scmp.lt.s32.totalorder %s84, 1
        %s1207 = scalar_select %p1206, %s84, 1
        %s1208 = scalar_lea.vmem %s67, %s1207
        %p1209 = pneg %p899
        %p1210 = pneg %p896
        %s1211 = sand.u32 %s886, 1
        %s1212 = scalar_lea.sflag [#allocation5], %s1211
        %s1213 = sand.u32 %s886, 1
        %s1214 = scalar_lea.vmem [#allocation4], %s1213
        %p1215 = scmp.lt.s32.totalorder %s84, 1
        %s1216 = scalar_select %p1215, %s84, 1
        %s1217 = smul.addr %s1216, 16
        %s1218 = smul.addr %s1217, 8
        %s1219 = scalar_lea.vmem %s1, %s1218
        %p1220 = scmp.lt.s32.totalorder %s84, 1
        %s1221 = scalar_select %p1220, %s84, 1
        %s1222 = smul.addr %s1221, 16
        %s1223 = smul.addr %s1222, 8
        %s1224 = scalar_lea.vmem %s3, %s1223
        %p1225 = scmp.lt.s32.totalorder %s84, 1
        %s1226 = scalar_select %p1225, %s84, 1
        %s1227 = smul.addr %s1226, 13
        %s1228 = smul.addr %s1227, 8
        %s1229 = scalar_lea.vmem %s5, %s1228
        %p1230 = scmp.lt.s32.totalorder %s84, 1
        %s1231 = scalar_select %p1230, %s84, 1
        %s1232 = smul.addr %s1231, 16
        %s1233 = smul.addr %s1232, 8
        %s1234 = scalar_lea.vmem %s7, %s1233
        %p1235 = scmp.lt.s32.totalorder %s84, 1
        %s1236 = scalar_select %p1235, %s84, 1
        %s1237 = smul.addr %s1236, 13
        %s1238 = smul.addr %s1237, 8
        %s1239 = scalar_lea.vmem %s9, %s1238
        %p1240 = scmp.lt.s32.totalorder %s84, 1
        %s1241 = scalar_select %p1240, %s84, 1
        %s1242 = smul.addr %s1241, 16
        %s1243 = smul.addr %s1242, 8
        %s1244 = scalar_lea.vmem %s11, %s1243
        %p1245 = scmp.lt.s32.totalorder %s84, 1
        %s1246 = scalar_select %p1245, %s84, 1
        %s1247 = smul.addr %s1246, 13
        %s1248 = smul.addr %s1247, 8
        %s1249 = scalar_lea.vmem %s13, %s1248
        %p1250 = scmp.lt.s32.totalorder %s84, 1
        %s1251 = scalar_select %p1250, %s84, 1
        %s1252 = scalar_lea.vmem %s29, %s1251
        %p1253 = scmp.lt.s32.totalorder %s84, 1
        %s1254 = scalar_select %p1253, %s84, 1
        %s1255 = scalar_lea.vmem %s31, %s1254
        %p1256 = scmp.lt.s32.totalorder %s84, 1
        %s1257 = scalar_select %p1256, %s84, 1
        %s1258 = scalar_lea.vmem %s33, %s1257
        %p1259 = scmp.lt.s32.totalorder %s84, 1
        %s1260 = scalar_select %p1259, %s84, 1
        %s1261 = scalar_lea.vmem %s35, %s1260
        %p1262 = scmp.lt.s32.totalorder %s84, 1
        %s1263 = scalar_select %p1262, %s84, 1
        %s1264 = scalar_lea.vmem %s37, %s1263
        %p1265 = scmp.lt.s32.totalorder %s84, 1
        %s1266 = scalar_select %p1265, %s84, 1
        %s1267 = scalar_lea.vmem %s39, %s1266
        %p1268 = scmp.lt.s32.totalorder %s84, 1
        %s1269 = scalar_select %p1268, %s84, 1
        %s1270 = scalar_lea.vmem %s41, %s1269
        %p1271 = scmp.lt.s32.totalorder %s84, 1
        %s1272 = scalar_select %p1271, %s84, 1
        %s1273 = smul.addr %s1272, 13
        %s1274 = smul.addr %s1273, 8
        %s1275 = scalar_lea.vmem %s65, %s1274
        %p1276 = scmp.lt.s32.totalorder %s84, 1
        %s1277 = scalar_select %p1276, %s84, 1
        %s1278 = scalar_lea.vmem %s67, %s1277
        %v1280 = vld [vmem:[%s15] sm:$0xff]
        %v1281 = vld [vmem:[%s15 + $0x8] sm:$0xff]
        %v1282 = vld [vmem:[%s15 + $0x10] sm:$0xff]
        %v1283 = vld [vmem:[%s15 + $0x18] sm:$0xff]
        %v1284 = vld [vmem:[%s15 + $0x20] sm:$0xff]
        %v1285 = vld [vmem:[%s15 + $0x28] sm:$0xff]
        %v1286 = vld [vmem:[%s15 + $0x30] sm:$0xff]
        %v1287 = vld [vmem:[%s15 + $0x38] sm:$0xff]
        %v1288 = vld [vmem:[%s15 + $0x40] sm:$0xff]
        %v1289 = vld [vmem:[%s15 + $0x48] sm:$0xff]
        %v1290 = vld [vmem:[%s15 + $0x50] sm:$0xff]
        %v1291 = vld [vmem:[%s15 + $0x58] sm:$0xff]
        %v1292 = vld [vmem:[%s15 + $0x60] sm:$0xf]
        %vm1293 = vcmp.gt.f32.partialorder %v1280, 0.5
        %vm1294 = vcmp.gt.f32.partialorder %v1281, 0.5
        %vm1295 = vcmp.gt.f32.partialorder %v1282, 0.5
        %vm1296 = vcmp.gt.f32.partialorder %v1283, 0.5
        %vm1297 = vcmp.gt.f32.partialorder %v1284, 0.5
        %vm1298 = vcmp.gt.f32.partialorder %v1285, 0.5
        %vm1299 = vcmp.gt.f32.partialorder %v1286, 0.5
        %vm1300 = vcmp.gt.f32.partialorder %v1287, 0.5
        %vm1301 = vcmp.gt.f32.partialorder %v1288, 0.5
        %vm1302 = vcmp.gt.f32.partialorder %v1289, 0.5
        %vm1303 = vcmp.gt.f32.partialorder %v1290, 0.5
        %vm1304 = vcmp.gt.f32.partialorder %v1291, 0.5
        %vm1305 = vcmp.gt.f32.partialorder %v1292, 0.5
        %v1306 = vld [vmem:[%s1219 + $0x5] sm:$0xff]
        %v1307 = vld [vmem:[%s1219 + $0xd] sm:$0xff]
        %v1308 = vld [vmem:[%s1219 + $0x15] sm:$0xff]
        %v1309 = vld [vmem:[%s1219 + $0x1d] sm:$0xff]
        %v1310 = vld [vmem:[%s1219 + $0x25] sm:$0xff]
        %v1311 = vld [vmem:[%s1219 + $0x2d] sm:$0xff]
        %v1312 = vld [vmem:[%s1219 + $0x35] sm:$0xff]
        %v1313 = vld [vmem:[%s1219 + $0x3d] sm:$0xff]
        %v1314 = vld [vmem:[%s1219 + $0x45] sm:$0xff]
        %v1315 = vld [vmem:[%s1219 + $0x4d] sm:$0xff]
        %v1316 = vld [vmem:[%s1219 + $0x55] sm:$0xff]
        %v1317 = vld [vmem:[%s1219 + $0x5d] sm:$0xff]
        %v1318 = vld [vmem:[%s1219 + $0x65] sm:$0xf]
        %v1319 = vld [vmem:[%s1219 + $0x6] sm:$0xff]
        %v1320 = vld [vmem:[%s1219 + $0xe] sm:$0xff]
        %v1321 = vld [vmem:[%s1219 + $0x16] sm:$0xff]
        %v1322 = vld [vmem:[%s1219 + $0x1e] sm:$0xff]
        %v1323 = vld [vmem:[%s1219 + $0x26] sm:$0xff]
        %v1324 = vld [vmem:[%s1219 + $0x2e] sm:$0xff]
        %v1325 = vld [vmem:[%s1219 + $0x36] sm:$0xff]
        %v1326 = vld [vmem:[%s1219 + $0x3e] sm:$0xff]
        %v1327 = vld [vmem:[%s1219 + $0x46] sm:$0xff]
        %v1328 = vld [vmem:[%s1219 + $0x4e] sm:$0xff]
        %v1329 = vld [vmem:[%s1219 + $0x56] sm:$0xff]
        %v1330 = vld [vmem:[%s1219 + $0x5e] sm:$0xff]
        %v1331 = vld [vmem:[%s1219 + $0x66] sm:$0xf]
        %v1332 = vld [vmem:[%s1219 + $0x7] sm:$0xff]
        %v1333 = vld [vmem:[%s1219 + $0xf] sm:$0xff]
        %v1334 = vld [vmem:[%s1219 + $0x17] sm:$0xff]
        %v1335 = vld [vmem:[%s1219 + $0x1f] sm:$0xff]
        %v1336 = vld [vmem:[%s1219 + $0x27] sm:$0xff]
        %v1337 = vld [vmem:[%s1219 + $0x2f] sm:$0xff]
        %v1338 = vld [vmem:[%s1219 + $0x37] sm:$0xff]
        %v1339 = vld [vmem:[%s1219 + $0x3f] sm:$0xff]
        %v1340 = vld [vmem:[%s1219 + $0x47] sm:$0xff]
        %v1341 = vld [vmem:[%s1219 + $0x4f] sm:$0xff]
        %v1342 = vld [vmem:[%s1219 + $0x57] sm:$0xff]
        %v1343 = vld [vmem:[%s1219 + $0x5f] sm:$0xff]
        %v1344 = vld [vmem:[%s1219 + $0x67] sm:$0xf]
        %v1345 = vld [vmem:[%s1219 + $0x67] sm:$0xff]
        %v1346 = vld [vmem:[%s1219 + $0x6f] sm:$0xf]
        %v1347 = vld [vmem:[%s1219 + $0x10] sm:$0xff]
        %v1348 = vld [vmem:[%s1219 + $0x18] sm:$0xff]
        %v1349 = vld [vmem:[%s1219 + $0x20] sm:$0xff]
        %v1350 = vld [vmem:[%s1219 + $0x28] sm:$0xff]
        %v1351 = vld [vmem:[%s1219 + $0x30] sm:$0xff]
        %v1352 = vld [vmem:[%s1219 + $0x38] sm:$0xff]
        %v1353 = vld [vmem:[%s1219 + $0x40] sm:$0xff]
        %v1354 = vld [vmem:[%s1219 + $0x48] sm:$0xff]
        %v1355 = vld [vmem:[%s1219 + $0x50] sm:$0xff]
        %v1356 = vld [vmem:[%s1219 + $0x58] sm:$0xff]
        %v1357 = vld [vmem:[%s1219 + $0x60] sm:$0xff]
        %v1358 = vld [vmem:[%s1219 + $0x68] sm:$0xff]
        %v1359 = vld [vmem:[%s1219 + $0x70] sm:$0xf]
        %v1360 = vld [vmem:[%s1219 + $0x11] sm:$0xff]
        %v1361 = vld [vmem:[%s1219 + $0x19] sm:$0xff]
        %v1362 = vld [vmem:[%s1219 + $0x21] sm:$0xff]
        %v1363 = vld [vmem:[%s1219 + $0x29] sm:$0xff]
        %v1364 = vld [vmem:[%s1219 + $0x31] sm:$0xff]
        %v1365 = vld [vmem:[%s1219 + $0x39] sm:$0xff]
        %v1366 = vld [vmem:[%s1219 + $0x41] sm:$0xff]
        %v1367 = vld [vmem:[%s1219 + $0x49] sm:$0xff]
        %v1368 = vld [vmem:[%s1219 + $0x51] sm:$0xff]
        %v1369 = vld [vmem:[%s1219 + $0x59] sm:$0xff]
        %v1370 = vld [vmem:[%s1219 + $0x61] sm:$0xff]
        %v1371 = vld [vmem:[%s1219 + $0x69] sm:$0xff]
        %v1372 = vld [vmem:[%s1219 + $0x71] sm:$0xf]
        %v1373 = vld [vmem:[%s1219 + $0x71] sm:$0xff]
        %v1374 = vld [vmem:[%s1219 + $0x79] sm:$0xf]
        %v1375 = vld [vmem:[%s1219 + $0x1a] sm:$0xff]
        %v1376 = vld [vmem:[%s1219 + $0x22] sm:$0xff]
        %v1377 = vld [vmem:[%s1219 + $0x2a] sm:$0xff]
        %v1378 = vld [vmem:[%s1219 + $0x32] sm:$0xff]
        %v1379 = vld [vmem:[%s1219 + $0x3a] sm:$0xff]
        %v1380 = vld [vmem:[%s1219 + $0x42] sm:$0xff]
        %v1381 = vld [vmem:[%s1219 + $0x4a] sm:$0xff]
        %v1382 = vld [vmem:[%s1219 + $0x52] sm:$0xff]
        %v1383 = vld [vmem:[%s1219 + $0x5a] sm:$0xff]
        %v1384 = vld [vmem:[%s1219 + $0x62] sm:$0xff]
        %v1385 = vld [vmem:[%s1219 + $0x6a] sm:$0xff]
        %v1386 = vld [vmem:[%s1219 + $0x72] sm:$0xff]
        %v1387 = vld [vmem:[%s1219 + $0x7a] sm:$0xf]
        %v1388 = vld [vmem:[%s1219 + $0x1b] sm:$0xff]
        %v1389 = vld [vmem:[%s1219 + $0x23] sm:$0xff]
        %v1390 = vld [vmem:[%s1219 + $0x2b] sm:$0xff]
        %v1391 = vld [vmem:[%s1219 + $0x33] sm:$0xff]
        %v1392 = vld [vmem:[%s1219 + $0x3b] sm:$0xff]
        %v1393 = vld [vmem:[%s1219 + $0x43] sm:$0xff]
        %v1394 = vld [vmem:[%s1219 + $0x4b] sm:$0xff]
        %v1395 = vld [vmem:[%s1219 + $0x53] sm:$0xff]
        %v1396 = vld [vmem:[%s1219 + $0x5b] sm:$0xff]
        %v1397 = vld [vmem:[%s1219 + $0x63] sm:$0xff]
        %v1398 = vld [vmem:[%s1219 + $0x6b] sm:$0xff]
        %v1399 = vld [vmem:[%s1219 + $0x73] sm:$0xff]
        %v1400 = vld [vmem:[%s1219 + $0x7b] sm:$0xf]
        %v1401 = vld [vmem:[%s1224 + $0x5] sm:$0xff]
        %v1402 = vld [vmem:[%s1224 + $0xd] sm:$0xff]
        %v1403 = vld [vmem:[%s1224 + $0x15] sm:$0xff]
        %v1404 = vld [vmem:[%s1224 + $0x1d] sm:$0xff]
        %v1405 = vld [vmem:[%s1224 + $0x25] sm:$0xff]
        %v1406 = vld [vmem:[%s1224 + $0x2d] sm:$0xff]
        %v1407 = vld [vmem:[%s1224 + $0x35] sm:$0xff]
        %v1408 = vld [vmem:[%s1224 + $0x3d] sm:$0xff]
        %v1409 = vld [vmem:[%s1224 + $0x45] sm:$0xff]
        %v1410 = vld [vmem:[%s1224 + $0x4d] sm:$0xff]
        %v1411 = vld [vmem:[%s1224 + $0x55] sm:$0xff]
        %v1412 = vld [vmem:[%s1224 + $0x5d] sm:$0xff]
        %v1413 = vld [vmem:[%s1224 + $0x65] sm:$0xf]
        %v1414 = vld [vmem:[%s1224 + $0x6] sm:$0xff]
        %v1415 = vld [vmem:[%s1224 + $0xe] sm:$0xff]
        %v1416 = vld [vmem:[%s1224 + $0x16] sm:$0xff]
        %v1417 = vld [vmem:[%s1224 + $0x1e] sm:$0xff]
        %v1418 = vld [vmem:[%s1224 + $0x26] sm:$0xff]
        %v1419 = vld [vmem:[%s1224 + $0x2e] sm:$0xff]
        %v1420 = vld [vmem:[%s1224 + $0x36] sm:$0xff]
        %v1421 = vld [vmem:[%s1224 + $0x3e] sm:$0xff]
        %v1422 = vld [vmem:[%s1224 + $0x46] sm:$0xff]
        %v1423 = vld [vmem:[%s1224 + $0x4e] sm:$0xff]
        %v1424 = vld [vmem:[%s1224 + $0x56] sm:$0xff]
        %v1425 = vld [vmem:[%s1224 + $0x5e] sm:$0xff]
        %v1426 = vld [vmem:[%s1224 + $0x66] sm:$0xf]
        %v1427 = vld [vmem:[%s1224 + $0x7] sm:$0xff]
        %v1428 = vld [vmem:[%s1224 + $0xf] sm:$0xff]
        %v1429 = vld [vmem:[%s1224 + $0x17] sm:$0xff]
        %v1430 = vld [vmem:[%s1224 + $0x1f] sm:$0xff]
        %v1431 = vld [vmem:[%s1224 + $0x27] sm:$0xff]
        %v1432 = vld [vmem:[%s1224 + $0x2f] sm:$0xff]
        %v1433 = vld [vmem:[%s1224 + $0x37] sm:$0xff]
        %v1434 = vld [vmem:[%s1224 + $0x3f] sm:$0xff]
        %v1435 = vld [vmem:[%s1224 + $0x47] sm:$0xff]
        %v1436 = vld [vmem:[%s1224 + $0x4f] sm:$0xff]
        %v1437 = vld [vmem:[%s1224 + $0x57] sm:$0xff]
        %v1438 = vld [vmem:[%s1224 + $0x5f] sm:$0xff]
        %v1439 = vld [vmem:[%s1224 + $0x67] sm:$0xf]
        %v1440 = vld [vmem:[%s1224 + $0x67] sm:$0xff]
        %v1441 = vld [vmem:[%s1224 + $0x6f] sm:$0xf]
        %v1442 = vld [vmem:[%s1224 + $0x10] sm:$0xff]
        %v1443 = vld [vmem:[%s1224 + $0x18] sm:$0xff]
        %v1444 = vld [vmem:[%s1224 + $0x20] sm:$0xff]
        %v1445 = vld [vmem:[%s1224 + $0x28] sm:$0xff]
        %v1446 = vld [vmem:[%s1224 + $0x30] sm:$0xff]
        %v1447 = vld [vmem:[%s1224 + $0x38] sm:$0xff]
        %v1448 = vld [vmem:[%s1224 + $0x40] sm:$0xff]
        %v1449 = vld [vmem:[%s1224 + $0x48] sm:$0xff]
        %v1450 = vld [vmem:[%s1224 + $0x50] sm:$0xff]
        %v1451 = vld [vmem:[%s1224 + $0x58] sm:$0xff]
        %v1452 = vld [vmem:[%s1224 + $0x60] sm:$0xff]
        %v1453 = vld [vmem:[%s1224 + $0x68] sm:$0xff]
        %v1454 = vld [vmem:[%s1224 + $0x70] sm:$0xf]
        %v1455 = vld [vmem:[%s1224 + $0x11] sm:$0xff]
        %v1456 = vld [vmem:[%s1224 + $0x19] sm:$0xff]
        %v1457 = vld [vmem:[%s1224 + $0x21] sm:$0xff]
        %v1458 = vld [vmem:[%s1224 + $0x29] sm:$0xff]
        %v1459 = vld [vmem:[%s1224 + $0x31] sm:$0xff]
        %v1460 = vld [vmem:[%s1224 + $0x39] sm:$0xff]
        %v1461 = vld [vmem:[%s1224 + $0x41] sm:$0xff]
        %v1462 = vld [vmem:[%s1224 + $0x49] sm:$0xff]
        %v1463 = vld [vmem:[%s1224 + $0x51] sm:$0xff]
        %v1464 = vld [vmem:[%s1224 + $0x59] sm:$0xff]
        %v1465 = vld [vmem:[%s1224 + $0x61] sm:$0xff]
        %v1466 = vld [vmem:[%s1224 + $0x69] sm:$0xff]
        %v1467 = vld [vmem:[%s1224 + $0x71] sm:$0xf]
        %v1468 = vld [vmem:[%s1224 + $0x71] sm:$0xff]
        %v1469 = vld [vmem:[%s1224 + $0x79] sm:$0xf]
        %v1470 = vld [vmem:[%s1224 + $0x1a] sm:$0xff]
        %v1471 = vld [vmem:[%s1224 + $0x22] sm:$0xff]
        %v1472 = vld [vmem:[%s1224 + $0x2a] sm:$0xff]
        %v1473 = vld [vmem:[%s1224 + $0x32] sm:$0xff]
        %v1474 = vld [vmem:[%s1224 + $0x3a] sm:$0xff]
        %v1475 = vld [vmem:[%s1224 + $0x42] sm:$0xff]
        %v1476 = vld [vmem:[%s1224 + $0x4a] sm:$0xff]
        %v1477 = vld [vmem:[%s1224 + $0x52] sm:$0xff]
        %v1478 = vld [vmem:[%s1224 + $0x5a] sm:$0xff]
        %v1479 = vld [vmem:[%s1224 + $0x62] sm:$0xff]
        %v1480 = vld [vmem:[%s1224 + $0x6a] sm:$0xff]
        %v1481 = vld [vmem:[%s1224 + $0x72] sm:$0xff]
        %v1482 = vld [vmem:[%s1224 + $0x7a] sm:$0xf]
        %v1483 = vld [vmem:[%s1224 + $0x1b] sm:$0xff]
        %v1484 = vld [vmem:[%s1224 + $0x23] sm:$0xff]
        %v1485 = vld [vmem:[%s1224 + $0x2b] sm:$0xff]
        %v1486 = vld [vmem:[%s1224 + $0x33] sm:$0xff]
        %v1487 = vld [vmem:[%s1224 + $0x3b] sm:$0xff]
        %v1488 = vld [vmem:[%s1224 + $0x43] sm:$0xff]
        %v1489 = vld [vmem:[%s1224 + $0x4b] sm:$0xff]
        %v1490 = vld [vmem:[%s1224 + $0x53] sm:$0xff]
        %v1491 = vld [vmem:[%s1224 + $0x5b] sm:$0xff]
        %v1492 = vld [vmem:[%s1224 + $0x63] sm:$0xff]
        %v1493 = vld [vmem:[%s1224 + $0x6b] sm:$0xff]
        %v1494 = vld [vmem:[%s1224 + $0x73] sm:$0xff]
        %v1495 = vld [vmem:[%s1224 + $0x7b] sm:$0xf]
        %1509 = vrot.lane.b32.xlu0 %v1319, 4
        %v1510 = vpop.permute.xlu0 %1509
        %1511 = vrot.lane.b32.xlu0 %v1320, 4
        %v1512 = vpop.permute.xlu0 %1511
        %1513 = vrot.lane.b32.xlu0 %v1321, 4
        %v1514 = vpop.permute.xlu0 %1513
        %1515 = vrot.lane.b32.xlu0 %v1322, 4
        %v1516 = vpop.permute.xlu0 %1515
        %1517 = vrot.lane.b32.xlu0 %v1323, 4
        %v1518 = vpop.permute.xlu0 %1517
        %1519 = vrot.lane.b32.xlu0 %v1324, 4
        %v1520 = vpop.permute.xlu0 %1519
        %1521 = vrot.lane.b32.xlu0 %v1325, 4
        %v1522 = vpop.permute.xlu0 %1521
        %1523 = vrot.lane.b32.xlu0 %v1326, 4
        %v1524 = vpop.permute.xlu0 %1523
        %1525 = vrot.lane.b32.xlu0 %v1327, 4
        %v1526 = vpop.permute.xlu0 %1525
        %1527 = vrot.lane.b32.xlu0 %v1328, 4
        %v1528 = vpop.permute.xlu0 %1527
        %1529 = vrot.lane.b32.xlu0 %v1329, 4
        %v1530 = vpop.permute.xlu0 %1529
        %1531 = vrot.lane.b32.xlu0 %v1330, 4
        %v1532 = vpop.permute.xlu0 %1531
        %1533 = vrot.lane.b32.xlu0 %v1331, 4
        %v1534 = vpop.permute.xlu0 %1533
        %1561 = vrot.lane.b32.xlu0 %v1332, 8
        %v1562 = vpop.permute.xlu0 %1561
        %1563 = vrot.lane.b32.xlu0 %v1333, 8
        %v1564 = vpop.permute.xlu0 %1563
        %1565 = vrot.lane.b32.xlu0 %v1334, 8
        %v1566 = vpop.permute.xlu0 %1565
        %1567 = vrot.lane.b32.xlu0 %v1335, 8
        %v1568 = vpop.permute.xlu0 %1567
        %1569 = vrot.lane.b32.xlu0 %v1336, 8
        %v1570 = vpop.permute.xlu0 %1569
        %1571 = vrot.lane.b32.xlu0 %v1337, 8
        %v1572 = vpop.permute.xlu0 %1571
        %1573 = vrot.lane.b32.xlu0 %v1338, 8
        %v1574 = vpop.permute.xlu0 %1573
        %1575 = vrot.lane.b32.xlu0 %v1339, 8
        %v1576 = vpop.permute.xlu0 %1575
        %1577 = vrot.lane.b32.xlu0 %v1340, 8
        %v1578 = vpop.permute.xlu0 %1577
        %1579 = vrot.lane.b32.xlu0 %v1341, 8
        %v1580 = vpop.permute.xlu0 %1579
        %1581 = vrot.lane.b32.xlu0 %v1342, 8
        %v1582 = vpop.permute.xlu0 %1581
        %1583 = vrot.lane.b32.xlu0 %v1343, 8
        %v1584 = vpop.permute.xlu0 %1583
        %1585 = vrot.lane.b32.xlu0 %v1344, 8
        %v1586 = vpop.permute.xlu0 %1585
        %1602 = vrot.lane.b32.xlu0 %v1333, 12
        %v1603 = vpop.permute.xlu0 %1602
        %1604 = vrot.lane.b32.xlu0 %v1334, 12
        %v1605 = vpop.permute.xlu0 %1604
        %1606 = vrot.lane.b32.xlu0 %v1335, 12
        %v1607 = vpop.permute.xlu0 %1606
        %1608 = vrot.lane.b32.xlu0 %v1336, 12
        %v1609 = vpop.permute.xlu0 %1608
        %1610 = vrot.lane.b32.xlu0 %v1337, 12
        %v1611 = vpop.permute.xlu0 %1610
        %1612 = vrot.lane.b32.xlu0 %v1338, 12
        %v1613 = vpop.permute.xlu0 %1612
        %1614 = vrot.lane.b32.xlu0 %v1339, 12
        %v1615 = vpop.permute.xlu0 %1614
        %1616 = vrot.lane.b32.xlu0 %v1340, 12
        %v1617 = vpop.permute.xlu0 %1616
        %1618 = vrot.lane.b32.xlu0 %v1341, 12
        %v1619 = vpop.permute.xlu0 %1618
        %1620 = vrot.lane.b32.xlu0 %v1342, 12
        %v1621 = vpop.permute.xlu0 %1620
        %1622 = vrot.lane.b32.xlu0 %v1343, 12
        %v1623 = vpop.permute.xlu0 %1622
        %1624 = vrot.lane.b32.xlu0 %v1345, 12
        %v1625 = vpop.permute.xlu0 %1624
        %1626 = vrot.lane.b32.xlu0 %v1346, 12
        %v1627 = vpop.permute.xlu0 %1626
        %1654 = vrot.lane.b32.xlu0 %v1347, 16
        %v1655 = vpop.permute.xlu0 %1654
        %1656 = vrot.lane.b32.xlu0 %v1348, 16
        %v1657 = vpop.permute.xlu0 %1656
        %1658 = vrot.lane.b32.xlu0 %v1349, 16
        %v1659 = vpop.permute.xlu0 %1658
        %1660 = vrot.lane.b32.xlu0 %v1350, 16
        %v1661 = vpop.permute.xlu0 %1660
        %1662 = vrot.lane.b32.xlu0 %v1351, 16
        %v1663 = vpop.permute.xlu0 %1662
        %1664 = vrot.lane.b32.xlu0 %v1352, 16
        %v1665 = vpop.permute.xlu0 %1664
        %1666 = vrot.lane.b32.xlu0 %v1353, 16
        %v1667 = vpop.permute.xlu0 %1666
        %1668 = vrot.lane.b32.xlu0 %v1354, 16
        %v1669 = vpop.permute.xlu0 %1668
        %1670 = vrot.lane.b32.xlu0 %v1355, 16
        %v1671 = vpop.permute.xlu0 %1670
        %1672 = vrot.lane.b32.xlu0 %v1356, 16
        %v1673 = vpop.permute.xlu0 %1672
        %1674 = vrot.lane.b32.xlu0 %v1357, 16
        %v1675 = vpop.permute.xlu0 %1674
        %1676 = vrot.lane.b32.xlu0 %v1358, 16
        %v1677 = vpop.permute.xlu0 %1676
        %1678 = vrot.lane.b32.xlu0 %v1359, 16
        %v1679 = vpop.permute.xlu0 %1678
        %1706 = vrot.lane.b32.xlu0 %v1360, 20
        %v1707 = vpop.permute.xlu0 %1706
        %1708 = vrot.lane.b32.xlu0 %v1361, 20
        %v1709 = vpop.permute.xlu0 %1708
        %1710 = vrot.lane.b32.xlu0 %v1362, 20
        %v1711 = vpop.permute.xlu0 %1710
        %1712 = vrot.lane.b32.xlu0 %v1363, 20
        %v1713 = vpop.permute.xlu0 %1712
        %1714 = vrot.lane.b32.xlu0 %v1364, 20
        %v1715 = vpop.permute.xlu0 %1714
        %1716 = vrot.lane.b32.xlu0 %v1365, 20
        %v1717 = vpop.permute.xlu0 %1716
        %1718 = vrot.lane.b32.xlu0 %v1366, 20
        %v1719 = vpop.permute.xlu0 %1718
        %1720 = vrot.lane.b32.xlu0 %v1367, 20
        %v1721 = vpop.permute.xlu0 %1720
        %1722 = vrot.lane.b32.xlu0 %v1368, 20
        %v1723 = vpop.permute.xlu0 %1722
        %1724 = vrot.lane.b32.xlu0 %v1369, 20
        %v1725 = vpop.permute.xlu0 %1724
        %1726 = vrot.lane.b32.xlu0 %v1370, 20
        %v1727 = vpop.permute.xlu0 %1726
        %1728 = vrot.lane.b32.xlu0 %v1371, 20
        %v1729 = vpop.permute.xlu0 %1728
        %1730 = vrot.lane.b32.xlu0 %v1372, 20
        %v1731 = vpop.permute.xlu0 %1730
        %1747 = vrot.lane.b32.xlu0 %v1361, 24
        %v1748 = vpop.permute.xlu0 %1747
        %1749 = vrot.lane.b32.xlu0 %v1362, 24
        %v1750 = vpop.permute.xlu0 %1749
        %1751 = vrot.lane.b32.xlu0 %v1363, 24
        %v1752 = vpop.permute.xlu0 %1751
        %1753 = vrot.lane.b32.xlu0 %v1364, 24
        %v1754 = vpop.permute.xlu0 %1753
        %1755 = vrot.lane.b32.xlu0 %v1365, 24
        %v1756 = vpop.permute.xlu0 %1755
        %1757 = vrot.lane.b32.xlu0 %v1366, 24
        %v1758 = vpop.permute.xlu0 %1757
        %1759 = vrot.lane.b32.xlu0 %v1367, 24
        %v1760 = vpop.permute.xlu0 %1759
        %1761 = vrot.lane.b32.xlu0 %v1368, 24
        %v1762 = vpop.permute.xlu0 %1761
        %1763 = vrot.lane.b32.xlu0 %v1369, 24
        %v1764 = vpop.permute.xlu0 %1763
        %1765 = vrot.lane.b32.xlu0 %v1370, 24
        %v1766 = vpop.permute.xlu0 %1765
        %1767 = vrot.lane.b32.xlu0 %v1371, 24
        %v1768 = vpop.permute.xlu0 %1767
        %1769 = vrot.lane.b32.xlu0 %v1373, 24
        %v1770 = vpop.permute.xlu0 %1769
        %1771 = vrot.lane.b32.xlu0 %v1374, 24
        %v1772 = vpop.permute.xlu0 %1771
        %1799 = vrot.lane.b32.xlu0 %v1375, 28
        %v1800 = vpop.permute.xlu0 %1799
        %1801 = vrot.lane.b32.xlu0 %v1376, 28
        %v1802 = vpop.permute.xlu0 %1801
        %1803 = vrot.lane.b32.xlu0 %v1377, 28
        %v1804 = vpop.permute.xlu0 %1803
        %1805 = vrot.lane.b32.xlu0 %v1378, 28
        %v1806 = vpop.permute.xlu0 %1805
        %1807 = vrot.lane.b32.xlu0 %v1379, 28
        %v1808 = vpop.permute.xlu0 %1807
        %1809 = vrot.lane.b32.xlu0 %v1380, 28
        %v1810 = vpop.permute.xlu0 %1809
        %1811 = vrot.lane.b32.xlu0 %v1381, 28
        %v1812 = vpop.permute.xlu0 %1811
        %1813 = vrot.lane.b32.xlu0 %v1382, 28
        %v1814 = vpop.permute.xlu0 %1813
        %1815 = vrot.lane.b32.xlu0 %v1383, 28
        %v1816 = vpop.permute.xlu0 %1815
        %1817 = vrot.lane.b32.xlu0 %v1384, 28
        %v1818 = vpop.permute.xlu0 %1817
        %1819 = vrot.lane.b32.xlu0 %v1385, 28
        %v1820 = vpop.permute.xlu0 %1819
        %1821 = vrot.lane.b32.xlu0 %v1386, 28
        %v1822 = vpop.permute.xlu0 %1821
        %1823 = vrot.lane.b32.xlu0 %v1387, 28
        %v1824 = vpop.permute.xlu0 %1823
        %1851 = vrot.lane.b32.xlu0 %v1388, 32
        %v1852 = vpop.permute.xlu0 %1851
        %1853 = vrot.lane.b32.xlu0 %v1389, 32
        %v1854 = vpop.permute.xlu0 %1853
        %1855 = vrot.lane.b32.xlu0 %v1390, 32
        %v1856 = vpop.permute.xlu0 %1855
        %1857 = vrot.lane.b32.xlu0 %v1391, 32
        %v1858 = vpop.permute.xlu0 %1857
        %1859 = vrot.lane.b32.xlu0 %v1392, 32
        %v1860 = vpop.permute.xlu0 %1859
        %1861 = vrot.lane.b32.xlu0 %v1393, 32
        %v1862 = vpop.permute.xlu0 %1861
        %1863 = vrot.lane.b32.xlu0 %v1394, 32
        %v1864 = vpop.permute.xlu0 %1863
        %1865 = vrot.lane.b32.xlu0 %v1395, 32
        %v1866 = vpop.permute.xlu0 %1865
        %1867 = vrot.lane.b32.xlu0 %v1396, 32
        %v1868 = vpop.permute.xlu0 %1867
        %1869 = vrot.lane.b32.xlu0 %v1397, 32
        %v1870 = vpop.permute.xlu0 %1869
        %1871 = vrot.lane.b32.xlu0 %v1398, 32
        %v1872 = vpop.permute.xlu0 %1871
        %1873 = vrot.lane.b32.xlu0 %v1399, 32
        %v1874 = vpop.permute.xlu0 %1873
        %1875 = vrot.lane.b32.xlu0 %v1400, 32
        %v1876 = vpop.permute.xlu0 %1875
        %1903 = vrot.lane.b32.xlu0 %v1401, 36
        %v1904 = vpop.permute.xlu0 %1903
        %1905 = vrot.lane.b32.xlu0 %v1402, 36
        %v1906 = vpop.permute.xlu0 %1905
        %1907 = vrot.lane.b32.xlu0 %v1403, 36
        %v1908 = vpop.permute.xlu0 %1907
        %1909 = vrot.lane.b32.xlu0 %v1404, 36
        %v1910 = vpop.permute.xlu0 %1909
        %1911 = vrot.lane.b32.xlu0 %v1405, 36
        %v1912 = vpop.permute.xlu0 %1911
        %1913 = vrot.lane.b32.xlu0 %v1406, 36
        %v1914 = vpop.permute.xlu0 %1913
        %1915 = vrot.lane.b32.xlu0 %v1407, 36
        %v1916 = vpop.permute.xlu0 %1915
        %1917 = vrot.lane.b32.xlu0 %v1408, 36
        %v1918 = vpop.permute.xlu0 %1917
        %1919 = vrot.lane.b32.xlu0 %v1409, 36
        %v1920 = vpop.permute.xlu0 %1919
        %1921 = vrot.lane.b32.xlu0 %v1410, 36
        %v1922 = vpop.permute.xlu0 %1921
        %1923 = vrot.lane.b32.xlu0 %v1411, 36
        %v1924 = vpop.permute.xlu0 %1923
        %1925 = vrot.lane.b32.xlu0 %v1412, 36
        %v1926 = vpop.permute.xlu0 %1925
        %1927 = vrot.lane.b32.xlu0 %v1413, 36
        %v1928 = vpop.permute.xlu0 %1927
        %1955 = vrot.lane.b32.xlu0 %v1414, 44
        %v1956 = vpop.permute.xlu0 %1955
        %1957 = vrot.lane.b32.xlu0 %v1415, 44
        %v1958 = vpop.permute.xlu0 %1957
        %1959 = vrot.lane.b32.xlu0 %v1416, 44
        %v1960 = vpop.permute.xlu0 %1959
        %1961 = vrot.lane.b32.xlu0 %v1417, 44
        %v1962 = vpop.permute.xlu0 %1961
        %1963 = vrot.lane.b32.xlu0 %v1418, 44
        %v1964 = vpop.permute.xlu0 %1963
        %1965 = vrot.lane.b32.xlu0 %v1419, 44
        %v1966 = vpop.permute.xlu0 %1965
        %1967 = vrot.lane.b32.xlu0 %v1420, 44
        %v1968 = vpop.permute.xlu0 %1967
        %1969 = vrot.lane.b32.xlu0 %v1421, 44
        %v1970 = vpop.permute.xlu0 %1969
        %1971 = vrot.lane.b32.xlu0 %v1422, 44
        %v1972 = vpop.permute.xlu0 %1971
        %1973 = vrot.lane.b32.xlu0 %v1423, 44
        %v1974 = vpop.permute.xlu0 %1973
        %1975 = vrot.lane.b32.xlu0 %v1424, 44
        %v1976 = vpop.permute.xlu0 %1975
        %1977 = vrot.lane.b32.xlu0 %v1425, 44
        %v1978 = vpop.permute.xlu0 %1977
        %1979 = vrot.lane.b32.xlu0 %v1426, 44
        %v1980 = vpop.permute.xlu0 %1979
        %2007 = vrot.lane.b32.xlu0 %v1427, 52
        %v2008 = vpop.permute.xlu0 %2007
        %2009 = vrot.lane.b32.xlu0 %v1428, 52
        %v2010 = vpop.permute.xlu0 %2009
        %2011 = vrot.lane.b32.xlu0 %v1429, 52
        %v2012 = vpop.permute.xlu0 %2011
        %2013 = vrot.lane.b32.xlu0 %v1430, 52
        %v2014 = vpop.permute.xlu0 %2013
        %2015 = vrot.lane.b32.xlu0 %v1431, 52
        %v2016 = vpop.permute.xlu0 %2015
        %2017 = vrot.lane.b32.xlu0 %v1432, 52
        %v2018 = vpop.permute.xlu0 %2017
        %2019 = vrot.lane.b32.xlu0 %v1433, 52
        %v2020 = vpop.permute.xlu0 %2019
        %2021 = vrot.lane.b32.xlu0 %v1434, 52
        %v2022 = vpop.permute.xlu0 %2021
        %2023 = vrot.lane.b32.xlu0 %v1435, 52
        %v2024 = vpop.permute.xlu0 %2023
        %2025 = vrot.lane.b32.xlu0 %v1436, 52
        %v2026 = vpop.permute.xlu0 %2025
        %2027 = vrot.lane.b32.xlu0 %v1437, 52
        %v2028 = vpop.permute.xlu0 %2027
        %2029 = vrot.lane.b32.xlu0 %v1438, 52
        %v2030 = vpop.permute.xlu0 %2029
        %2031 = vrot.lane.b32.xlu0 %v1439, 52
        %v2032 = vpop.permute.xlu0 %2031
        %2048 = vrot.lane.b32.xlu0 %v1428, 60
        %v2049 = vpop.permute.xlu0 %2048
        %2050 = vrot.lane.b32.xlu0 %v1429, 60
        %v2051 = vpop.permute.xlu0 %2050
        %2052 = vrot.lane.b32.xlu0 %v1430, 60
        %v2053 = vpop.permute.xlu0 %2052
        %2054 = vrot.lane.b32.xlu0 %v1431, 60
        %v2055 = vpop.permute.xlu0 %2054
        %2056 = vrot.lane.b32.xlu0 %v1432, 60
        %v2057 = vpop.permute.xlu0 %2056
        %2058 = vrot.lane.b32.xlu0 %v1433, 60
        %v2059 = vpop.permute.xlu0 %2058
        %2060 = vrot.lane.b32.xlu0 %v1434, 60
        %v2061 = vpop.permute.xlu0 %2060
        %2062 = vrot.lane.b32.xlu0 %v1435, 60
        %v2063 = vpop.permute.xlu0 %2062
        %2064 = vrot.lane.b32.xlu0 %v1436, 60
        %v2065 = vpop.permute.xlu0 %2064
        %2066 = vrot.lane.b32.xlu0 %v1437, 60
        %v2067 = vpop.permute.xlu0 %2066
        %2068 = vrot.lane.b32.xlu0 %v1438, 60
        %v2069 = vpop.permute.xlu0 %2068
        %2070 = vrot.lane.b32.xlu0 %v1440, 60
        %v2071 = vpop.permute.xlu0 %2070
        %2072 = vrot.lane.b32.xlu0 %v1441, 60
        %v2073 = vpop.permute.xlu0 %2072
        %2100 = vrot.lane.b32.xlu0 %v1442, 68
        %v2101 = vpop.permute.xlu0 %2100
        %2102 = vrot.lane.b32.xlu0 %v1443, 68
        %v2103 = vpop.permute.xlu0 %2102
        %2104 = vrot.lane.b32.xlu0 %v1444, 68
        %v2105 = vpop.permute.xlu0 %2104
        %2106 = vrot.lane.b32.xlu0 %v1445, 68
        %v2107 = vpop.permute.xlu0 %2106
        %2108 = vrot.lane.b32.xlu0 %v1446, 68
        %v2109 = vpop.permute.xlu0 %2108
        %2110 = vrot.lane.b32.xlu0 %v1447, 68
        %v2111 = vpop.permute.xlu0 %2110
        %2112 = vrot.lane.b32.xlu0 %v1448, 68
        %v2113 = vpop.permute.xlu0 %2112
        %2114 = vrot.lane.b32.xlu0 %v1449, 68
        %v2115 = vpop.permute.xlu0 %2114
        %2116 = vrot.lane.b32.xlu0 %v1450, 68
        %v2117 = vpop.permute.xlu0 %2116
        %2118 = vrot.lane.b32.xlu0 %v1451, 68
        %v2119 = vpop.permute.xlu0 %2118
        %2120 = vrot.lane.b32.xlu0 %v1452, 68
        %v2121 = vpop.permute.xlu0 %2120
        %2122 = vrot.lane.b32.xlu0 %v1453, 68
        %v2123 = vpop.permute.xlu0 %2122
        %2124 = vrot.lane.b32.xlu0 %v1454, 68
        %v2125 = vpop.permute.xlu0 %2124
        %2152 = vrot.lane.b32.xlu0 %v1455, 76
        %v2153 = vpop.permute.xlu0 %2152
        %2154 = vrot.lane.b32.xlu0 %v1456, 76
        %v2155 = vpop.permute.xlu0 %2154
        %2156 = vrot.lane.b32.xlu0 %v1457, 76
        %v2157 = vpop.permute.xlu0 %2156
        %2158 = vrot.lane.b32.xlu0 %v1458, 76
        %v2159 = vpop.permute.xlu0 %2158
        %2160 = vrot.lane.b32.xlu0 %v1459, 76
        %v2161 = vpop.permute.xlu0 %2160
        %2162 = vrot.lane.b32.xlu0 %v1460, 76
        %v2163 = vpop.permute.xlu0 %2162
        %2164 = vrot.lane.b32.xlu0 %v1461, 76
        %v2165 = vpop.permute.xlu0 %2164
        %2166 = vrot.lane.b32.xlu0 %v1462, 76
        %v2167 = vpop.permute.xlu0 %2166
        %2168 = vrot.lane.b32.xlu0 %v1463, 76
        %v2169 = vpop.permute.xlu0 %2168
        %2170 = vrot.lane.b32.xlu0 %v1464, 76
        %v2171 = vpop.permute.xlu0 %2170
        %2172 = vrot.lane.b32.xlu0 %v1465, 76
        %v2173 = vpop.permute.xlu0 %2172
        %2174 = vrot.lane.b32.xlu0 %v1466, 76
        %v2175 = vpop.permute.xlu0 %2174
        %2176 = vrot.lane.b32.xlu0 %v1467, 76
        %v2177 = vpop.permute.xlu0 %2176
        %2193 = vrot.lane.b32.xlu0 %v1456, 84
        %v2194 = vpop.permute.xlu0 %2193
        %2195 = vrot.lane.b32.xlu0 %v1457, 84
        %v2196 = vpop.permute.xlu0 %2195
        %2197 = vrot.lane.b32.xlu0 %v1458, 84
        %v2198 = vpop.permute.xlu0 %2197
        %2199 = vrot.lane.b32.xlu0 %v1459, 84
        %v2200 = vpop.permute.xlu0 %2199
        %2201 = vrot.lane.b32.xlu0 %v1460, 84
        %v2202 = vpop.permute.xlu0 %2201
        %2203 = vrot.lane.b32.xlu0 %v1461, 84
        %v2204 = vpop.permute.xlu0 %2203
        %2205 = vrot.lane.b32.xlu0 %v1462, 84
        %v2206 = vpop.permute.xlu0 %2205
        %2207 = vrot.lane.b32.xlu0 %v1463, 84
        %v2208 = vpop.permute.xlu0 %2207
        %2209 = vrot.lane.b32.xlu0 %v1464, 84
        %v2210 = vpop.permute.xlu0 %2209
        %2211 = vrot.lane.b32.xlu0 %v1465, 84
        %v2212 = vpop.permute.xlu0 %2211
        %2213 = vrot.lane.b32.xlu0 %v1466, 84
        %v2214 = vpop.permute.xlu0 %2213
        %2215 = vrot.lane.b32.xlu0 %v1468, 84
        %v2216 = vpop.permute.xlu0 %2215
        %2217 = vrot.lane.b32.xlu0 %v1469, 84
        %v2218 = vpop.permute.xlu0 %2217
        %vm2232 = vcmask 31744
        %v2233 = vsel %vm2232, %v1306, %v1510
        %v2234 = vsel %vm2232, %v1307, %v1512
        %v2235 = vsel %vm2232, %v1308, %v1514
        %v2236 = vsel %vm2232, %v1309, %v1516
        %v2237 = vsel %vm2232, %v1310, %v1518
        %v2238 = vsel %vm2232, %v1311, %v1520
        %v2239 = vsel %vm2232, %v1312, %v1522
        %v2240 = vsel %vm2232, %v1313, %v1524
        %v2241 = vsel %vm2232, %v1314, %v1526
        %v2242 = vsel %vm2232, %v1315, %v1528
        %v2243 = vsel %vm2232, %v1316, %v1530
        %v2244 = vsel %vm2232, %v1317, %v1532
        %v2245 = vsel %vm2232, %v1318, %v1534
        %vm2246 = vcmask 64512
        %v2247 = vsel %vm2246, %v2233, %v1562
        %v2248 = vsel %vm2246, %v2234, %v1564
        %v2249 = vsel %vm2246, %v2235, %v1566
        %v2250 = vsel %vm2246, %v2236, %v1568
        %v2251 = vsel %vm2246, %v2237, %v1570
        %v2252 = vsel %vm2246, %v2238, %v1572
        %v2253 = vsel %vm2246, %v2239, %v1574
        %v2254 = vsel %vm2246, %v2240, %v1576
        %v2255 = vsel %vm2246, %v2241, %v1578
        %v2256 = vsel %vm2246, %v2242, %v1580
        %v2257 = vsel %vm2246, %v2243, %v1582
        %v2258 = vsel %vm2246, %v2244, %v1584
        %v2259 = vsel %vm2246, %v2245, %v1586
        %vm2260 = vcmask 97280
        %v2261 = vsel %vm2260, %v2247, %v1603
        %v2262 = vsel %vm2260, %v2248, %v1605
        %v2263 = vsel %vm2260, %v2249, %v1607
        %v2264 = vsel %vm2260, %v2250, %v1609
        %v2265 = vsel %vm2260, %v2251, %v1611
        %v2266 = vsel %vm2260, %v2252, %v1613
        %v2267 = vsel %vm2260, %v2253, %v1615
        %v2268 = vsel %vm2260, %v2254, %v1617
        %v2269 = vsel %vm2260, %v2255, %v1619
        %v2270 = vsel %vm2260, %v2256, %v1621
        %v2271 = vsel %vm2260, %v2257, %v1623
        %v2272 = vsel %vm2260, %v2258, %v1625
        %v2273 = vsel %vm2260, %v2259, %v1627
        %vm2274 = vcmask 130048
        %v2275 = vsel %vm2274, %v2261, %v1655
        %v2276 = vsel %vm2274, %v2262, %v1657
        %v2277 = vsel %vm2274, %v2263, %v1659
        %v2278 = vsel %vm2274, %v2264, %v1661
        %v2279 = vsel %vm2274, %v2265, %v1663
        %v2280 = vsel %vm2274, %v2266, %v1665
        %v2281 = vsel %vm2274, %v2267, %v1667
        %v2282 = vsel %vm2274, %v2268, %v1669
        %v2283 = vsel %vm2274, %v2269, %v1671
        %v2284 = vsel %vm2274, %v2270, %v1673
        %v2285 = vsel %vm2274, %v2271, %v1675
        %v2286 = vsel %vm2274, %v2272, %v1677
        %v2287 = vsel %vm2274, %v2273, %v1679
        %vm2288 = vcmask 162816
        %v2289 = vsel %vm2288, %v2275, %v1707
        %v2290 = vsel %vm2288, %v2276, %v1709
        %v2291 = vsel %vm2288, %v2277, %v1711
        %v2292 = vsel %vm2288, %v2278, %v1713
        %v2293 = vsel %vm2288, %v2279, %v1715
        %v2294 = vsel %vm2288, %v2280, %v1717
        %v2295 = vsel %vm2288, %v2281, %v1719
        %v2296 = vsel %vm2288, %v2282, %v1721
        %v2297 = vsel %vm2288, %v2283, %v1723
        %v2298 = vsel %vm2288, %v2284, %v1725
        %v2299 = vsel %vm2288, %v2285, %v1727
        %v2300 = vsel %vm2288, %v2286, %v1729
        %v2301 = vsel %vm2288, %v2287, %v1731
        %vm2302 = vcmask 195584
        %v2303 = vsel %vm2302, %v2289, %v1748
        %v2304 = vsel %vm2302, %v2290, %v1750
        %v2305 = vsel %vm2302, %v2291, %v1752
        %v2306 = vsel %vm2302, %v2292, %v1754
        %v2307 = vsel %vm2302, %v2293, %v1756
        %v2308 = vsel %vm2302, %v2294, %v1758
        %v2309 = vsel %vm2302, %v2295, %v1760
        %v2310 = vsel %vm2302, %v2296, %v1762
        %v2311 = vsel %vm2302, %v2297, %v1764
        %v2312 = vsel %vm2302, %v2298, %v1766
        %v2313 = vsel %vm2302, %v2299, %v1768
        %v2314 = vsel %vm2302, %v2300, %v1770
        %v2315 = vsel %vm2302, %v2301, %v1772
        %vm2316 = vcmask 228352
        %v2317 = vsel %vm2316, %v2303, %v1800
        %v2318 = vsel %vm2316, %v2304, %v1802
        %v2319 = vsel %vm2316, %v2305, %v1804
        %v2320 = vsel %vm2316, %v2306, %v1806
        %v2321 = vsel %vm2316, %v2307, %v1808
        %v2322 = vsel %vm2316, %v2308, %v1810
        %v2323 = vsel %vm2316, %v2309, %v1812
        %v2324 = vsel %vm2316, %v2310, %v1814
        %v2325 = vsel %vm2316, %v2311, %v1816
        %v2326 = vsel %vm2316, %v2312, %v1818
        %v2327 = vsel %vm2316, %v2313, %v1820
        %v2328 = vsel %vm2316, %v2314, %v1822
        %v2329 = vsel %vm2316, %v2315, %v1824
        %vm2330 = vcmask 261120
        %v2331 = vsel %vm2330, %v2317, %v1852
        %v2332 = vsel %vm2330, %v2318, %v1854
        %v2333 = vsel %vm2330, %v2319, %v1856
        %v2334 = vsel %vm2330, %v2320, %v1858
        %v2335 = vsel %vm2330, %v2321, %v1860
        %v2336 = vsel %vm2330, %v2322, %v1862
        %v2337 = vsel %vm2330, %v2323, %v1864
        %v2338 = vsel %vm2330, %v2324, %v1866
        %v2339 = vsel %vm2330, %v2325, %v1868
        %v2340 = vsel %vm2330, %v2326, %v1870
        %v2341 = vsel %vm2330, %v2327, %v1872
        %v2342 = vsel %vm2330, %v2328, %v1874
        %v2343 = vsel %vm2330, %v2329, %v1876
        %vm2344 = vcmask 293888
        %v2345 = vsel %vm2344, %v2331, %v1904
        %v2346 = vsel %vm2344, %v2332, %v1906
        %v2347 = vsel %vm2344, %v2333, %v1908
        %v2348 = vsel %vm2344, %v2334, %v1910
        %v2349 = vsel %vm2344, %v2335, %v1912
        %v2350 = vsel %vm2344, %v2336, %v1914
        %v2351 = vsel %vm2344, %v2337, %v1916
        %v2352 = vsel %vm2344, %v2338, %v1918
        %v2353 = vsel %vm2344, %v2339, %v1920
        %v2354 = vsel %vm2344, %v2340, %v1922
        %v2355 = vsel %vm2344, %v2341, %v1924
        %v2356 = vsel %vm2344, %v2342, %v1926
        %v2357 = vsel %vm2344, %v2343, %v1928
        %vm2358 = vcmask 359424
        %v2359 = vsel %vm2358, %v2345, %v1956
        %v2360 = vsel %vm2358, %v2346, %v1958
        %v2361 = vsel %vm2358, %v2347, %v1960
        %v2362 = vsel %vm2358, %v2348, %v1962
        %v2363 = vsel %vm2358, %v2349, %v1964
        %v2364 = vsel %vm2358, %v2350, %v1966
        %v2365 = vsel %vm2358, %v2351, %v1968
        %v2366 = vsel %vm2358, %v2352, %v1970
        %v2367 = vsel %vm2358, %v2353, %v1972
        %v2368 = vsel %vm2358, %v2354, %v1974
        %v2369 = vsel %vm2358, %v2355, %v1976
        %v2370 = vsel %vm2358, %v2356, %v1978
        %v2371 = vsel %vm2358, %v2357, %v1980
        %vm2372 = vcmask 424960
        %v2373 = vsel %vm2372, %v2359, %v2008
        %v2374 = vsel %vm2372, %v2360, %v2010
        %v2375 = vsel %vm2372, %v2361, %v2012
        %v2376 = vsel %vm2372, %v2362, %v2014
        %v2377 = vsel %vm2372, %v2363, %v2016
        %v2378 = vsel %vm2372, %v2364, %v2018
        %v2379 = vsel %vm2372, %v2365, %v2020
        %v2380 = vsel %vm2372, %v2366, %v2022
        %v2381 = vsel %vm2372, %v2367, %v2024
        %v2382 = vsel %vm2372, %v2368, %v2026
        %v2383 = vsel %vm2372, %v2369, %v2028
        %v2384 = vsel %vm2372, %v2370, %v2030
        %v2385 = vsel %vm2372, %v2371, %v2032
        %vm2386 = vcmask 490496
        %v2387 = vsel %vm2386, %v2373, %v2049
        %v2388 = vsel %vm2386, %v2374, %v2051
        %v2389 = vsel %vm2386, %v2375, %v2053
        %v2390 = vsel %vm2386, %v2376, %v2055
        %v2391 = vsel %vm2386, %v2377, %v2057
        %v2392 = vsel %vm2386, %v2378, %v2059
        %v2393 = vsel %vm2386, %v2379, %v2061
        %v2394 = vsel %vm2386, %v2380, %v2063
        %v2395 = vsel %vm2386, %v2381, %v2065
        %v2396 = vsel %vm2386, %v2382, %v2067
        %v2397 = vsel %vm2386, %v2383, %v2069
        %v2398 = vsel %vm2386, %v2384, %v2071
        %v2399 = vsel %vm2386, %v2385, %v2073
        %vm2400 = vcmask 556032
        %v2401 = vsel %vm2400, %v2387, %v2101
        %v2402 = vsel %vm2400, %v2388, %v2103
        %v2403 = vsel %vm2400, %v2389, %v2105
        %v2404 = vsel %vm2400, %v2390, %v2107
        %v2405 = vsel %vm2400, %v2391, %v2109
        %v2406 = vsel %vm2400, %v2392, %v2111
        %v2407 = vsel %vm2400, %v2393, %v2113
        %v2408 = vsel %vm2400, %v2394, %v2115
        %v2409 = vsel %vm2400, %v2395, %v2117
        %v2410 = vsel %vm2400, %v2396, %v2119
        %v2411 = vsel %vm2400, %v2397, %v2121
        %v2412 = vsel %vm2400, %v2398, %v2123
        %v2413 = vsel %vm2400, %v2399, %v2125
        %vm2414 = vcmask 621568
        %v2415 = vsel %vm2414, %v2401, %v2153
        %v2416 = vsel %vm2414, %v2402, %v2155
        %v2417 = vsel %vm2414, %v2403, %v2157
        %v2418 = vsel %vm2414, %v2404, %v2159
        %v2419 = vsel %vm2414, %v2405, %v2161
        %v2420 = vsel %vm2414, %v2406, %v2163
        %v2421 = vsel %vm2414, %v2407, %v2165
        %v2422 = vsel %vm2414, %v2408, %v2167
        %v2423 = vsel %vm2414, %v2409, %v2169
        %v2424 = vsel %vm2414, %v2410, %v2171
        %v2425 = vsel %vm2414, %v2411, %v2173
        %v2426 = vsel %vm2414, %v2412, %v2175
        %v2427 = vsel %vm2414, %v2413, %v2177
        %vm2428 = vcmask 687104
        %v2429 = vsel %vm2428, %v2415, %v2194
        %v2430 = vsel %vm2428, %v2416, %v2196
        %v2431 = vsel %vm2428, %v2417, %v2198
        %v2432 = vsel %vm2428, %v2418, %v2200
        %v2433 = vsel %vm2428, %v2419, %v2202
        %v2434 = vsel %vm2428, %v2420, %v2204
        %v2435 = vsel %vm2428, %v2421, %v2206
        %v2436 = vsel %vm2428, %v2422, %v2208
        %v2437 = vsel %vm2428, %v2423, %v2210
        %v2438 = vsel %vm2428, %v2424, %v2212
        %v2439 = vsel %vm2428, %v2425, %v2214
        %v2440 = vsel %vm2428, %v2426, %v2216
        %v2441 = vsel %vm2428, %v2427, %v2218
        %2455 = vrot.lane.b32.xlu0 %v1483, 8
        %v2456 = vpop.permute.xlu0 %2455
        %2457 = vrot.lane.b32.xlu0 %v1484, 8
        %v2458 = vpop.permute.xlu0 %2457
        %2459 = vrot.lane.b32.xlu0 %v1485, 8
        %v2460 = vpop.permute.xlu0 %2459
        %2461 = vrot.lane.b32.xlu0 %v1486, 8
        %v2462 = vpop.permute.xlu0 %2461
        %2463 = vrot.lane.b32.xlu0 %v1487, 8
        %v2464 = vpop.permute.xlu0 %2463
        %2465 = vrot.lane.b32.xlu0 %v1488, 8
        %v2466 = vpop.permute.xlu0 %2465
        %2467 = vrot.lane.b32.xlu0 %v1489, 8
        %v2468 = vpop.permute.xlu0 %2467
        %2469 = vrot.lane.b32.xlu0 %v1490, 8
        %v2470 = vpop.permute.xlu0 %2469
        %2471 = vrot.lane.b32.xlu0 %v1491, 8
        %v2472 = vpop.permute.xlu0 %2471
        %2473 = vrot.lane.b32.xlu0 %v1492, 8
        %v2474 = vpop.permute.xlu0 %2473
        %2475 = vrot.lane.b32.xlu0 %v1493, 8
        %v2476 = vpop.permute.xlu0 %2475
        %2477 = vrot.lane.b32.xlu0 %v1494, 8
        %v2478 = vpop.permute.xlu0 %2477
        %2479 = vrot.lane.b32.xlu0 %v1495, 8
        %v2480 = vpop.permute.xlu0 %2479
        %v2494 = vsel %vm2246, %v1470, %v2456
        %v2495 = vsel %vm2246, %v1471, %v2458
        %v2496 = vsel %vm2246, %v1472, %v2460
        %v2497 = vsel %vm2246, %v1473, %v2462
        %v2498 = vsel %vm2246, %v1474, %v2464
        %v2499 = vsel %vm2246, %v1475, %v2466
        %v2500 = vsel %vm2246, %v1476, %v2468
        %v2501 = vsel %vm2246, %v1477, %v2470
        %v2502 = vsel %vm2246, %v1478, %v2472
        %v2503 = vsel %vm2246, %v1479, %v2474
        %v2504 = vsel %vm2246, %v1480, %v2476
        %v2505 = vsel %vm2246, %v1481, %v2478
        %v2506 = vsel %vm2246, %v1482, %v2480
        %2520 = vrot.lane.b32.xlu0 %v2494, 92
        %v2521 = vpop.permute.xlu0 %2520
        %2522 = vrot.lane.b32.xlu0 %v2495, 92
        %v2523 = vpop.permute.xlu0 %2522
        %2524 = vrot.lane.b32.xlu0 %v2496, 92
        %v2525 = vpop.permute.xlu0 %2524
        %2526 = vrot.lane.b32.xlu0 %v2497, 92
        %v2527 = vpop.permute.xlu0 %2526
        %2528 = vrot.lane.b32.xlu0 %v2498, 92
        %v2529 = vpop.permute.xlu0 %2528
        %2530 = vrot.lane.b32.xlu0 %v2499, 92
        %v2531 = vpop.permute.xlu0 %2530
        %2532 = vrot.lane.b32.xlu0 %v2500, 92
        %v2533 = vpop.permute.xlu0 %2532
        %2534 = vrot.lane.b32.xlu0 %v2501, 92
        %v2535 = vpop.permute.xlu0 %2534
        %2536 = vrot.lane.b32.xlu0 %v2502, 92
        %v2537 = vpop.permute.xlu0 %2536
        %2538 = vrot.lane.b32.xlu0 %v2503, 92
        %v2539 = vpop.permute.xlu0 %2538
        %2540 = vrot.lane.b32.xlu0 %v2504, 92
        %v2541 = vpop.permute.xlu0 %2540
        %2542 = vrot.lane.b32.xlu0 %v2505, 92
        %v2543 = vpop.permute.xlu0 %2542
        %2544 = vrot.lane.b32.xlu0 %v2506, 92
        %v2545 = vpop.permute.xlu0 %2544
        %vm2559 = vcmask 752640
        %v2560 = vsel %vm2559, %v2429, %v2521
        %v2561 = vsel %vm2559, %v2430, %v2523
        %v2562 = vsel %vm2559, %v2431, %v2525
        %v2563 = vsel %vm2559, %v2432, %v2527
        %v2564 = vsel %vm2559, %v2433, %v2529
        %v2565 = vsel %vm2559, %v2434, %v2531
        %v2566 = vsel %vm2559, %v2435, %v2533
        %v2567 = vsel %vm2559, %v2436, %v2535
        %v2568 = vsel %vm2559, %v2437, %v2537
        %v2569 = vsel %vm2559, %v2438, %v2539
        %v2570 = vsel %vm2559, %v2439, %v2541
        %v2571 = vsel %vm2559, %v2440, %v2543
        %v2572 = vsel %vm2559, %v2441, %v2545
        %v2573 = vpack.c.bf16 %v2561, %v2560
        %v2574 = vpack.c.bf16 %v2563, %v2562
        %v2575 = vpack.c.bf16 %v2565, %v2564
        %v2576 = vpack.c.bf16 %v2567, %v2566
        %v2577 = vpack.c.bf16 %v2569, %v2568
        %v2578 = vpack.c.bf16 %v2571, %v2570
        %v2579 = vpack.c.bf16 %v2572, %v2572
        %v2580 = vld [vmem:[%s17] sm:$0xff]
        %v2581 = vld [vmem:[%s17 + $0x8] sm:$0xff]
        %v2582 = vld [vmem:[%s17 + $0x10] sm:$0xff]
        %v2583 = vld [vmem:[%s17 + $0x18] sm:$0xff]
        %v2584 = vld [vmem:[%s17 + $0x20] sm:$0xff]
        %v2585 = vld [vmem:[%s17 + $0x28] sm:$0xff]
        %v2586 = vld [vmem:[%s17 + $0x30] sm:$0xff]
        %v2587 = vld [vmem:[%s17 + $0x38] sm:$0xff]
        %v2588 = vld [vmem:[%s17 + $0x40] sm:$0xff]
        %v2589 = vld [vmem:[%s17 + $0x48] sm:$0xff]
        %v2590 = vld [vmem:[%s17 + $0x50] sm:$0xff]
        %v2591 = vld [vmem:[%s17 + $0x58] sm:$0xff]
        %v2592 = vld [vmem:[%s17 + $0x60] sm:$0xff]
        %v2593 = vld [vmem:[%s17 + $0x68] sm:$0xf]
        %v2594 = vpack.c.bf16 %v2581, %v2580
        %v2595 = vpack.c.bf16 %v2583, %v2582
        %v2596 = vpack.c.bf16 %v2585, %v2584
        %v2597 = vpack.c.bf16 %v2587, %v2586
        %v2598 = vpack.c.bf16 %v2589, %v2588
        %v2599 = vpack.c.bf16 %v2591, %v2590
        %v2600 = vpack.c.bf16 %v2593, %v2592
        %v2601 = vld [vmem:[%s19] sm:$0x1]
        %v2603 = vlaneseq
        %v2604 = vshrl.u32 %v2603, 7
        %v2605 = vsub.s32 0, %v2604
        %v2606 = vrot.slane %v2601, %v2605
        %vm2608 = vcmask 883712
        %v2610 = vsel %vm2608, %v2573, 0
        %v2613 = vsel %vm2608, %v2574, 0
        %v2616 = vsel %vm2608, %v2575, 0
        %v2619 = vsel %vm2608, %v2576, 0
        %v2622 = vsel %vm2608, %v2577, 0
        %v2625 = vsel %vm2608, %v2578, 0
        %v2628 = vsel %vm2608, %v2579, 0
        %vm2630 = vcmask 1045504
        %v2632 = vsel %vm2630, %v2600, 0
        %2634 = vmatprep.subr.bf16.mxu0 0
        %2635 = vmatpush1.bf16.msra.mxu0 %v2594
        %2636 = vmatprep.subr.bf16.mxu0 0
        %2637 = vmatpush1.bf16.msra.mxu0 %v2595
        %2638 = vmatprep.subr.bf16.mxu0 0
        %2639 = vmatpush1.bf16.msra.mxu0 %v2596
        %2640 = vmatprep.subr.bf16.mxu0 0
        %2641 = vmatpush1.bf16.msra.mxu0 %v2597
        %2642 = vmatprep.subr.bf16.mxu0 0
        %2643 = vmatpush1.bf16.msra.mxu0 %v2598
        %2644 = vmatprep.subr.bf16.mxu0 0
        %2645 = vmatpush1.bf16.msra.mxu0 %v2599
        %2646 = vmatprep.subr.bf16.mxu0 0
        %2647 = vmatpush1.bf16.msra.mxu0 %v2632
        %2648 = vmatprep.subr.bf16.mxu0 0
        %2649 = vmatpush1.bf16.msra.mxu0 0
        %2650 = vmatprep.subr.bf16.mxu0 0
        %2651 = vmatpush1.bf16.msra.mxu0 0
        %2652 = vmatprep.subr.bf16.mxu0 0
        %2653 = vmatpush1.bf16.msra.mxu0 0
        %2654 = vmatprep.subr.bf16.mxu0 0
        %2655 = vmatpush1.bf16.msra.mxu0 0
        %2656 = vmatprep.subr.bf16.mxu0 0
        %2657 = vmatpush1.bf16.msra.mxu0 0
        %2658 = vmatprep.subr.bf16.mxu0 0
        %2659 = vmatpush1.bf16.msra.mxu0 0
        %2660 = vmatprep.subr.bf16.mxu0 0
        %2661 = vmatpush1.bf16.msra.mxu0 0
        %2662 = vmatprep.subr.bf16.mxu0 0
        %2663 = vmatpush1.bf16.msra.mxu0 0
        %2664 = vmatprep.subr.bf16.mxu0 0
        %2665 = vmatpush1.bf16.msra.mxu0 0
        %2666 = vmatprep.mubr.bf16.mxu0 0
        %2667 = vmatmul.mubr.bf16.gmra.mrb[0].mxu0 %v2610
        %v2668 = vpop.f32.mrb[0].mxu0
        %v2669 = vadd.f32 %v2606, %v2668
        %v2670 = vpop.f32.mrb[0].mxu0
        %v2671 = vpop.f32.mrb[0].mxu0
        %v2672 = vadd.f32 %v2606, %v2671
        %v2673 = vpop.f32.mrb[0].mxu0
        %2674 = vmatprep.mubr.bf16.mxu0 0
        %2675 = vmatmul.mubr.bf16.gmra.mrb[0].mxu0 %v2613
        %v2676 = vpop.f32.mrb[0].mxu0
        %v2677 = vadd.f32 %v2606, %v2676
        %v2678 = vpop.f32.mrb[0].mxu0
        %v2679 = vpop.f32.mrb[0].mxu0
        %v2680 = vadd.f32 %v2606, %v2679
        %v2681 = vpop.f32.mrb[0].mxu0
        %2682 = vmatprep.mubr.bf16.mxu0 0
        %2683 = vmatmul.mubr.bf16.gmra.mrb[0].mxu0 %v2616
        %v2684 = vpop.f32.mrb[0].mxu0
        %v2685 = vadd.f32 %v2606, %v2684
        %v2686 = vpop.f32.mrb[0].mxu0
        %v2687 = vpop.f32.mrb[0].mxu0
        %v2688 = vadd.f32 %v2606, %v2687
        %v2689 = vpop.f32.mrb[0].mxu0
        %2690 = vmatprep.mubr.bf16.mxu0 0
        %2691 = vmatmul.mubr.bf16.gmra.mrb[0].mxu0 %v2619
        %v2692 = vpop.f32.mrb[0].mxu0
        %v2693 = vadd.f32 %v2606, %v2692
        %v2694 = vpop.f32.mrb[0].mxu0
        %v2695 = vpop.f32.mrb[0].mxu0
        %v2696 = vadd.f32 %v2606, %v2695
        %v2697 = vpop.f32.mrb[0].mxu0
        %2698 = vmatprep.mubr.bf16.mxu0 0
        %2699 = vmatmul.mubr.bf16.gmra.mrb[0].mxu0 %v2622
        %v2700 = vpop.f32.mrb[0].mxu0
        %v2701 = vadd.f32 %v2606, %v2700
        %v2702 = vpop.f32.mrb[0].mxu0
        %v2703 = vpop.f32.mrb[0].mxu0
        %v2704 = vadd.f32 %v2606, %v2703
        %v2705 = vpop.f32.mrb[0].mxu0
        %2706 = vmatprep.mubr.bf16.mxu0 0
        %2707 = vmatmul.mubr.bf16.gmra.mrb[0].mxu0 %v2625
        %v2708 = vpop.f32.mrb[0].mxu0
        %v2709 = vadd.f32 %v2606, %v2708
        %v2710 = vpop.f32.mrb[0].mxu0
        %v2711 = vpop.f32.mrb[0].mxu0
        %v2712 = vadd.f32 %v2606, %v2711
        %v2713 = vpop.f32.mrb[0].mxu0
        %2714 = vmatprep.mubr.bf16.mxu0 0
        %2715 = vmatmul.mubr.bf16.gmra.mrb[0].mxu0 %v2628
        %v2716 = vpop.f32.mrb[0].mxu0
        %v2717 = vadd.f32 %v2606, %v2716
        %v2718 = vpop.f32.mrb[0].mxu0
        %v2719 = vpop.f32.mrb[0].mxu0
        %v2720 = vpop.f32.mrb[0].mxu0
        %2721 = vdwg.mxu0
        %v2722 = vxor.u32 %v2669, 2147483648
        %v2723 = vxor.u32 %v2672, 2147483648
        %v2724 = vxor.u32 %v2677, 2147483648
        %v2725 = vxor.u32 %v2680, 2147483648
        %v2726 = vxor.u32 %v2685, 2147483648
        %v2727 = vxor.u32 %v2688, 2147483648
        %v2728 = vxor.u32 %v2693, 2147483648
        %v2729 = vxor.u32 %v2696, 2147483648
        %v2730 = vxor.u32 %v2701, 2147483648
        %v2731 = vxor.u32 %v2704, 2147483648
        %v2732 = vxor.u32 %v2709, 2147483648
        %v2733 = vxor.u32 %v2712, 2147483648
        %v2734 = vxor.u32 %v2717, 2147483648
        %v2735 = vmul.f32 %v2722, 1.442695
        %v2736 = vpow.pop %v2735
        %v2737 = vmul.f32 %v2723, 1.442695
        %v2738 = vpow.pop %v2737
        %v2739 = vmul.f32 %v2724, 1.442695
        %v2740 = vpow.pop %v2739
        %v2741 = vmul.f32 %v2725, 1.442695
        %v2742 = vpow.pop %v2741
        %v2743 = vmul.f32 %v2726, 1.442695
        %v2744 = vpow.pop %v2743
        %v2745 = vmul.f32 %v2727, 1.442695
        %v2746 = vpow.pop %v2745
        %v2747 = vmul.f32 %v2728, 1.442695
        %v2748 = vpow.pop %v2747
        %v2749 = vmul.f32 %v2729, 1.442695
        %v2750 = vpow.pop %v2749
        %v2751 = vmul.f32 %v2730, 1.442695
        %v2752 = vpow.pop %v2751
        %v2753 = vmul.f32 %v2731, 1.442695
        %v2754 = vpow.pop %v2753
        %v2755 = vmul.f32 %v2732, 1.442695
        %v2756 = vpow.pop %v2755
        %v2757 = vmul.f32 %v2733, 1.442695
        %v2758 = vpow.pop %v2757
        %v2759 = vmul.f32 %v2734, 1.442695
        %v2760 = vpow.pop %v2759
        %v2761 = vadd.f32 %v2736, 1.0
        %v2762 = vadd.f32 %v2738, 1.0
        %v2763 = vadd.f32 %v2740, 1.0
        %v2764 = vadd.f32 %v2742, 1.0
        %v2765 = vadd.f32 %v2744, 1.0
        %v2766 = vadd.f32 %v2746, 1.0
        %v2767 = vadd.f32 %v2748, 1.0
        %v2768 = vadd.f32 %v2750, 1.0
        %v2769 = vadd.f32 %v2752, 1.0
        %v2770 = vadd.f32 %v2754, 1.0
        %v2771 = vadd.f32 %v2756, 1.0
        %v2772 = vadd.f32 %v2758, 1.0
        %v2773 = vadd.f32 %v2760, 1.0
        %v2774 = vrcp.pop %v2761
        %v2775 = vmul.f32 1.0, %v2774
        %v2776 = vrcp.pop %v2762
        %v2777 = vmul.f32 1.0, %v2776
        %v2778 = vrcp.pop %v2763
        %v2779 = vmul.f32 1.0, %v2778
        %v2780 = vrcp.pop %v2764
        %v2781 = vmul.f32 1.0, %v2780
        %v2782 = vrcp.pop %v2765
        %v2783 = vmul.f32 1.0, %v2782
        %v2784 = vrcp.pop %v2766
        %v2785 = vmul.f32 1.0, %v2784
        %v2786 = vrcp.pop %v2767
        %v2787 = vmul.f32 1.0, %v2786
        %v2788 = vrcp.pop %v2768
        %v2789 = vmul.f32 1.0, %v2788
        %v2790 = vrcp.pop %v2769
        %v2791 = vmul.f32 1.0, %v2790
        %v2792 = vrcp.pop %v2770
        %v2793 = vmul.f32 1.0, %v2792
        %v2794 = vrcp.pop %v2771
        %v2795 = vmul.f32 1.0, %v2794
        %v2796 = vrcp.pop %v2772
        %v2797 = vmul.f32 1.0, %v2796
        %v2798 = vrcp.pop %v2773
        %v2799 = vmul.f32 1.0, %v2798
        %v2800 = vtanh.pop %v2669
        %v2801 = vtanh.pop %v2672
        %v2802 = vtanh.pop %v2677
        %v2803 = vtanh.pop %v2680
        %v2804 = vtanh.pop %v2685
        %v2805 = vtanh.pop %v2688
        %v2806 = vtanh.pop %v2693
        %v2807 = vtanh.pop %v2696
        %v2808 = vtanh.pop %v2701
        %v2809 = vtanh.pop %v2704
        %v2810 = vtanh.pop %v2709
        %v2811 = vtanh.pop %v2712
        %v2812 = vtanh.pop %v2717
        %v2813 = vld [vmem:[%s1229] sm:$0xff]
        %v2814 = vld [vmem:[%s1229 + $0x8] sm:$0xff]
        %v2815 = vld [vmem:[%s1229 + $0x10] sm:$0xff]
        %v2816 = vld [vmem:[%s1229 + $0x18] sm:$0xff]
        %v2817 = vld [vmem:[%s1229 + $0x20] sm:$0xff]
        %v2818 = vld [vmem:[%s1229 + $0x28] sm:$0xff]
        %v2819 = vld [vmem:[%s1229 + $0x30] sm:$0xff]
        %v2820 = vld [vmem:[%s1229 + $0x38] sm:$0xff]
        %v2821 = vld [vmem:[%s1229 + $0x40] sm:$0xff]
        %v2822 = vld [vmem:[%s1229 + $0x48] sm:$0xff]
        %v2823 = vld [vmem:[%s1229 + $0x50] sm:$0xff]
        %v2824 = vld [vmem:[%s1229 + $0x58] sm:$0xff]
        %v2825 = vld [vmem:[%s1229 + $0x60] sm:$0xf]
        %2839 = vrot.lane.b32.xlu0 %v2813, 8
        %v2840 = vpop.permute.xlu0 %2839
        %2841 = vrot.lane.b32.xlu0 %v2814, 8
        %v2842 = vpop.permute.xlu0 %2841
        %2843 = vrot.lane.b32.xlu0 %v2815, 8
        %v2844 = vpop.permute.xlu0 %2843
        %2845 = vrot.lane.b32.xlu0 %v2816, 8
        %v2846 = vpop.permute.xlu0 %2845
        %2847 = vrot.lane.b32.xlu0 %v2817, 8
        %v2848 = vpop.permute.xlu0 %2847
        %2849 = vrot.lane.b32.xlu0 %v2818, 8
        %v2850 = vpop.permute.xlu0 %2849
        %2851 = vrot.lane.b32.xlu0 %v2819, 8
        %v2852 = vpop.permute.xlu0 %2851
        %2853 = vrot.lane.b32.xlu0 %v2820, 8
        %v2854 = vpop.permute.xlu0 %2853
        %2855 = vrot.lane.b32.xlu0 %v2821, 8
        %v2856 = vpop.permute.xlu0 %2855
        %2857 = vrot.lane.b32.xlu0 %v2822, 8
        %v2858 = vpop.permute.xlu0 %2857
        %2859 = vrot.lane.b32.xlu0 %v2823, 8
        %v2860 = vpop.permute.xlu0 %2859
        %2861 = vrot.lane.b32.xlu0 %v2824, 8
        %v2862 = vpop.permute.xlu0 %2861
        %2863 = vrot.lane.b32.xlu0 %v2825, 8
        %v2864 = vpop.permute.xlu0 %2863
        %v2878 = vmul.f32 %v2775, %v2840
        %v2879 = vmul.f32 %v2777, %v2842
        %v2880 = vmul.f32 %v2779, %v2844
        %v2881 = vmul.f32 %v2781, %v2846
        %v2882 = vmul.f32 %v2783, %v2848
        %v2883 = vmul.f32 %v2785, %v2850
        %v2884 = vmul.f32 %v2787, %v2852
        %v2885 = vmul.f32 %v2789, %v2854
        %v2886 = vmul.f32 %v2791, %v2856
        %v2887 = vmul.f32 %v2793, %v2858
        %v2888 = vmul.f32 %v2795, %v2860
        %v2889 = vmul.f32 %v2797, %v2862
        %v2890 = vmul.f32 %v2799, %v2864
        %2904 = vrot.lane.b32.xlu0 %v2800, 112
        %v2905 = vpop.permute.xlu0 %2904
        %2906 = vrot.lane.b32.xlu0 %v2801, 112
        %v2907 = vpop.permute.xlu0 %2906
        %2908 = vrot.lane.b32.xlu0 %v2802, 112
        %v2909 = vpop.permute.xlu0 %2908
        %2910 = vrot.lane.b32.xlu0 %v2803, 112
        %v2911 = vpop.permute.xlu0 %2910
        %2912 = vrot.lane.b32.xlu0 %v2804, 112
        %v2913 = vpop.permute.xlu0 %2912
        %2914 = vrot.lane.b32.xlu0 %v2805, 112
        %v2915 = vpop.permute.xlu0 %2914
        %2916 = vrot.lane.b32.xlu0 %v2806, 112
        %v2917 = vpop.permute.xlu0 %2916
        %2918 = vrot.lane.b32.xlu0 %v2807, 112
        %v2919 = vpop.permute.xlu0 %2918
        %2920 = vrot.lane.b32.xlu0 %v2808, 112
        %v2921 = vpop.permute.xlu0 %2920
        %2922 = vrot.lane.b32.xlu0 %v2809, 112
        %v2923 = vpop.permute.xlu0 %2922
        %2924 = vrot.lane.b32.xlu0 %v2810, 112
        %v2925 = vpop.permute.xlu0 %2924
        %2926 = vrot.lane.b32.xlu0 %v2811, 112
        %v2927 = vpop.permute.xlu0 %2926
        %2928 = vrot.lane.b32.xlu0 %v2812, 112
        %v2929 = vpop.permute.xlu0 %2928
        %v2943 = vmul.f32 %v2775, %v2905
        %v2944 = vmul.f32 %v2777, %v2907
        %v2945 = vmul.f32 %v2779, %v2909
        %v2946 = vmul.f32 %v2781, %v2911
        %v2947 = vmul.f32 %v2783, %v2913
        %v2948 = vmul.f32 %v2785, %v2915
        %v2949 = vmul.f32 %v2787, %v2917
        %v2950 = vmul.f32 %v2789, %v2919
        %v2951 = vmul.f32 %v2791, %v2921
        %v2952 = vmul.f32 %v2793, %v2923
        %v2953 = vmul.f32 %v2795, %v2925
        %v2954 = vmul.f32 %v2797, %v2927
        %v2955 = vmul.f32 %v2799, %v2929
        %2969 = vrot.lane.b32.xlu0 %v2943, 8
        %v2970 = vpop.permute.xlu0 %2969
        %2971 = vrot.lane.b32.xlu0 %v2944, 8
        %v2972 = vpop.permute.xlu0 %2971
        %2973 = vrot.lane.b32.xlu0 %v2945, 8
        %v2974 = vpop.permute.xlu0 %2973
        %2975 = vrot.lane.b32.xlu0 %v2946, 8
        %v2976 = vpop.permute.xlu0 %2975
        %2977 = vrot.lane.b32.xlu0 %v2947, 8
        %v2978 = vpop.permute.xlu0 %2977
        %2979 = vrot.lane.b32.xlu0 %v2948, 8
        %v2980 = vpop.permute.xlu0 %2979
        %2981 = vrot.lane.b32.xlu0 %v2949, 8
        %v2982 = vpop.permute.xlu0 %2981
        %2983 = vrot.lane.b32.xlu0 %v2950, 8
        %v2984 = vpop.permute.xlu0 %2983
        %2985 = vrot.lane.b32.xlu0 %v2951, 8
        %v2986 = vpop.permute.xlu0 %2985
        %2987 = vrot.lane.b32.xlu0 %v2952, 8
        %v2988 = vpop.permute.xlu0 %2987
        %2989 = vrot.lane.b32.xlu0 %v2953, 8
        %v2990 = vpop.permute.xlu0 %2989
        %2991 = vrot.lane.b32.xlu0 %v2954, 8
        %v2992 = vpop.permute.xlu0 %2991
        %2993 = vrot.lane.b32.xlu0 %v2955, 8
        %v2994 = vpop.permute.xlu0 %2993
        %v3008 = vadd.f32 %v2878, %v2970
        %v3009 = vadd.f32 %v2879, %v2972
        %v3010 = vadd.f32 %v2880, %v2974
        %v3011 = vadd.f32 %v2881, %v2976
        %v3012 = vadd.f32 %v2882, %v2978
        %v3013 = vadd.f32 %v2883, %v2980
        %v3014 = vadd.f32 %v2884, %v2982
        %v3015 = vadd.f32 %v2885, %v2984
        %v3016 = vadd.f32 %v2886, %v2986
        %v3017 = vadd.f32 %v2887, %v2988
        %v3018 = vadd.f32 %v2888, %v2990
        %v3019 = vadd.f32 %v2889, %v2992
        %v3020 = vadd.f32 %v2890, %v2994
        %v3021 = vtanh.pop %v3008
        %v3022 = vtanh.pop %v3009
        %v3023 = vtanh.pop %v3010
        %v3024 = vtanh.pop %v3011
        %v3025 = vtanh.pop %v3012
        %v3026 = vtanh.pop %v3013
        %v3027 = vtanh.pop %v3014
        %v3028 = vtanh.pop %v3015
        %v3029 = vtanh.pop %v3016
        %v3030 = vtanh.pop %v3017
        %v3031 = vtanh.pop %v3018
        %v3032 = vtanh.pop %v3019
        %v3033 = vtanh.pop %v3020
        %3047 = vrot.lane.b32.xlu0 %v3021, 16
        %v3048 = vpop.permute.xlu0 %3047
        %3049 = vrot.lane.b32.xlu0 %v3022, 16
        %v3050 = vpop.permute.xlu0 %3049
        %3051 = vrot.lane.b32.xlu0 %v3023, 16
        %v3052 = vpop.permute.xlu0 %3051
        %3053 = vrot.lane.b32.xlu0 %v3024, 16
        %v3054 = vpop.permute.xlu0 %3053
        %3055 = vrot.lane.b32.xlu0 %v3025, 16
        %v3056 = vpop.permute.xlu0 %3055
        %3057 = vrot.lane.b32.xlu0 %v3026, 16
        %v3058 = vpop.permute.xlu0 %3057
        %3059 = vrot.lane.b32.xlu0 %v3027, 16
        %v3060 = vpop.permute.xlu0 %3059
        %3061 = vrot.lane.b32.xlu0 %v3028, 16
        %v3062 = vpop.permute.xlu0 %3061
        %3063 = vrot.lane.b32.xlu0 %v3029, 16
        %v3064 = vpop.permute.xlu0 %3063
        %3065 = vrot.lane.b32.xlu0 %v3030, 16
        %v3066 = vpop.permute.xlu0 %3065
        %3067 = vrot.lane.b32.xlu0 %v3031, 16
        %v3068 = vpop.permute.xlu0 %3067
        %3069 = vrot.lane.b32.xlu0 %v3032, 16
        %v3070 = vpop.permute.xlu0 %3069
        %3071 = vrot.lane.b32.xlu0 %v3033, 16
        %v3072 = vpop.permute.xlu0 %3071
        %v3086 = vmul.f32 %v2775, %v3048
        %v3087 = vmul.f32 %v2777, %v3050
        %v3088 = vmul.f32 %v2779, %v3052
        %v3089 = vmul.f32 %v2781, %v3054
        %v3090 = vmul.f32 %v2783, %v3056
        %v3091 = vmul.f32 %v2785, %v3058
        %v3092 = vmul.f32 %v2787, %v3060
        %v3093 = vmul.f32 %v2789, %v3062
        %v3094 = vmul.f32 %v2791, %v3064
        %v3095 = vmul.f32 %v2793, %v3066
        %v3096 = vmul.f32 %v2795, %v3068
        %v3097 = vmul.f32 %v2797, %v3070
        %v3098 = vmul.f32 %v2799, %v3072
        %v3099 = vsel %vm1293, 1, 0
        %v3100 = vsel %vm1294, 1, 0
        %v3101 = vsel %vm1295, 1, 0
        %v3102 = vsel %vm1296, 1, 0
        %v3103 = vsel %vm1297, 1, 0
        %v3104 = vsel %vm1298, 1, 0
        %v3105 = vsel %vm1299, 1, 0
        %v3106 = vsel %vm1300, 1, 0
        %v3107 = vsel %vm1301, 1, 0
        %v3108 = vsel %vm1302, 1, 0
        %v3109 = vsel %vm1303, 1, 0
        %v3110 = vsel %vm1304, 1, 0
        %v3111 = vsel %vm1305, 1, 0
        %3112 = vset.pattern.permute.xlu0 0
        %3113 = vperm.xlu0 %3112, %v3099
        %v3114 = vpop.permute.xlu0 %3113
        %3115 = vset.pattern.permute.xlu0 0
        %3116 = vperm.xlu0 %3115, %v3100
        %v3117 = vpop.permute.xlu0 %3116
        %3118 = vset.pattern.permute.xlu0 0
        %3119 = vperm.xlu0 %3118, %v3101
        %v3120 = vpop.permute.xlu0 %3119
        %3121 = vset.pattern.permute.xlu0 0
        %3122 = vperm.xlu0 %3121, %v3102
        %v3123 = vpop.permute.xlu0 %3122
        %3124 = vset.pattern.permute.xlu0 0
        %3125 = vperm.xlu0 %3124, %v3103
        %v3126 = vpop.permute.xlu0 %3125
        %3127 = vset.pattern.permute.xlu0 0
        %3128 = vperm.xlu0 %3127, %v3104
        %v3129 = vpop.permute.xlu0 %3128
        %3130 = vset.pattern.permute.xlu0 0
        %3131 = vperm.xlu0 %3130, %v3105
        %v3132 = vpop.permute.xlu0 %3131
        %3133 = vset.pattern.permute.xlu0 0
        %3134 = vperm.xlu0 %3133, %v3106
        %v3135 = vpop.permute.xlu0 %3134
        %3136 = vset.pattern.permute.xlu0 0
        %3137 = vperm.xlu0 %3136, %v3107
        %v3138 = vpop.permute.xlu0 %3137
        %3139 = vset.pattern.permute.xlu0 0
        %3140 = vperm.xlu0 %3139, %v3108
        %v3141 = vpop.permute.xlu0 %3140
        %3142 = vset.pattern.permute.xlu0 0
        %3143 = vperm.xlu0 %3142, %v3109
        %v3144 = vpop.permute.xlu0 %3143
        %3145 = vset.pattern.permute.xlu0 0
        %3146 = vperm.xlu0 %3145, %v3110
        %v3147 = vpop.permute.xlu0 %3146
        %3148 = vset.pattern.permute.xlu0 0
        %3149 = vperm.xlu0 %3148, %v3111
        %v3150 = vpop.permute.xlu0 %3149
        %vm3151 = vcmp.eq.s32.totalorder %v3114, 1
        %vm3152 = vcmp.eq.s32.totalorder %v3117, 1
        %vm3153 = vcmp.eq.s32.totalorder %v3120, 1
        %vm3154 = vcmp.eq.s32.totalorder %v3123, 1
        %vm3155 = vcmp.eq.s32.totalorder %v3126, 1
        %vm3156 = vcmp.eq.s32.totalorder %v3129, 1
        %vm3157 = vcmp.eq.s32.totalorder %v3132, 1
        %vm3158 = vcmp.eq.s32.totalorder %v3135, 1
        %vm3159 = vcmp.eq.s32.totalorder %v3138, 1
        %vm3160 = vcmp.eq.s32.totalorder %v3141, 1
        %vm3161 = vcmp.eq.s32.totalorder %v3144, 1
        %vm3162 = vcmp.eq.s32.totalorder %v3147, 1
        %vm3163 = vcmp.eq.s32.totalorder %v3150, 1
        %v3164 = vsel %vm3151, %v3086, 0.0
        %v3165 = vsel %vm3152, %v3087, 0.0
        %v3166 = vsel %vm3153, %v3088, 0.0
        %v3167 = vsel %vm3154, %v3089, 0.0
        %v3168 = vsel %vm3155, %v3090, 0.0
        %v3169 = vsel %vm3156, %v3091, 0.0
        %v3170 = vsel %vm3157, %v3092, 0.0
        %v3171 = vsel %vm3158, %v3093, 0.0
        %v3172 = vsel %vm3159, %v3094, 0.0
        %v3173 = vsel %vm3160, %v3095, 0.0
        %v3174 = vsel %vm3161, %v3096, 0.0
        %v3175 = vsel %vm3162, %v3097, 0.0
        %v3176 = vsel %vm3163, %v3098, 0.0
        %v3177 = vsel %vm3151, %v3008, 0.0
        %v3178 = vsel %vm3152, %v3009, 0.0
        %v3179 = vsel %vm3153, %v3010, 0.0
        %v3180 = vsel %vm3154, %v3011, 0.0
        %v3181 = vsel %vm3155, %v3012, 0.0
        %v3182 = vsel %vm3156, %v3013, 0.0
        %v3183 = vsel %vm3157, %v3014, 0.0
        %v3184 = vsel %vm3158, %v3015, 0.0
        %v3185 = vsel %vm3159, %v3016, 0.0
        %v3186 = vsel %vm3160, %v3017, 0.0
        %v3187 = vsel %vm3161, %v3018, 0.0
        %v3188 = vsel %vm3162, %v3019, 0.0
        %v3189 = vsel %vm3163, %v3020, 0.0
        %3190 = vst.msk [vmem:[#allocation2] sm:$0xff] %vm2246, 0.0
        %3191 = vst.msk [vmem:[#allocation2 + $0x8] sm:$0xff] %vm2246, 0.0
        %3192 = vst.msk [vmem:[#allocation2 + $0x74] sm:$0xff] %vm2246, 0.0
        %vm3193 = vcmask 60416
        %3194 = vst.msk [vmem:[#allocation2 + $0x7c] sm:$0xf] %vm3193, 0.0
        %3208 = vrot.lane.b32.xlu0 %v3164, 104
        %v3209 = vpop.permute.xlu0 %3208
        %3210 = vrot.lane.b32.xlu0 %v3165, 104
        %v3211 = vpop.permute.xlu0 %3210
        %3212 = vrot.lane.b32.xlu0 %v3166, 104
        %v3213 = vpop.permute.xlu0 %3212
        %3214 = vrot.lane.b32.xlu0 %v3167, 104
        %v3215 = vpop.permute.xlu0 %3214
        %3216 = vrot.lane.b32.xlu0 %v3168, 104
        %v3217 = vpop.permute.xlu0 %3216
        %3218 = vrot.lane.b32.xlu0 %v3169, 104
        %v3219 = vpop.permute.xlu0 %3218
        %3220 = vrot.lane.b32.xlu0 %v3170, 104
        %v3221 = vpop.permute.xlu0 %3220
        %3222 = vrot.lane.b32.xlu0 %v3171, 104
        %v3223 = vpop.permute.xlu0 %3222
        %3224 = vrot.lane.b32.xlu0 %v3172, 104
        %v3225 = vpop.permute.xlu0 %3224
        %3226 = vrot.lane.b32.xlu0 %v3173, 104
        %v3227 = vpop.permute.xlu0 %3226
        %3228 = vrot.lane.b32.xlu0 %v3174, 104
        %v3229 = vpop.permute.xlu0 %3228
        %3230 = vrot.lane.b32.xlu0 %v3175, 104
        %v3231 = vpop.permute.xlu0 %3230
        %3232 = vrot.lane.b32.xlu0 %v3176, 104
        %v3233 = vpop.permute.xlu0 %3232
        %3247 = vst.msk [vmem:[#allocation2 + $0x10] sm:$0xff] %vm2246, %v3209
        %3248 = vst.msk [vmem:[#allocation2 + $0x18] sm:$0xff] %vm2246, %v3211
        %3249 = vst.msk [vmem:[#allocation2 + $0x20] sm:$0xff] %vm2246, %v3213
        %3250 = vst.msk [vmem:[#allocation2 + $0x28] sm:$0xff] %vm2246, %v3215
        %3251 = vst.msk [vmem:[#allocation2 + $0x30] sm:$0xff] %vm2246, %v3217
        %3252 = vst.msk [vmem:[#allocation2 + $0x38] sm:$0xff] %vm2246, %v3219
        %3253 = vst.msk [vmem:[#allocation2 + $0x40] sm:$0xff] %vm2246, %v3221
        %3254 = vst.msk [vmem:[#allocation2 + $0x48] sm:$0xff] %vm2246, %v3223
        %3255 = vst.msk [vmem:[#allocation2 + $0x50] sm:$0xff] %vm2246, %v3225
        %3256 = vst.msk [vmem:[#allocation2 + $0x58] sm:$0xff] %vm2246, %v3227
        %3257 = vst.msk [vmem:[#allocation2 + $0x60] sm:$0xff] %vm2246, %v3229
        %3258 = vst.msk [vmem:[#allocation2 + $0x68] sm:$0xff] %vm2246, %v3231
        %3259 = vst.msk [vmem:[#allocation2 + $0x70] sm:$0xf] %vm3193, %v3233
        %v3260 = vld [vmem:[#allocation2 + $0x5] sm:$0xff]
        %v3261 = vld [vmem:[#allocation2 + $0xd] sm:$0xff]
        %v3262 = vld [vmem:[#allocation2 + $0x15] sm:$0xff]
        %v3263 = vld [vmem:[#allocation2 + $0x1d] sm:$0xff]
        %v3264 = vld [vmem:[#allocation2 + $0x25] sm:$0xff]
        %v3265 = vld [vmem:[#allocation2 + $0x2d] sm:$0xff]
        %v3266 = vld [vmem:[#allocation2 + $0x35] sm:$0xff]
        %v3267 = vld [vmem:[#allocation2 + $0x3d] sm:$0xff]
        %v3268 = vld [vmem:[#allocation2 + $0x45] sm:$0xff]
        %v3269 = vld [vmem:[#allocation2 + $0x4d] sm:$0xff]
        %v3270 = vld [vmem:[#allocation2 + $0x55] sm:$0xff]
        %v3271 = vld [vmem:[#allocation2 + $0x5d] sm:$0xff]
        %v3272 = vld [vmem:[#allocation2 + $0x65] sm:$0xf]
        %v3273 = vld [vmem:[#allocation2 + $0x6] sm:$0xff]
        %v3274 = vld [vmem:[#allocation2 + $0xe] sm:$0xff]
        %v3275 = vld [vmem:[#allocation2 + $0x16] sm:$0xff]
        %v3276 = vld [vmem:[#allocation2 + $0x1e] sm:$0xff]
        %v3277 = vld [vmem:[#allocation2 + $0x26] sm:$0xff]
        %v3278 = vld [vmem:[#allocation2 + $0x2e] sm:$0xff]
        %v3279 = vld [vmem:[#allocation2 + $0x36] sm:$0xff]
        %v3280 = vld [vmem:[#allocation2 + $0x3e] sm:$0xff]
        %v3281 = vld [vmem:[#allocation2 + $0x46] sm:$0xff]
        %v3282 = vld [vmem:[#allocation2 + $0x4e] sm:$0xff]
        %v3283 = vld [vmem:[#allocation2 + $0x56] sm:$0xff]
        %v3284 = vld [vmem:[#allocation2 + $0x5e] sm:$0xff]
        %v3285 = vld [vmem:[#allocation2 + $0x66] sm:$0xf]
        %v3286 = vld [vmem:[#allocation2 + $0x7] sm:$0xff]
        %v3287 = vld [vmem:[#allocation2 + $0xf] sm:$0xff]
        %v3288 = vld [vmem:[#allocation2 + $0x17] sm:$0xff]
        %v3289 = vld [vmem:[#allocation2 + $0x1f] sm:$0xff]
        %v3290 = vld [vmem:[#allocation2 + $0x27] sm:$0xff]
        %v3291 = vld [vmem:[#allocation2 + $0x2f] sm:$0xff]
        %v3292 = vld [vmem:[#allocation2 + $0x37] sm:$0xff]
        %v3293 = vld [vmem:[#allocation2 + $0x3f] sm:$0xff]
        %v3294 = vld [vmem:[#allocation2 + $0x47] sm:$0xff]
        %v3295 = vld [vmem:[#allocation2 + $0x4f] sm:$0xff]
        %v3296 = vld [vmem:[#allocation2 + $0x57] sm:$0xff]
        %v3297 = vld [vmem:[#allocation2 + $0x5f] sm:$0xff]
        %v3298 = vld [vmem:[#allocation2 + $0x67] sm:$0xf]
        %v3299 = vld [vmem:[#allocation2 + $0x67] sm:$0xff]
        %v3300 = vld [vmem:[#allocation2 + $0x6f] sm:$0xf]
        %v3301 = vld [vmem:[#allocation2 + $0x10] sm:$0xff]
        %v3302 = vld [vmem:[#allocation2 + $0x18] sm:$0xff]
        %v3303 = vld [vmem:[#allocation2 + $0x20] sm:$0xff]
        %v3304 = vld [vmem:[#allocation2 + $0x28] sm:$0xff]
        %v3305 = vld [vmem:[#allocation2 + $0x30] sm:$0xff]
        %v3306 = vld [vmem:[#allocation2 + $0x38] sm:$0xff]
        %v3307 = vld [vmem:[#allocation2 + $0x40] sm:$0xff]
        %v3308 = vld [vmem:[#allocation2 + $0x48] sm:$0xff]
        %v3309 = vld [vmem:[#allocation2 + $0x50] sm:$0xff]
        %v3310 = vld [vmem:[#allocation2 + $0x58] sm:$0xff]
        %v3311 = vld [vmem:[#allocation2 + $0x60] sm:$0xff]
        %v3312 = vld [vmem:[#allocation2 + $0x68] sm:$0xff]
        %v3313 = vld [vmem:[#allocation2 + $0x70] sm:$0xf]
        %v3314 = vld [vmem:[#allocation2 + $0x11] sm:$0xff]
        %v3315 = vld [vmem:[#allocation2 + $0x19] sm:$0xff]
        %v3316 = vld [vmem:[#allocation2 + $0x21] sm:$0xff]
        %v3317 = vld [vmem:[#allocation2 + $0x29] sm:$0xff]
        %v3318 = vld [vmem:[#allocation2 + $0x31] sm:$0xff]
        %v3319 = vld [vmem:[#allocation2 + $0x39] sm:$0xff]
        %v3320 = vld [vmem:[#allocation2 + $0x41] sm:$0xff]
        %v3321 = vld [vmem:[#allocation2 + $0x49] sm:$0xff]
        %v3322 = vld [vmem:[#allocation2 + $0x51] sm:$0xff]
        %v3323 = vld [vmem:[#allocation2 + $0x59] sm:$0xff]
        %v3324 = vld [vmem:[#allocation2 + $0x61] sm:$0xff]
        %v3325 = vld [vmem:[#allocation2 + $0x69] sm:$0xff]
        %v3326 = vld [vmem:[#allocation2 + $0x71] sm:$0xf]
        %v3327 = vld [vmem:[#allocation2 + $0x71] sm:$0xff]
        %v3328 = vld [vmem:[#allocation2 + $0x79] sm:$0xf]
        %v3329 = vld [vmem:[#allocation2 + $0x1a] sm:$0xff]
        %v3330 = vld [vmem:[#allocation2 + $0x22] sm:$0xff]
        %v3331 = vld [vmem:[#allocation2 + $0x2a] sm:$0xff]
        %v3332 = vld [vmem:[#allocation2 + $0x32] sm:$0xff]
        %v3333 = vld [vmem:[#allocation2 + $0x3a] sm:$0xff]
        %v3334 = vld [vmem:[#allocation2 + $0x42] sm:$0xff]
        %v3335 = vld [vmem:[#allocation2 + $0x4a] sm:$0xff]
        %v3336 = vld [vmem:[#allocation2 + $0x52] sm:$0xff]
        %v3337 = vld [vmem:[#allocation2 + $0x5a] sm:$0xff]
        %v3338 = vld [vmem:[#allocation2 + $0x62] sm:$0xff]
        %v3339 = vld [vmem:[#allocation2 + $0x6a] sm:$0xff]
        %v3340 = vld [vmem:[#allocation2 + $0x72] sm:$0xff]
        %v3341 = vld [vmem:[#allocation2 + $0x7a] sm:$0xf]
        %v3342 = vld [vmem:[#allocation2 + $0x1b] sm:$0xff]
        %v3343 = vld [vmem:[#allocation2 + $0x23] sm:$0xff]
        %v3344 = vld [vmem:[#allocation2 + $0x2b] sm:$0xff]
        %v3345 = vld [vmem:[#allocation2 + $0x33] sm:$0xff]
        %v3346 = vld [vmem:[#allocation2 + $0x3b] sm:$0xff]
        %v3347 = vld [vmem:[#allocation2 + $0x43] sm:$0xff]
        %v3348 = vld [vmem:[#allocation2 + $0x4b] sm:$0xff]
        %v3349 = vld [vmem:[#allocation2 + $0x53] sm:$0xff]
        %v3350 = vld [vmem:[#allocation2 + $0x5b] sm:$0xff]
        %v3351 = vld [vmem:[#allocation2 + $0x63] sm:$0xff]
        %v3352 = vld [vmem:[#allocation2 + $0x6b] sm:$0xff]
        %v3353 = vld [vmem:[#allocation2 + $0x73] sm:$0xff]
        %v3354 = vld [vmem:[#allocation2 + $0x7b] sm:$0xf]
        %v3355 = vld [vmem:[%s1234 + $0x5] sm:$0xff]
        %v3356 = vld [vmem:[%s1234 + $0xd] sm:$0xff]
        %v3357 = vld [vmem:[%s1234 + $0x15] sm:$0xff]
        %v3358 = vld [vmem:[%s1234 + $0x1d] sm:$0xff]
        %v3359 = vld [vmem:[%s1234 + $0x25] sm:$0xff]
        %v3360 = vld [vmem:[%s1234 + $0x2d] sm:$0xff]
        %v3361 = vld [vmem:[%s1234 + $0x35] sm:$0xff]
        %v3362 = vld [vmem:[%s1234 + $0x3d] sm:$0xff]
        %v3363 = vld [vmem:[%s1234 + $0x45] sm:$0xff]
        %v3364 = vld [vmem:[%s1234 + $0x4d] sm:$0xff]
        %v3365 = vld [vmem:[%s1234 + $0x55] sm:$0xff]
        %v3366 = vld [vmem:[%s1234 + $0x5d] sm:$0xff]
        %v3367 = vld [vmem:[%s1234 + $0x65] sm:$0xf]
        %v3368 = vld [vmem:[%s1234 + $0x6] sm:$0xff]
        %v3369 = vld [vmem:[%s1234 + $0xe] sm:$0xff]
        %v3370 = vld [vmem:[%s1234 + $0x16] sm:$0xff]
        %v3371 = vld [vmem:[%s1234 + $0x1e] sm:$0xff]
        %v3372 = vld [vmem:[%s1234 + $0x26] sm:$0xff]
        %v3373 = vld [vmem:[%s1234 + $0x2e] sm:$0xff]
        %v3374 = vld [vmem:[%s1234 + $0x36] sm:$0xff]
        %v3375 = vld [vmem:[%s1234 + $0x3e] sm:$0xff]
        %v3376 = vld [vmem:[%s1234 + $0x46] sm:$0xff]
        %v3377 = vld [vmem:[%s1234 + $0x4e] sm:$0xff]
        %v3378 = vld [vmem:[%s1234 + $0x56] sm:$0xff]
        %v3379 = vld [vmem:[%s1234 + $0x5e] sm:$0xff]
        %v3380 = vld [vmem:[%s1234 + $0x66] sm:$0xf]
        %v3381 = vld [vmem:[%s1234 + $0x7] sm:$0xff]
        %v3382 = vld [vmem:[%s1234 + $0xf] sm:$0xff]
        %v3383 = vld [vmem:[%s1234 + $0x17] sm:$0xff]
        %v3384 = vld [vmem:[%s1234 + $0x1f] sm:$0xff]
        %v3385 = vld [vmem:[%s1234 + $0x27] sm:$0xff]
        %v3386 = vld [vmem:[%s1234 + $0x2f] sm:$0xff]
        %v3387 = vld [vmem:[%s1234 + $0x37] sm:$0xff]
        %v3388 = vld [vmem:[%s1234 + $0x3f] sm:$0xff]
        %v3389 = vld [vmem:[%s1234 + $0x47] sm:$0xff]
        %v3390 = vld [vmem:[%s1234 + $0x4f] sm:$0xff]
        %v3391 = vld [vmem:[%s1234 + $0x57] sm:$0xff]
        %v3392 = vld [vmem:[%s1234 + $0x5f] sm:$0xff]
        %v3393 = vld [vmem:[%s1234 + $0x67] sm:$0xf]
        %v3394 = vld [vmem:[%s1234 + $0x67] sm:$0xff]
        %v3395 = vld [vmem:[%s1234 + $0x6f] sm:$0xf]
        %v3396 = vld [vmem:[%s1234 + $0x10] sm:$0xff]
        %v3397 = vld [vmem:[%s1234 + $0x18] sm:$0xff]
        %v3398 = vld [vmem:[%s1234 + $0x20] sm:$0xff]
        %v3399 = vld [vmem:[%s1234 + $0x28] sm:$0xff]
        %v3400 = vld [vmem:[%s1234 + $0x30] sm:$0xff]
        %v3401 = vld [vmem:[%s1234 + $0x38] sm:$0xff]
        %v3402 = vld [vmem:[%s1234 + $0x40] sm:$0xff]
        %v3403 = vld [vmem:[%s1234 + $0x48] sm:$0xff]
        %v3404 = vld [vmem:[%s1234 + $0x50] sm:$0xff]
        %v3405 = vld [vmem:[%s1234 + $0x58] sm:$0xff]
        %v3406 = vld [vmem:[%s1234 + $0x60] sm:$0xff]
        %v3407 = vld [vmem:[%s1234 + $0x68] sm:$0xff]
        %v3408 = vld [vmem:[%s1234 + $0x70] sm:$0xf]
        %v3409 = vld [vmem:[%s1234 + $0x11] sm:$0xff]
        %v3410 = vld [vmem:[%s1234 + $0x19] sm:$0xff]
        %v3411 = vld [vmem:[%s1234 + $0x21] sm:$0xff]
        %v3412 = vld [vmem:[%s1234 + $0x29] sm:$0xff]
        %v3413 = vld [vmem:[%s1234 + $0x31] sm:$0xff]
        %v3414 = vld [vmem:[%s1234 + $0x39] sm:$0xff]
        %v3415 = vld [vmem:[%s1234 + $0x41] sm:$0xff]
        %v3416 = vld [vmem:[%s1234 + $0x49] sm:$0xff]
        %v3417 = vld [vmem:[%s1234 + $0x51] sm:$0xff]
        %v3418 = vld [vmem:[%s1234 + $0x59] sm:$0xff]
        %v3419 = vld [vmem:[%s1234 + $0x61] sm:$0xff]
        %v3420 = vld [vmem:[%s1234 + $0x69] sm:$0xff]
        %v3421 = vld [vmem:[%s1234 + $0x71] sm:$0xf]
        %v3422 = vld [vmem:[%s1234 + $0x71] sm:$0xff]
        %v3423 = vld [vmem:[%s1234 + $0x79] sm:$0xf]
        %v3424 = vld [vmem:[%s1234 + $0x1a] sm:$0xff]
        %v3425 = vld [vmem:[%s1234 + $0x22] sm:$0xff]
        %v3426 = vld [vmem:[%s1234 + $0x2a] sm:$0xff]
        %v3427 = vld [vmem:[%s1234 + $0x32] sm:$0xff]
        %v3428 = vld [vmem:[%s1234 + $0x3a] sm:$0xff]
        %v3429 = vld [vmem:[%s1234 + $0x42] sm:$0xff]
        %v3430 = vld [vmem:[%s1234 + $0x4a] sm:$0xff]
        %v3431 = vld [vmem:[%s1234 + $0x52] sm:$0xff]
        %v3432 = vld [vmem:[%s1234 + $0x5a] sm:$0xff]
        %v3433 = vld [vmem:[%s1234 + $0x62] sm:$0xff]
        %v3434 = vld [vmem:[%s1234 + $0x6a] sm:$0xff]
        %v3435 = vld [vmem:[%s1234 + $0x72] sm:$0xff]
        %v3436 = vld [vmem:[%s1234 + $0x7a] sm:$0xf]
        %v3437 = vld [vmem:[%s1234 + $0x1b] sm:$0xff]
        %v3438 = vld [vmem:[%s1234 + $0x23] sm:$0xff]
        %v3439 = vld [vmem:[%s1234 + $0x2b] sm:$0xff]
        %v3440 = vld [vmem:[%s1234 + $0x33] sm:$0xff]
        %v3441 = vld [vmem:[%s1234 + $0x3b] sm:$0xff]
        %v3442 = vld [vmem:[%s1234 + $0x43] sm:$0xff]
        %v3443 = vld [vmem:[%s1234 + $0x4b] sm:$0xff]
        %v3444 = vld [vmem:[%s1234 + $0x53] sm:$0xff]
        %v3445 = vld [vmem:[%s1234 + $0x5b] sm:$0xff]
        %v3446 = vld [vmem:[%s1234 + $0x63] sm:$0xff]
        %v3447 = vld [vmem:[%s1234 + $0x6b] sm:$0xff]
        %v3448 = vld [vmem:[%s1234 + $0x73] sm:$0xff]
        %v3449 = vld [vmem:[%s1234 + $0x7b] sm:$0xf]
        %3463 = vrot.lane.b32.xlu0 %v3273, 8
        %v3464 = vpop.permute.xlu0 %3463
        %3465 = vrot.lane.b32.xlu0 %v3274, 8
        %v3466 = vpop.permute.xlu0 %3465
        %3467 = vrot.lane.b32.xlu0 %v3275, 8
        %v3468 = vpop.permute.xlu0 %3467
        %3469 = vrot.lane.b32.xlu0 %v3276, 8
        %v3470 = vpop.permute.xlu0 %3469
        %3471 = vrot.lane.b32.xlu0 %v3277, 8
        %v3472 = vpop.permute.xlu0 %3471
        %3473 = vrot.lane.b32.xlu0 %v3278, 8
        %v3474 = vpop.permute.xlu0 %3473
        %3475 = vrot.lane.b32.xlu0 %v3279, 8
        %v3476 = vpop.permute.xlu0 %3475
        %3477 = vrot.lane.b32.xlu0 %v3280, 8
        %v3478 = vpop.permute.xlu0 %3477
        %3479 = vrot.lane.b32.xlu0 %v3281, 8
        %v3480 = vpop.permute.xlu0 %3479
        %3481 = vrot.lane.b32.xlu0 %v3282, 8
        %v3482 = vpop.permute.xlu0 %3481
        %3483 = vrot.lane.b32.xlu0 %v3283, 8
        %v3484 = vpop.permute.xlu0 %3483
        %3485 = vrot.lane.b32.xlu0 %v3284, 8
        %v3486 = vpop.permute.xlu0 %3485
        %3487 = vrot.lane.b32.xlu0 %v3285, 8
        %v3488 = vpop.permute.xlu0 %3487
        %3515 = vrot.lane.b32.xlu0 %v3286, 16
        %v3516 = vpop.permute.xlu0 %3515
        %3517 = vrot.lane.b32.xlu0 %v3287, 16
        %v3518 = vpop.permute.xlu0 %3517
        %3519 = vrot.lane.b32.xlu0 %v3288, 16
        %v3520 = vpop.permute.xlu0 %3519
        %3521 = vrot.lane.b32.xlu0 %v3289, 16
        %v3522 = vpop.permute.xlu0 %3521
        %3523 = vrot.lane.b32.xlu0 %v3290, 16
        %v3524 = vpop.permute.xlu0 %3523
        %3525 = vrot.lane.b32.xlu0 %v3291, 16
        %v3526 = vpop.permute.xlu0 %3525
        %3527 = vrot.lane.b32.xlu0 %v3292, 16
        %v3528 = vpop.permute.xlu0 %3527
        %3529 = vrot.lane.b32.xlu0 %v3293, 16
        %v3530 = vpop.permute.xlu0 %3529
        %3531 = vrot.lane.b32.xlu0 %v3294, 16
        %v3532 = vpop.permute.xlu0 %3531
        %3533 = vrot.lane.b32.xlu0 %v3295, 16
        %v3534 = vpop.permute.xlu0 %3533
        %3535 = vrot.lane.b32.xlu0 %v3296, 16
        %v3536 = vpop.permute.xlu0 %3535
        %3537 = vrot.lane.b32.xlu0 %v3297, 16
        %v3538 = vpop.permute.xlu0 %3537
        %3539 = vrot.lane.b32.xlu0 %v3298, 16
        %v3540 = vpop.permute.xlu0 %3539
        %3556 = vrot.lane.b32.xlu0 %v3287, 24
        %v3557 = vpop.permute.xlu0 %3556
        %3558 = vrot.lane.b32.xlu0 %v3288, 24
        %v3559 = vpop.permute.xlu0 %3558
        %3560 = vrot.lane.b32.xlu0 %v3289, 24
        %v3561 = vpop.permute.xlu0 %3560
        %3562 = vrot.lane.b32.xlu0 %v3290, 24
        %v3563 = vpop.permute.xlu0 %3562
        %3564 = vrot.lane.b32.xlu0 %v3291, 24
        %v3565 = vpop.permute.xlu0 %3564
        %3566 = vrot.lane.b32.xlu0 %v3292, 24
        %v3567 = vpop.permute.xlu0 %3566
        %3568 = vrot.lane.b32.xlu0 %v3293, 24
        %v3569 = vpop.permute.xlu0 %3568
        %3570 = vrot.lane.b32.xlu0 %v3294, 24
        %v3571 = vpop.permute.xlu0 %3570
        %3572 = vrot.lane.b32.xlu0 %v3295, 24
        %v3573 = vpop.permute.xlu0 %3572
        %3574 = vrot.lane.b32.xlu0 %v3296, 24
        %v3575 = vpop.permute.xlu0 %3574
        %3576 = vrot.lane.b32.xlu0 %v3297, 24
        %v3577 = vpop.permute.xlu0 %3576
        %3578 = vrot.lane.b32.xlu0 %v3299, 24
        %v3579 = vpop.permute.xlu0 %3578
        %3580 = vrot.lane.b32.xlu0 %v3300, 24
        %v3581 = vpop.permute.xlu0 %3580
        %3608 = vrot.lane.b32.xlu0 %v3301, 32
        %v3609 = vpop.permute.xlu0 %3608
        %3610 = vrot.lane.b32.xlu0 %v3302, 32
        %v3611 = vpop.permute.xlu0 %3610
        %3612 = vrot.lane.b32.xlu0 %v3303, 32
        %v3613 = vpop.permute.xlu0 %3612
        %3614 = vrot.lane.b32.xlu0 %v3304, 32
        %v3615 = vpop.permute.xlu0 %3614
        %3616 = vrot.lane.b32.xlu0 %v3305, 32
        %v3617 = vpop.permute.xlu0 %3616
        %3618 = vrot.lane.b32.xlu0 %v3306, 32
        %v3619 = vpop.permute.xlu0 %3618
        %3620 = vrot.lane.b32.xlu0 %v3307, 32
        %v3621 = vpop.permute.xlu0 %3620
        %3622 = vrot.lane.b32.xlu0 %v3308, 32
        %v3623 = vpop.permute.xlu0 %3622
        %3624 = vrot.lane.b32.xlu0 %v3309, 32
        %v3625 = vpop.permute.xlu0 %3624
        %3626 = vrot.lane.b32.xlu0 %v3310, 32
        %v3627 = vpop.permute.xlu0 %3626
        %3628 = vrot.lane.b32.xlu0 %v3311, 32
        %v3629 = vpop.permute.xlu0 %3628
        %3630 = vrot.lane.b32.xlu0 %v3312, 32
        %v3631 = vpop.permute.xlu0 %3630
        %3632 = vrot.lane.b32.xlu0 %v3313, 32
        %v3633 = vpop.permute.xlu0 %3632
        %3660 = vrot.lane.b32.xlu0 %v3314, 40
        %v3661 = vpop.permute.xlu0 %3660
        %3662 = vrot.lane.b32.xlu0 %v3315, 40
        %v3663 = vpop.permute.xlu0 %3662
        %3664 = vrot.lane.b32.xlu0 %v3316, 40
        %v3665 = vpop.permute.xlu0 %3664
        %3666 = vrot.lane.b32.xlu0 %v3317, 40
        %v3667 = vpop.permute.xlu0 %3666
        %3668 = vrot.lane.b32.xlu0 %v3318, 40
        %v3669 = vpop.permute.xlu0 %3668
        %3670 = vrot.lane.b32.xlu0 %v3319, 40
        %v3671 = vpop.permute.xlu0 %3670
        %3672 = vrot.lane.b32.xlu0 %v3320, 40
        %v3673 = vpop.permute.xlu0 %3672
        %3674 = vrot.lane.b32.xlu0 %v3321, 40
        %v3675 = vpop.permute.xlu0 %3674
        %3676 = vrot.lane.b32.xlu0 %v3322, 40
        %v3677 = vpop.permute.xlu0 %3676
        %3678 = vrot.lane.b32.xlu0 %v3323, 40
        %v3679 = vpop.permute.xlu0 %3678
        %3680 = vrot.lane.b32.xlu0 %v3324, 40
        %v3681 = vpop.permute.xlu0 %3680
        %3682 = vrot.lane.b32.xlu0 %v3325, 40
        %v3683 = vpop.permute.xlu0 %3682
        %3684 = vrot.lane.b32.xlu0 %v3326, 40
        %v3685 = vpop.permute.xlu0 %3684
        %3701 = vrot.lane.b32.xlu0 %v3315, 48
        %v3702 = vpop.permute.xlu0 %3701
        %3703 = vrot.lane.b32.xlu0 %v3316, 48
        %v3704 = vpop.permute.xlu0 %3703
        %3705 = vrot.lane.b32.xlu0 %v3317, 48
        %v3706 = vpop.permute.xlu0 %3705
        %3707 = vrot.lane.b32.xlu0 %v3318, 48
        %v3708 = vpop.permute.xlu0 %3707
        %3709 = vrot.lane.b32.xlu0 %v3319, 48
        %v3710 = vpop.permute.xlu0 %3709
        %3711 = vrot.lane.b32.xlu0 %v3320, 48
        %v3712 = vpop.permute.xlu0 %3711
        %3713 = vrot.lane.b32.xlu0 %v3321, 48
        %v3714 = vpop.permute.xlu0 %3713
        %3715 = vrot.lane.b32.xlu0 %v3322, 48
        %v3716 = vpop.permute.xlu0 %3715
        %3717 = vrot.lane.b32.xlu0 %v3323, 48
        %v3718 = vpop.permute.xlu0 %3717
        %3719 = vrot.lane.b32.xlu0 %v3324, 48
        %v3720 = vpop.permute.xlu0 %3719
        %3721 = vrot.lane.b32.xlu0 %v3325, 48
        %v3722 = vpop.permute.xlu0 %3721
        %3723 = vrot.lane.b32.xlu0 %v3327, 48
        %v3724 = vpop.permute.xlu0 %3723
        %3725 = vrot.lane.b32.xlu0 %v3328, 48
        %v3726 = vpop.permute.xlu0 %3725
        %3753 = vrot.lane.b32.xlu0 %v3329, 56
        %v3754 = vpop.permute.xlu0 %3753
        %3755 = vrot.lane.b32.xlu0 %v3330, 56
        %v3756 = vpop.permute.xlu0 %3755
        %3757 = vrot.lane.b32.xlu0 %v3331, 56
        %v3758 = vpop.permute.xlu0 %3757
        %3759 = vrot.lane.b32.xlu0 %v3332, 56
        %v3760 = vpop.permute.xlu0 %3759
        %3761 = vrot.lane.b32.xlu0 %v3333, 56
        %v3762 = vpop.permute.xlu0 %3761
        %3763 = vrot.lane.b32.xlu0 %v3334, 56
        %v3764 = vpop.permute.xlu0 %3763
        %3765 = vrot.lane.b32.xlu0 %v3335, 56
        %v3766 = vpop.permute.xlu0 %3765
        %3767 = vrot.lane.b32.xlu0 %v3336, 56
        %v3768 = vpop.permute.xlu0 %3767
        %3769 = vrot.lane.b32.xlu0 %v3337, 56
        %v3770 = vpop.permute.xlu0 %3769
        %3771 = vrot.lane.b32.xlu0 %v3338, 56
        %v3772 = vpop.permute.xlu0 %3771
        %3773 = vrot.lane.b32.xlu0 %v3339, 56
        %v3774 = vpop.permute.xlu0 %3773
        %3775 = vrot.lane.b32.xlu0 %v3340, 56
        %v3776 = vpop.permute.xlu0 %3775
        %3777 = vrot.lane.b32.xlu0 %v3341, 56
        %v3778 = vpop.permute.xlu0 %3777
        %3805 = vrot.lane.b32.xlu0 %v3342, 64
        %v3806 = vpop.permute.xlu0 %3805
        %3807 = vrot.lane.b32.xlu0 %v3343, 64
        %v3808 = vpop.permute.xlu0 %3807
        %3809 = vrot.lane.b32.xlu0 %v3344, 64
        %v3810 = vpop.permute.xlu0 %3809
        %3811 = vrot.lane.b32.xlu0 %v3345, 64
        %v3812 = vpop.permute.xlu0 %3811
        %3813 = vrot.lane.b32.xlu0 %v3346, 64
        %v3814 = vpop.permute.xlu0 %3813
        %3815 = vrot.lane.b32.xlu0 %v3347, 64
        %v3816 = vpop.permute.xlu0 %3815
        %3817 = vrot.lane.b32.xlu0 %v3348, 64
        %v3818 = vpop.permute.xlu0 %3817
        %3819 = vrot.lane.b32.xlu0 %v3349, 64
        %v3820 = vpop.permute.xlu0 %3819
        %3821 = vrot.lane.b32.xlu0 %v3350, 64
        %v3822 = vpop.permute.xlu0 %3821
        %3823 = vrot.lane.b32.xlu0 %v3351, 64
        %v3824 = vpop.permute.xlu0 %3823
        %3825 = vrot.lane.b32.xlu0 %v3352, 64
        %v3826 = vpop.permute.xlu0 %3825
        %3827 = vrot.lane.b32.xlu0 %v3353, 64
        %v3828 = vpop.permute.xlu0 %3827
        %3829 = vrot.lane.b32.xlu0 %v3354, 64
        %v3830 = vpop.permute.xlu0 %3829
        %3857 = vrot.lane.b32.xlu0 %v3355, 72
        %v3858 = vpop.permute.xlu0 %3857
        %3859 = vrot.lane.b32.xlu0 %v3356, 72
        %v3860 = vpop.permute.xlu0 %3859
        %3861 = vrot.lane.b32.xlu0 %v3357, 72
        %v3862 = vpop.permute.xlu0 %3861
        %3863 = vrot.lane.b32.xlu0 %v3358, 72
        %v3864 = vpop.permute.xlu0 %3863
        %3865 = vrot.lane.b32.xlu0 %v3359, 72
        %v3866 = vpop.permute.xlu0 %3865
        %3867 = vrot.lane.b32.xlu0 %v3360, 72
        %v3868 = vpop.permute.xlu0 %3867
        %3869 = vrot.lane.b32.xlu0 %v3361, 72
        %v3870 = vpop.permute.xlu0 %3869
        %3871 = vrot.lane.b32.xlu0 %v3362, 72
        %v3872 = vpop.permute.xlu0 %3871
        %3873 = vrot.lane.b32.xlu0 %v3363, 72
        %v3874 = vpop.permute.xlu0 %3873
        %3875 = vrot.lane.b32.xlu0 %v3364, 72
        %v3876 = vpop.permute.xlu0 %3875
        %3877 = vrot.lane.b32.xlu0 %v3365, 72
        %v3878 = vpop.permute.xlu0 %3877
        %3879 = vrot.lane.b32.xlu0 %v3366, 72
        %v3880 = vpop.permute.xlu0 %3879
        %3881 = vrot.lane.b32.xlu0 %v3367, 72
        %v3882 = vpop.permute.xlu0 %3881
        %3909 = vrot.lane.b32.xlu0 %v3368, 80
        %v3910 = vpop.permute.xlu0 %3909
        %3911 = vrot.lane.b32.xlu0 %v3369, 80
        %v3912 = vpop.permute.xlu0 %3911
        %3913 = vrot.lane.b32.xlu0 %v3370, 80
        %v3914 = vpop.permute.xlu0 %3913
        %3915 = vrot.lane.b32.xlu0 %v3371, 80
        %v3916 = vpop.permute.xlu0 %3915
        %3917 = vrot.lane.b32.xlu0 %v3372, 80
        %v3918 = vpop.permute.xlu0 %3917
        %3919 = vrot.lane.b32.xlu0 %v3373, 80
        %v3920 = vpop.permute.xlu0 %3919
        %3921 = vrot.lane.b32.xlu0 %v3374, 80
        %v3922 = vpop.permute.xlu0 %3921
        %3923 = vrot.lane.b32.xlu0 %v3375, 80
        %v3924 = vpop.permute.xlu0 %3923
        %3925 = vrot.lane.b32.xlu0 %v3376, 80
        %v3926 = vpop.permute.xlu0 %3925
        %3927 = vrot.lane.b32.xlu0 %v3377, 80
        %v3928 = vpop.permute.xlu0 %3927
        %3929 = vrot.lane.b32.xlu0 %v3378, 80
        %v3930 = vpop.permute.xlu0 %3929
        %3931 = vrot.lane.b32.xlu0 %v3379, 80
        %v3932 = vpop.permute.xlu0 %3931
        %3933 = vrot.lane.b32.xlu0 %v3380, 80
        %v3934 = vpop.permute.xlu0 %3933
        %3961 = vrot.lane.b32.xlu0 %v3381, 88
        %v3962 = vpop.permute.xlu0 %3961
        %3963 = vrot.lane.b32.xlu0 %v3382, 88
        %v3964 = vpop.permute.xlu0 %3963
        %3965 = vrot.lane.b32.xlu0 %v3383, 88
        %v3966 = vpop.permute.xlu0 %3965
        %3967 = vrot.lane.b32.xlu0 %v3384, 88
        %v3968 = vpop.permute.xlu0 %3967
        %3969 = vrot.lane.b32.xlu0 %v3385, 88
        %v3970 = vpop.permute.xlu0 %3969
        %3971 = vrot.lane.b32.xlu0 %v3386, 88
        %v3972 = vpop.permute.xlu0 %3971
        %3973 = vrot.lane.b32.xlu0 %v3387, 88
        %v3974 = vpop.permute.xlu0 %3973
        %3975 = vrot.lane.b32.xlu0 %v3388, 88
        %v3976 = vpop.permute.xlu0 %3975
        %3977 = vrot.lane.b32.xlu0 %v3389, 88
        %v3978 = vpop.permute.xlu0 %3977
        %3979 = vrot.lane.b32.xlu0 %v3390, 88
        %v3980 = vpop.permute.xlu0 %3979
        %3981 = vrot.lane.b32.xlu0 %v3391, 88
        %v3982 = vpop.permute.xlu0 %3981
        %3983 = vrot.lane.b32.xlu0 %v3392, 88
        %v3984 = vpop.permute.xlu0 %3983
        %3985 = vrot.lane.b32.xlu0 %v3393, 88
        %v3986 = vpop.permute.xlu0 %3985
        %4002 = vrot.lane.b32.xlu0 %v3382, 96
        %v4003 = vpop.permute.xlu0 %4002
        %4004 = vrot.lane.b32.xlu0 %v3383, 96
        %v4005 = vpop.permute.xlu0 %4004
        %4006 = vrot.lane.b32.xlu0 %v3384, 96
        %v4007 = vpop.permute.xlu0 %4006
        %4008 = vrot.lane.b32.xlu0 %v3385, 96
        %v4009 = vpop.permute.xlu0 %4008
        %4010 = vrot.lane.b32.xlu0 %v3386, 96
        %v4011 = vpop.permute.xlu0 %4010
        %4012 = vrot.lane.b32.xlu0 %v3387, 96
        %v4013 = vpop.permute.xlu0 %4012
        %4014 = vrot.lane.b32.xlu0 %v3388, 96
        %v4015 = vpop.permute.xlu0 %4014
        %4016 = vrot.lane.b32.xlu0 %v3389, 96
        %v4017 = vpop.permute.xlu0 %4016
        %4018 = vrot.lane.b32.xlu0 %v3390, 96
        %v4019 = vpop.permute.xlu0 %4018
        %4020 = vrot.lane.b32.xlu0 %v3391, 96
        %v4021 = vpop.permute.xlu0 %4020
        %4022 = vrot.lane.b32.xlu0 %v3392, 96
        %v4023 = vpop.permute.xlu0 %4022
        %4024 = vrot.lane.b32.xlu0 %v3394, 96
        %v4025 = vpop.permute.xlu0 %4024
        %4026 = vrot.lane.b32.xlu0 %v3395, 96
        %v4027 = vpop.permute.xlu0 %4026
        %4054 = vrot.lane.b32.xlu0 %v3396, 104
        %v4055 = vpop.permute.xlu0 %4054
        %4056 = vrot.lane.b32.xlu0 %v3397, 104
        %v4057 = vpop.permute.xlu0 %4056
        %4058 = vrot.lane.b32.xlu0 %v3398, 104
        %v4059 = vpop.permute.xlu0 %4058
        %4060 = vrot.lane.b32.xlu0 %v3399, 104
        %v4061 = vpop.permute.xlu0 %4060
        %4062 = vrot.lane.b32.xlu0 %v3400, 104
        %v4063 = vpop.permute.xlu0 %4062
        %4064 = vrot.lane.b32.xlu0 %v3401, 104
        %v4065 = vpop.permute.xlu0 %4064
        %4066 = vrot.lane.b32.xlu0 %v3402, 104
        %v4067 = vpop.permute.xlu0 %4066
        %4068 = vrot.lane.b32.xlu0 %v3403, 104
        %v4069 = vpop.permute.xlu0 %4068
        %4070 = vrot.lane.b32.xlu0 %v3404, 104
        %v4071 = vpop.permute.xlu0 %4070
        %4072 = vrot.lane.b32.xlu0 %v3405, 104
        %v4073 = vpop.permute.xlu0 %4072
        %4074 = vrot.lane.b32.xlu0 %v3406, 104
        %v4075 = vpop.permute.xlu0 %4074
        %4076 = vrot.lane.b32.xlu0 %v3407, 104
        %v4077 = vpop.permute.xlu0 %4076
        %4078 = vrot.lane.b32.xlu0 %v3408, 104
        %v4079 = vpop.permute.xlu0 %4078
        %4106 = vrot.lane.b32.xlu0 %v3409, 112
        %v4107 = vpop.permute.xlu0 %4106
        %4108 = vrot.lane.b32.xlu0 %v3410, 112
        %v4109 = vpop.permute.xlu0 %4108
        %4110 = vrot.lane.b32.xlu0 %v3411, 112
        %v4111 = vpop.permute.xlu0 %4110
        %4112 = vrot.lane.b32.xlu0 %v3412, 112
        %v4113 = vpop.permute.xlu0 %4112
        %4114 = vrot.lane.b32.xlu0 %v3413, 112
        %v4115 = vpop.permute.xlu0 %4114
        %4116 = vrot.lane.b32.xlu0 %v3414, 112
        %v4117 = vpop.permute.xlu0 %4116
        %4118 = vrot.lane.b32.xlu0 %v3415, 112
        %v4119 = vpop.permute.xlu0 %4118
        %4120 = vrot.lane.b32.xlu0 %v3416, 112
        %v4121 = vpop.permute.xlu0 %4120
        %4122 = vrot.lane.b32.xlu0 %v3417, 112
        %v4123 = vpop.permute.xlu0 %4122
        %4124 = vrot.lane.b32.xlu0 %v3418, 112
        %v4125 = vpop.permute.xlu0 %4124
        %4126 = vrot.lane.b32.xlu0 %v3419, 112
        %v4127 = vpop.permute.xlu0 %4126
        %4128 = vrot.lane.b32.xlu0 %v3420, 112
        %v4129 = vpop.permute.xlu0 %4128
        %4130 = vrot.lane.b32.xlu0 %v3421, 112
        %v4131 = vpop.permute.xlu0 %4130
        %4147 = vrot.lane.b32.xlu0 %v3410, 120
        %v4148 = vpop.permute.xlu0 %4147
        %4149 = vrot.lane.b32.xlu0 %v3411, 120
        %v4150 = vpop.permute.xlu0 %4149
        %4151 = vrot.lane.b32.xlu0 %v3412, 120
        %v4152 = vpop.permute.xlu0 %4151
        %4153 = vrot.lane.b32.xlu0 %v3413, 120
        %v4154 = vpop.permute.xlu0 %4153
        %4155 = vrot.lane.b32.xlu0 %v3414, 120
        %v4156 = vpop.permute.xlu0 %4155
        %4157 = vrot.lane.b32.xlu0 %v3415, 120
        %v4158 = vpop.permute.xlu0 %4157
        %4159 = vrot.lane.b32.xlu0 %v3416, 120
        %v4160 = vpop.permute.xlu0 %4159
        %4161 = vrot.lane.b32.xlu0 %v3417, 120
        %v4162 = vpop.permute.xlu0 %4161
        %4163 = vrot.lane.b32.xlu0 %v3418, 120
        %v4164 = vpop.permute.xlu0 %4163
        %4165 = vrot.lane.b32.xlu0 %v3419, 120
        %v4166 = vpop.permute.xlu0 %4165
        %4167 = vrot.lane.b32.xlu0 %v3420, 120
        %v4168 = vpop.permute.xlu0 %4167
        %4169 = vrot.lane.b32.xlu0 %v3422, 120
        %v4170 = vpop.permute.xlu0 %4169
        %4171 = vrot.lane.b32.xlu0 %v3423, 120
        %v4172 = vpop.permute.xlu0 %4171
        %v4186 = vsel %vm2246, %v3260, %v3464
        %v4187 = vsel %vm2246, %v3261, %v3466
        %v4188 = vsel %vm2246, %v3262, %v3468
        %v4189 = vsel %vm2246, %v3263, %v3470
        %v4190 = vsel %vm2246, %v3264, %v3472
        %v4191 = vsel %vm2246, %v3265, %v3474
        %v4192 = vsel %vm2246, %v3266, %v3476
        %v4193 = vsel %vm2246, %v3267, %v3478
        %v4194 = vsel %vm2246, %v3268, %v3480
        %v4195 = vsel %vm2246, %v3269, %v3482
        %v4196 = vsel %vm2246, %v3270, %v3484
        %v4197 = vsel %vm2246, %v3271, %v3486
        %v4198 = vsel %vm2246, %v3272, %v3488
        %v4199 = vsel %vm2274, %v4186, %v3516
        %v4200 = vsel %vm2274, %v4187, %v3518
        %v4201 = vsel %vm2274, %v4188, %v3520
        %v4202 = vsel %vm2274, %v4189, %v3522
        %v4203 = vsel %vm2274, %v4190, %v3524
        %v4204 = vsel %vm2274, %v4191, %v3526
        %v4205 = vsel %vm2274, %v4192, %v3528
        %v4206 = vsel %vm2274, %v4193, %v3530
        %v4207 = vsel %vm2274, %v4194, %v3532
        %v4208 = vsel %vm2274, %v4195, %v3534
        %v4209 = vsel %vm2274, %v4196, %v3536
        %v4210 = vsel %vm2274, %v4197, %v3538
        %v4211 = vsel %vm2274, %v4198, %v3540
        %v4212 = vsel %vm2302, %v4199, %v3557
        %v4213 = vsel %vm2302, %v4200, %v3559
        %v4214 = vsel %vm2302, %v4201, %v3561
        %v4215 = vsel %vm2302, %v4202, %v3563
        %v4216 = vsel %vm2302, %v4203, %v3565
        %v4217 = vsel %vm2302, %v4204, %v3567
        %v4218 = vsel %vm2302, %v4205, %v3569
        %v4219 = vsel %vm2302, %v4206, %v3571
        %v4220 = vsel %vm2302, %v4207, %v3573
        %v4221 = vsel %vm2302, %v4208, %v3575
        %v4222 = vsel %vm2302, %v4209, %v3577
        %v4223 = vsel %vm2302, %v4210, %v3579
        %v4224 = vsel %vm2302, %v4211, %v3581
        %v4225 = vsel %vm2330, %v4212, %v3609
        %v4226 = vsel %vm2330, %v4213, %v3611
        %v4227 = vsel %vm2330, %v4214, %v3613
        %v4228 = vsel %vm2330, %v4215, %v3615
        %v4229 = vsel %vm2330, %v4216, %v3617
        %v4230 = vsel %vm2330, %v4217, %v3619
        %v4231 = vsel %vm2330, %v4218, %v3621
        %v4232 = vsel %vm2330, %v4219, %v3623
        %v4233 = vsel %vm2330, %v4220, %v3625
        %v4234 = vsel %vm2330, %v4221, %v3627
        %v4235 = vsel %vm2330, %v4222, %v3629
        %v4236 = vsel %vm2330, %v4223, %v3631
        %v4237 = vsel %vm2330, %v4224, %v3633
        %vm4238 = vcmask 326656
        %v4239 = vsel %vm4238, %v4225, %v3661
        %v4240 = vsel %vm4238, %v4226, %v3663
        %v4241 = vsel %vm4238, %v4227, %v3665
        %v4242 = vsel %vm4238, %v4228, %v3667
        %v4243 = vsel %vm4238, %v4229, %v3669
        %v4244 = vsel %vm4238, %v4230, %v3671
        %v4245 = vsel %vm4238, %v4231, %v3673
        %v4246 = vsel %vm4238, %v4232, %v3675
        %v4247 = vsel %vm4238, %v4233, %v3677
        %v4248 = vsel %vm4238, %v4234, %v3679
        %v4249 = vsel %vm4238, %v4235, %v3681
        %v4250 = vsel %vm4238, %v4236, %v3683
        %v4251 = vsel %vm4238, %v4237, %v3685
        %vm4252 = vcmask 392192
        %v4253 = vsel %vm4252, %v4239, %v3702
        %v4254 = vsel %vm4252, %v4240, %v3704
        %v4255 = vsel %vm4252, %v4241, %v3706
        %v4256 = vsel %vm4252, %v4242, %v3708
        %v4257 = vsel %vm4252, %v4243, %v3710
        %v4258 = vsel %vm4252, %v4244, %v3712
        %v4259 = vsel %vm4252, %v4245, %v3714
        %v4260 = vsel %vm4252, %v4246, %v3716
        %v4261 = vsel %vm4252, %v4247, %v3718
        %v4262 = vsel %vm4252, %v4248, %v3720
        %v4263 = vsel %vm4252, %v4249, %v3722
        %v4264 = vsel %vm4252, %v4250, %v3724
        %v4265 = vsel %vm4252, %v4251, %v3726
        %vm4266 = vcmask 457728
        %v4267 = vsel %vm4266, %v4253, %v3754
        %v4268 = vsel %vm4266, %v4254, %v3756
        %v4269 = vsel %vm4266, %v4255, %v3758
        %v4270 = vsel %vm4266, %v4256, %v3760
        %v4271 = vsel %vm4266, %v4257, %v3762
        %v4272 = vsel %vm4266, %v4258, %v3764
        %v4273 = vsel %vm4266, %v4259, %v3766
        %v4274 = vsel %vm4266, %v4260, %v3768
        %v4275 = vsel %vm4266, %v4261, %v3770
        %v4276 = vsel %vm4266, %v4262, %v3772
        %v4277 = vsel %vm4266, %v4263, %v3774
        %v4278 = vsel %vm4266, %v4264, %v3776
        %v4279 = vsel %vm4266, %v4265, %v3778
        %vm4280 = vcmask 523264
        %v4281 = vsel %vm4280, %v4267, %v3806
        %v4282 = vsel %vm4280, %v4268, %v3808
        %v4283 = vsel %vm4280, %v4269, %v3810
        %v4284 = vsel %vm4280, %v4270, %v3812
        %v4285 = vsel %vm4280, %v4271, %v3814
        %v4286 = vsel %vm4280, %v4272, %v3816
        %v4287 = vsel %vm4280, %v4273, %v3818
        %v4288 = vsel %vm4280, %v4274, %v3820
        %v4289 = vsel %vm4280, %v4275, %v3822
        %v4290 = vsel %vm4280, %v4276, %v3824
        %v4291 = vsel %vm4280, %v4277, %v3826
        %v4292 = vsel %vm4280, %v4278, %v3828
        %v4293 = vsel %vm4280, %v4279, %v3830
        %vm4294 = vcmask 588800
        %v4295 = vsel %vm4294, %v4281, %v3858
        %v4296 = vsel %vm4294, %v4282, %v3860
        %v4297 = vsel %vm4294, %v4283, %v3862
        %v4298 = vsel %vm4294, %v4284, %v3864
        %v4299 = vsel %vm4294, %v4285, %v3866
        %v4300 = vsel %vm4294, %v4286, %v3868
        %v4301 = vsel %vm4294, %v4287, %v3870
        %v4302 = vsel %vm4294, %v4288, %v3872
        %v4303 = vsel %vm4294, %v4289, %v3874
        %v4304 = vsel %vm4294, %v4290, %v3876
        %v4305 = vsel %vm4294, %v4291, %v3878
        %v4306 = vsel %vm4294, %v4292, %v3880
        %v4307 = vsel %vm4294, %v4293, %v3882
        %vm4308 = vcmask 654336
        %v4309 = vsel %vm4308, %v4295, %v3910
        %v4310 = vsel %vm4308, %v4296, %v3912
        %v4311 = vsel %vm4308, %v4297, %v3914
        %v4312 = vsel %vm4308, %v4298, %v3916
        %v4313 = vsel %vm4308, %v4299, %v3918
        %v4314 = vsel %vm4308, %v4300, %v3920
        %v4315 = vsel %vm4308, %v4301, %v3922
        %v4316 = vsel %vm4308, %v4302, %v3924
        %v4317 = vsel %vm4308, %v4303, %v3926
        %v4318 = vsel %vm4308, %v4304, %v3928
        %v4319 = vsel %vm4308, %v4305, %v3930
        %v4320 = vsel %vm4308, %v4306, %v3932
        %v4321 = vsel %vm4308, %v4307, %v3934
        %vm4322 = vcmask 719872
        %v4323 = vsel %vm4322, %v4309, %v3962
        %v4324 = vsel %vm4322, %v4310, %v3964
        %v4325 = vsel %vm4322, %v4311, %v3966
        %v4326 = vsel %vm4322, %v4312, %v3968
        %v4327 = vsel %vm4322, %v4313, %v3970
        %v4328 = vsel %vm4322, %v4314, %v3972
        %v4329 = vsel %vm4322, %v4315, %v3974
        %v4330 = vsel %vm4322, %v4316, %v3976
        %v4331 = vsel %vm4322, %v4317, %v3978
        %v4332 = vsel %vm4322, %v4318, %v3980
        %v4333 = vsel %vm4322, %v4319, %v3982
        %v4334 = vsel %vm4322, %v4320, %v3984
        %v4335 = vsel %vm4322, %v4321, %v3986
        %vm4336 = vcmask 785408
        %v4337 = vsel %vm4336, %v4323, %v4003
        %v4338 = vsel %vm4336, %v4324, %v4005
        %v4339 = vsel %vm4336, %v4325, %v4007
        %v4340 = vsel %vm4336, %v4326, %v4009
        %v4341 = vsel %vm4336, %v4327, %v4011
        %v4342 = vsel %vm4336, %v4328, %v4013
        %v4343 = vsel %vm4336, %v4329, %v4015
        %v4344 = vsel %vm4336, %v4330, %v4017
        %v4345 = vsel %vm4336, %v4331, %v4019
        %v4346 = vsel %vm4336, %v4332, %v4021
        %v4347 = vsel %vm4336, %v4333, %v4023
        %v4348 = vsel %vm4336, %v4334, %v4025
        %v4349 = vsel %vm4336, %v4335, %v4027
        %vm4350 = vcmask 850944
        %v4351 = vsel %vm4350, %v4337, %v4055
        %v4352 = vsel %vm4350, %v4338, %v4057
        %v4353 = vsel %vm4350, %v4339, %v4059
        %v4354 = vsel %vm4350, %v4340, %v4061
        %v4355 = vsel %vm4350, %v4341, %v4063
        %v4356 = vsel %vm4350, %v4342, %v4065
        %v4357 = vsel %vm4350, %v4343, %v4067
        %v4358 = vsel %vm4350, %v4344, %v4069
        %v4359 = vsel %vm4350, %v4345, %v4071
        %v4360 = vsel %vm4350, %v4346, %v4073
        %v4361 = vsel %vm4350, %v4347, %v4075
        %v4362 = vsel %vm4350, %v4348, %v4077
        %v4363 = vsel %vm4350, %v4349, %v4079
        %vm4364 = vcmask 916480
        %v4365 = vsel %vm4364, %v4351, %v4107
        %v4366 = vsel %vm4364, %v4352, %v4109
        %v4367 = vsel %vm4364, %v4353, %v4111
        %v4368 = vsel %vm4364, %v4354, %v4113
        %v4369 = vsel %vm4364, %v4355, %v4115
        %v4370 = vsel %vm4364, %v4356, %v4117
        %v4371 = vsel %vm4364, %v4357, %v4119
        %v4372 = vsel %vm4364, %v4358, %v4121
        %v4373 = vsel %vm4364, %v4359, %v4123
        %v4374 = vsel %vm4364, %v4360, %v4125
        %v4375 = vsel %vm4364, %v4361, %v4127
        %v4376 = vsel %vm4364, %v4362, %v4129
        %v4377 = vsel %vm4364, %v4363, %v4131
        %vm4378 = vcmask 982016
        %v4379 = vsel %vm4378, %v4365, %v4148
        %v4380 = vsel %vm4378, %v4366, %v4150
        %v4381 = vsel %vm4378, %v4367, %v4152
        %v4382 = vsel %vm4378, %v4368, %v4154
        %v4383 = vsel %vm4378, %v4369, %v4156
        %v4384 = vsel %vm4378, %v4370, %v4158
        %v4385 = vsel %vm4378, %v4371, %v4160
        %v4386 = vsel %vm4378, %v4372, %v4162
        %v4387 = vsel %vm4378, %v4373, %v4164
        %v4388 = vsel %vm4378, %v4374, %v4166
        %v4389 = vsel %vm4378, %v4375, %v4168
        %v4390 = vsel %vm4378, %v4376, %v4170
        %v4391 = vsel %vm4378, %v4377, %v4172
        %4405 = vrot.lane.b32.xlu0 %v3437, 8
        %v4406 = vpop.permute.xlu0 %4405
        %4407 = vrot.lane.b32.xlu0 %v3438, 8
        %v4408 = vpop.permute.xlu0 %4407
        %4409 = vrot.lane.b32.xlu0 %v3439, 8
        %v4410 = vpop.permute.xlu0 %4409
        %4411 = vrot.lane.b32.xlu0 %v3440, 8
        %v4412 = vpop.permute.xlu0 %4411
        %4413 = vrot.lane.b32.xlu0 %v3441, 8
        %v4414 = vpop.permute.xlu0 %4413
        %4415 = vrot.lane.b32.xlu0 %v3442, 8
        %v4416 = vpop.permute.xlu0 %4415
        %4417 = vrot.lane.b32.xlu0 %v3443, 8
        %v4418 = vpop.permute.xlu0 %4417
        %4419 = vrot.lane.b32.xlu0 %v3444, 8
        %v4420 = vpop.permute.xlu0 %4419
        %4421 = vrot.lane.b32.xlu0 %v3445, 8
        %v4422 = vpop.permute.xlu0 %4421
        %4423 = vrot.lane.b32.xlu0 %v3446, 8
        %v4424 = vpop.permute.xlu0 %4423
        %4425 = vrot.lane.b32.xlu0 %v3447, 8
        %v4426 = vpop.permute.xlu0 %4425
        %4427 = vrot.lane.b32.xlu0 %v3448, 8
        %v4428 = vpop.permute.xlu0 %4427
        %4429 = vrot.lane.b32.xlu0 %v3449, 8
        %v4430 = vpop.permute.xlu0 %4429
        %v4444 = vsel %vm2246, %v3424, %v4406
        %v4445 = vsel %vm2246, %v3425, %v4408
        %v4446 = vsel %vm2246, %v3426, %v4410
        %v4447 = vsel %vm2246, %v3427, %v4412
        %v4448 = vsel %vm2246, %v3428, %v4414
        %v4449 = vsel %vm2246, %v3429, %v4416
        %v4450 = vsel %vm2246, %v3430, %v4418
        %v4451 = vsel %vm2246, %v3431, %v4420
        %v4452 = vsel %vm2246, %v3432, %v4422
        %v4453 = vsel %vm2246, %v3433, %v4424
        %v4454 = vsel %vm2246, %v3434, %v4426
        %v4455 = vsel %vm2246, %v3435, %v4428
        %v4456 = vsel %vm2246, %v3436, %v4430
        %v4457 = vpack.c.bf16 %v4380, %v4379
        %v4458 = vpack.c.bf16 %v4445, %v4444
        %v4459 = vpack.c.bf16 %v4382, %v4381
        %v4460 = vpack.c.bf16 %v4447, %v4446
        %v4461 = vpack.c.bf16 %v4384, %v4383
        %v4462 = vpack.c.bf16 %v4449, %v4448
        %v4463 = vpack.c.bf16 %v4386, %v4385
        %v4464 = vpack.c.bf16 %v4451, %v4450
        %v4465 = vpack.c.bf16 %v4388, %v4387
        %v4466 = vpack.c.bf16 %v4453, %v4452
        %v4467 = vpack.c.bf16 %v4390, %v4389
        %v4468 = vpack.c.bf16 %v4455, %v4454
        %v4469 = vpack.c.bf16 %v4391, %v4391
        %v4470 = vpack.c.bf16 %v4456, %v4456
        %v4471 = vld [vmem:[%s21] sm:$0xff]
        %v4472 = vld [vmem:[%s21 + $0x8] sm:$0xff]
        %v4473 = vld [vmem:[%s21 + $0x10] sm:$0xff]
        %v4474 = vld [vmem:[%s21 + $0x18] sm:$0xff]
        %v4475 = vld [vmem:[%s21 + $0x20] sm:$0xff]
        %v4476 = vld [vmem:[%s21 + $0x28] sm:$0xff]
        %v4477 = vld [vmem:[%s21 + $0x30] sm:$0xff]
        %v4478 = vld [vmem:[%s21 + $0x38] sm:$0xff]
        %v4479 = vld [vmem:[%s21 + $0x40] sm:$0xff]
        %v4480 = vld [vmem:[%s21 + $0x48] sm:$0xff]
        %v4481 = vld [vmem:[%s21 + $0x50] sm:$0xff]
        %v4482 = vld [vmem:[%s21 + $0x58] sm:$0xff]
        %v4483 = vld [vmem:[%s21 + $0x60] sm:$0xff]
        %v4484 = vld [vmem:[%s21 + $0x68] sm:$0xff]
        %v4485 = vld [vmem:[%s21 + $0x70] sm:$0xff]
        %v4486 = vld [vmem:[%s21 + $0x78] sm:$0xff]
        %v4487 = vld [vmem:[%s21 + $0x80] sm:$0xff]
        %v4488 = vld [vmem:[%s21 + $0x88] sm:$0xff]
        %v4489 = vpack.c.bf16 %v4472, %v4471
        %v4490 = vpack.c.bf16 %v4474, %v4473
        %v4491 = vpack.c.bf16 %v4476, %v4475
        %v4492 = vpack.c.bf16 %v4478, %v4477
        %v4493 = vpack.c.bf16 %v4480, %v4479
        %v4494 = vpack.c.bf16 %v4482, %v4481
        %v4495 = vpack.c.bf16 %v4484, %v4483
        %v4496 = vpack.c.bf16 %v4486, %v4485
        %v4497 = vpack.c.bf16 %v4488, %v4487
        %v4498 = vld [vmem:[%s23] sm:$0x1]
        %v4500 = vlaneseq
        %v4501 = vshrl.u32 %v4500, 7
        %v4502 = vsub.s32 0, %v4501
        %v4503 = vrot.slane %v4498, %v4502
        %v4506 = vsel %vm2274, %v4458, 0
        %v4509 = vsel %vm2274, %v4460, 0
        %v4512 = vsel %vm2274, %v4462, 0
        %v4515 = vsel %vm2274, %v4464, 0
        %v4518 = vsel %vm2274, %v4466, 0
        %v4521 = vsel %vm2274, %v4468, 0
        %v4524 = vsel %vm2274, %v4470, 0
        %4526 = vmatprep.subr.bf16.mxu0 0
        %4527 = vmatpush1.bf16.msra.mxu0 %v4489
        %4528 = vmatprep.subr.bf16.mxu0 0
        %4529 = vmatpush1.bf16.msra.mxu0 %v4490
        %4530 = vmatprep.subr.bf16.mxu0 0
        %4531 = vmatpush1.bf16.msra.mxu0 %v4491
        %4532 = vmatprep.subr.bf16.mxu0 0
        %4533 = vmatpush1.bf16.msra.mxu0 %v4492
        %4534 = vmatprep.subr.bf16.mxu0 0
        %4535 = vmatpush1.bf16.msra.mxu0 %v4493
        %4536 = vmatprep.subr.bf16.mxu0 0
        %4537 = vmatpush1.bf16.msra.mxu0 %v4494
        %4538 = vmatprep.subr.bf16.mxu0 0
        %4539 = vmatpush1.bf16.msra.mxu0 %v4495
        %4540 = vmatprep.subr.bf16.mxu0 0
        %4541 = vmatpush1.bf16.msra.mxu0 %v4496
        %4542 = vmatprep.subr.bf16.mxu0 0
        %4543 = vmatpush1.bf16.msra.mxu0 %v4497
        %4544 = vmatprep.subr.bf16.mxu0 0
        %4545 = vmatpush1.bf16.msra.mxu0 0
        %4546 = vmatprep.subr.bf16.mxu0 0
        %4547 = vmatpush1.bf16.msra.mxu0 0
        %4548 = vmatprep.subr.bf16.mxu0 0
        %4549 = vmatpush1.bf16.msra.mxu0 0
        %4550 = vmatprep.subr.bf16.mxu0 0
        %4551 = vmatpush1.bf16.msra.mxu0 0
        %4552 = vmatprep.subr.bf16.mxu0 0
        %4553 = vmatpush1.bf16.msra.mxu0 0
        %4554 = vmatprep.subr.bf16.mxu0 0
        %4555 = vmatpush1.bf16.msra.mxu0 0
        %4556 = vmatprep.subr.bf16.mxu0 0
        %4557 = vmatpush1.bf16.msra.mxu0 0
        %4558 = vmatprep.mubr.bf16.mxu0 %v4506
        %4559 = vmatmul.mubr.bf16.gmra.mrb[0].mxu0 %v4457
        %v4560 = vpop.f32.mrb[0].mxu0
        %v4561 = vadd.f32 %v4503, %v4560
        %v4562 = vpop.f32.mrb[0].mxu0
        %v4563 = vpop.f32.mrb[0].mxu0
        %v4564 = vadd.f32 %v4503, %v4563
        %v4565 = vpop.f32.mrb[0].mxu0
        %4566 = vmatprep.mubr.bf16.mxu0 %v4509
        %4567 = vmatmul.mubr.bf16.gmra.mrb[0].mxu0 %v4459
        %v4568 = vpop.f32.mrb[0].mxu0
        %v4569 = vadd.f32 %v4503, %v4568
        %v4570 = vpop.f32.mrb[0].mxu0
        %v4571 = vpop.f32.mrb[0].mxu0
        %v4572 = vadd.f32 %v4503, %v4571
        %v4573 = vpop.f32.mrb[0].mxu0
        %4574 = vmatprep.mubr.bf16.mxu0 %v4512
        %4575 = vmatmul.mubr.bf16.gmra.mrb[0].mxu0 %v4461
        %v4576 = vpop.f32.mrb[0].mxu0
        %v4577 = vadd.f32 %v4503, %v4576
        %v4578 = vpop.f32.mrb[0].mxu0
        %v4579 = vpop.f32.mrb[0].mxu0
        %v4580 = vadd.f32 %v4503, %v4579
        %v4581 = vpop.f32.mrb[0].mxu0
        %4582 = vmatprep.mubr.bf16.mxu0 %v4515
        %4583 = vmatmul.mubr.bf16.gmra.mrb[0].mxu0 %v4463
        %v4584 = vpop.f32.mrb[0].mxu0
        %v4585 = vadd.f32 %v4503, %v4584
        %v4586 = vpop.f32.mrb[0].mxu0
        %v4587 = vpop.f32.mrb[0].mxu0
        %v4588 = vadd.f32 %v4503, %v4587
        %v4589 = vpop.f32.mrb[0].mxu0
        %4590 = vmatprep.mubr.bf16.mxu0 %v4518
        %4591 = vmatmul.mubr.bf16.gmra.mrb[0].mxu0 %v4465
        %v4592 = vpop.f32.mrb[0].mxu0
        %v4593 = vadd.f32 %v4503, %v4592
        %v4594 = vpop.f32.mrb[0].mxu0
        %v4595 = vpop.f32.mrb[0].mxu0
        %v4596 = vadd.f32 %v4503, %v4595
        %v4597 = vpop.f32.mrb[0].mxu0
        %4598 = vmatprep.mubr.bf16.mxu0 %v4521
        %4599 = vmatmul.mubr.bf16.gmra.mrb[0].mxu0 %v4467
        %v4600 = vpop.f32.mrb[0].mxu0
        %v4601 = vadd.f32 %v4503, %v4600
        %v4602 = vpop.f32.mrb[0].mxu0
        %v4603 = vpop.f32.mrb[0].mxu0
        %v4604 = vadd.f32 %v4503, %v4603
        %v4605 = vpop.f32.mrb[0].mxu0
        %4606 = vmatprep.mubr.bf16.mxu0 %v4524
        %4607 = vmatmul.mubr.bf16.gmra.mrb[0].mxu0 %v4469
        %v4608 = vpop.f32.mrb[0].mxu0
        %v4609 = vadd.f32 %v4503, %v4608
        %v4610 = vpop.f32.mrb[0].mxu0
        %v4611 = vpop.f32.mrb[0].mxu0
        %v4612 = vpop.f32.mrb[0].mxu0
        %4613 = vdwg.mxu0
        %v4614 = vxor.u32 %v4561, 2147483648
        %v4615 = vxor.u32 %v4564, 2147483648
        %v4616 = vxor.u32 %v4569, 2147483648
        %v4617 = vxor.u32 %v4572, 2147483648
        %v4618 = vxor.u32 %v4577, 2147483648
        %v4619 = vxor.u32 %v4580, 2147483648
        %v4620 = vxor.u32 %v4585, 2147483648
        %v4621 = vxor.u32 %v4588, 2147483648
        %v4622 = vxor.u32 %v4593, 2147483648
        %v4623 = vxor.u32 %v4596, 2147483648
        %v4624 = vxor.u32 %v4601, 2147483648
        %v4625 = vxor.u32 %v4604, 2147483648
        %v4626 = vxor.u32 %v4609, 2147483648
        %v4627 = vmul.f32 %v4614, 1.442695
        %v4628 = vpow.pop %v4627
        %v4629 = vmul.f32 %v4615, 1.442695
        %v4630 = vpow.pop %v4629
        %v4631 = vmul.f32 %v4616, 1.442695
        %v4632 = vpow.pop %v4631
        %v4633 = vmul.f32 %v4617, 1.442695
        %v4634 = vpow.pop %v4633
        %v4635 = vmul.f32 %v4618, 1.442695
        %v4636 = vpow.pop %v4635
        %v4637 = vmul.f32 %v4619, 1.442695
        %v4638 = vpow.pop %v4637
        %v4639 = vmul.f32 %v4620, 1.442695
        %v4640 = vpow.pop %v4639
        %v4641 = vmul.f32 %v4621, 1.442695
        %v4642 = vpow.pop %v4641
        %v4643 = vmul.f32 %v4622, 1.442695
        %v4644 = vpow.pop %v4643
        %v4645 = vmul.f32 %v4623, 1.442695
        %v4646 = vpow.pop %v4645
        %v4647 = vmul.f32 %v4624, 1.442695
        %v4648 = vpow.pop %v4647
        %v4649 = vmul.f32 %v4625, 1.442695
        %v4650 = vpow.pop %v4649
        %v4651 = vmul.f32 %v4626, 1.442695
        %v4652 = vpow.pop %v4651
        %v4653 = vadd.f32 %v4628, 1.0
        %v4654 = vadd.f32 %v4630, 1.0
        %v4655 = vadd.f32 %v4632, 1.0
        %v4656 = vadd.f32 %v4634, 1.0
        %v4657 = vadd.f32 %v4636, 1.0
        %v4658 = vadd.f32 %v4638, 1.0
        %v4659 = vadd.f32 %v4640, 1.0
        %v4660 = vadd.f32 %v4642, 1.0
        %v4661 = vadd.f32 %v4644, 1.0
        %v4662 = vadd.f32 %v4646, 1.0
        %v4663 = vadd.f32 %v4648, 1.0
        %v4664 = vadd.f32 %v4650, 1.0
        %v4665 = vadd.f32 %v4652, 1.0
        %v4666 = vrcp.pop %v4653
        %v4667 = vmul.f32 1.0, %v4666
        %v4668 = vrcp.pop %v4654
        %v4669 = vmul.f32 1.0, %v4668
        %v4670 = vrcp.pop %v4655
        %v4671 = vmul.f32 1.0, %v4670
        %v4672 = vrcp.pop %v4656
        %v4673 = vmul.f32 1.0, %v4672
        %v4674 = vrcp.pop %v4657
        %v4675 = vmul.f32 1.0, %v4674
        %v4676 = vrcp.pop %v4658
        %v4677 = vmul.f32 1.0, %v4676
        %v4678 = vrcp.pop %v4659
        %v4679 = vmul.f32 1.0, %v4678
        %v4680 = vrcp.pop %v4660
        %v4681 = vmul.f32 1.0, %v4680
        %v4682 = vrcp.pop %v4661
        %v4683 = vmul.f32 1.0, %v4682
        %v4684 = vrcp.pop %v4662
        %v4685 = vmul.f32 1.0, %v4684
        %v4686 = vrcp.pop %v4663
        %v4687 = vmul.f32 1.0, %v4686
        %v4688 = vrcp.pop %v4664
        %v4689 = vmul.f32 1.0, %v4688
        %v4690 = vrcp.pop %v4665
        %v4691 = vmul.f32 1.0, %v4690
        %v4692 = vtanh.pop %v4561
        %v4693 = vtanh.pop %v4564
        %v4694 = vtanh.pop %v4569
        %v4695 = vtanh.pop %v4572
        %v4696 = vtanh.pop %v4577
        %v4697 = vtanh.pop %v4580
        %v4698 = vtanh.pop %v4585
        %v4699 = vtanh.pop %v4588
        %v4700 = vtanh.pop %v4593
        %v4701 = vtanh.pop %v4596
        %v4702 = vtanh.pop %v4601
        %v4703 = vtanh.pop %v4604
        %v4704 = vtanh.pop %v4609
        %v4705 = vld [vmem:[%s1239] sm:$0xff]
        %v4706 = vld [vmem:[%s1239 + $0x8] sm:$0xff]
        %v4707 = vld [vmem:[%s1239 + $0x10] sm:$0xff]
        %v4708 = vld [vmem:[%s1239 + $0x18] sm:$0xff]
        %v4709 = vld [vmem:[%s1239 + $0x20] sm:$0xff]
        %v4710 = vld [vmem:[%s1239 + $0x28] sm:$0xff]
        %v4711 = vld [vmem:[%s1239 + $0x30] sm:$0xff]
        %v4712 = vld [vmem:[%s1239 + $0x38] sm:$0xff]
        %v4713 = vld [vmem:[%s1239 + $0x40] sm:$0xff]
        %v4714 = vld [vmem:[%s1239 + $0x48] sm:$0xff]
        %v4715 = vld [vmem:[%s1239 + $0x50] sm:$0xff]
        %v4716 = vld [vmem:[%s1239 + $0x58] sm:$0xff]
        %v4717 = vld [vmem:[%s1239 + $0x60] sm:$0xf]
        %4731 = vrot.lane.b32.xlu0 %v4705, 8
        %v4732 = vpop.permute.xlu0 %4731
        %4733 = vrot.lane.b32.xlu0 %v4706, 8
        %v4734 = vpop.permute.xlu0 %4733
        %4735 = vrot.lane.b32.xlu0 %v4707, 8
        %v4736 = vpop.permute.xlu0 %4735
        %4737 = vrot.lane.b32.xlu0 %v4708, 8
        %v4738 = vpop.permute.xlu0 %4737
        %4739 = vrot.lane.b32.xlu0 %v4709, 8
        %v4740 = vpop.permute.xlu0 %4739
        %4741 = vrot.lane.b32.xlu0 %v4710, 8
        %v4742 = vpop.permute.xlu0 %4741
        %4743 = vrot.lane.b32.xlu0 %v4711, 8
        %v4744 = vpop.permute.xlu0 %4743
        %4745 = vrot.lane.b32.xlu0 %v4712, 8
        %v4746 = vpop.permute.xlu0 %4745
        %4747 = vrot.lane.b32.xlu0 %v4713, 8
        %v4748 = vpop.permute.xlu0 %4747
        %4749 = vrot.lane.b32.xlu0 %v4714, 8
        %v4750 = vpop.permute.xlu0 %4749
        %4751 = vrot.lane.b32.xlu0 %v4715, 8
        %v4752 = vpop.permute.xlu0 %4751
        %4753 = vrot.lane.b32.xlu0 %v4716, 8
        %v4754 = vpop.permute.xlu0 %4753
        %4755 = vrot.lane.b32.xlu0 %v4717, 8
        %v4756 = vpop.permute.xlu0 %4755
        %v4770 = vmul.f32 %v4667, %v4732
        %v4771 = vmul.f32 %v4669, %v4734
        %v4772 = vmul.f32 %v4671, %v4736
        %v4773 = vmul.f32 %v4673, %v4738
        %v4774 = vmul.f32 %v4675, %v4740
        %v4775 = vmul.f32 %v4677, %v4742
        %v4776 = vmul.f32 %v4679, %v4744
        %v4777 = vmul.f32 %v4681, %v4746
        %v4778 = vmul.f32 %v4683, %v4748
        %v4779 = vmul.f32 %v4685, %v4750
        %v4780 = vmul.f32 %v4687, %v4752
        %v4781 = vmul.f32 %v4689, %v4754
        %v4782 = vmul.f32 %v4691, %v4756
        %4796 = vrot.lane.b32.xlu0 %v4692, 112
        %v4797 = vpop.permute.xlu0 %4796
        %4798 = vrot.lane.b32.xlu0 %v4693, 112
        %v4799 = vpop.permute.xlu0 %4798
        %4800 = vrot.lane.b32.xlu0 %v4694, 112
        %v4801 = vpop.permute.xlu0 %4800
        %4802 = vrot.lane.b32.xlu0 %v4695, 112
        %v4803 = vpop.permute.xlu0 %4802
        %4804 = vrot.lane.b32.xlu0 %v4696, 112
        %v4805 = vpop.permute.xlu0 %4804
        %4806 = vrot.lane.b32.xlu0 %v4697, 112
        %v4807 = vpop.permute.xlu0 %4806
        %4808 = vrot.lane.b32.xlu0 %v4698, 112
        %v4809 = vpop.permute.xlu0 %4808
        %4810 = vrot.lane.b32.xlu0 %v4699, 112
        %v4811 = vpop.permute.xlu0 %4810
        %4812 = vrot.lane.b32.xlu0 %v4700, 112
        %v4813 = vpop.permute.xlu0 %4812
        %4814 = vrot.lane.b32.xlu0 %v4701, 112
        %v4815 = vpop.permute.xlu0 %4814
        %4816 = vrot.lane.b32.xlu0 %v4702, 112
        %v4817 = vpop.permute.xlu0 %4816
        %4818 = vrot.lane.b32.xlu0 %v4703, 112
        %v4819 = vpop.permute.xlu0 %4818
        %4820 = vrot.lane.b32.xlu0 %v4704, 112
        %v4821 = vpop.permute.xlu0 %4820
        %v4835 = vmul.f32 %v4667, %v4797
        %v4836 = vmul.f32 %v4669, %v4799
        %v4837 = vmul.f32 %v4671, %v4801
        %v4838 = vmul.f32 %v4673, %v4803
        %v4839 = vmul.f32 %v4675, %v4805
        %v4840 = vmul.f32 %v4677, %v4807
        %v4841 = vmul.f32 %v4679, %v4809
        %v4842 = vmul.f32 %v4681, %v4811
        %v4843 = vmul.f32 %v4683, %v4813
        %v4844 = vmul.f32 %v4685, %v4815
        %v4845 = vmul.f32 %v4687, %v4817
        %v4846 = vmul.f32 %v4689, %v4819
        %v4847 = vmul.f32 %v4691, %v4821
        %4861 = vrot.lane.b32.xlu0 %v4835, 8
        %v4862 = vpop.permute.xlu0 %4861
        %4863 = vrot.lane.b32.xlu0 %v4836, 8
        %v4864 = vpop.permute.xlu0 %4863
        %4865 = vrot.lane.b32.xlu0 %v4837, 8
        %v4866 = vpop.permute.xlu0 %4865
        %4867 = vrot.lane.b32.xlu0 %v4838, 8
        %v4868 = vpop.permute.xlu0 %4867
        %4869 = vrot.lane.b32.xlu0 %v4839, 8
        %v4870 = vpop.permute.xlu0 %4869
        %4871 = vrot.lane.b32.xlu0 %v4840, 8
        %v4872 = vpop.permute.xlu0 %4871
        %4873 = vrot.lane.b32.xlu0 %v4841, 8
        %v4874 = vpop.permute.xlu0 %4873
        %4875 = vrot.lane.b32.xlu0 %v4842, 8
        %v4876 = vpop.permute.xlu0 %4875
        %4877 = vrot.lane.b32.xlu0 %v4843, 8
        %v4878 = vpop.permute.xlu0 %4877
        %4879 = vrot.lane.b32.xlu0 %v4844, 8
        %v4880 = vpop.permute.xlu0 %4879
        %4881 = vrot.lane.b32.xlu0 %v4845, 8
        %v4882 = vpop.permute.xlu0 %4881
        %4883 = vrot.lane.b32.xlu0 %v4846, 8
        %v4884 = vpop.permute.xlu0 %4883
        %4885 = vrot.lane.b32.xlu0 %v4847, 8
        %v4886 = vpop.permute.xlu0 %4885
        %v4900 = vadd.f32 %v4770, %v4862
        %v4901 = vadd.f32 %v4771, %v4864
        %v4902 = vadd.f32 %v4772, %v4866
        %v4903 = vadd.f32 %v4773, %v4868
        %v4904 = vadd.f32 %v4774, %v4870
        %v4905 = vadd.f32 %v4775, %v4872
        %v4906 = vadd.f32 %v4776, %v4874
        %v4907 = vadd.f32 %v4777, %v4876
        %v4908 = vadd.f32 %v4778, %v4878
        %v4909 = vadd.f32 %v4779, %v4880
        %v4910 = vadd.f32 %v4780, %v4882
        %v4911 = vadd.f32 %v4781, %v4884
        %v4912 = vadd.f32 %v4782, %v4886
        %v4913 = vtanh.pop %v4900
        %v4914 = vtanh.pop %v4901
        %v4915 = vtanh.pop %v4902
        %v4916 = vtanh.pop %v4903
        %v4917 = vtanh.pop %v4904
        %v4918 = vtanh.pop %v4905
        %v4919 = vtanh.pop %v4906
        %v4920 = vtanh.pop %v4907
        %v4921 = vtanh.pop %v4908
        %v4922 = vtanh.pop %v4909
        %v4923 = vtanh.pop %v4910
        %v4924 = vtanh.pop %v4911
        %v4925 = vtanh.pop %v4912
        %4939 = vrot.lane.b32.xlu0 %v4913, 16
        %v4940 = vpop.permute.xlu0 %4939
        %4941 = vrot.lane.b32.xlu0 %v4914, 16
        %v4942 = vpop.permute.xlu0 %4941
        %4943 = vrot.lane.b32.xlu0 %v4915, 16
        %v4944 = vpop.permute.xlu0 %4943
        %4945 = vrot.lane.b32.xlu0 %v4916, 16
        %v4946 = vpop.permute.xlu0 %4945
        %4947 = vrot.lane.b32.xlu0 %v4917, 16
        %v4948 = vpop.permute.xlu0 %4947
        %4949 = vrot.lane.b32.xlu0 %v4918, 16
        %v4950 = vpop.permute.xlu0 %4949
        %4951 = vrot.lane.b32.xlu0 %v4919, 16
        %v4952 = vpop.permute.xlu0 %4951
        %4953 = vrot.lane.b32.xlu0 %v4920, 16
        %v4954 = vpop.permute.xlu0 %4953
        %4955 = vrot.lane.b32.xlu0 %v4921, 16
        %v4956 = vpop.permute.xlu0 %4955
        %4957 = vrot.lane.b32.xlu0 %v4922, 16
        %v4958 = vpop.permute.xlu0 %4957
        %4959 = vrot.lane.b32.xlu0 %v4923, 16
        %v4960 = vpop.permute.xlu0 %4959
        %4961 = vrot.lane.b32.xlu0 %v4924, 16
        %v4962 = vpop.permute.xlu0 %4961
        %4963 = vrot.lane.b32.xlu0 %v4925, 16
        %v4964 = vpop.permute.xlu0 %4963
        %v4978 = vmul.f32 %v4667, %v4940
        %v4979 = vmul.f32 %v4669, %v4942
        %v4980 = vmul.f32 %v4671, %v4944
        %v4981 = vmul.f32 %v4673, %v4946
        %v4982 = vmul.f32 %v4675, %v4948
        %v4983 = vmul.f32 %v4677, %v4950
        %v4984 = vmul.f32 %v4679, %v4952
        %v4985 = vmul.f32 %v4681, %v4954
        %v4986 = vmul.f32 %v4683, %v4956
        %v4987 = vmul.f32 %v4685, %v4958
        %v4988 = vmul.f32 %v4687, %v4960
        %v4989 = vmul.f32 %v4689, %v4962
        %v4990 = vmul.f32 %v4691, %v4964
        %v4991 = vsel %vm3151, %v4978, 0.0
        %v4992 = vsel %vm3152, %v4979, 0.0
        %v4993 = vsel %vm3153, %v4980, 0.0
        %v4994 = vsel %vm3154, %v4981, 0.0
        %v4995 = vsel %vm3155, %v4982, 0.0
        %v4996 = vsel %vm3156, %v4983, 0.0
        %v4997 = vsel %vm3157, %v4984, 0.0
        %v4998 = vsel %vm3158, %v4985, 0.0
        %v4999 = vsel %vm3159, %v4986, 0.0
        %v5000 = vsel %vm3160, %v4987, 0.0
        %v5001 = vsel %vm3161, %v4988, 0.0
        %v5002 = vsel %vm3162, %v4989, 0.0
        %v5003 = vsel %vm3163, %v4990, 0.0
        %v5004 = vsel %vm3151, %v4900, 0.0
        %v5005 = vsel %vm3152, %v4901, 0.0
        %v5006 = vsel %vm3153, %v4902, 0.0
        %v5007 = vsel %vm3154, %v4903, 0.0
        %v5008 = vsel %vm3155, %v4904, 0.0
        %v5009 = vsel %vm3156, %v4905, 0.0
        %v5010 = vsel %vm3157, %v4906, 0.0
        %v5011 = vsel %vm3158, %v4907, 0.0
        %v5012 = vsel %vm3159, %v4908, 0.0
        %v5013 = vsel %vm3160, %v4909, 0.0
        %v5014 = vsel %vm3161, %v4910, 0.0
        %v5015 = vsel %vm3162, %v4911, 0.0
        %v5016 = vsel %vm3163, %v4912, 0.0
        %5017 = vst.msk [vmem:[#allocation3] sm:$0xff] %vm2246, 0.0
        %5018 = vst.msk [vmem:[#allocation3 + $0x8] sm:$0xff] %vm2246, 0.0
        %5019 = vst.msk [vmem:[#allocation3 + $0x74] sm:$0xff] %vm2246, 0.0
        %5020 = vst.msk [vmem:[#allocation3 + $0x7c] sm:$0xf] %vm3193, 0.0
        %5034 = vrot.lane.b32.xlu0 %v4991, 104
        %v5035 = vpop.permute.xlu0 %5034
        %5036 = vrot.lane.b32.xlu0 %v4992, 104
        %v5037 = vpop.permute.xlu0 %5036
        %5038 = vrot.lane.b32.xlu0 %v4993, 104
        %v5039 = vpop.permute.xlu0 %5038
        %5040 = vrot.lane.b32.xlu0 %v4994, 104
        %v5041 = vpop.permute.xlu0 %5040
        %5042 = vrot.lane.b32.xlu0 %v4995, 104
        %v5043 = vpop.permute.xlu0 %5042
        %5044 = vrot.lane.b32.xlu0 %v4996, 104
        %v5045 = vpop.permute.xlu0 %5044
        %5046 = vrot.lane.b32.xlu0 %v4997, 104
        %v5047 = vpop.permute.xlu0 %5046
        %5048 = vrot.lane.b32.xlu0 %v4998, 104
        %v5049 = vpop.permute.xlu0 %5048
        %5050 = vrot.lane.b32.xlu0 %v4999, 104
        %v5051 = vpop.permute.xlu0 %5050
        %5052 = vrot.lane.b32.xlu0 %v5000, 104
        %v5053 = vpop.permute.xlu0 %5052
        %5054 = vrot.lane.b32.xlu0 %v5001, 104
        %v5055 = vpop.permute.xlu0 %5054
        %5056 = vrot.lane.b32.xlu0 %v5002, 104
        %v5057 = vpop.permute.xlu0 %5056
        %5058 = vrot.lane.b32.xlu0 %v5003, 104
        %v5059 = vpop.permute.xlu0 %5058
        %5073 = vst.msk [vmem:[#allocation3 + $0x10] sm:$0xff] %vm2246, %v5035
        %5074 = vst.msk [vmem:[#allocation3 + $0x18] sm:$0xff] %vm2246, %v5037
        %5075 = vst.msk [vmem:[#allocation3 + $0x20] sm:$0xff] %vm2246, %v5039
        %5076 = vst.msk [vmem:[#allocation3 + $0x28] sm:$0xff] %vm2246, %v5041
        %5077 = vst.msk [vmem:[#allocation3 + $0x30] sm:$0xff] %vm2246, %v5043
        %5078 = vst.msk [vmem:[#allocation3 + $0x38] sm:$0xff] %vm2246, %v5045
        %5079 = vst.msk [vmem:[#allocation3 + $0x40] sm:$0xff] %vm2246, %v5047
        %5080 = vst.msk [vmem:[#allocation3 + $0x48] sm:$0xff] %vm2246, %v5049
        %5081 = vst.msk [vmem:[#allocation3 + $0x50] sm:$0xff] %vm2246, %v5051
        %5082 = vst.msk [vmem:[#allocation3 + $0x58] sm:$0xff] %vm2246, %v5053
        %5083 = vst.msk [vmem:[#allocation3 + $0x60] sm:$0xff] %vm2246, %v5055
        %5084 = vst.msk [vmem:[#allocation3 + $0x68] sm:$0xff] %vm2246, %v5057
        %5085 = vst.msk [vmem:[#allocation3 + $0x70] sm:$0xf] %vm3193, %v5059
        %v5086 = vld [vmem:[#allocation3 + $0x5] sm:$0xff]
        %v5087 = vld [vmem:[#allocation3 + $0xd] sm:$0xff]
        %v5088 = vld [vmem:[#allocation3 + $0x15] sm:$0xff]
        %v5089 = vld [vmem:[#allocation3 + $0x1d] sm:$0xff]
        %v5090 = vld [vmem:[#allocation3 + $0x25] sm:$0xff]
        %v5091 = vld [vmem:[#allocation3 + $0x2d] sm:$0xff]
        %v5092 = vld [vmem:[#allocation3 + $0x35] sm:$0xff]
        %v5093 = vld [vmem:[#allocation3 + $0x3d] sm:$0xff]
        %v5094 = vld [vmem:[#allocation3 + $0x45] sm:$0xff]
        %v5095 = vld [vmem:[#allocation3 + $0x4d] sm:$0xff]
        %v5096 = vld [vmem:[#allocation3 + $0x55] sm:$0xff]
        %v5097 = vld [vmem:[#allocation3 + $0x5d] sm:$0xff]
        %v5098 = vld [vmem:[#allocation3 + $0x65] sm:$0xf]
        %v5099 = vld [vmem:[#allocation3 + $0x6] sm:$0xff]
        %v5100 = vld [vmem:[#allocation3 + $0xe] sm:$0xff]
        %v5101 = vld [vmem:[#allocation3 + $0x16] sm:$0xff]
        %v5102 = vld [vmem:[#allocation3 + $0x1e] sm:$0xff]
        %v5103 = vld [vmem:[#allocation3 + $0x26] sm:$0xff]
        %v5104 = vld [vmem:[#allocation3 + $0x2e] sm:$0xff]
        %v5105 = vld [vmem:[#allocation3 + $0x36] sm:$0xff]
        %v5106 = vld [vmem:[#allocation3 + $0x3e] sm:$0xff]
        %v5107 = vld [vmem:[#allocation3 + $0x46] sm:$0xff]
        %v5108 = vld [vmem:[#allocation3 + $0x4e] sm:$0xff]
        %v5109 = vld [vmem:[#allocation3 + $0x56] sm:$0xff]
        %v5110 = vld [vmem:[#allocation3 + $0x5e] sm:$0xff]
        %v5111 = vld [vmem:[#allocation3 + $0x66] sm:$0xf]
        %v5112 = vld [vmem:[#allocation3 + $0x7] sm:$0xff]
        %v5113 = vld [vmem:[#allocation3 + $0xf] sm:$0xff]
        %v5114 = vld [vmem:[#allocation3 + $0x17] sm:$0xff]
        %v5115 = vld [vmem:[#allocation3 + $0x1f] sm:$0xff]
        %v5116 = vld [vmem:[#allocation3 + $0x27] sm:$0xff]
        %v5117 = vld [vmem:[#allocation3 + $0x2f] sm:$0xff]
        %v5118 = vld [vmem:[#allocation3 + $0x37] sm:$0xff]
        %v5119 = vld [vmem:[#allocation3 + $0x3f] sm:$0xff]
        %v5120 = vld [vmem:[#allocation3 + $0x47] sm:$0xff]
        %v5121 = vld [vmem:[#allocation3 + $0x4f] sm:$0xff]
        %v5122 = vld [vmem:[#allocation3 + $0x57] sm:$0xff]
        %v5123 = vld [vmem:[#allocation3 + $0x5f] sm:$0xff]
        %v5124 = vld [vmem:[#allocation3 + $0x67] sm:$0xf]
        %v5125 = vld [vmem:[#allocation3 + $0x67] sm:$0xff]
        %v5126 = vld [vmem:[#allocation3 + $0x6f] sm:$0xf]
        %v5127 = vld [vmem:[#allocation3 + $0x10] sm:$0xff]
        %v5128 = vld [vmem:[#allocation3 + $0x18] sm:$0xff]
        %v5129 = vld [vmem:[#allocation3 + $0x20] sm:$0xff]
        %v5130 = vld [vmem:[#allocation3 + $0x28] sm:$0xff]
        %v5131 = vld [vmem:[#allocation3 + $0x30] sm:$0xff]
        %v5132 = vld [vmem:[#allocation3 + $0x38] sm:$0xff]
        %v5133 = vld [vmem:[#allocation3 + $0x40] sm:$0xff]
        %v5134 = vld [vmem:[#allocation3 + $0x48] sm:$0xff]
        %v5135 = vld [vmem:[#allocation3 + $0x50] sm:$0xff]
        %v5136 = vld [vmem:[#allocation3 + $0x58] sm:$0xff]
        %v5137 = vld [vmem:[#allocation3 + $0x60] sm:$0xff]
        %v5138 = vld [vmem:[#allocation3 + $0x68] sm:$0xff]
        %v5139 = vld [vmem:[#allocation3 + $0x70] sm:$0xf]
        %v5140 = vld [vmem:[#allocation3 + $0x11] sm:$0xff]
        %v5141 = vld [vmem:[#allocation3 + $0x19] sm:$0xff]
        %v5142 = vld [vmem:[#allocation3 + $0x21] sm:$0xff]
        %v5143 = vld [vmem:[#allocation3 + $0x29] sm:$0xff]
        %v5144 = vld [vmem:[#allocation3 + $0x31] sm:$0xff]
        %v5145 = vld [vmem:[#allocation3 + $0x39] sm:$0xff]
        %v5146 = vld [vmem:[#allocation3 + $0x41] sm:$0xff]
        %v5147 = vld [vmem:[#allocation3 + $0x49] sm:$0xff]
        %v5148 = vld [vmem:[#allocation3 + $0x51] sm:$0xff]
        %v5149 = vld [vmem:[#allocation3 + $0x59] sm:$0xff]
        %v5150 = vld [vmem:[#allocation3 + $0x61] sm:$0xff]
        %v5151 = vld [vmem:[#allocation3 + $0x69] sm:$0xff]
        %v5152 = vld [vmem:[#allocation3 + $0x71] sm:$0xf]
        %v5153 = vld [vmem:[#allocation3 + $0x71] sm:$0xff]
        %v5154 = vld [vmem:[#allocation3 + $0x79] sm:$0xf]
        %v5155 = vld [vmem:[#allocation3 + $0x1a] sm:$0xff]
        %v5156 = vld [vmem:[#allocation3 + $0x22] sm:$0xff]
        %v5157 = vld [vmem:[#allocation3 + $0x2a] sm:$0xff]
        %v5158 = vld [vmem:[#allocation3 + $0x32] sm:$0xff]
        %v5159 = vld [vmem:[#allocation3 + $0x3a] sm:$0xff]
        %v5160 = vld [vmem:[#allocation3 + $0x42] sm:$0xff]
        %v5161 = vld [vmem:[#allocation3 + $0x4a] sm:$0xff]
        %v5162 = vld [vmem:[#allocation3 + $0x52] sm:$0xff]
        %v5163 = vld [vmem:[#allocation3 + $0x5a] sm:$0xff]
        %v5164 = vld [vmem:[#allocation3 + $0x62] sm:$0xff]
        %v5165 = vld [vmem:[#allocation3 + $0x6a] sm:$0xff]
        %v5166 = vld [vmem:[#allocation3 + $0x72] sm:$0xff]
        %v5167 = vld [vmem:[#allocation3 + $0x7a] sm:$0xf]
        %v5168 = vld [vmem:[#allocation3 + $0x1b] sm:$0xff]
        %v5169 = vld [vmem:[#allocation3 + $0x23] sm:$0xff]
        %v5170 = vld [vmem:[#allocation3 + $0x2b] sm:$0xff]
        %v5171 = vld [vmem:[#allocation3 + $0x33] sm:$0xff]
        %v5172 = vld [vmem:[#allocation3 + $0x3b] sm:$0xff]
        %v5173 = vld [vmem:[#allocation3 + $0x43] sm:$0xff]
        %v5174 = vld [vmem:[#allocation3 + $0x4b] sm:$0xff]
        %v5175 = vld [vmem:[#allocation3 + $0x53] sm:$0xff]
        %v5176 = vld [vmem:[#allocation3 + $0x5b] sm:$0xff]
        %v5177 = vld [vmem:[#allocation3 + $0x63] sm:$0xff]
        %v5178 = vld [vmem:[#allocation3 + $0x6b] sm:$0xff]
        %v5179 = vld [vmem:[#allocation3 + $0x73] sm:$0xff]
        %v5180 = vld [vmem:[#allocation3 + $0x7b] sm:$0xf]
        %v5181 = vld [vmem:[%s1244 + $0x5] sm:$0xff]
        %v5182 = vld [vmem:[%s1244 + $0xd] sm:$0xff]
        %v5183 = vld [vmem:[%s1244 + $0x15] sm:$0xff]
        %v5184 = vld [vmem:[%s1244 + $0x1d] sm:$0xff]
        %v5185 = vld [vmem:[%s1244 + $0x25] sm:$0xff]
        %v5186 = vld [vmem:[%s1244 + $0x2d] sm:$0xff]
        %v5187 = vld [vmem:[%s1244 + $0x35] sm:$0xff]
        %v5188 = vld [vmem:[%s1244 + $0x3d] sm:$0xff]
        %v5189 = vld [vmem:[%s1244 + $0x45] sm:$0xff]
        %v5190 = vld [vmem:[%s1244 + $0x4d] sm:$0xff]
        %v5191 = vld [vmem:[%s1244 + $0x55] sm:$0xff]
        %v5192 = vld [vmem:[%s1244 + $0x5d] sm:$0xff]
        %v5193 = vld [vmem:[%s1244 + $0x65] sm:$0xf]
        %v5194 = vld [vmem:[%s1244 + $0x6] sm:$0xff]
        %v5195 = vld [vmem:[%s1244 + $0xe] sm:$0xff]
        %v5196 = vld [vmem:[%s1244 + $0x16] sm:$0xff]
        %v5197 = vld [vmem:[%s1244 + $0x1e] sm:$0xff]
        %v5198 = vld [vmem:[%s1244 + $0x26] sm:$0xff]
        %v5199 = vld [vmem:[%s1244 + $0x2e] sm:$0xff]
        %v5200 = vld [vmem:[%s1244 + $0x36] sm:$0xff]
        %v5201 = vld [vmem:[%s1244 + $0x3e] sm:$0xff]
        %v5202 = vld [vmem:[%s1244 + $0x46] sm:$0xff]
        %v5203 = vld [vmem:[%s1244 + $0x4e] sm:$0xff]
        %v5204 = vld [vmem:[%s1244 + $0x56] sm:$0xff]
        %v5205 = vld [vmem:[%s1244 + $0x5e] sm:$0xff]
        %v5206 = vld [vmem:[%s1244 + $0x66] sm:$0xf]
        %v5207 = vld [vmem:[%s1244 + $0x7] sm:$0xff]
        %v5208 = vld [vmem:[%s1244 + $0xf] sm:$0xff]
        %v5209 = vld [vmem:[%s1244 + $0x17] sm:$0xff]
        %v5210 = vld [vmem:[%s1244 + $0x1f] sm:$0xff]
        %v5211 = vld [vmem:[%s1244 + $0x27] sm:$0xff]
        %v5212 = vld [vmem:[%s1244 + $0x2f] sm:$0xff]
        %v5213 = vld [vmem:[%s1244 + $0x37] sm:$0xff]
        %v5214 = vld [vmem:[%s1244 + $0x3f] sm:$0xff]
        %v5215 = vld [vmem:[%s1244 + $0x47] sm:$0xff]
        %v5216 = vld [vmem:[%s1244 + $0x4f] sm:$0xff]
        %v5217 = vld [vmem:[%s1244 + $0x57] sm:$0xff]
        %v5218 = vld [vmem:[%s1244 + $0x5f] sm:$0xff]
        %v5219 = vld [vmem:[%s1244 + $0x67] sm:$0xf]
        %v5220 = vld [vmem:[%s1244 + $0x67] sm:$0xff]
        %v5221 = vld [vmem:[%s1244 + $0x6f] sm:$0xf]
        %v5222 = vld [vmem:[%s1244 + $0x10] sm:$0xff]
        %v5223 = vld [vmem:[%s1244 + $0x18] sm:$0xff]
        %v5224 = vld [vmem:[%s1244 + $0x20] sm:$0xff]
        %v5225 = vld [vmem:[%s1244 + $0x28] sm:$0xff]
        %v5226 = vld [vmem:[%s1244 + $0x30] sm:$0xff]
        %v5227 = vld [vmem:[%s1244 + $0x38] sm:$0xff]
        %v5228 = vld [vmem:[%s1244 + $0x40] sm:$0xff]
        %v5229 = vld [vmem:[%s1244 + $0x48] sm:$0xff]
        %v5230 = vld [vmem:[%s1244 + $0x50] sm:$0xff]
        %v5231 = vld [vmem:[%s1244 + $0x58] sm:$0xff]
        %v5232 = vld [vmem:[%s1244 + $0x60] sm:$0xff]
        %v5233 = vld [vmem:[%s1244 + $0x68] sm:$0xff]
        %v5234 = vld [vmem:[%s1244 + $0x70] sm:$0xf]
        %v5235 = vld [vmem:[%s1244 + $0x11] sm:$0xff]
        %v5236 = vld [vmem:[%s1244 + $0x19] sm:$0xff]
        %v5237 = vld [vmem:[%s1244 + $0x21] sm:$0xff]
        %v5238 = vld [vmem:[%s1244 + $0x29] sm:$0xff]
        %v5239 = vld [vmem:[%s1244 + $0x31] sm:$0xff]
        %v5240 = vld [vmem:[%s1244 + $0x39] sm:$0xff]
        %v5241 = vld [vmem:[%s1244 + $0x41] sm:$0xff]
        %v5242 = vld [vmem:[%s1244 + $0x49] sm:$0xff]
        %v5243 = vld [vmem:[%s1244 + $0x51] sm:$0xff]
        %v5244 = vld [vmem:[%s1244 + $0x59] sm:$0xff]
        %v5245 = vld [vmem:[%s1244 + $0x61] sm:$0xff]
        %v5246 = vld [vmem:[%s1244 + $0x69] sm:$0xff]
        %v5247 = vld [vmem:[%s1244 + $0x71] sm:$0xf]
        %v5248 = vld [vmem:[%s1244 + $0x71] sm:$0xff]
        %v5249 = vld [vmem:[%s1244 + $0x79] sm:$0xf]
        %v5250 = vld [vmem:[%s1244 + $0x1a] sm:$0xff]
        %v5251 = vld [vmem:[%s1244 + $0x22] sm:$0xff]
        %v5252 = vld [vmem:[%s1244 + $0x2a] sm:$0xff]
        %v5253 = vld [vmem:[%s1244 + $0x32] sm:$0xff]
        %v5254 = vld [vmem:[%s1244 + $0x3a] sm:$0xff]
        %v5255 = vld [vmem:[%s1244 + $0x42] sm:$0xff]
        %v5256 = vld [vmem:[%s1244 + $0x4a] sm:$0xff]
        %v5257 = vld [vmem:[%s1244 + $0x52] sm:$0xff]
        %v5258 = vld [vmem:[%s1244 + $0x5a] sm:$0xff]
        %v5259 = vld [vmem:[%s1244 + $0x62] sm:$0xff]
        %v5260 = vld [vmem:[%s1244 + $0x6a] sm:$0xff]
        %v5261 = vld [vmem:[%s1244 + $0x72] sm:$0xff]
        %v5262 = vld [vmem:[%s1244 + $0x7a] sm:$0xf]
        %v5263 = vld [vmem:[%s1244 + $0x1b] sm:$0xff]
        %v5264 = vld [vmem:[%s1244 + $0x23] sm:$0xff]
        %v5265 = vld [vmem:[%s1244 + $0x2b] sm:$0xff]
        %v5266 = vld [vmem:[%s1244 + $0x33] sm:$0xff]
        %v5267 = vld [vmem:[%s1244 + $0x3b] sm:$0xff]
        %v5268 = vld [vmem:[%s1244 + $0x43] sm:$0xff]
        %v5269 = vld [vmem:[%s1244 + $0x4b] sm:$0xff]
        %v5270 = vld [vmem:[%s1244 + $0x53] sm:$0xff]
        %v5271 = vld [vmem:[%s1244 + $0x5b] sm:$0xff]
        %v5272 = vld [vmem:[%s1244 + $0x63] sm:$0xff]
        %v5273 = vld [vmem:[%s1244 + $0x6b] sm:$0xff]
        %v5274 = vld [vmem:[%s1244 + $0x73] sm:$0xff]
        %v5275 = vld [vmem:[%s1244 + $0x7b] sm:$0xf]
        %5289 = vrot.lane.b32.xlu0 %v5099, 8
        %v5290 = vpop.permute.xlu0 %5289
        %5291 = vrot.lane.b32.xlu0 %v5100, 8
        %v5292 = vpop.permute.xlu0 %5291
        %5293 = vrot.lane.b32.xlu0 %v5101, 8
        %v5294 = vpop.permute.xlu0 %5293
        %5295 = vrot.lane.b32.xlu0 %v5102, 8
        %v5296 = vpop.permute.xlu0 %5295
        %5297 = vrot.lane.b32.xlu0 %v5103, 8
        %v5298 = vpop.permute.xlu0 %5297
        %5299 = vrot.lane.b32.xlu0 %v5104, 8
        %v5300 = vpop.permute.xlu0 %5299
        %5301 = vrot.lane.b32.xlu0 %v5105, 8
        %v5302 = vpop.permute.xlu0 %5301
        %5303 = vrot.lane.b32.xlu0 %v5106, 8
        %v5304 = vpop.permute.xlu0 %5303
        %5305 = vrot.lane.b32.xlu0 %v5107, 8
        %v5306 = vpop.permute.xlu0 %5305
        %5307 = vrot.lane.b32.xlu0 %v5108, 8
        %v5308 = vpop.permute.xlu0 %5307
        %5309 = vrot.lane.b32.xlu0 %v5109, 8
        %v5310 = vpop.permute.xlu0 %5309
        %5311 = vrot.lane.b32.xlu0 %v5110, 8
        %v5312 = vpop.permute.xlu0 %5311
        %5313 = vrot.lane.b32.xlu0 %v5111, 8
        %v5314 = vpop.permute.xlu0 %5313
        %5341 = vrot.lane.b32.xlu0 %v5112, 16
        %v5342 = vpop.permute.xlu0 %5341
        %5343 = vrot.lane.b32.xlu0 %v5113, 16
        %v5344 = vpop.permute.xlu0 %5343
        %5345 = vrot.lane.b32.xlu0 %v5114, 16
        %v5346 = vpop.permute.xlu0 %5345
        %5347 = vrot.lane.b32.xlu0 %v5115, 16
        %v5348 = vpop.permute.xlu0 %5347
        %5349 = vrot.lane.b32.xlu0 %v5116, 16
        %v5350 = vpop.permute.xlu0 %5349
        %5351 = vrot.lane.b32.xlu0 %v5117, 16
        %v5352 = vpop.permute.xlu0 %5351
        %5353 = vrot.lane.b32.xlu0 %v5118, 16
        %v5354 = vpop.permute.xlu0 %5353
        %5355 = vrot.lane.b32.xlu0 %v5119, 16
        %v5356 = vpop.permute.xlu0 %5355
        %5357 = vrot.lane.b32.xlu0 %v5120, 16
        %v5358 = vpop.permute.xlu0 %5357
        %5359 = vrot.lane.b32.xlu0 %v5121, 16
        %v5360 = vpop.permute.xlu0 %5359
        %5361 = vrot.lane.b32.xlu0 %v5122, 16
        %v5362 = vpop.permute.xlu0 %5361
        %5363 = vrot.lane.b32.xlu0 %v5123, 16
        %v5364 = vpop.permute.xlu0 %5363
        %5365 = vrot.lane.b32.xlu0 %v5124, 16
        %v5366 = vpop.permute.xlu0 %5365
        %5382 = vrot.lane.b32.xlu0 %v5113, 24
        %v5383 = vpop.permute.xlu0 %5382
        %5384 = vrot.lane.b32.xlu0 %v5114, 24
        %v5385 = vpop.permute.xlu0 %5384
        %5386 = vrot.lane.b32.xlu0 %v5115, 24
        %v5387 = vpop.permute.xlu0 %5386
        %5388 = vrot.lane.b32.xlu0 %v5116, 24
        %v5389 = vpop.permute.xlu0 %5388
        %5390 = vrot.lane.b32.xlu0 %v5117, 24
        %v5391 = vpop.permute.xlu0 %5390
        %5392 = vrot.lane.b32.xlu0 %v5118, 24
        %v5393 = vpop.permute.xlu0 %5392
        %5394 = vrot.lane.b32.xlu0 %v5119, 24
        %v5395 = vpop.permute.xlu0 %5394
        %5396 = vrot.lane.b32.xlu0 %v5120, 24
        %v5397 = vpop.permute.xlu0 %5396
        %5398 = vrot.lane.b32.xlu0 %v5121, 24
        %v5399 = vpop.permute.xlu0 %5398
        %5400 = vrot.lane.b32.xlu0 %v5122, 24
        %v5401 = vpop.permute.xlu0 %5400
        %5402 = vrot.lane.b32.xlu0 %v5123, 24
        %v5403 = vpop.permute.xlu0 %5402
        %5404 = vrot.lane.b32.xlu0 %v5125, 24
        %v5405 = vpop.permute.xlu0 %5404
        %5406 = vrot.lane.b32.xlu0 %v5126, 24
        %v5407 = vpop.permute.xlu0 %5406
        %5434 = vrot.lane.b32.xlu0 %v5127, 32
        %v5435 = vpop.permute.xlu0 %5434
        %5436 = vrot.lane.b32.xlu0 %v5128, 32
        %v5437 = vpop.permute.xlu0 %5436
        %5438 = vrot.lane.b32.xlu0 %v5129, 32
        %v5439 = vpop.permute.xlu0 %5438
        %5440 = vrot.lane.b32.xlu0 %v5130, 32
        %v5441 = vpop.permute.xlu0 %5440
        %5442 = vrot.lane.b32.xlu0 %v5131, 32
        %v5443 = vpop.permute.xlu0 %5442
        %5444 = vrot.lane.b32.xlu0 %v5132, 32
        %v5445 = vpop.permute.xlu0 %5444
        %5446 = vrot.lane.b32.xlu0 %v5133, 32
        %v5447 = vpop.permute.xlu0 %5446
        %5448 = vrot.lane.b32.xlu0 %v5134, 32
        %v5449 = vpop.permute.xlu0 %5448
        %5450 = vrot.lane.b32.xlu0 %v5135, 32
        %v5451 = vpop.permute.xlu0 %5450
        %5452 = vrot.lane.b32.xlu0 %v5136, 32
        %v5453 = vpop.permute.xlu0 %5452
        %5454 = vrot.lane.b32.xlu0 %v5137, 32
        %v5455 = vpop.permute.xlu0 %5454
        %5456 = vrot.lane.b32.xlu0 %v5138, 32
        %v5457 = vpop.permute.xlu0 %5456
        %5458 = vrot.lane.b32.xlu0 %v5139, 32
        %v5459 = vpop.permute.xlu0 %5458
        %5486 = vrot.lane.b32.xlu0 %v5140, 40
        %v5487 = vpop.permute.xlu0 %5486
        %5488 = vrot.lane.b32.xlu0 %v5141, 40
        %v5489 = vpop.permute.xlu0 %5488
        %5490 = vrot.lane.b32.xlu0 %v5142, 40
        %v5491 = vpop.permute.xlu0 %5490
        %5492 = vrot.lane.b32.xlu0 %v5143, 40
        %v5493 = vpop.permute.xlu0 %5492
        %5494 = vrot.lane.b32.xlu0 %v5144, 40
        %v5495 = vpop.permute.xlu0 %5494
        %5496 = vrot.lane.b32.xlu0 %v5145, 40
        %v5497 = vpop.permute.xlu0 %5496
        %5498 = vrot.lane.b32.xlu0 %v5146, 40
        %v5499 = vpop.permute.xlu0 %5498
        %5500 = vrot.lane.b32.xlu0 %v5147, 40
        %v5501 = vpop.permute.xlu0 %5500
        %5502 = vrot.lane.b32.xlu0 %v5148, 40
        %v5503 = vpop.permute.xlu0 %5502
        %5504 = vrot.lane.b32.xlu0 %v5149, 40
        %v5505 = vpop.permute.xlu0 %5504
        %5506 = vrot.lane.b32.xlu0 %v5150, 40
        %v5507 = vpop.permute.xlu0 %5506
        %5508 = vrot.lane.b32.xlu0 %v5151, 40
        %v5509 = vpop.permute.xlu0 %5508
        %5510 = vrot.lane.b32.xlu0 %v5152, 40
        %v5511 = vpop.permute.xlu0 %5510
        %5527 = vrot.lane.b32.xlu0 %v5141, 48
        %v5528 = vpop.permute.xlu0 %5527
        %5529 = vrot.lane.b32.xlu0 %v5142, 48
        %v5530 = vpop.permute.xlu0 %5529
        %5531 = vrot.lane.b32.xlu0 %v5143, 48
        %v5532 = vpop.permute.xlu0 %5531
        %5533 = vrot.lane.b32.xlu0 %v5144, 48
        %v5534 = vpop.permute.xlu0 %5533
        %5535 = vrot.lane.b32.xlu0 %v5145, 48
        %v5536 = vpop.permute.xlu0 %5535
        %5537 = vrot.lane.b32.xlu0 %v5146, 48
        %v5538 = vpop.permute.xlu0 %5537
        %5539 = vrot.lane.b32.xlu0 %v5147, 48
        %v5540 = vpop.permute.xlu0 %5539
        %5541 = vrot.lane.b32.xlu0 %v5148, 48
        %v5542 = vpop.permute.xlu0 %5541
        %5543 = vrot.lane.b32.xlu0 %v5149, 48
        %v5544 = vpop.permute.xlu0 %5543
        %5545 = vrot.lane.b32.xlu0 %v5150, 48
        %v5546 = vpop.permute.xlu0 %5545
        %5547 = vrot.lane.b32.xlu0 %v5151, 48
        %v5548 = vpop.permute.xlu0 %5547
        %5549 = vrot.lane.b32.xlu0 %v5153, 48
        %v5550 = vpop.permute.xlu0 %5549
        %5551 = vrot.lane.b32.xlu0 %v5154, 48
        %v5552 = vpop.permute.xlu0 %5551
        %5579 = vrot.lane.b32.xlu0 %v5155, 56
        %v5580 = vpop.permute.xlu0 %5579
        %5581 = vrot.lane.b32.xlu0 %v5156, 56
        %v5582 = vpop.permute.xlu0 %5581
        %5583 = vrot.lane.b32.xlu0 %v5157, 56
        %v5584 = vpop.permute.xlu0 %5583
        %5585 = vrot.lane.b32.xlu0 %v5158, 56
        %v5586 = vpop.permute.xlu0 %5585
        %5587 = vrot.lane.b32.xlu0 %v5159, 56
        %v5588 = vpop.permute.xlu0 %5587
        %5589 = vrot.lane.b32.xlu0 %v5160, 56
        %v5590 = vpop.permute.xlu0 %5589
        %5591 = vrot.lane.b32.xlu0 %v5161, 56
        %v5592 = vpop.permute.xlu0 %5591
        %5593 = vrot.lane.b32.xlu0 %v5162, 56
        %v5594 = vpop.permute.xlu0 %5593
        %5595 = vrot.lane.b32.xlu0 %v5163, 56
        %v5596 = vpop.permute.xlu0 %5595
        %5597 = vrot.lane.b32.xlu0 %v5164, 56
        %v5598 = vpop.permute.xlu0 %5597
        %5599 = vrot.lane.b32.xlu0 %v5165, 56
        %v5600 = vpop.permute.xlu0 %5599
        %5601 = vrot.lane.b32.xlu0 %v5166, 56
        %v5602 = vpop.permute.xlu0 %5601
        %5603 = vrot.lane.b32.xlu0 %v5167, 56
        %v5604 = vpop.permute.xlu0 %5603
        %5631 = vrot.lane.b32.xlu0 %v5168, 64
        %v5632 = vpop.permute.xlu0 %5631
        %5633 = vrot.lane.b32.xlu0 %v5169, 64
        %v5634 = vpop.permute.xlu0 %5633
        %5635 = vrot.lane.b32.xlu0 %v5170, 64
        %v5636 = vpop.permute.xlu0 %5635
        %5637 = vrot.lane.b32.xlu0 %v5171, 64
        %v5638 = vpop.permute.xlu0 %5637
        %5639 = vrot.lane.b32.xlu0 %v5172, 64
        %v5640 = vpop.permute.xlu0 %5639
        %5641 = vrot.lane.b32.xlu0 %v5173, 64
        %v5642 = vpop.permute.xlu0 %5641
        %5643 = vrot.lane.b32.xlu0 %v5174, 64
        %v5644 = vpop.permute.xlu0 %5643
        %5645 = vrot.lane.b32.xlu0 %v5175, 64
        %v5646 = vpop.permute.xlu0 %5645
        %5647 = vrot.lane.b32.xlu0 %v5176, 64
        %v5648 = vpop.permute.xlu0 %5647
        %5649 = vrot.lane.b32.xlu0 %v5177, 64
        %v5650 = vpop.permute.xlu0 %5649
        %5651 = vrot.lane.b32.xlu0 %v5178, 64
        %v5652 = vpop.permute.xlu0 %5651
        %5653 = vrot.lane.b32.xlu0 %v5179, 64
        %v5654 = vpop.permute.xlu0 %5653
        %5655 = vrot.lane.b32.xlu0 %v5180, 64
        %v5656 = vpop.permute.xlu0 %5655
        %5683 = vrot.lane.b32.xlu0 %v5181, 72
        %v5684 = vpop.permute.xlu0 %5683
        %5685 = vrot.lane.b32.xlu0 %v5182, 72
        %v5686 = vpop.permute.xlu0 %5685
        %5687 = vrot.lane.b32.xlu0 %v5183, 72
        %v5688 = vpop.permute.xlu0 %5687
        %5689 = vrot.lane.b32.xlu0 %v5184, 72
        %v5690 = vpop.permute.xlu0 %5689
        %5691 = vrot.lane.b32.xlu0 %v5185, 72
        %v5692 = vpop.permute.xlu0 %5691
        %5693 = vrot.lane.b32.xlu0 %v5186, 72
        %v5694 = vpop.permute.xlu0 %5693
        %5695 = vrot.lane.b32.xlu0 %v5187, 72
        %v5696 = vpop.permute.xlu0 %5695
        %5697 = vrot.lane.b32.xlu0 %v5188, 72
        %v5698 = vpop.permute.xlu0 %5697
        %5699 = vrot.lane.b32.xlu0 %v5189, 72
        %v5700 = vpop.permute.xlu0 %5699
        %5701 = vrot.lane.b32.xlu0 %v5190, 72
        %v5702 = vpop.permute.xlu0 %5701
        %5703 = vrot.lane.b32.xlu0 %v5191, 72
        %v5704 = vpop.permute.xlu0 %5703
        %5705 = vrot.lane.b32.xlu0 %v5192, 72
        %v5706 = vpop.permute.xlu0 %5705
        %5707 = vrot.lane.b32.xlu0 %v5193, 72
        %v5708 = vpop.permute.xlu0 %5707
        %5735 = vrot.lane.b32.xlu0 %v5194, 80
        %v5736 = vpop.permute.xlu0 %5735
        %5737 = vrot.lane.b32.xlu0 %v5195, 80
        %v5738 = vpop.permute.xlu0 %5737
        %5739 = vrot.lane.b32.xlu0 %v5196, 80
        %v5740 = vpop.permute.xlu0 %5739
        %5741 = vrot.lane.b32.xlu0 %v5197, 80
        %v5742 = vpop.permute.xlu0 %5741
        %5743 = vrot.lane.b32.xlu0 %v5198, 80
        %v5744 = vpop.permute.xlu0 %5743
        %5745 = vrot.lane.b32.xlu0 %v5199, 80
        %v5746 = vpop.permute.xlu0 %5745
        %5747 = vrot.lane.b32.xlu0 %v5200, 80
        %v5748 = vpop.permute.xlu0 %5747
        %5749 = vrot.lane.b32.xlu0 %v5201, 80
        %v5750 = vpop.permute.xlu0 %5749
        %5751 = vrot.lane.b32.xlu0 %v5202, 80
        %v5752 = vpop.permute.xlu0 %5751
        %5753 = vrot.lane.b32.xlu0 %v5203, 80
        %v5754 = vpop.permute.xlu0 %5753
        %5755 = vrot.lane.b32.xlu0 %v5204, 80
        %v5756 = vpop.permute.xlu0 %5755
        %5757 = vrot.lane.b32.xlu0 %v5205, 80
        %v5758 = vpop.permute.xlu0 %5757
        %5759 = vrot.lane.b32.xlu0 %v5206, 80
        %v5760 = vpop.permute.xlu0 %5759
        %5787 = vrot.lane.b32.xlu0 %v5207, 88
        %v5788 = vpop.permute.xlu0 %5787
        %5789 = vrot.lane.b32.xlu0 %v5208, 88
        %v5790 = vpop.permute.xlu0 %5789
        %5791 = vrot.lane.b32.xlu0 %v5209, 88
        %v5792 = vpop.permute.xlu0 %5791
        %5793 = vrot.lane.b32.xlu0 %v5210, 88
        %v5794 = vpop.permute.xlu0 %5793
        %5795 = vrot.lane.b32.xlu0 %v5211, 88
        %v5796 = vpop.permute.xlu0 %5795
        %5797 = vrot.lane.b32.xlu0 %v5212, 88
        %v5798 = vpop.permute.xlu0 %5797
        %5799 = vrot.lane.b32.xlu0 %v5213, 88
        %v5800 = vpop.permute.xlu0 %5799
        %5801 = vrot.lane.b32.xlu0 %v5214, 88
        %v5802 = vpop.permute.xlu0 %5801
        %5803 = vrot.lane.b32.xlu0 %v5215, 88
        %v5804 = vpop.permute.xlu0 %5803
        %5805 = vrot.lane.b32.xlu0 %v5216, 88
        %v5806 = vpop.permute.xlu0 %5805
        %5807 = vrot.lane.b32.xlu0 %v5217, 88
        %v5808 = vpop.permute.xlu0 %5807
        %5809 = vrot.lane.b32.xlu0 %v5218, 88
        %v5810 = vpop.permute.xlu0 %5809
        %5811 = vrot.lane.b32.xlu0 %v5219, 88
        %v5812 = vpop.permute.xlu0 %5811
        %5828 = vrot.lane.b32.xlu0 %v5208, 96
        %v5829 = vpop.permute.xlu0 %5828
        %5830 = vrot.lane.b32.xlu0 %v5209, 96
        %v5831 = vpop.permute.xlu0 %5830
        %5832 = vrot.lane.b32.xlu0 %v5210, 96
        %v5833 = vpop.permute.xlu0 %5832
        %5834 = vrot.lane.b32.xlu0 %v5211, 96
        %v5835 = vpop.permute.xlu0 %5834
        %5836 = vrot.lane.b32.xlu0 %v5212, 96
        %v5837 = vpop.permute.xlu0 %5836
        %5838 = vrot.lane.b32.xlu0 %v5213, 96
        %v5839 = vpop.permute.xlu0 %5838
        %5840 = vrot.lane.b32.xlu0 %v5214, 96
        %v5841 = vpop.permute.xlu0 %5840
        %5842 = vrot.lane.b32.xlu0 %v5215, 96
        %v5843 = vpop.permute.xlu0 %5842
        %5844 = vrot.lane.b32.xlu0 %v5216, 96
        %v5845 = vpop.permute.xlu0 %5844
        %5846 = vrot.lane.b32.xlu0 %v5217, 96
        %v5847 = vpop.permute.xlu0 %5846
        %5848 = vrot.lane.b32.xlu0 %v5218, 96
        %v5849 = vpop.permute.xlu0 %5848
        %5850 = vrot.lane.b32.xlu0 %v5220, 96
        %v5851 = vpop.permute.xlu0 %5850
        %5852 = vrot.lane.b32.xlu0 %v5221, 96
        %v5853 = vpop.permute.xlu0 %5852
        %5880 = vrot.lane.b32.xlu0 %v5222, 104
        %v5881 = vpop.permute.xlu0 %5880
        %5882 = vrot.lane.b32.xlu0 %v5223, 104
        %v5883 = vpop.permute.xlu0 %5882
        %5884 = vrot.lane.b32.xlu0 %v5224, 104
        %v5885 = vpop.permute.xlu0 %5884
        %5886 = vrot.lane.b32.xlu0 %v5225, 104
        %v5887 = vpop.permute.xlu0 %5886
        %5888 = vrot.lane.b32.xlu0 %v5226, 104
        %v5889 = vpop.permute.xlu0 %5888
        %5890 = vrot.lane.b32.xlu0 %v5227, 104
        %v5891 = vpop.permute.xlu0 %5890
        %5892 = vrot.lane.b32.xlu0 %v5228, 104
        %v5893 = vpop.permute.xlu0 %5892
        %5894 = vrot.lane.b32.xlu0 %v5229, 104
        %v5895 = vpop.permute.xlu0 %5894
        %5896 = vrot.lane.b32.xlu0 %v5230, 104
        %v5897 = vpop.permute.xlu0 %5896
        %5898 = vrot.lane.b32.xlu0 %v5231, 104
        %v5899 = vpop.permute.xlu0 %5898
        %5900 = vrot.lane.b32.xlu0 %v5232, 104
        %v5901 = vpop.permute.xlu0 %5900
        %5902 = vrot.lane.b32.xlu0 %v5233, 104
        %v5903 = vpop.permute.xlu0 %5902
        %5904 = vrot.lane.b32.xlu0 %v5234, 104
        %v5905 = vpop.permute.xlu0 %5904
        %5932 = vrot.lane.b32.xlu0 %v5235, 112
        %v5933 = vpop.permute.xlu0 %5932
        %5934 = vrot.lane.b32.xlu0 %v5236, 112
        %v5935 = vpop.permute.xlu0 %5934
        %5936 = vrot.lane.b32.xlu0 %v5237, 112
        %v5937 = vpop.permute.xlu0 %5936
        %5938 = vrot.lane.b32.xlu0 %v5238, 112
        %v5939 = vpop.permute.xlu0 %5938
        %5940 = vrot.lane.b32.xlu0 %v5239, 112
        %v5941 = vpop.permute.xlu0 %5940
        %5942 = vrot.lane.b32.xlu0 %v5240, 112
        %v5943 = vpop.permute.xlu0 %5942
        %5944 = vrot.lane.b32.xlu0 %v5241, 112
        %v5945 = vpop.permute.xlu0 %5944
        %5946 = vrot.lane.b32.xlu0 %v5242, 112
        %v5947 = vpop.permute.xlu0 %5946
        %5948 = vrot.lane.b32.xlu0 %v5243, 112
        %v5949 = vpop.permute.xlu0 %5948
        %5950 = vrot.lane.b32.xlu0 %v5244, 112
        %v5951 = vpop.permute.xlu0 %5950
        %5952 = vrot.lane.b32.xlu0 %v5245, 112
        %v5953 = vpop.permute.xlu0 %5952
        %5954 = vrot.lane.b32.xlu0 %v5246, 112
        %v5955 = vpop.permute.xlu0 %5954
        %5956 = vrot.lane.b32.xlu0 %v5247, 112
        %v5957 = vpop.permute.xlu0 %5956
        %5973 = vrot.lane.b32.xlu0 %v5236, 120
        %v5974 = vpop.permute.xlu0 %5973
        %5975 = vrot.lane.b32.xlu0 %v5237, 120
        %v5976 = vpop.permute.xlu0 %5975
        %5977 = vrot.lane.b32.xlu0 %v5238, 120
        %v5978 = vpop.permute.xlu0 %5977
        %5979 = vrot.lane.b32.xlu0 %v5239, 120
        %v5980 = vpop.permute.xlu0 %5979
        %5981 = vrot.lane.b32.xlu0 %v5240, 120
        %v5982 = vpop.permute.xlu0 %5981
        %5983 = vrot.lane.b32.xlu0 %v5241, 120
        %v5984 = vpop.permute.xlu0 %5983
        %5985 = vrot.lane.b32.xlu0 %v5242, 120
        %v5986 = vpop.permute.xlu0 %5985
        %5987 = vrot.lane.b32.xlu0 %v5243, 120
        %v5988 = vpop.permute.xlu0 %5987
        %5989 = vrot.lane.b32.xlu0 %v5244, 120
        %v5990 = vpop.permute.xlu0 %5989
        %5991 = vrot.lane.b32.xlu0 %v5245, 120
        %v5992 = vpop.permute.xlu0 %5991
        %5993 = vrot.lane.b32.xlu0 %v5246, 120
        %v5994 = vpop.permute.xlu0 %5993
        %5995 = vrot.lane.b32.xlu0 %v5248, 120
        %v5996 = vpop.permute.xlu0 %5995
        %5997 = vrot.lane.b32.xlu0 %v5249, 120
        %v5998 = vpop.permute.xlu0 %5997
        %v6012 = vsel %vm2246, %v5086, %v5290
        %v6013 = vsel %vm2246, %v5087, %v5292
        %v6014 = vsel %vm2246, %v5088, %v5294
        %v6015 = vsel %vm2246, %v5089, %v5296
        %v6016 = vsel %vm2246, %v5090, %v5298
        %v6017 = vsel %vm2246, %v5091, %v5300
        %v6018 = vsel %vm2246, %v5092, %v5302
        %v6019 = vsel %vm2246, %v5093, %v5304
        %v6020 = vsel %vm2246, %v5094, %v5306
        %v6021 = vsel %vm2246, %v5095, %v5308
        %v6022 = vsel %vm2246, %v5096, %v5310
        %v6023 = vsel %vm2246, %v5097, %v5312
        %v6024 = vsel %vm2246, %v5098, %v5314
        %v6025 = vsel %vm2274, %v6012, %v5342
        %v6026 = vsel %vm2274, %v6013, %v5344
        %v6027 = vsel %vm2274, %v6014, %v5346
        %v6028 = vsel %vm2274, %v6015, %v5348
        %v6029 = vsel %vm2274, %v6016, %v5350
        %v6030 = vsel %vm2274, %v6017, %v5352
        %v6031 = vsel %vm2274, %v6018, %v5354
        %v6032 = vsel %vm2274, %v6019, %v5356
        %v6033 = vsel %vm2274, %v6020, %v5358
        %v6034 = vsel %vm2274, %v6021, %v5360
        %v6035 = vsel %vm2274, %v6022, %v5362
        %v6036 = vsel %vm2274, %v6023, %v5364
        %v6037 = vsel %vm2274, %v6024, %v5366
        %v6038 = vsel %vm2302, %v6025, %v5383
        %v6039 = vsel %vm2302, %v6026, %v5385
        %v6040 = vsel %vm2302, %v6027, %v5387
        %v6041 = vsel %vm2302, %v6028, %v5389
        %v6042 = vsel %vm2302, %v6029, %v5391
        %v6043 = vsel %vm2302, %v6030, %v5393
        %v6044 = vsel %vm2302, %v6031, %v5395
        %v6045 = vsel %vm2302, %v6032, %v5397
        %v6046 = vsel %vm2302, %v6033, %v5399
        %v6047 = vsel %vm2302, %v6034, %v5401
        %v6048 = vsel %vm2302, %v6035, %v5403
        %v6049 = vsel %vm2302, %v6036, %v5405
        %v6050 = vsel %vm2302, %v6037, %v5407
        %v6051 = vsel %vm2330, %v6038, %v5435
        %v6052 = vsel %vm2330, %v6039, %v5437
        %v6053 = vsel %vm2330, %v6040, %v5439
        %v6054 = vsel %vm2330, %v6041, %v5441
        %v6055 = vsel %vm2330, %v6042, %v5443
        %v6056 = vsel %vm2330, %v6043, %v5445
        %v6057 = vsel %vm2330, %v6044, %v5447
        %v6058 = vsel %vm2330, %v6045, %v5449
        %v6059 = vsel %vm2330, %v6046, %v5451
        %v6060 = vsel %vm2330, %v6047, %v5453
        %v6061 = vsel %vm2330, %v6048, %v5455
        %v6062 = vsel %vm2330, %v6049, %v5457
        %v6063 = vsel %vm2330, %v6050, %v5459
        %v6064 = vsel %vm4238, %v6051, %v5487
        %v6065 = vsel %vm4238, %v6052, %v5489
        %v6066 = vsel %vm4238, %v6053, %v5491
        %v6067 = vsel %vm4238, %v6054, %v5493
        %v6068 = vsel %vm4238, %v6055, %v5495
        %v6069 = vsel %vm4238, %v6056, %v5497
        %v6070 = vsel %vm4238, %v6057, %v5499
        %v6071 = vsel %vm4238, %v6058, %v5501
        %v6072 = vsel %vm4238, %v6059, %v5503
        %v6073 = vsel %vm4238, %v6060, %v5505
        %v6074 = vsel %vm4238, %v6061, %v5507
        %v6075 = vsel %vm4238, %v6062, %v5509
        %v6076 = vsel %vm4238, %v6063, %v5511
        %v6077 = vsel %vm4252, %v6064, %v5528
        %v6078 = vsel %vm4252, %v6065, %v5530
        %v6079 = vsel %vm4252, %v6066, %v5532
        %v6080 = vsel %vm4252, %v6067, %v5534
        %v6081 = vsel %vm4252, %v6068, %v5536
        %v6082 = vsel %vm4252, %v6069, %v5538
        %v6083 = vsel %vm4252, %v6070, %v5540
        %v6084 = vsel %vm4252, %v6071, %v5542
        %v6085 = vsel %vm4252, %v6072, %v5544
        %v6086 = vsel %vm4252, %v6073, %v5546
        %v6087 = vsel %vm4252, %v6074, %v5548
        %v6088 = vsel %vm4252, %v6075, %v5550
        %v6089 = vsel %vm4252, %v6076, %v5552
        %v6090 = vsel %vm4266, %v6077, %v5580
        %v6091 = vsel %vm4266, %v6078, %v5582
        %v6092 = vsel %vm4266, %v6079, %v5584
        %v6093 = vsel %vm4266, %v6080, %v5586
        %v6094 = vsel %vm4266, %v6081, %v5588
        %v6095 = vsel %vm4266, %v6082, %v5590
        %v6096 = vsel %vm4266, %v6083, %v5592
        %v6097 = vsel %vm4266, %v6084, %v5594
        %v6098 = vsel %vm4266, %v6085, %v5596
        %v6099 = vsel %vm4266, %v6086, %v5598
        %v6100 = vsel %vm4266, %v6087, %v5600
        %v6101 = vsel %vm4266, %v6088, %v5602
        %v6102 = vsel %vm4266, %v6089, %v5604
        %v6103 = vsel %vm4280, %v6090, %v5632
        %v6104 = vsel %vm4280, %v6091, %v5634
        %v6105 = vsel %vm4280, %v6092, %v5636
        %v6106 = vsel %vm4280, %v6093, %v5638
        %v6107 = vsel %vm4280, %v6094, %v5640
        %v6108 = vsel %vm4280, %v6095, %v5642
        %v6109 = vsel %vm4280, %v6096, %v5644
        %v6110 = vsel %vm4280, %v6097, %v5646
        %v6111 = vsel %vm4280, %v6098, %v5648
        %v6112 = vsel %vm4280, %v6099, %v5650
        %v6113 = vsel %vm4280, %v6100, %v5652
        %v6114 = vsel %vm4280, %v6101, %v5654
        %v6115 = vsel %vm4280, %v6102, %v5656
        %v6116 = vsel %vm4294, %v6103, %v5684
        %v6117 = vsel %vm4294, %v6104, %v5686
        %v6118 = vsel %vm4294, %v6105, %v5688
        %v6119 = vsel %vm4294, %v6106, %v5690
        %v6120 = vsel %vm4294, %v6107, %v5692
        %v6121 = vsel %vm4294, %v6108, %v5694
        %v6122 = vsel %vm4294, %v6109, %v5696
        %v6123 = vsel %vm4294, %v6110, %v5698
        %v6124 = vsel %vm4294, %v6111, %v5700
        %v6125 = vsel %vm4294, %v6112, %v5702
        %v6126 = vsel %vm4294, %v6113, %v5704
        %v6127 = vsel %vm4294, %v6114, %v5706
        %v6128 = vsel %vm4294, %v6115, %v5708
        %v6129 = vsel %vm4308, %v6116, %v5736
        %v6130 = vsel %vm4308, %v6117, %v5738
        %v6131 = vsel %vm4308, %v6118, %v5740
        %v6132 = vsel %vm4308, %v6119, %v5742
        %v6133 = vsel %vm4308, %v6120, %v5744
        %v6134 = vsel %vm4308, %v6121, %v5746
        %v6135 = vsel %vm4308, %v6122, %v5748
        %v6136 = vsel %vm4308, %v6123, %v5750
        %v6137 = vsel %vm4308, %v6124, %v5752
        %v6138 = vsel %vm4308, %v6125, %v5754
        %v6139 = vsel %vm4308, %v6126, %v5756
        %v6140 = vsel %vm4308, %v6127, %v5758
        %v6141 = vsel %vm4308, %v6128, %v5760
        %v6142 = vsel %vm4322, %v6129, %v5788
        %v6143 = vsel %vm4322, %v6130, %v5790
        %v6144 = vsel %vm4322, %v6131, %v5792
        %v6145 = vsel %vm4322, %v6132, %v5794
        %v6146 = vsel %vm4322, %v6133, %v5796
        %v6147 = vsel %vm4322, %v6134, %v5798
        %v6148 = vsel %vm4322, %v6135, %v5800
        %v6149 = vsel %vm4322, %v6136, %v5802
        %v6150 = vsel %vm4322, %v6137, %v5804
        %v6151 = vsel %vm4322, %v6138, %v5806
        %v6152 = vsel %vm4322, %v6139, %v5808
        %v6153 = vsel %vm4322, %v6140, %v5810
        %v6154 = vsel %vm4322, %v6141, %v5812
        %v6155 = vsel %vm4336, %v6142, %v5829
        %v6156 = vsel %vm4336, %v6143, %v5831
        %v6157 = vsel %vm4336, %v6144, %v5833
        %v6158 = vsel %vm4336, %v6145, %v5835
        %v6159 = vsel %vm4336, %v6146, %v5837
        %v6160 = vsel %vm4336, %v6147, %v5839
        %v6161 = vsel %vm4336, %v6148, %v5841
        %v6162 = vsel %vm4336, %v6149, %v5843
        %v6163 = vsel %vm4336, %v6150, %v5845
        %v6164 = vsel %vm4336, %v6151, %v5847
        %v6165 = vsel %vm4336, %v6152, %v5849
        %v6166 = vsel %vm4336, %v6153, %v5851
        %v6167 = vsel %vm4336, %v6154, %v5853
        %v6168 = vsel %vm4350, %v6155, %v5881
        %v6169 = vsel %vm4350, %v6156, %v5883
        %v6170 = vsel %vm4350, %v6157, %v5885
        %v6171 = vsel %vm4350, %v6158, %v5887
        %v6172 = vsel %vm4350, %v6159, %v5889
        %v6173 = vsel %vm4350, %v6160, %v5891
        %v6174 = vsel %vm4350, %v6161, %v5893
        %v6175 = vsel %vm4350, %v6162, %v5895
        %v6176 = vsel %vm4350, %v6163, %v5897
        %v6177 = vsel %vm4350, %v6164, %v5899
        %v6178 = vsel %vm4350, %v6165, %v5901
        %v6179 = vsel %vm4350, %v6166, %v5903
        %v6180 = vsel %vm4350, %v6167, %v5905
        %v6181 = vsel %vm4364, %v6168, %v5933
        %v6182 = vsel %vm4364, %v6169, %v5935
        %v6183 = vsel %vm4364, %v6170, %v5937
        %v6184 = vsel %vm4364, %v6171, %v5939
        %v6185 = vsel %vm4364, %v6172, %v5941
        %v6186 = vsel %vm4364, %v6173, %v5943
        %v6187 = vsel %vm4364, %v6174, %v5945
        %v6188 = vsel %vm4364, %v6175, %v5947
        %v6189 = vsel %vm4364, %v6176, %v5949
        %v6190 = vsel %vm4364, %v6177, %v5951
        %v6191 = vsel %vm4364, %v6178, %v5953
        %v6192 = vsel %vm4364, %v6179, %v5955
        %v6193 = vsel %vm4364, %v6180, %v5957
        %v6194 = vsel %vm4378, %v6181, %v5974
        %v6195 = vsel %vm4378, %v6182, %v5976
        %v6196 = vsel %vm4378, %v6183, %v5978
        %v6197 = vsel %vm4378, %v6184, %v5980
        %v6198 = vsel %vm4378, %v6185, %v5982
        %v6199 = vsel %vm4378, %v6186, %v5984
        %v6200 = vsel %vm4378, %v6187, %v5986
        %v6201 = vsel %vm4378, %v6188, %v5988
        %v6202 = vsel %vm4378, %v6189, %v5990
        %v6203 = vsel %vm4378, %v6190, %v5992
        %v6204 = vsel %vm4378, %v6191, %v5994
        %v6205 = vsel %vm4378, %v6192, %v5996
        %v6206 = vsel %vm4378, %v6193, %v5998
        %6220 = vrot.lane.b32.xlu0 %v5263, 8
        %v6221 = vpop.permute.xlu0 %6220
        %6222 = vrot.lane.b32.xlu0 %v5264, 8
        %v6223 = vpop.permute.xlu0 %6222
        %6224 = vrot.lane.b32.xlu0 %v5265, 8
        %v6225 = vpop.permute.xlu0 %6224
        %6226 = vrot.lane.b32.xlu0 %v5266, 8
        %v6227 = vpop.permute.xlu0 %6226
        %6228 = vrot.lane.b32.xlu0 %v5267, 8
        %v6229 = vpop.permute.xlu0 %6228
        %6230 = vrot.lane.b32.xlu0 %v5268, 8
        %v6231 = vpop.permute.xlu0 %6230
        %6232 = vrot.lane.b32.xlu0 %v5269, 8
        %v6233 = vpop.permute.xlu0 %6232
        %6234 = vrot.lane.b32.xlu0 %v5270, 8
        %v6235 = vpop.permute.xlu0 %6234
        %6236 = vrot.lane.b32.xlu0 %v5271, 8
        %v6237 = vpop.permute.xlu0 %6236
        %6238 = vrot.lane.b32.xlu0 %v5272, 8
        %v6239 = vpop.permute.xlu0 %6238
        %6240 = vrot.lane.b32.xlu0 %v5273, 8
        %v6241 = vpop.permute.xlu0 %6240
        %6242 = vrot.lane.b32.xlu0 %v5274, 8
        %v6243 = vpop.permute.xlu0 %6242
        %6244 = vrot.lane.b32.xlu0 %v5275, 8
        %v6245 = vpop.permute.xlu0 %6244
        %v6259 = vsel %vm2246, %v5250, %v6221
        %v6260 = vsel %vm2246, %v5251, %v6223
        %v6261 = vsel %vm2246, %v5252, %v6225
        %v6262 = vsel %vm2246, %v5253, %v6227
        %v6263 = vsel %vm2246, %v5254, %v6229
        %v6264 = vsel %vm2246, %v5255, %v6231
        %v6265 = vsel %vm2246, %v5256, %v6233
        %v6266 = vsel %vm2246, %v5257, %v6235
        %v6267 = vsel %vm2246, %v5258, %v6237
        %v6268 = vsel %vm2246, %v5259, %v6239
        %v6269 = vsel %vm2246, %v5260, %v6241
        %v6270 = vsel %vm2246, %v5261, %v6243
        %v6271 = vsel %vm2246, %v5262, %v6245
        %v6272 = vpack.c.bf16 %v6195, %v6194
        %v6273 = vpack.c.bf16 %v6260, %v6259
        %v6274 = vpack.c.bf16 %v6197, %v6196
        %v6275 = vpack.c.bf16 %v6262, %v6261
        %v6276 = vpack.c.bf16 %v6199, %v6198
        %v6277 = vpack.c.bf16 %v6264, %v6263
        %v6278 = vpack.c.bf16 %v6201, %v6200
        %v6279 = vpack.c.bf16 %v6266, %v6265
        %v6280 = vpack.c.bf16 %v6203, %v6202
        %v6281 = vpack.c.bf16 %v6268, %v6267
        %v6282 = vpack.c.bf16 %v6205, %v6204
        %v6283 = vpack.c.bf16 %v6270, %v6269
        %v6284 = vpack.c.bf16 %v6206, %v6206
        %v6285 = vpack.c.bf16 %v6271, %v6271
        %v6286 = vld [vmem:[%s25] sm:$0xff]
        %v6287 = vld [vmem:[%s25 + $0x8] sm:$0xff]
        %v6288 = vld [vmem:[%s25 + $0x10] sm:$0xff]
        %v6289 = vld [vmem:[%s25 + $0x18] sm:$0xff]
        %v6290 = vld [vmem:[%s25 + $0x20] sm:$0xff]
        %v6291 = vld [vmem:[%s25 + $0x28] sm:$0xff]
        %v6292 = vld [vmem:[%s25 + $0x30] sm:$0xff]
        %v6293 = vld [vmem:[%s25 + $0x38] sm:$0xff]
        %v6294 = vld [vmem:[%s25 + $0x40] sm:$0xff]
        %v6295 = vld [vmem:[%s25 + $0x48] sm:$0xff]
        %v6296 = vld [vmem:[%s25 + $0x50] sm:$0xff]
        %v6297 = vld [vmem:[%s25 + $0x58] sm:$0xff]
        %v6298 = vld [vmem:[%s25 + $0x60] sm:$0xff]
        %v6299 = vld [vmem:[%s25 + $0x68] sm:$0xff]
        %v6300 = vld [vmem:[%s25 + $0x70] sm:$0xff]
        %v6301 = vld [vmem:[%s25 + $0x78] sm:$0xff]
        %v6302 = vld [vmem:[%s25 + $0x80] sm:$0xff]
        %v6303 = vld [vmem:[%s25 + $0x88] sm:$0xff]
        %v6304 = vpack.c.bf16 %v6287, %v6286
        %v6305 = vpack.c.bf16 %v6289, %v6288
        %v6306 = vpack.c.bf16 %v6291, %v6290
        %v6307 = vpack.c.bf16 %v6293, %v6292
        %v6308 = vpack.c.bf16 %v6295, %v6294
        %v6309 = vpack.c.bf16 %v6297, %v6296
        %v6310 = vpack.c.bf16 %v6299, %v6298
        %v6311 = vpack.c.bf16 %v6301, %v6300
        %v6312 = vpack.c.bf16 %v6303, %v6302
        %v6313 = vld [vmem:[%s27] sm:$0x1]
        %v6315 = vlaneseq
        %v6316 = vshrl.u32 %v6315, 7
        %v6317 = vsub.s32 0, %v6316
        %v6318 = vrot.slane %v6313, %v6317
        %v6321 = vsel %vm2274, %v6273, 0
        %v6324 = vsel %vm2274, %v6275, 0
        %v6327 = vsel %vm2274, %v6277, 0
        %v6330 = vsel %vm2274, %v6279, 0
        %v6333 = vsel %vm2274, %v6281, 0
        %v6336 = vsel %vm2274, %v6283, 0
        %v6339 = vsel %vm2274, %v6285, 0
        %6341 = vmatprep.subr.bf16.mxu0 0
        %6342 = vmatpush1.bf16.msra.mxu0 %v6304
        %6343 = vmatprep.subr.bf16.mxu0 0
        %6344 = vmatpush1.bf16.msra.mxu0 %v6305
        %6345 = vmatprep.subr.bf16.mxu0 0
        %6346 = vmatpush1.bf16.msra.mxu0 %v6306
        %6347 = vmatprep.subr.bf16.mxu0 0
        %6348 = vmatpush1.bf16.msra.mxu0 %v6307
        %6349 = vmatprep.subr.bf16.mxu0 0
        %6350 = vmatpush1.bf16.msra.mxu0 %v6308
        %6351 = vmatprep.subr.bf16.mxu0 0
        %6352 = vmatpush1.bf16.msra.mxu0 %v6309
        %6353 = vmatprep.subr.bf16.mxu0 0
        %6354 = vmatpush1.bf16.msra.mxu0 %v6310
        %6355 = vmatprep.subr.bf16.mxu0 0
        %6356 = vmatpush1.bf16.msra.mxu0 %v6311
        %6357 = vmatprep.subr.bf16.mxu0 0
        %6358 = vmatpush1.bf16.msra.mxu0 %v6312
        %6359 = vmatprep.subr.bf16.mxu0 0
        %6360 = vmatpush1.bf16.msra.mxu0 0
        %6361 = vmatprep.subr.bf16.mxu0 0
        %6362 = vmatpush1.bf16.msra.mxu0 0
        %6363 = vmatprep.subr.bf16.mxu0 0
        %6364 = vmatpush1.bf16.msra.mxu0 0
        %6365 = vmatprep.subr.bf16.mxu0 0
        %6366 = vmatpush1.bf16.msra.mxu0 0
        %6367 = vmatprep.subr.bf16.mxu0 0
        %6368 = vmatpush1.bf16.msra.mxu0 0
        %6369 = vmatprep.subr.bf16.mxu0 0
        %6370 = vmatpush1.bf16.msra.mxu0 0
        %6371 = vmatprep.subr.bf16.mxu0 0
        %6372 = vmatpush1.bf16.msra.mxu0 0
        %6373 = vmatprep.mubr.bf16.mxu0 %v6321
        %6374 = vmatmul.mubr.bf16.gmra.mrb[0].mxu0 %v6272
        %v6375 = vpop.f32.mrb[0].mxu0
        %v6376 = vadd.f32 %v6318, %v6375
        %v6377 = vpop.f32.mrb[0].mxu0
        %v6378 = vpop.f32.mrb[0].mxu0
        %v6379 = vadd.f32 %v6318, %v6378
        %v6380 = vpop.f32.mrb[0].mxu0
        %6381 = vmatprep.mubr.bf16.mxu0 %v6324
        %6382 = vmatmul.mubr.bf16.gmra.mrb[0].mxu0 %v6274
        %v6383 = vpop.f32.mrb[0].mxu0
        %v6384 = vadd.f32 %v6318, %v6383
        %v6385 = vpop.f32.mrb[0].mxu0
        %v6386 = vpop.f32.mrb[0].mxu0
        %v6387 = vadd.f32 %v6318, %v6386
        %v6388 = vpop.f32.mrb[0].mxu0
        %6389 = vmatprep.mubr.bf16.mxu0 %v6327
        %6390 = vmatmul.mubr.bf16.gmra.mrb[0].mxu0 %v6276
        %v6391 = vpop.f32.mrb[0].mxu0
        %v6392 = vadd.f32 %v6318, %v6391
        %v6393 = vpop.f32.mrb[0].mxu0
        %v6394 = vpop.f32.mrb[0].mxu0
        %v6395 = vadd.f32 %v6318, %v6394
        %v6396 = vpop.f32.mrb[0].mxu0
        %6397 = vmatprep.mubr.bf16.mxu0 %v6330
        %6398 = vmatmul.mubr.bf16.gmra.mrb[0].mxu0 %v6278
        %v6399 = vpop.f32.mrb[0].mxu0
        %v6400 = vadd.f32 %v6318, %v6399
        %v6401 = vpop.f32.mrb[0].mxu0
        %v6402 = vpop.f32.mrb[0].mxu0
        %v6403 = vadd.f32 %v6318, %v6402
        %v6404 = vpop.f32.mrb[0].mxu0
        %6405 = vmatprep.mubr.bf16.mxu0 %v6333
        %6406 = vmatmul.mubr.bf16.gmra.mrb[0].mxu0 %v6280
        %v6407 = vpop.f32.mrb[0].mxu0
        %v6408 = vadd.f32 %v6318, %v6407
        %v6409 = vpop.f32.mrb[0].mxu0
        %v6410 = vpop.f32.mrb[0].mxu0
        %v6411 = vadd.f32 %v6318, %v6410
        %v6412 = vpop.f32.mrb[0].mxu0
        %6413 = vmatprep.mubr.bf16.mxu0 %v6336
        %6414 = vmatmul.mubr.bf16.gmra.mrb[0].mxu0 %v6282
        %v6415 = vpop.f32.mrb[0].mxu0
        %v6416 = vadd.f32 %v6318, %v6415
        %v6417 = vpop.f32.mrb[0].mxu0
        %v6418 = vpop.f32.mrb[0].mxu0
        %v6419 = vadd.f32 %v6318, %v6418
        %v6420 = vpop.f32.mrb[0].mxu0
        %6421 = vmatprep.mubr.bf16.mxu0 %v6339
        %6422 = vmatmul.mubr.bf16.gmra.mrb[0].mxu0 %v6284
        %v6423 = vpop.f32.mrb[0].mxu0
        %v6424 = vadd.f32 %v6318, %v6423
        %v6425 = vpop.f32.mrb[0].mxu0
        %v6426 = vpop.f32.mrb[0].mxu0
        %v6427 = vpop.f32.mrb[0].mxu0
        %6428 = vdwg.mxu0
        %v6429 = vxor.u32 %v6376, 2147483648
        %v6430 = vxor.u32 %v6379, 2147483648
        %v6431 = vxor.u32 %v6384, 2147483648
        %v6432 = vxor.u32 %v6387, 2147483648
        %v6433 = vxor.u32 %v6392, 2147483648
        %v6434 = vxor.u32 %v6395, 2147483648
        %v6435 = vxor.u32 %v6400, 2147483648
        %v6436 = vxor.u32 %v6403, 2147483648
        %v6437 = vxor.u32 %v6408, 2147483648
        %v6438 = vxor.u32 %v6411, 2147483648
        %v6439 = vxor.u32 %v6416, 2147483648
        %v6440 = vxor.u32 %v6419, 2147483648
        %v6441 = vxor.u32 %v6424, 2147483648
        %v6442 = vmul.f32 %v6429, 1.442695
        %v6443 = vpow.pop %v6442
        %v6444 = vmul.f32 %v6430, 1.442695
        %v6445 = vpow.pop %v6444
        %v6446 = vmul.f32 %v6431, 1.442695
        %v6447 = vpow.pop %v6446
        %v6448 = vmul.f32 %v6432, 1.442695
        %v6449 = vpow.pop %v6448
        %v6450 = vmul.f32 %v6433, 1.442695
        %v6451 = vpow.pop %v6450
        %v6452 = vmul.f32 %v6434, 1.442695
        %v6453 = vpow.pop %v6452
        %v6454 = vmul.f32 %v6435, 1.442695
        %v6455 = vpow.pop %v6454
        %v6456 = vmul.f32 %v6436, 1.442695
        %v6457 = vpow.pop %v6456
        %v6458 = vmul.f32 %v6437, 1.442695
        %v6459 = vpow.pop %v6458
        %v6460 = vmul.f32 %v6438, 1.442695
        %v6461 = vpow.pop %v6460
        %v6462 = vmul.f32 %v6439, 1.442695
        %v6463 = vpow.pop %v6462
        %v6464 = vmul.f32 %v6440, 1.442695
        %v6465 = vpow.pop %v6464
        %v6466 = vmul.f32 %v6441, 1.442695
        %v6467 = vpow.pop %v6466
        %v6468 = vadd.f32 %v6443, 1.0
        %v6469 = vadd.f32 %v6445, 1.0
        %v6470 = vadd.f32 %v6447, 1.0
        %v6471 = vadd.f32 %v6449, 1.0
        %v6472 = vadd.f32 %v6451, 1.0
        %v6473 = vadd.f32 %v6453, 1.0
        %v6474 = vadd.f32 %v6455, 1.0
        %v6475 = vadd.f32 %v6457, 1.0
        %v6476 = vadd.f32 %v6459, 1.0
        %v6477 = vadd.f32 %v6461, 1.0
        %v6478 = vadd.f32 %v6463, 1.0
        %v6479 = vadd.f32 %v6465, 1.0
        %v6480 = vadd.f32 %v6467, 1.0
        %v6481 = vrcp.pop %v6468
        %v6482 = vmul.f32 1.0, %v6481
        %v6483 = vrcp.pop %v6469
        %v6484 = vmul.f32 1.0, %v6483
        %v6485 = vrcp.pop %v6470
        %v6486 = vmul.f32 1.0, %v6485
        %v6487 = vrcp.pop %v6471
        %v6488 = vmul.f32 1.0, %v6487
        %v6489 = vrcp.pop %v6472
        %v6490 = vmul.f32 1.0, %v6489
        %v6491 = vrcp.pop %v6473
        %v6492 = vmul.f32 1.0, %v6491
        %v6493 = vrcp.pop %v6474
        %v6494 = vmul.f32 1.0, %v6493
        %v6495 = vrcp.pop %v6475
        %v6496 = vmul.f32 1.0, %v6495
        %v6497 = vrcp.pop %v6476
        %v6498 = vmul.f32 1.0, %v6497
        %v6499 = vrcp.pop %v6477
        %v6500 = vmul.f32 1.0, %v6499
        %v6501 = vrcp.pop %v6478
        %v6502 = vmul.f32 1.0, %v6501
        %v6503 = vrcp.pop %v6479
        %v6504 = vmul.f32 1.0, %v6503
        %v6505 = vrcp.pop %v6480
        %v6506 = vmul.f32 1.0, %v6505
        %v6507 = vtanh.pop %v6376
        %v6508 = vtanh.pop %v6379
        %v6509 = vtanh.pop %v6384
        %v6510 = vtanh.pop %v6387
        %v6511 = vtanh.pop %v6392
        %v6512 = vtanh.pop %v6395
        %v6513 = vtanh.pop %v6400
        %v6514 = vtanh.pop %v6403
        %v6515 = vtanh.pop %v6408
        %v6516 = vtanh.pop %v6411
        %v6517 = vtanh.pop %v6416
        %v6518 = vtanh.pop %v6419
        %v6519 = vtanh.pop %v6424
        %v6520 = vld [vmem:[%s1249] sm:$0xff]
        %v6521 = vld [vmem:[%s1249 + $0x8] sm:$0xff]
        %v6522 = vld [vmem:[%s1249 + $0x10] sm:$0xff]
        %v6523 = vld [vmem:[%s1249 + $0x18] sm:$0xff]
        %v6524 = vld [vmem:[%s1249 + $0x20] sm:$0xff]
        %v6525 = vld [vmem:[%s1249 + $0x28] sm:$0xff]
        %v6526 = vld [vmem:[%s1249 + $0x30] sm:$0xff]
        %v6527 = vld [vmem:[%s1249 + $0x38] sm:$0xff]
        %v6528 = vld [vmem:[%s1249 + $0x40] sm:$0xff]
        %v6529 = vld [vmem:[%s1249 + $0x48] sm:$0xff]
        %v6530 = vld [vmem:[%s1249 + $0x50] sm:$0xff]
        %v6531 = vld [vmem:[%s1249 + $0x58] sm:$0xff]
        %v6532 = vld [vmem:[%s1249 + $0x60] sm:$0xf]
        %6546 = vrot.lane.b32.xlu0 %v6520, 8
        %v6547 = vpop.permute.xlu0 %6546
        %6548 = vrot.lane.b32.xlu0 %v6521, 8
        %v6549 = vpop.permute.xlu0 %6548
        %6550 = vrot.lane.b32.xlu0 %v6522, 8
        %v6551 = vpop.permute.xlu0 %6550
        %6552 = vrot.lane.b32.xlu0 %v6523, 8
        %v6553 = vpop.permute.xlu0 %6552
        %6554 = vrot.lane.b32.xlu0 %v6524, 8
        %v6555 = vpop.permute.xlu0 %6554
        %6556 = vrot.lane.b32.xlu0 %v6525, 8
        %v6557 = vpop.permute.xlu0 %6556
        %6558 = vrot.lane.b32.xlu0 %v6526, 8
        %v6559 = vpop.permute.xlu0 %6558
        %6560 = vrot.lane.b32.xlu0 %v6527, 8
        %v6561 = vpop.permute.xlu0 %6560
        %6562 = vrot.lane.b32.xlu0 %v6528, 8
        %v6563 = vpop.permute.xlu0 %6562
        %6564 = vrot.lane.b32.xlu0 %v6529, 8
        %v6565 = vpop.permute.xlu0 %6564
        %6566 = vrot.lane.b32.xlu0 %v6530, 8
        %v6567 = vpop.permute.xlu0 %6566
        %6568 = vrot.lane.b32.xlu0 %v6531, 8
        %v6569 = vpop.permute.xlu0 %6568
        %6570 = vrot.lane.b32.xlu0 %v6532, 8
        %v6571 = vpop.permute.xlu0 %6570
        %v6585 = vmul.f32 %v6482, %v6547
        %v6586 = vmul.f32 %v6484, %v6549
        %v6587 = vmul.f32 %v6486, %v6551
        %v6588 = vmul.f32 %v6488, %v6553
        %v6589 = vmul.f32 %v6490, %v6555
        %v6590 = vmul.f32 %v6492, %v6557
        %v6591 = vmul.f32 %v6494, %v6559
        %v6592 = vmul.f32 %v6496, %v6561
        %v6593 = vmul.f32 %v6498, %v6563
        %v6594 = vmul.f32 %v6500, %v6565
        %v6595 = vmul.f32 %v6502, %v6567
        %v6596 = vmul.f32 %v6504, %v6569
        %v6597 = vmul.f32 %v6506, %v6571
        %6611 = vrot.lane.b32.xlu0 %v6507, 112
        %v6612 = vpop.permute.xlu0 %6611
        %6613 = vrot.lane.b32.xlu0 %v6508, 112
        %v6614 = vpop.permute.xlu0 %6613
        %6615 = vrot.lane.b32.xlu0 %v6509, 112
        %v6616 = vpop.permute.xlu0 %6615
        %6617 = vrot.lane.b32.xlu0 %v6510, 112
        %v6618 = vpop.permute.xlu0 %6617
        %6619 = vrot.lane.b32.xlu0 %v6511, 112
        %v6620 = vpop.permute.xlu0 %6619
        %6621 = vrot.lane.b32.xlu0 %v6512, 112
        %v6622 = vpop.permute.xlu0 %6621
        %6623 = vrot.lane.b32.xlu0 %v6513, 112
        %v6624 = vpop.permute.xlu0 %6623
        %6625 = vrot.lane.b32.xlu0 %v6514, 112
        %v6626 = vpop.permute.xlu0 %6625
        %6627 = vrot.lane.b32.xlu0 %v6515, 112
        %v6628 = vpop.permute.xlu0 %6627
        %6629 = vrot.lane.b32.xlu0 %v6516, 112
        %v6630 = vpop.permute.xlu0 %6629
        %6631 = vrot.lane.b32.xlu0 %v6517, 112
        %v6632 = vpop.permute.xlu0 %6631
        %6633 = vrot.lane.b32.xlu0 %v6518, 112
        %v6634 = vpop.permute.xlu0 %6633
        %6635 = vrot.lane.b32.xlu0 %v6519, 112
        %v6636 = vpop.permute.xlu0 %6635
        %v6650 = vmul.f32 %v6482, %v6612
        %v6651 = vmul.f32 %v6484, %v6614
        %v6652 = vmul.f32 %v6486, %v6616
        %v6653 = vmul.f32 %v6488, %v6618
        %v6654 = vmul.f32 %v6490, %v6620
        %v6655 = vmul.f32 %v6492, %v6622
        %v6656 = vmul.f32 %v6494, %v6624
        %v6657 = vmul.f32 %v6496, %v6626
        %v6658 = vmul.f32 %v6498, %v6628
        %v6659 = vmul.f32 %v6500, %v6630
        %v6660 = vmul.f32 %v6502, %v6632
        %v6661 = vmul.f32 %v6504, %v6634
        %v6662 = vmul.f32 %v6506, %v6636
        %6676 = vrot.lane.b32.xlu0 %v6650, 8
        %v6677 = vpop.permute.xlu0 %6676
        %6678 = vrot.lane.b32.xlu0 %v6651, 8
        %v6679 = vpop.permute.xlu0 %6678
        %6680 = vrot.lane.b32.xlu0 %v6652, 8
        %v6681 = vpop.permute.xlu0 %6680
        %6682 = vrot.lane.b32.xlu0 %v6653, 8
        %v6683 = vpop.permute.xlu0 %6682
        %6684 = vrot.lane.b32.xlu0 %v6654, 8
        %v6685 = vpop.permute.xlu0 %6684
        %6686 = vrot.lane.b32.xlu0 %v6655, 8
        %v6687 = vpop.permute.xlu0 %6686
        %6688 = vrot.lane.b32.xlu0 %v6656, 8
        %v6689 = vpop.permute.xlu0 %6688
        %6690 = vrot.lane.b32.xlu0 %v6657, 8
        %v6691 = vpop.permute.xlu0 %6690
        %6692 = vrot.lane.b32.xlu0 %v6658, 8
        %v6693 = vpop.permute.xlu0 %6692
        %6694 = vrot.lane.b32.xlu0 %v6659, 8
        %v6695 = vpop.permute.xlu0 %6694
        %6696 = vrot.lane.b32.xlu0 %v6660, 8
        %v6697 = vpop.permute.xlu0 %6696
        %6698 = vrot.lane.b32.xlu0 %v6661, 8
        %v6699 = vpop.permute.xlu0 %6698
        %6700 = vrot.lane.b32.xlu0 %v6662, 8
        %v6701 = vpop.permute.xlu0 %6700
        %v6715 = vadd.f32 %v6585, %v6677
        %v6716 = vadd.f32 %v6586, %v6679
        %v6717 = vadd.f32 %v6587, %v6681
        %v6718 = vadd.f32 %v6588, %v6683
        %v6719 = vadd.f32 %v6589, %v6685
        %v6720 = vadd.f32 %v6590, %v6687
        %v6721 = vadd.f32 %v6591, %v6689
        %v6722 = vadd.f32 %v6592, %v6691
        %v6723 = vadd.f32 %v6593, %v6693
        %v6724 = vadd.f32 %v6594, %v6695
        %v6725 = vadd.f32 %v6595, %v6697
        %v6726 = vadd.f32 %v6596, %v6699
        %v6727 = vadd.f32 %v6597, %v6701
        %v6728 = vtanh.pop %v6715
        %v6729 = vtanh.pop %v6716
        %v6730 = vtanh.pop %v6717
        %v6731 = vtanh.pop %v6718
        %v6732 = vtanh.pop %v6719
        %v6733 = vtanh.pop %v6720
        %v6734 = vtanh.pop %v6721
        %v6735 = vtanh.pop %v6722
        %v6736 = vtanh.pop %v6723
        %v6737 = vtanh.pop %v6724
        %v6738 = vtanh.pop %v6725
        %v6739 = vtanh.pop %v6726
        %v6740 = vtanh.pop %v6727
        %6754 = vrot.lane.b32.xlu0 %v6728, 16
        %v6755 = vpop.permute.xlu0 %6754
        %6756 = vrot.lane.b32.xlu0 %v6729, 16
        %v6757 = vpop.permute.xlu0 %6756
        %6758 = vrot.lane.b32.xlu0 %v6730, 16
        %v6759 = vpop.permute.xlu0 %6758
        %6760 = vrot.lane.b32.xlu0 %v6731, 16
        %v6761 = vpop.permute.xlu0 %6760
        %6762 = vrot.lane.b32.xlu0 %v6732, 16
        %v6763 = vpop.permute.xlu0 %6762
        %6764 = vrot.lane.b32.xlu0 %v6733, 16
        %v6765 = vpop.permute.xlu0 %6764
        %6766 = vrot.lane.b32.xlu0 %v6734, 16
        %v6767 = vpop.permute.xlu0 %6766
        %6768 = vrot.lane.b32.xlu0 %v6735, 16
        %v6769 = vpop.permute.xlu0 %6768
        %6770 = vrot.lane.b32.xlu0 %v6736, 16
        %v6771 = vpop.permute.xlu0 %6770
        %6772 = vrot.lane.b32.xlu0 %v6737, 16
        %v6773 = vpop.permute.xlu0 %6772
        %6774 = vrot.lane.b32.xlu0 %v6738, 16
        %v6775 = vpop.permute.xlu0 %6774
        %6776 = vrot.lane.b32.xlu0 %v6739, 16
        %v6777 = vpop.permute.xlu0 %6776
        %6778 = vrot.lane.b32.xlu0 %v6740, 16
        %v6779 = vpop.permute.xlu0 %6778
        %v6793 = vmul.f32 %v6482, %v6755
        %v6794 = vmul.f32 %v6484, %v6757
        %v6795 = vmul.f32 %v6486, %v6759
        %v6796 = vmul.f32 %v6488, %v6761
        %v6797 = vmul.f32 %v6490, %v6763
        %v6798 = vmul.f32 %v6492, %v6765
        %v6799 = vmul.f32 %v6494, %v6767
        %v6800 = vmul.f32 %v6496, %v6769
        %v6801 = vmul.f32 %v6498, %v6771
        %v6802 = vmul.f32 %v6500, %v6773
        %v6803 = vmul.f32 %v6502, %v6775
        %v6804 = vmul.f32 %v6504, %v6777
        %v6805 = vmul.f32 %v6506, %v6779
        %v6806 = vsel %vm3151, %v6793, 0.0
        %v6807 = vsel %vm3152, %v6794, 0.0
        %v6808 = vsel %vm3153, %v6795, 0.0
        %v6809 = vsel %vm3154, %v6796, 0.0
        %v6810 = vsel %vm3155, %v6797, 0.0
        %v6811 = vsel %vm3156, %v6798, 0.0
        %v6812 = vsel %vm3157, %v6799, 0.0
        %v6813 = vsel %vm3158, %v6800, 0.0
        %v6814 = vsel %vm3159, %v6801, 0.0
        %v6815 = vsel %vm3160, %v6802, 0.0
        %v6816 = vsel %vm3161, %v6803, 0.0
        %v6817 = vsel %vm3162, %v6804, 0.0
        %v6818 = vsel %vm3163, %v6805, 0.0
        %v6819 = vsel %vm3151, %v6715, 0.0
        %v6820 = vsel %vm3152, %v6716, 0.0
        %v6821 = vsel %vm3153, %v6717, 0.0
        %v6822 = vsel %vm3154, %v6718, 0.0
        %v6823 = vsel %vm3155, %v6719, 0.0
        %v6824 = vsel %vm3156, %v6720, 0.0
        %v6825 = vsel %vm3157, %v6721, 0.0
        %v6826 = vsel %vm3158, %v6722, 0.0
        %v6827 = vsel %vm3159, %v6723, 0.0
        %v6828 = vsel %vm3160, %v6724, 0.0
        %v6829 = vsel %vm3161, %v6725, 0.0
        %v6830 = vsel %vm3162, %v6726, 0.0
        %v6831 = vsel %vm3163, %v6727, 0.0
        %6832 = vrot.lane.b32.xlu0 %v4991, 120
        %v6833 = vpop.permute.xlu0 %6832
        %6834 = vrot.lane.b32.xlu0 %v4992, 120
        %v6835 = vpop.permute.xlu0 %6834
        %6836 = vrot.lane.b32.xlu0 %v4993, 120
        %v6837 = vpop.permute.xlu0 %6836
        %6838 = vrot.lane.b32.xlu0 %v4994, 120
        %v6839 = vpop.permute.xlu0 %6838
        %6840 = vrot.lane.b32.xlu0 %v4995, 120
        %v6841 = vpop.permute.xlu0 %6840
        %6842 = vrot.lane.b32.xlu0 %v4996, 120
        %v6843 = vpop.permute.xlu0 %6842
        %6844 = vrot.lane.b32.xlu0 %v4997, 120
        %v6845 = vpop.permute.xlu0 %6844
        %6846 = vrot.lane.b32.xlu0 %v4998, 120
        %v6847 = vpop.permute.xlu0 %6846
        %6848 = vrot.lane.b32.xlu0 %v4999, 120
        %v6849 = vpop.permute.xlu0 %6848
        %6850 = vrot.lane.b32.xlu0 %v5000, 120
        %v6851 = vpop.permute.xlu0 %6850
        %6852 = vrot.lane.b32.xlu0 %v5001, 120
        %v6853 = vpop.permute.xlu0 %6852
        %6854 = vrot.lane.b32.xlu0 %v5002, 120
        %v6855 = vpop.permute.xlu0 %6854
        %6856 = vrot.lane.b32.xlu0 %v5003, 120
        %v6857 = vpop.permute.xlu0 %6856
        %6884 = vrot.lane.b32.xlu0 %v5004, 16
        %v6885 = vpop.permute.xlu0 %6884
        %6886 = vrot.lane.b32.xlu0 %v5005, 16
        %v6887 = vpop.permute.xlu0 %6886
        %6888 = vrot.lane.b32.xlu0 %v5006, 16
        %v6889 = vpop.permute.xlu0 %6888
        %6890 = vrot.lane.b32.xlu0 %v5007, 16
        %v6891 = vpop.permute.xlu0 %6890
        %6892 = vrot.lane.b32.xlu0 %v5008, 16
        %v6893 = vpop.permute.xlu0 %6892
        %6894 = vrot.lane.b32.xlu0 %v5009, 16
        %v6895 = vpop.permute.xlu0 %6894
        %6896 = vrot.lane.b32.xlu0 %v5010, 16
        %v6897 = vpop.permute.xlu0 %6896
        %6898 = vrot.lane.b32.xlu0 %v5011, 16
        %v6899 = vpop.permute.xlu0 %6898
        %6900 = vrot.lane.b32.xlu0 %v5012, 16
        %v6901 = vpop.permute.xlu0 %6900
        %6902 = vrot.lane.b32.xlu0 %v5013, 16
        %v6903 = vpop.permute.xlu0 %6902
        %6904 = vrot.lane.b32.xlu0 %v5014, 16
        %v6905 = vpop.permute.xlu0 %6904
        %6906 = vrot.lane.b32.xlu0 %v5015, 16
        %v6907 = vpop.permute.xlu0 %6906
        %6908 = vrot.lane.b32.xlu0 %v5016, 16
        %v6909 = vpop.permute.xlu0 %6908
        %6936 = vrot.lane.b32.xlu0 %v6806, 8
        %v6937 = vpop.permute.xlu0 %6936
        %6938 = vrot.lane.b32.xlu0 %v6807, 8
        %v6939 = vpop.permute.xlu0 %6938
        %6940 = vrot.lane.b32.xlu0 %v6808, 8
        %v6941 = vpop.permute.xlu0 %6940
        %6942 = vrot.lane.b32.xlu0 %v6809, 8
        %v6943 = vpop.permute.xlu0 %6942
        %6944 = vrot.lane.b32.xlu0 %v6810, 8
        %v6945 = vpop.permute.xlu0 %6944
        %6946 = vrot.lane.b32.xlu0 %v6811, 8
        %v6947 = vpop.permute.xlu0 %6946
        %6948 = vrot.lane.b32.xlu0 %v6812, 8
        %v6949 = vpop.permute.xlu0 %6948
        %6950 = vrot.lane.b32.xlu0 %v6813, 8
        %v6951 = vpop.permute.xlu0 %6950
        %6952 = vrot.lane.b32.xlu0 %v6814, 8
        %v6953 = vpop.permute.xlu0 %6952
        %6954 = vrot.lane.b32.xlu0 %v6815, 8
        %v6955 = vpop.permute.xlu0 %6954
        %6956 = vrot.lane.b32.xlu0 %v6816, 8
        %v6957 = vpop.permute.xlu0 %6956
        %6958 = vrot.lane.b32.xlu0 %v6817, 8
        %v6959 = vpop.permute.xlu0 %6958
        %6960 = vrot.lane.b32.xlu0 %v6818, 8
        %v6961 = vpop.permute.xlu0 %6960
        %6988 = vrot.lane.b32.xlu0 %v6819, 32
        %v6989 = vpop.permute.xlu0 %6988
        %6990 = vrot.lane.b32.xlu0 %v6820, 32
        %v6991 = vpop.permute.xlu0 %6990
        %6992 = vrot.lane.b32.xlu0 %v6821, 32
        %v6993 = vpop.permute.xlu0 %6992
        %6994 = vrot.lane.b32.xlu0 %v6822, 32
        %v6995 = vpop.permute.xlu0 %6994
        %6996 = vrot.lane.b32.xlu0 %v6823, 32
        %v6997 = vpop.permute.xlu0 %6996
        %6998 = vrot.lane.b32.xlu0 %v6824, 32
        %v6999 = vpop.permute.xlu0 %6998
        %7000 = vrot.lane.b32.xlu0 %v6825, 32
        %v7001 = vpop.permute.xlu0 %7000
        %7002 = vrot.lane.b32.xlu0 %v6826, 32
        %v7003 = vpop.permute.xlu0 %7002
        %7004 = vrot.lane.b32.xlu0 %v6827, 32
        %v7005 = vpop.permute.xlu0 %7004
        %7006 = vrot.lane.b32.xlu0 %v6828, 32
        %v7007 = vpop.permute.xlu0 %7006
        %7008 = vrot.lane.b32.xlu0 %v6829, 32
        %v7009 = vpop.permute.xlu0 %7008
        %7010 = vrot.lane.b32.xlu0 %v6830, 32
        %v7011 = vpop.permute.xlu0 %7010
        %7012 = vrot.lane.b32.xlu0 %v6831, 32
        %v7013 = vpop.permute.xlu0 %7012
        %v7027 = vsel %vm2246, %v3209, %v3177
        %v7028 = vsel %vm2246, %v3211, %v3178
        %v7029 = vsel %vm2246, %v3213, %v3179
        %v7030 = vsel %vm2246, %v3215, %v3180
        %v7031 = vsel %vm2246, %v3217, %v3181
        %v7032 = vsel %vm2246, %v3219, %v3182
        %v7033 = vsel %vm2246, %v3221, %v3183
        %v7034 = vsel %vm2246, %v3223, %v3184
        %v7035 = vsel %vm2246, %v3225, %v3185
        %v7036 = vsel %vm2246, %v3227, %v3186
        %v7037 = vsel %vm2246, %v3229, %v3187
        %v7038 = vsel %vm2246, %v3231, %v3188
        %v7039 = vsel %vm2246, %v3233, %v3189
        %v7040 = vsel %vm2274, %v7027, %v6833
        %v7041 = vsel %vm2274, %v7028, %v6835
        %v7042 = vsel %vm2274, %v7029, %v6837
        %v7043 = vsel %vm2274, %v7030, %v6839
        %v7044 = vsel %vm2274, %v7031, %v6841
        %v7045 = vsel %vm2274, %v7032, %v6843
        %v7046 = vsel %vm2274, %v7033, %v6845
        %v7047 = vsel %vm2274, %v7034, %v6847
        %v7048 = vsel %vm2274, %v7035, %v6849
        %v7049 = vsel %vm2274, %v7036, %v6851
        %v7050 = vsel %vm2274, %v7037, %v6853
        %v7051 = vsel %vm2274, %v7038, %v6855
        %v7052 = vsel %vm2274, %v7039, %v6857
        %v7053 = vsel %vm2302, %v7040, %v6885
        %v7054 = vsel %vm2302, %v7041, %v6887
        %v7055 = vsel %vm2302, %v7042, %v6889
        %v7056 = vsel %vm2302, %v7043, %v6891
        %v7057 = vsel %vm2302, %v7044, %v6893
        %v7058 = vsel %vm2302, %v7045, %v6895
        %v7059 = vsel %vm2302, %v7046, %v6897
        %v7060 = vsel %vm2302, %v7047, %v6899
        %v7061 = vsel %vm2302, %v7048, %v6901
        %v7062 = vsel %vm2302, %v7049, %v6903
        %v7063 = vsel %vm2302, %v7050, %v6905
        %v7064 = vsel %vm2302, %v7051, %v6907
        %v7065 = vsel %vm2302, %v7052, %v6909
        %v7066 = vsel %vm2330, %v7053, %v6937
        %v7067 = vsel %vm2330, %v7054, %v6939
        %v7068 = vsel %vm2330, %v7055, %v6941
        %v7069 = vsel %vm2330, %v7056, %v6943
        %v7070 = vsel %vm2330, %v7057, %v6945
        %v7071 = vsel %vm2330, %v7058, %v6947
        %v7072 = vsel %vm2330, %v7059, %v6949
        %v7073 = vsel %vm2330, %v7060, %v6951
        %v7074 = vsel %vm2330, %v7061, %v6953
        %v7075 = vsel %vm2330, %v7062, %v6955
        %v7076 = vsel %vm2330, %v7063, %v6957
        %v7077 = vsel %vm2330, %v7064, %v6959
        %v7078 = vsel %vm2330, %v7065, %v6961
        %v7079 = vsel %vm4238, %v7066, %v6989
        %v7080 = vsel %vm4238, %v7067, %v6991
        %v7081 = vsel %vm4238, %v7068, %v6993
        %v7082 = vsel %vm4238, %v7069, %v6995
        %v7083 = vsel %vm4238, %v7070, %v6997
        %v7084 = vsel %vm4238, %v7071, %v6999
        %v7085 = vsel %vm4238, %v7072, %v7001
        %v7086 = vsel %vm4238, %v7073, %v7003
        %v7087 = vsel %vm4238, %v7074, %v7005
        %v7088 = vsel %vm4238, %v7075, %v7007
        %v7089 = vsel %vm4238, %v7076, %v7009
        %v7090 = vsel %vm4238, %v7077, %v7011
        %v7091 = vsel %vm4238, %v7078, %v7013
        %7092 = vst.msk [vmem:[%s1275] sm:$0xff] %vm4252, %v7079
        %7093 = vst.msk [vmem:[%s1275 + $0x8] sm:$0xff] %vm4252, %v7080
        %7094 = vst.msk [vmem:[%s1275 + $0x10] sm:$0xff] %vm4252, %v7081
        %7095 = vst.msk [vmem:[%s1275 + $0x18] sm:$0xff] %vm4252, %v7082
        %7096 = vst.msk [vmem:[%s1275 + $0x20] sm:$0xff] %vm4252, %v7083
        %7097 = vst.msk [vmem:[%s1275 + $0x28] sm:$0xff] %vm4252, %v7084
        %7098 = vst.msk [vmem:[%s1275 + $0x30] sm:$0xff] %vm4252, %v7085
        %7099 = vst.msk [vmem:[%s1275 + $0x38] sm:$0xff] %vm4252, %v7086
        %7100 = vst.msk [vmem:[%s1275 + $0x40] sm:$0xff] %vm4252, %v7087
        %7101 = vst.msk [vmem:[%s1275 + $0x48] sm:$0xff] %vm4252, %v7088
        %7102 = vst.msk [vmem:[%s1275 + $0x50] sm:$0xff] %vm4252, %v7089
        %7103 = vst.msk [vmem:[%s1275 + $0x58] sm:$0xff] %vm4252, %v7090
        %vm7104 = vcmask 388096
        %7105 = vst.msk [vmem:[%s1275 + $0x60] sm:$0xf] %vm7104, %v7091
        %v7106 = vld [vmem:[%s1252] sm:$0x1]
        %v7107 = vld [vmem:[%s1255] sm:$0x1]
        %v7108 = vld [vmem:[%s1258] sm:$0x1]
        %v7110 = vlaneseq
        %v7111 = vshrl.u32 %v7110, 7
        %v7112 = vsub.s32 0, %v7111
        %v7113 = vrot.slane %v7107, %v7112
        %7114 = vrot.lane.b32.xlu0 %v7113, 8
        %v7115 = vpop.permute.xlu0 %7114
        %v7117 = vsel %vm2246, %v7106, %v7115
        %v7118 = vpack.c.bf16 %v7117, %v7117
        %v7119 = vld [vmem:[%s43] sm:$0xff]
        %v7120 = vld [vmem:[%s43 + $0x8] sm:$0xff]
        %v7121 = vld [vmem:[%s43 + $0x10] sm:$0xff]
        %v7122 = vpack.c.bf16 %v7120, %v7119
        %v7123 = vpack.c.bf16 %v7121, %v7121
        %v7124 = vld [vmem:[%s45] sm:$0x1]
        %v7126 = vsel %vm2302, %v7118, 0
        %vm7128 = vcmask 1043456
        %v7130 = vsel %vm7128, %v7123, 0
        %7132 = vmatprep.subr.bf16.mxu0 0
        %7133 = vmatpush1.bf16.msra.mxu0 %v7122
        %7134 = vmatprep.subr.bf16.mxu0 0
        %7135 = vmatpush1.bf16.msra.mxu0 %v7130
        %7136 = vmatprep.subr.bf16.mxu0 0
        %7137 = vmatpush1.bf16.msra.mxu0 0
        %7138 = vmatprep.subr.bf16.mxu0 0
        %7139 = vmatpush1.bf16.msra.mxu0 0
        %7140 = vmatprep.subr.bf16.mxu0 0
        %7141 = vmatpush1.bf16.msra.mxu0 0
        %7142 = vmatprep.subr.bf16.mxu0 0
        %7143 = vmatpush1.bf16.msra.mxu0 0
        %7144 = vmatprep.subr.bf16.mxu0 0
        %7145 = vmatpush1.bf16.msra.mxu0 0
        %7146 = vmatprep.subr.bf16.mxu0 0
        %7147 = vmatpush1.bf16.msra.mxu0 0
        %7148 = vmatprep.subr.bf16.mxu0 0
        %7149 = vmatpush1.bf16.msra.mxu0 0
        %7150 = vmatprep.subr.bf16.mxu0 0
        %7151 = vmatpush1.bf16.msra.mxu0 0
        %7152 = vmatprep.subr.bf16.mxu0 0
        %7153 = vmatpush1.bf16.msra.mxu0 0
        %7154 = vmatprep.subr.bf16.mxu0 0
        %7155 = vmatpush1.bf16.msra.mxu0 0
        %7156 = vmatprep.subr.bf16.mxu0 0
        %7157 = vmatpush1.bf16.msra.mxu0 0
        %7158 = vmatprep.subr.bf16.mxu0 0
        %7159 = vmatpush1.bf16.msra.mxu0 0
        %7160 = vmatprep.subr.bf16.mxu0 0
        %7161 = vmatpush1.bf16.msra.mxu0 0
        %7162 = vmatprep.subr.bf16.mxu0 0
        %7163 = vmatpush1.bf16.msra.mxu0 0
        %7164 = vmatprep.mubr.bf16.mxu0 0
        %7165 = vmatmul.mubr.bf16.gmra.mrb[0].mxu0 %v7126
        %v7166 = vpop.f32.mrb[0].mxu0
        %v7167 = vadd.f32 %v7124, %v7166
        %v7168 = vpop.f32.mrb[0].mxu0
        %v7169 = vpop.f32.mrb[0].mxu0
        %v7170 = vpop.f32.mrb[0].mxu0
        %7171 = vdwg.mxu0
        %v7172 = vxor.u32 %v7167, 2147483648
        %v7173 = vmul.f32 %v7172, 1.442695
        %v7174 = vpow.pop %v7173
        %v7175 = vadd.f32 %v7174, 1.0
        %v7176 = vrcp.pop %v7175
        %v7177 = vmul.f32 1.0, %v7176
        %v7178 = vtanh.pop %v7167
        %v7180 = vlaneseq
        %v7181 = vshrl.u32 %v7180, 7
        %v7182 = vsub.s32 0, %v7181
        %v7183 = vrot.slane %v7108, %v7182
        %7184 = vrot.lane.b32.xlu0 %v7183, 16
        %v7185 = vpop.permute.xlu0 %7184
        %v7187 = vmul.f32 %v7177, %v7185
        %7189 = vrot.lane.b32.xlu0 %v7178, 96
        %v7190 = vpop.permute.xlu0 %7189
        %v7192 = vmul.f32 %v7177, %v7190
        %7194 = vrot.lane.b32.xlu0 %v7192, 16
        %v7195 = vpop.permute.xlu0 %7194
        %v7197 = vadd.f32 %v7187, %v7195
        %v7198 = vtanh.pop %v7197
        %7200 = vrot.lane.b32.xlu0 %v7198, 32
        %v7201 = vpop.permute.xlu0 %7200
        %v7203 = vmul.f32 %v7177, %v7201
        %v7204 = vld [vmem:[%s1261] sm:$0x1]
        %v7205 = vld [vmem:[%s1264] sm:$0x1]
        %7207 = vrot.lane.b32.xlu0 %v7203, 80
        %v7208 = vpop.permute.xlu0 %7207
        %v7211 = vlaneseq
        %v7212 = vshrl.u32 %v7211, 7
        %v7213 = vsub.s32 0, %v7212
        %v7214 = vrot.slane %v7204, %v7213
        %7215 = vrot.lane.b32.xlu0 %v7214, 16
        %v7216 = vpop.permute.xlu0 %7215
        %v7218 = vsel %vm2274, %v7208, %v7216
        %v7219 = vpack.c.bf16 %v7218, %v7218
        %v7220 = vld [vmem:[%s47] sm:$0xff]
        %v7221 = vld [vmem:[%s47 + $0x8] sm:$0xff]
        %v7222 = vld [vmem:[%s47 + $0x10] sm:$0xff]
        %v7223 = vld [vmem:[%s47 + $0x18] sm:$0xff]
        %v7224 = vpack.c.bf16 %v7221, %v7220
        %v7225 = vpack.c.bf16 %v7223, %v7222
        %v7226 = vld [vmem:[%s49] sm:$0x1]
        %v7228 = vsel %vm2330, %v7219, 0
        %7230 = vmatprep.subr.bf16.mxu0 0
        %7231 = vmatpush1.bf16.msra.mxu0 %v7224
        %7232 = vmatprep.subr.bf16.mxu0 0
        %7233 = vmatpush1.bf16.msra.mxu0 %v7225
        %7234 = vmatprep.subr.bf16.mxu0 0
        %7235 = vmatpush1.bf16.msra.mxu0 0
        %7236 = vmatprep.subr.bf16.mxu0 0
        %7237 = vmatpush1.bf16.msra.mxu0 0
        %7238 = vmatprep.subr.bf16.mxu0 0
        %7239 = vmatpush1.bf16.msra.mxu0 0
        %7240 = vmatprep.subr.bf16.mxu0 0
        %7241 = vmatpush1.bf16.msra.mxu0 0
        %7242 = vmatprep.subr.bf16.mxu0 0
        %7243 = vmatpush1.bf16.msra.mxu0 0
        %7244 = vmatprep.subr.bf16.mxu0 0
        %7245 = vmatpush1.bf16.msra.mxu0 0
        %7246 = vmatprep.subr.bf16.mxu0 0
        %7247 = vmatpush1.bf16.msra.mxu0 0
        %7248 = vmatprep.subr.bf16.mxu0 0
        %7249 = vmatpush1.bf16.msra.mxu0 0
        %7250 = vmatprep.subr.bf16.mxu0 0
        %7251 = vmatpush1.bf16.msra.mxu0 0
        %7252 = vmatprep.subr.bf16.mxu0 0
        %7253 = vmatpush1.bf16.msra.mxu0 0
        %7254 = vmatprep.subr.bf16.mxu0 0
        %7255 = vmatpush1.bf16.msra.mxu0 0
        %7256 = vmatprep.subr.bf16.mxu0 0
        %7257 = vmatpush1.bf16.msra.mxu0 0
        %7258 = vmatprep.subr.bf16.mxu0 0
        %7259 = vmatpush1.bf16.msra.mxu0 0
        %7260 = vmatprep.subr.bf16.mxu0 0
        %7261 = vmatpush1.bf16.msra.mxu0 0
        %7262 = vmatprep.mubr.bf16.mxu0 0
        %7263 = vmatmul.mubr.bf16.gmra.mrb[0].mxu0 %v7228
        %v7264 = vpop.f32.mrb[0].mxu0
        %v7265 = vadd.f32 %v7226, %v7264
        %v7266 = vpop.f32.mrb[0].mxu0
        %v7267 = vpop.f32.mrb[0].mxu0
        %v7268 = vpop.f32.mrb[0].mxu0
        %7269 = vdwg.mxu0
        %v7270 = vxor.u32 %v7265, 2147483648
        %v7271 = vmul.f32 %v7270, 1.442695
        %v7272 = vpow.pop %v7271
        %v7273 = vadd.f32 %v7272, 1.0
        %v7274 = vrcp.pop %v7273
        %v7275 = vmul.f32 1.0, %v7274
        %v7276 = vtanh.pop %v7265
        %v7278 = vlaneseq
        %v7279 = vshrl.u32 %v7278, 7
        %v7280 = vsub.s32 0, %v7279
        %v7281 = vrot.slane %v7205, %v7280
        %7282 = vrot.lane.b32.xlu0 %v7281, 16
        %v7283 = vpop.permute.xlu0 %7282
        %v7285 = vmul.f32 %v7275, %v7283
        %7287 = vrot.lane.b32.xlu0 %v7276, 96
        %v7288 = vpop.permute.xlu0 %7287
        %v7290 = vmul.f32 %v7275, %v7288
        %7292 = vrot.lane.b32.xlu0 %v7290, 16
        %v7293 = vpop.permute.xlu0 %7292
        %v7295 = vadd.f32 %v7285, %v7293
        %v7296 = vtanh.pop %v7295
        %7298 = vrot.lane.b32.xlu0 %v7296, 32
        %v7299 = vpop.permute.xlu0 %7298
        %v7301 = vmul.f32 %v7275, %v7299
        %v7302 = vld [vmem:[%s1267] sm:$0x1]
        %v7303 = vld [vmem:[%s1270] sm:$0x1]
        %7305 = vrot.lane.b32.xlu0 %v7301, 80
        %v7306 = vpop.permute.xlu0 %7305
        %v7309 = vlaneseq
        %v7310 = vshrl.u32 %v7309, 7
        %v7311 = vsub.s32 0, %v7310
        %v7312 = vrot.slane %v7302, %v7311
        %7313 = vrot.lane.b32.xlu0 %v7312, 16
        %v7314 = vpop.permute.xlu0 %7313
        %v7316 = vsel %vm2274, %v7306, %v7314
        %v7317 = vpack.c.bf16 %v7316, %v7316
        %v7318 = vld [vmem:[%s51] sm:$0xff]
        %v7319 = vld [vmem:[%s51 + $0x8] sm:$0xff]
        %v7320 = vld [vmem:[%s51 + $0x10] sm:$0xff]
        %v7321 = vld [vmem:[%s51 + $0x18] sm:$0xff]
        %v7322 = vpack.c.bf16 %v7319, %v7318
        %v7323 = vpack.c.bf16 %v7321, %v7320
        %v7324 = vld [vmem:[%s53] sm:$0x1]
        %v7326 = vsel %vm2330, %v7317, 0
        %7328 = vmatprep.subr.bf16.mxu0 0
        %7329 = vmatpush1.bf16.msra.mxu0 %v7322
        %7330 = vmatprep.subr.bf16.mxu0 0
        %7331 = vmatpush1.bf16.msra.mxu0 %v7323
        %7332 = vmatprep.subr.bf16.mxu0 0
        %7333 = vmatpush1.bf16.msra.mxu0 0
        %7334 = vmatprep.subr.bf16.mxu0 0
        %7335 = vmatpush1.bf16.msra.mxu0 0
        %7336 = vmatprep.subr.bf16.mxu0 0
        %7337 = vmatpush1.bf16.msra.mxu0 0
        %7338 = vmatprep.subr.bf16.mxu0 0
        %7339 = vmatpush1.bf16.msra.mxu0 0
        %7340 = vmatprep.subr.bf16.mxu0 0
        %7341 = vmatpush1.bf16.msra.mxu0 0
        %7342 = vmatprep.subr.bf16.mxu0 0
        %7343 = vmatpush1.bf16.msra.mxu0 0
        %7344 = vmatprep.subr.bf16.mxu0 0
        %7345 = vmatpush1.bf16.msra.mxu0 0
        %7346 = vmatprep.subr.bf16.mxu0 0
        %7347 = vmatpush1.bf16.msra.mxu0 0
        %7348 = vmatprep.subr.bf16.mxu0 0
        %7349 = vmatpush1.bf16.msra.mxu0 0
        %7350 = vmatprep.subr.bf16.mxu0 0
        %7351 = vmatpush1.bf16.msra.mxu0 0
        %7352 = vmatprep.subr.bf16.mxu0 0
        %7353 = vmatpush1.bf16.msra.mxu0 0
        %7354 = vmatprep.subr.bf16.mxu0 0
        %7355 = vmatpush1.bf16.msra.mxu0 0
        %7356 = vmatprep.subr.bf16.mxu0 0
        %7357 = vmatpush1.bf16.msra.mxu0 0
        %7358 = vmatprep.subr.bf16.mxu0 0
        %7359 = vmatpush1.bf16.msra.mxu0 0
        %7360 = vmatprep.mubr.bf16.mxu0 0
        %7361 = vmatmul.mubr.bf16.gmra.mrb[0].mxu0 %v7326
        %v7362 = vpop.f32.mrb[0].mxu0
        %v7363 = vadd.f32 %v7324, %v7362
        %v7364 = vpop.f32.mrb[0].mxu0
        %v7365 = vpop.f32.mrb[0].mxu0
        %v7366 = vpop.f32.mrb[0].mxu0
        %7367 = vdwg.mxu0
        %v7368 = vxor.u32 %v7363, 2147483648
        %v7369 = vmul.f32 %v7368, 1.442695
        %v7370 = vpow.pop %v7369
        %v7371 = vadd.f32 %v7370, 1.0
        %v7372 = vrcp.pop %v7371
        %v7373 = vmul.f32 1.0, %v7372
        %v7374 = vtanh.pop %v7363
        %v7376 = vlaneseq
        %v7377 = vshrl.u32 %v7376, 7
        %v7378 = vsub.s32 0, %v7377
        %v7379 = vrot.slane %v7303, %v7378
        %7380 = vrot.lane.b32.xlu0 %v7379, 16
        %v7381 = vpop.permute.xlu0 %7380
        %v7383 = vmul.f32 %v7373, %v7381
        %7385 = vrot.lane.b32.xlu0 %v7374, 96
        %v7386 = vpop.permute.xlu0 %7385
        %v7388 = vmul.f32 %v7373, %v7386
        %7390 = vrot.lane.b32.xlu0 %v7388, 16
        %v7391 = vpop.permute.xlu0 %7390
        %v7393 = vadd.f32 %v7383, %v7391
        %v7394 = vtanh.pop %v7393
        %7396 = vrot.lane.b32.xlu0 %v7394, 32
        %v7397 = vpop.permute.xlu0 %7396
        %v7399 = vmul.f32 %v7373, %v7397
        %7400 = vrot.lane.b32.xlu0 %v7301, 112
        %v7401 = vpop.permute.xlu0 %7400
        %7404 = vrot.lane.b32.xlu0 %v7295, 32
        %v7405 = vpop.permute.xlu0 %7404
        %7408 = vrot.lane.b32.xlu0 %v7399, 16
        %v7409 = vpop.permute.xlu0 %7408
        %7412 = vrot.lane.b32.xlu0 %v7393, 64
        %v7413 = vpop.permute.xlu0 %7412
        %v7415 = vsel %vm2274, %v7208, %v7197
        %v7416 = vsel %vm2330, %v7415, %v7401
        %v7417 = vsel %vm4252, %v7416, %v7405
        %v7418 = vsel %vm4280, %v7417, %v7409
        %v7419 = vsel %vm4308, %v7418, %v7413
        %vm7420 = vcmask 778240
        %7421 = vst.msk [vmem:[%s1278] sm:$0x1] %vm7420, %v7419
        %v7422 = vld [vmem:[%s55] sm:$0xff]
        %v7423 = vld [vmem:[%s55 + $0x8] sm:$0xff]
        %v7424 = vld [vmem:[%s55 + $0x10] sm:$0xff]
        %v7425 = vld [vmem:[%s55 + $0x18] sm:$0xff]
        %v7426 = vld [vmem:[%s55 + $0x20] sm:$0xff]
        %v7427 = vld [vmem:[%s55 + $0x28] sm:$0xff]
        %v7428 = vld [vmem:[%s55 + $0x30] sm:$0xff]
        %v7429 = vld [vmem:[%s55 + $0x38] sm:$0xff]
        %v7430 = vld [vmem:[%s55 + $0x40] sm:$0xff]
        %v7431 = vld [vmem:[%s55 + $0x48] sm:$0xff]
        %v7432 = vld [vmem:[%s55 + $0x50] sm:$0xff]
        %v7433 = vld [vmem:[%s55 + $0x58] sm:$0xff]
        %v7434 = vld [vmem:[%s55 + $0x60] sm:$0xf]
        %7435 = vset.pattern.permute.xlu0 24
        %7436 = vperm.xlu0 %7435, %v6806
        %v7437 = vpop.permute.xlu0 %7436
        %7439 = vset.pattern.permute.xlu0 24
        %7440 = vperm.xlu0 %7439, %v6807
        %v7441 = vpop.permute.xlu0 %7440
        %7443 = vset.pattern.permute.xlu0 24
        %7444 = vperm.xlu0 %7443, %v6808
        %v7445 = vpop.permute.xlu0 %7444
        %7447 = vset.pattern.permute.xlu0 24
        %7448 = vperm.xlu0 %7447, %v6809
        %v7449 = vpop.permute.xlu0 %7448
        %7451 = vset.pattern.permute.xlu0 24
        %7452 = vperm.xlu0 %7451, %v6810
        %v7453 = vpop.permute.xlu0 %7452
        %7455 = vset.pattern.permute.xlu0 24
        %7456 = vperm.xlu0 %7455, %v6811
        %v7457 = vpop.permute.xlu0 %7456
        %7459 = vset.pattern.permute.xlu0 24
        %7460 = vperm.xlu0 %7459, %v6812
        %v7461 = vpop.permute.xlu0 %7460
        %7463 = vset.pattern.permute.xlu0 24
        %7464 = vperm.xlu0 %7463, %v6813
        %v7465 = vpop.permute.xlu0 %7464
        %7467 = vset.pattern.permute.xlu0 24
        %7468 = vperm.xlu0 %7467, %v6814
        %v7469 = vpop.permute.xlu0 %7468
        %7471 = vset.pattern.permute.xlu0 24
        %7472 = vperm.xlu0 %7471, %v6815
        %v7473 = vpop.permute.xlu0 %7472
        %7475 = vset.pattern.permute.xlu0 24
        %7476 = vperm.xlu0 %7475, %v6816
        %v7477 = vpop.permute.xlu0 %7476
        %7479 = vset.pattern.permute.xlu0 24
        %7480 = vperm.xlu0 %7479, %v6817
        %v7481 = vpop.permute.xlu0 %7480
        %7483 = vset.pattern.permute.xlu0 24
        %7484 = vperm.xlu0 %7483, %v6818
        %v7485 = vpop.permute.xlu0 %7484
        %v7487 = vmul.f32 %v7437, %v7422
        %v7488 = vmul.f32 %v7441, %v7423
        %v7489 = vmul.f32 %v7445, %v7424
        %v7490 = vmul.f32 %v7449, %v7425
        %v7491 = vmul.f32 %v7453, %v7426
        %v7492 = vmul.f32 %v7457, %v7427
        %v7493 = vmul.f32 %v7461, %v7428
        %v7494 = vmul.f32 %v7465, %v7429
        %v7495 = vmul.f32 %v7469, %v7430
        %v7496 = vmul.f32 %v7473, %v7431
        %v7497 = vmul.f32 %v7477, %v7432
        %v7498 = vmul.f32 %v7481, %v7433
        %v7499 = vmul.f32 %v7485, %v7434
        %s7500 = scalar_lea.vmem %s55, 104
        %v7501 = vld [vmem:[%s7500] sm:$0xff]
        %v7502 = vld [vmem:[%s7500 + $0x8] sm:$0xff]
        %v7503 = vld [vmem:[%s7500 + $0x10] sm:$0xff]
        %v7504 = vld [vmem:[%s7500 + $0x18] sm:$0xff]
        %v7505 = vld [vmem:[%s7500 + $0x20] sm:$0xff]
        %v7506 = vld [vmem:[%s7500 + $0x28] sm:$0xff]
        %v7507 = vld [vmem:[%s7500 + $0x30] sm:$0xff]
        %v7508 = vld [vmem:[%s7500 + $0x38] sm:$0xff]
        %v7509 = vld [vmem:[%s7500 + $0x40] sm:$0xff]
        %v7510 = vld [vmem:[%s7500 + $0x48] sm:$0xff]
        %v7511 = vld [vmem:[%s7500 + $0x50] sm:$0xff]
        %v7512 = vld [vmem:[%s7500 + $0x58] sm:$0xff]
        %v7513 = vld [vmem:[%s7500 + $0x60] sm:$0xf]
        %7514 = vset.pattern.permute.xlu0 25
        %7515 = vperm.xlu0 %7514, %v6806
        %v7516 = vpop.permute.xlu0 %7515
        %7518 = vset.pattern.permute.xlu0 25
        %7519 = vperm.xlu0 %7518, %v6807
        %v7520 = vpop.permute.xlu0 %7519
        %7522 = vset.pattern.permute.xlu0 25
        %7523 = vperm.xlu0 %7522, %v6808
        %v7524 = vpop.permute.xlu0 %7523
        %7526 = vset.pattern.permute.xlu0 25
        %7527 = vperm.xlu0 %7526, %v6809
        %v7528 = vpop.permute.xlu0 %7527
        %7530 = vset.pattern.permute.xlu0 25
        %7531 = vperm.xlu0 %7530, %v6810
        %v7532 = vpop.permute.xlu0 %7531
        %7534 = vset.pattern.permute.xlu0 25
        %7535 = vperm.xlu0 %7534, %v6811
        %v7536 = vpop.permute.xlu0 %7535
        %7538 = vset.pattern.permute.xlu0 25
        %7539 = vperm.xlu0 %7538, %v6812
        %v7540 = vpop.permute.xlu0 %7539
        %7542 = vset.pattern.permute.xlu0 25
        %7543 = vperm.xlu0 %7542, %v6813
        %v7544 = vpop.permute.xlu0 %7543
        %7546 = vset.pattern.permute.xlu0 25
        %7547 = vperm.xlu0 %7546, %v6814
        %v7548 = vpop.permute.xlu0 %7547
        %7550 = vset.pattern.permute.xlu0 25
        %7551 = vperm.xlu0 %7550, %v6815
        %v7552 = vpop.permute.xlu0 %7551
        %7554 = vset.pattern.permute.xlu0 25
        %7555 = vperm.xlu0 %7554, %v6816
        %v7556 = vpop.permute.xlu0 %7555
        %7558 = vset.pattern.permute.xlu0 25
        %7559 = vperm.xlu0 %7558, %v6817
        %v7560 = vpop.permute.xlu0 %7559
        %7562 = vset.pattern.permute.xlu0 25
        %7563 = vperm.xlu0 %7562, %v6818
        %v7564 = vpop.permute.xlu0 %7563
        %v7566 = vmul.f32 %v7516, %v7501
        %v7567 = vmul.f32 %v7520, %v7502
        %v7568 = vmul.f32 %v7524, %v7503
        %v7569 = vmul.f32 %v7528, %v7504
        %v7570 = vmul.f32 %v7532, %v7505
        %v7571 = vmul.f32 %v7536, %v7506
        %v7572 = vmul.f32 %v7540, %v7507
        %v7573 = vmul.f32 %v7544, %v7508
        %v7574 = vmul.f32 %v7548, %v7509
        %v7575 = vmul.f32 %v7552, %v7510
        %v7576 = vmul.f32 %v7556, %v7511
        %v7577 = vmul.f32 %v7560, %v7512
        %v7578 = vmul.f32 %v7564, %v7513
        %v7579 = vadd.f32 %v7487, %v7566
        %v7580 = vadd.f32 %v7488, %v7567
        %v7581 = vadd.f32 %v7489, %v7568
        %v7582 = vadd.f32 %v7490, %v7569
        %v7583 = vadd.f32 %v7491, %v7570
        %v7584 = vadd.f32 %v7492, %v7571
        %v7585 = vadd.f32 %v7493, %v7572
        %v7586 = vadd.f32 %v7494, %v7573
        %v7587 = vadd.f32 %v7495, %v7574
        %v7588 = vadd.f32 %v7496, %v7575
        %v7589 = vadd.f32 %v7497, %v7576
        %v7590 = vadd.f32 %v7498, %v7577
        %v7591 = vadd.f32 %v7499, %v7578
        %s7592 = scalar_lea.vmem %s55, 208
        %v7593 = vld [vmem:[%s7592] sm:$0xff]
        %v7594 = vld [vmem:[%s7592 + $0x8] sm:$0xff]
        %v7595 = vld [vmem:[%s7592 + $0x10] sm:$0xff]
        %v7596 = vld [vmem:[%s7592 + $0x18] sm:$0xff]
        %v7597 = vld [vmem:[%s7592 + $0x20] sm:$0xff]
        %v7598 = vld [vmem:[%s7592 + $0x28] sm:$0xff]
        %v7599 = vld [vmem:[%s7592 + $0x30] sm:$0xff]
        %v7600 = vld [vmem:[%s7592 + $0x38] sm:$0xff]
        %v7601 = vld [vmem:[%s7592 + $0x40] sm:$0xff]
        %v7602 = vld [vmem:[%s7592 + $0x48] sm:$0xff]
        %v7603 = vld [vmem:[%s7592 + $0x50] sm:$0xff]
        %v7604 = vld [vmem:[%s7592 + $0x58] sm:$0xff]
        %v7605 = vld [vmem:[%s7592 + $0x60] sm:$0xf]
        %7606 = vset.pattern.permute.xlu0 26
        %7607 = vperm.xlu0 %7606, %v6806
        %v7608 = vpop.permute.xlu0 %7607
        %7610 = vset.pattern.permute.xlu0 26
        %7611 = vperm.xlu0 %7610, %v6807
        %v7612 = vpop.permute.xlu0 %7611
        %7614 = vset.pattern.permute.xlu0 26
        %7615 = vperm.xlu0 %7614, %v6808
        %v7616 = vpop.permute.xlu0 %7615
        %7618 = vset.pattern.permute.xlu0 26
        %7619 = vperm.xlu0 %7618, %v6809
        %v7620 = vpop.permute.xlu0 %7619
        %7622 = vset.pattern.permute.xlu0 26
        %7623 = vperm.xlu0 %7622, %v6810
        %v7624 = vpop.permute.xlu0 %7623
        %7626 = vset.pattern.permute.xlu0 26
        %7627 = vperm.xlu0 %7626, %v6811
        %v7628 = vpop.permute.xlu0 %7627
        %7630 = vset.pattern.permute.xlu0 26
        %7631 = vperm.xlu0 %7630, %v6812
        %v7632 = vpop.permute.xlu0 %7631
        %7634 = vset.pattern.permute.xlu0 26
        %7635 = vperm.xlu0 %7634, %v6813
        %v7636 = vpop.permute.xlu0 %7635
        %7638 = vset.pattern.permute.xlu0 26
        %7639 = vperm.xlu0 %7638, %v6814
        %v7640 = vpop.permute.xlu0 %7639
        %7642 = vset.pattern.permute.xlu0 26
        %7643 = vperm.xlu0 %7642, %v6815
        %v7644 = vpop.permute.xlu0 %7643
        %7646 = vset.pattern.permute.xlu0 26
        %7647 = vperm.xlu0 %7646, %v6816
        %v7648 = vpop.permute.xlu0 %7647
        %7650 = vset.pattern.permute.xlu0 26
        %7651 = vperm.xlu0 %7650, %v6817
        %v7652 = vpop.permute.xlu0 %7651
        %7654 = vset.pattern.permute.xlu0 26
        %7655 = vperm.xlu0 %7654, %v6818
        %v7656 = vpop.permute.xlu0 %7655
        %v7658 = vmul.f32 %v7608, %v7593
        %v7659 = vmul.f32 %v7612, %v7594
        %v7660 = vmul.f32 %v7616, %v7595
        %v7661 = vmul.f32 %v7620, %v7596
        %v7662 = vmul.f32 %v7624, %v7597
        %v7663 = vmul.f32 %v7628, %v7598
        %v7664 = vmul.f32 %v7632, %v7599
        %v7665 = vmul.f32 %v7636, %v7600
        %v7666 = vmul.f32 %v7640, %v7601
        %v7667 = vmul.f32 %v7644, %v7602
        %v7668 = vmul.f32 %v7648, %v7603
        %v7669 = vmul.f32 %v7652, %v7604
        %v7670 = vmul.f32 %v7656, %v7605
        %v7671 = vadd.f32 %v7579, %v7658
        %v7672 = vadd.f32 %v7580, %v7659
        %v7673 = vadd.f32 %v7581, %v7660
        %v7674 = vadd.f32 %v7582, %v7661
        %v7675 = vadd.f32 %v7583, %v7662
        %v7676 = vadd.f32 %v7584, %v7663
        %v7677 = vadd.f32 %v7585, %v7664
        %v7678 = vadd.f32 %v7586, %v7665
        %v7679 = vadd.f32 %v7587, %v7666
        %v7680 = vadd.f32 %v7588, %v7667
        %v7681 = vadd.f32 %v7589, %v7668
        %v7682 = vadd.f32 %v7590, %v7669
        %v7683 = vadd.f32 %v7591, %v7670
        %s7684 = scalar_lea.vmem %s55, 312
        %v7685 = vld [vmem:[%s7684] sm:$0xff]
        %v7686 = vld [vmem:[%s7684 + $0x8] sm:$0xff]
        %v7687 = vld [vmem:[%s7684 + $0x10] sm:$0xff]
        %v7688 = vld [vmem:[%s7684 + $0x18] sm:$0xff]
        %v7689 = vld [vmem:[%s7684 + $0x20] sm:$0xff]
        %v7690 = vld [vmem:[%s7684 + $0x28] sm:$0xff]
        %v7691 = vld [vmem:[%s7684 + $0x30] sm:$0xff]
        %v7692 = vld [vmem:[%s7684 + $0x38] sm:$0xff]
        %v7693 = vld [vmem:[%s7684 + $0x40] sm:$0xff]
        %v7694 = vld [vmem:[%s7684 + $0x48] sm:$0xff]
        %v7695 = vld [vmem:[%s7684 + $0x50] sm:$0xff]
        %v7696 = vld [vmem:[%s7684 + $0x58] sm:$0xff]
        %v7697 = vld [vmem:[%s7684 + $0x60] sm:$0xf]
        %7698 = vset.pattern.permute.xlu0 27
        %7699 = vperm.xlu0 %7698, %v6806
        %v7700 = vpop.permute.xlu0 %7699
        %7702 = vset.pattern.permute.xlu0 27
        %7703 = vperm.xlu0 %7702, %v6807
        %v7704 = vpop.permute.xlu0 %7703
        %7706 = vset.pattern.permute.xlu0 27
        %7707 = vperm.xlu0 %7706, %v6808
        %v7708 = vpop.permute.xlu0 %7707
        %7710 = vset.pattern.permute.xlu0 27
        %7711 = vperm.xlu0 %7710, %v6809
        %v7712 = vpop.permute.xlu0 %7711
        %7714 = vset.pattern.permute.xlu0 27
        %7715 = vperm.xlu0 %7714, %v6810
        %v7716 = vpop.permute.xlu0 %7715
        %7718 = vset.pattern.permute.xlu0 27
        %7719 = vperm.xlu0 %7718, %v6811
        %v7720 = vpop.permute.xlu0 %7719
        %7722 = vset.pattern.permute.xlu0 27
        %7723 = vperm.xlu0 %7722, %v6812
        %v7724 = vpop.permute.xlu0 %7723
        %7726 = vset.pattern.permute.xlu0 27
        %7727 = vperm.xlu0 %7726, %v6813
        %v7728 = vpop.permute.xlu0 %7727
        %7730 = vset.pattern.permute.xlu0 27
        %7731 = vperm.xlu0 %7730, %v6814
        %v7732 = vpop.permute.xlu0 %7731
        %7734 = vset.pattern.permute.xlu0 27
        %7735 = vperm.xlu0 %7734, %v6815
        %v7736 = vpop.permute.xlu0 %7735
        %7738 = vset.pattern.permute.xlu0 27
        %7739 = vperm.xlu0 %7738, %v6816
        %v7740 = vpop.permute.xlu0 %7739
        %7742 = vset.pattern.permute.xlu0 27
        %7743 = vperm.xlu0 %7742, %v6817
        %v7744 = vpop.permute.xlu0 %7743
        %7746 = vset.pattern.permute.xlu0 27
        %7747 = vperm.xlu0 %7746, %v6818
        %v7748 = vpop.permute.xlu0 %7747
        %v7750 = vmul.f32 %v7700, %v7685
        %v7751 = vmul.f32 %v7704, %v7686
        %v7752 = vmul.f32 %v7708, %v7687
        %v7753 = vmul.f32 %v7712, %v7688
        %v7754 = vmul.f32 %v7716, %v7689
        %v7755 = vmul.f32 %v7720, %v7690
        %v7756 = vmul.f32 %v7724, %v7691
        %v7757 = vmul.f32 %v7728, %v7692
        %v7758 = vmul.f32 %v7732, %v7693
        %v7759 = vmul.f32 %v7736, %v7694
        %v7760 = vmul.f32 %v7740, %v7695
        %v7761 = vmul.f32 %v7744, %v7696
        %v7762 = vmul.f32 %v7748, %v7697
        %v7763 = vadd.f32 %v7671, %v7750
        %v7764 = vadd.f32 %v7672, %v7751
        %v7765 = vadd.f32 %v7673, %v7752
        %v7766 = vadd.f32 %v7674, %v7753
        %v7767 = vadd.f32 %v7675, %v7754
        %v7768 = vadd.f32 %v7676, %v7755
        %v7769 = vadd.f32 %v7677, %v7756
        %v7770 = vadd.f32 %v7678, %v7757
        %v7771 = vadd.f32 %v7679, %v7758
        %v7772 = vadd.f32 %v7680, %v7759
        %v7773 = vadd.f32 %v7681, %v7760
        %v7774 = vadd.f32 %v7682, %v7761
        %v7775 = vadd.f32 %v7683, %v7762
        %s7776 = scalar_lea.vmem %s55, 416
        %v7777 = vld [vmem:[%s7776] sm:$0xff]
        %v7778 = vld [vmem:[%s7776 + $0x8] sm:$0xff]
        %v7779 = vld [vmem:[%s7776 + $0x10] sm:$0xff]
        %v7780 = vld [vmem:[%s7776 + $0x18] sm:$0xff]
        %v7781 = vld [vmem:[%s7776 + $0x20] sm:$0xff]
        %v7782 = vld [vmem:[%s7776 + $0x28] sm:$0xff]
        %v7783 = vld [vmem:[%s7776 + $0x30] sm:$0xff]
        %v7784 = vld [vmem:[%s7776 + $0x38] sm:$0xff]
        %v7785 = vld [vmem:[%s7776 + $0x40] sm:$0xff]
        %v7786 = vld [vmem:[%s7776 + $0x48] sm:$0xff]
        %v7787 = vld [vmem:[%s7776 + $0x50] sm:$0xff]
        %v7788 = vld [vmem:[%s7776 + $0x58] sm:$0xff]
        %v7789 = vld [vmem:[%s7776 + $0x60] sm:$0xf]
        %7790 = vset.pattern.permute.xlu0 28
        %7791 = vperm.xlu0 %7790, %v6806
        %v7792 = vpop.permute.xlu0 %7791
        %7794 = vset.pattern.permute.xlu0 28
        %7795 = vperm.xlu0 %7794, %v6807
        %v7796 = vpop.permute.xlu0 %7795
        %7798 = vset.pattern.permute.xlu0 28
        %7799 = vperm.xlu0 %7798, %v6808
        %v7800 = vpop.permute.xlu0 %7799
        %7802 = vset.pattern.permute.xlu0 28
        %7803 = vperm.xlu0 %7802, %v6809
        %v7804 = vpop.permute.xlu0 %7803
        %7806 = vset.pattern.permute.xlu0 28
        %7807 = vperm.xlu0 %7806, %v6810
        %v7808 = vpop.permute.xlu0 %7807
        %7810 = vset.pattern.permute.xlu0 28
        %7811 = vperm.xlu0 %7810, %v6811
        %v7812 = vpop.permute.xlu0 %7811
        %7814 = vset.pattern.permute.xlu0 28
        %7815 = vperm.xlu0 %7814, %v6812
        %v7816 = vpop.permute.xlu0 %7815
        %7818 = vset.pattern.permute.xlu0 28
        %7819 = vperm.xlu0 %7818, %v6813
        %v7820 = vpop.permute.xlu0 %7819
        %7822 = vset.pattern.permute.xlu0 28
        %7823 = vperm.xlu0 %7822, %v6814
        %v7824 = vpop.permute.xlu0 %7823
        %7826 = vset.pattern.permute.xlu0 28
        %7827 = vperm.xlu0 %7826, %v6815
        %v7828 = vpop.permute.xlu0 %7827
        %7830 = vset.pattern.permute.xlu0 28
        %7831 = vperm.xlu0 %7830, %v6816
        %v7832 = vpop.permute.xlu0 %7831
        %7834 = vset.pattern.permute.xlu0 28
        %7835 = vperm.xlu0 %7834, %v6817
        %v7836 = vpop.permute.xlu0 %7835
        %7838 = vset.pattern.permute.xlu0 28
        %7839 = vperm.xlu0 %7838, %v6818
        %v7840 = vpop.permute.xlu0 %7839
        %v7842 = vmul.f32 %v7792, %v7777
        %v7843 = vmul.f32 %v7796, %v7778
        %v7844 = vmul.f32 %v7800, %v7779
        %v7845 = vmul.f32 %v7804, %v7780
        %v7846 = vmul.f32 %v7808, %v7781
        %v7847 = vmul.f32 %v7812, %v7782
        %v7848 = vmul.f32 %v7816, %v7783
        %v7849 = vmul.f32 %v7820, %v7784
        %v7850 = vmul.f32 %v7824, %v7785
        %v7851 = vmul.f32 %v7828, %v7786
        %v7852 = vmul.f32 %v7832, %v7787
        %v7853 = vmul.f32 %v7836, %v7788
        %v7854 = vmul.f32 %v7840, %v7789
        %v7855 = vadd.f32 %v7763, %v7842
        %v7856 = vadd.f32 %v7764, %v7843
        %v7857 = vadd.f32 %v7765, %v7844
        %v7858 = vadd.f32 %v7766, %v7845
        %v7859 = vadd.f32 %v7767, %v7846
        %v7860 = vadd.f32 %v7768, %v7847
        %v7861 = vadd.f32 %v7769, %v7848
        %v7862 = vadd.f32 %v7770, %v7849
        %v7863 = vadd.f32 %v7771, %v7850
        %v7864 = vadd.f32 %v7772, %v7851
        %v7865 = vadd.f32 %v7773, %v7852
        %v7866 = vadd.f32 %v7774, %v7853
        %v7867 = vadd.f32 %v7775, %v7854
        %s7868 = scalar_lea.vmem %s55, 520
        %v7869 = vld [vmem:[%s7868] sm:$0xff]
        %v7870 = vld [vmem:[%s7868 + $0x8] sm:$0xff]
        %v7871 = vld [vmem:[%s7868 + $0x10] sm:$0xff]
        %v7872 = vld [vmem:[%s7868 + $0x18] sm:$0xff]
        %v7873 = vld [vmem:[%s7868 + $0x20] sm:$0xff]
        %v7874 = vld [vmem:[%s7868 + $0x28] sm:$0xff]
        %v7875 = vld [vmem:[%s7868 + $0x30] sm:$0xff]
        %v7876 = vld [vmem:[%s7868 + $0x38] sm:$0xff]
        %v7877 = vld [vmem:[%s7868 + $0x40] sm:$0xff]
        %v7878 = vld [vmem:[%s7868 + $0x48] sm:$0xff]
        %v7879 = vld [vmem:[%s7868 + $0x50] sm:$0xff]
        %v7880 = vld [vmem:[%s7868 + $0x58] sm:$0xff]
        %v7881 = vld [vmem:[%s7868 + $0x60] sm:$0xf]
        %7882 = vset.pattern.permute.xlu0 29
        %7883 = vperm.xlu0 %7882, %v6806
        %v7884 = vpop.permute.xlu0 %7883
        %7886 = vset.pattern.permute.xlu0 29
        %7887 = vperm.xlu0 %7886, %v6807
        %v7888 = vpop.permute.xlu0 %7887
        %7890 = vset.pattern.permute.xlu0 29
        %7891 = vperm.xlu0 %7890, %v6808
        %v7892 = vpop.permute.xlu0 %7891
        %7894 = vset.pattern.permute.xlu0 29
        %7895 = vperm.xlu0 %7894, %v6809
        %v7896 = vpop.permute.xlu0 %7895
        %7898 = vset.pattern.permute.xlu0 29
        %7899 = vperm.xlu0 %7898, %v6810
        %v7900 = vpop.permute.xlu0 %7899
        %7902 = vset.pattern.permute.xlu0 29
        %7903 = vperm.xlu0 %7902, %v6811
        %v7904 = vpop.permute.xlu0 %7903
        %7906 = vset.pattern.permute.xlu0 29
        %7907 = vperm.xlu0 %7906, %v6812
        %v7908 = vpop.permute.xlu0 %7907
        %7910 = vset.pattern.permute.xlu0 29
        %7911 = vperm.xlu0 %7910, %v6813
        %v7912 = vpop.permute.xlu0 %7911
        %7914 = vset.pattern.permute.xlu0 29
        %7915 = vperm.xlu0 %7914, %v6814
        %v7916 = vpop.permute.xlu0 %7915
        %7918 = vset.pattern.permute.xlu0 29
        %7919 = vperm.xlu0 %7918, %v6815
        %v7920 = vpop.permute.xlu0 %7919
        %7922 = vset.pattern.permute.xlu0 29
        %7923 = vperm.xlu0 %7922, %v6816
        %v7924 = vpop.permute.xlu0 %7923
        %7926 = vset.pattern.permute.xlu0 29
        %7927 = vperm.xlu0 %7926, %v6817
        %v7928 = vpop.permute.xlu0 %7927
        %7930 = vset.pattern.permute.xlu0 29
        %7931 = vperm.xlu0 %7930, %v6818
        %v7932 = vpop.permute.xlu0 %7931
        %v7934 = vmul.f32 %v7884, %v7869
        %v7935 = vmul.f32 %v7888, %v7870
        %v7936 = vmul.f32 %v7892, %v7871
        %v7937 = vmul.f32 %v7896, %v7872
        %v7938 = vmul.f32 %v7900, %v7873
        %v7939 = vmul.f32 %v7904, %v7874
        %v7940 = vmul.f32 %v7908, %v7875
        %v7941 = vmul.f32 %v7912, %v7876
        %v7942 = vmul.f32 %v7916, %v7877
        %v7943 = vmul.f32 %v7920, %v7878
        %v7944 = vmul.f32 %v7924, %v7879
        %v7945 = vmul.f32 %v7928, %v7880
        %v7946 = vmul.f32 %v7932, %v7881
        %v7947 = vadd.f32 %v7855, %v7934
        %v7948 = vadd.f32 %v7856, %v7935
        %v7949 = vadd.f32 %v7857, %v7936
        %v7950 = vadd.f32 %v7858, %v7937
        %v7951 = vadd.f32 %v7859, %v7938
        %v7952 = vadd.f32 %v7860, %v7939
        %v7953 = vadd.f32 %v7861, %v7940
        %v7954 = vadd.f32 %v7862, %v7941
        %v7955 = vadd.f32 %v7863, %v7942
        %v7956 = vadd.f32 %v7864, %v7943
        %v7957 = vadd.f32 %v7865, %v7944
        %v7958 = vadd.f32 %v7866, %v7945
        %v7959 = vadd.f32 %v7867, %v7946
        %s7960 = scalar_lea.vmem %s55, 624
        %v7961 = vld [vmem:[%s7960] sm:$0xff]
        %v7962 = vld [vmem:[%s7960 + $0x8] sm:$0xff]
        %v7963 = vld [vmem:[%s7960 + $0x10] sm:$0xff]
        %v7964 = vld [vmem:[%s7960 + $0x18] sm:$0xff]
        %v7965 = vld [vmem:[%s7960 + $0x20] sm:$0xff]
        %v7966 = vld [vmem:[%s7960 + $0x28] sm:$0xff]
        %v7967 = vld [vmem:[%s7960 + $0x30] sm:$0xff]
        %v7968 = vld [vmem:[%s7960 + $0x38] sm:$0xff]
        %v7969 = vld [vmem:[%s7960 + $0x40] sm:$0xff]
        %v7970 = vld [vmem:[%s7960 + $0x48] sm:$0xff]
        %v7971 = vld [vmem:[%s7960 + $0x50] sm:$0xff]
        %v7972 = vld [vmem:[%s7960 + $0x58] sm:$0xff]
        %v7973 = vld [vmem:[%s7960 + $0x60] sm:$0xf]
        %7974 = vset.pattern.permute.xlu0 30
        %7975 = vperm.xlu0 %7974, %v6806
        %v7976 = vpop.permute.xlu0 %7975
        %7978 = vset.pattern.permute.xlu0 30
        %7979 = vperm.xlu0 %7978, %v6807
        %v7980 = vpop.permute.xlu0 %7979
        %7982 = vset.pattern.permute.xlu0 30
        %7983 = vperm.xlu0 %7982, %v6808
        %v7984 = vpop.permute.xlu0 %7983
        %7986 = vset.pattern.permute.xlu0 30
        %7987 = vperm.xlu0 %7986, %v6809
        %v7988 = vpop.permute.xlu0 %7987
        %7990 = vset.pattern.permute.xlu0 30
        %7991 = vperm.xlu0 %7990, %v6810
        %v7992 = vpop.permute.xlu0 %7991
        %7994 = vset.pattern.permute.xlu0 30
        %7995 = vperm.xlu0 %7994, %v6811
        %v7996 = vpop.permute.xlu0 %7995
        %7998 = vset.pattern.permute.xlu0 30
        %7999 = vperm.xlu0 %7998, %v6812
        %v8000 = vpop.permute.xlu0 %7999
        %8002 = vset.pattern.permute.xlu0 30
        %8003 = vperm.xlu0 %8002, %v6813
        %v8004 = vpop.permute.xlu0 %8003
        %8006 = vset.pattern.permute.xlu0 30
        %8007 = vperm.xlu0 %8006, %v6814
        %v8008 = vpop.permute.xlu0 %8007
        %8010 = vset.pattern.permute.xlu0 30
        %8011 = vperm.xlu0 %8010, %v6815
        %v8012 = vpop.permute.xlu0 %8011
        %8014 = vset.pattern.permute.xlu0 30
        %8015 = vperm.xlu0 %8014, %v6816
        %v8016 = vpop.permute.xlu0 %8015
        %8018 = vset.pattern.permute.xlu0 30
        %8019 = vperm.xlu0 %8018, %v6817
        %v8020 = vpop.permute.xlu0 %8019
        %8022 = vset.pattern.permute.xlu0 30
        %8023 = vperm.xlu0 %8022, %v6818
        %v8024 = vpop.permute.xlu0 %8023
        %v8026 = vmul.f32 %v7976, %v7961
        %v8027 = vmul.f32 %v7980, %v7962
        %v8028 = vmul.f32 %v7984, %v7963
        %v8029 = vmul.f32 %v7988, %v7964
        %v8030 = vmul.f32 %v7992, %v7965
        %v8031 = vmul.f32 %v7996, %v7966
        %v8032 = vmul.f32 %v8000, %v7967
        %v8033 = vmul.f32 %v8004, %v7968
        %v8034 = vmul.f32 %v8008, %v7969
        %v8035 = vmul.f32 %v8012, %v7970
        %v8036 = vmul.f32 %v8016, %v7971
        %v8037 = vmul.f32 %v8020, %v7972
        %v8038 = vmul.f32 %v8024, %v7973
        %v8039 = vadd.f32 %v7947, %v8026
        %v8040 = vadd.f32 %v7948, %v8027
        %v8041 = vadd.f32 %v7949, %v8028
        %v8042 = vadd.f32 %v7950, %v8029
        %v8043 = vadd.f32 %v7951, %v8030
        %v8044 = vadd.f32 %v7952, %v8031
        %v8045 = vadd.f32 %v7953, %v8032
        %v8046 = vadd.f32 %v7954, %v8033
        %v8047 = vadd.f32 %v7955, %v8034
        %v8048 = vadd.f32 %v7956, %v8035
        %v8049 = vadd.f32 %v7957, %v8036
        %v8050 = vadd.f32 %v7958, %v8037
        %v8051 = vadd.f32 %v7959, %v8038
        %s8052 = scalar_lea.vmem %s55, 728
        %v8053 = vld [vmem:[%s8052] sm:$0xff]
        %v8054 = vld [vmem:[%s8052 + $0x8] sm:$0xff]
        %v8055 = vld [vmem:[%s8052 + $0x10] sm:$0xff]
        %v8056 = vld [vmem:[%s8052 + $0x18] sm:$0xff]
        %v8057 = vld [vmem:[%s8052 + $0x20] sm:$0xff]
        %v8058 = vld [vmem:[%s8052 + $0x28] sm:$0xff]
        %v8059 = vld [vmem:[%s8052 + $0x30] sm:$0xff]
        %v8060 = vld [vmem:[%s8052 + $0x38] sm:$0xff]
        %v8061 = vld [vmem:[%s8052 + $0x40] sm:$0xff]
        %v8062 = vld [vmem:[%s8052 + $0x48] sm:$0xff]
        %v8063 = vld [vmem:[%s8052 + $0x50] sm:$0xff]
        %v8064 = vld [vmem:[%s8052 + $0x58] sm:$0xff]
        %v8065 = vld [vmem:[%s8052 + $0x60] sm:$0xf]
        %8066 = vset.pattern.permute.xlu0 31
        %8067 = vperm.xlu0 %8066, %v6806
        %v8068 = vpop.permute.xlu0 %8067
        %8070 = vset.pattern.permute.xlu0 31
        %8071 = vperm.xlu0 %8070, %v6807
        %v8072 = vpop.permute.xlu0 %8071
        %8074 = vset.pattern.permute.xlu0 31
        %8075 = vperm.xlu0 %8074, %v6808
        %v8076 = vpop.permute.xlu0 %8075
        %8078 = vset.pattern.permute.xlu0 31
        %8079 = vperm.xlu0 %8078, %v6809
        %v8080 = vpop.permute.xlu0 %8079
        %8082 = vset.pattern.permute.xlu0 31
        %8083 = vperm.xlu0 %8082, %v6810
        %v8084 = vpop.permute.xlu0 %8083
        %8086 = vset.pattern.permute.xlu0 31
        %8087 = vperm.xlu0 %8086, %v6811
        %v8088 = vpop.permute.xlu0 %8087
        %8090 = vset.pattern.permute.xlu0 31
        %8091 = vperm.xlu0 %8090, %v6812
        %v8092 = vpop.permute.xlu0 %8091
        %8094 = vset.pattern.permute.xlu0 31
        %8095 = vperm.xlu0 %8094, %v6813
        %v8096 = vpop.permute.xlu0 %8095
        %8098 = vset.pattern.permute.xlu0 31
        %8099 = vperm.xlu0 %8098, %v6814
        %v8100 = vpop.permute.xlu0 %8099
        %8102 = vset.pattern.permute.xlu0 31
        %8103 = vperm.xlu0 %8102, %v6815
        %v8104 = vpop.permute.xlu0 %8103
        %8106 = vset.pattern.permute.xlu0 31
        %8107 = vperm.xlu0 %8106, %v6816
        %v8108 = vpop.permute.xlu0 %8107
        %8110 = vset.pattern.permute.xlu0 31
        %8111 = vperm.xlu0 %8110, %v6817
        %v8112 = vpop.permute.xlu0 %8111
        %8114 = vset.pattern.permute.xlu0 31
        %8115 = vperm.xlu0 %8114, %v6818
        %v8116 = vpop.permute.xlu0 %8115
        %v8118 = vmul.f32 %v8068, %v8053
        %v8119 = vmul.f32 %v8072, %v8054
        %v8120 = vmul.f32 %v8076, %v8055
        %v8121 = vmul.f32 %v8080, %v8056
        %v8122 = vmul.f32 %v8084, %v8057
        %v8123 = vmul.f32 %v8088, %v8058
        %v8124 = vmul.f32 %v8092, %v8059
        %v8125 = vmul.f32 %v8096, %v8060
        %v8126 = vmul.f32 %v8100, %v8061
        %v8127 = vmul.f32 %v8104, %v8062
        %v8128 = vmul.f32 %v8108, %v8063
        %v8129 = vmul.f32 %v8112, %v8064
        %v8130 = vmul.f32 %v8116, %v8065
        %v8131 = vadd.f32 %v8039, %v8118
        %v8132 = vadd.f32 %v8040, %v8119
        %v8133 = vadd.f32 %v8041, %v8120
        %v8134 = vadd.f32 %v8042, %v8121
        %v8135 = vadd.f32 %v8043, %v8122
        %v8136 = vadd.f32 %v8044, %v8123
        %v8137 = vadd.f32 %v8045, %v8124
        %v8138 = vadd.f32 %v8046, %v8125
        %v8139 = vadd.f32 %v8047, %v8126
        %v8140 = vadd.f32 %v8048, %v8127
        %v8141 = vadd.f32 %v8049, %v8128
        %v8142 = vadd.f32 %v8050, %v8129
        %v8143 = vadd.f32 %v8051, %v8130
        %v8144 = vsel %vm2330, %v8131, 0.0
        %v8145 = vsel %vm2330, %v8132, 0.0
        %v8146 = vadd.f32 %v8144, %v8145
        %v8147 = vsel %vm2330, %v8133, 0.0
        %v8148 = vadd.f32 %v8146, %v8147
        %v8149 = vsel %vm2330, %v8134, 0.0
        %v8150 = vadd.f32 %v8148, %v8149
        %v8151 = vsel %vm2330, %v8135, 0.0
        %v8152 = vadd.f32 %v8150, %v8151
        %v8153 = vsel %vm2330, %v8136, 0.0
        %v8154 = vadd.f32 %v8152, %v8153
        %v8155 = vsel %vm2330, %v8137, 0.0
        %v8156 = vadd.f32 %v8154, %v8155
        %v8157 = vsel %vm2330, %v8138, 0.0
        %v8158 = vadd.f32 %v8156, %v8157
        %v8159 = vsel %vm2330, %v8139, 0.0
        %v8160 = vadd.f32 %v8158, %v8159
        %v8161 = vsel %vm2330, %v8140, 0.0
        %v8162 = vadd.f32 %v8160, %v8161
        %v8163 = vsel %vm2330, %v8141, 0.0
        %v8164 = vadd.f32 %v8162, %v8163
        %v8165 = vsel %vm2330, %v8142, 0.0
        %v8166 = vadd.f32 %v8164, %v8165
        %vm8167 = vcmask 257024
        %v8168 = vsel %vm8167, %v8143, 0.0
        %v8169 = vadd.f32 %v8166, %v8168
        %v8170 = vrot.slane %v8169, 4
        %v8171 = vadd.f32 %v8169, %v8170
        %v8172 = vrot.slane %v8171, 2
        %v8173 = vadd.f32 %v8171, %v8172
        %v8174 = vrot.slane %v8173, 1
        %v8175 = vadd.f32 %v8173, %v8174
        %v8176 = vpack.c.bf16 %v7399, %v7399
        %v8177 = vld [vmem:[%s57] sm:$0xff]
        %v8178 = vld [vmem:[%s57 + $0x8] sm:$0xff]
        %v8179 = vpack.c.bf16 %v8178, %v8177
        %8181 = vrot.lane.b32.xlu0 %v8176, 80
        %v8182 = vpop.permute.xlu0 %8181
        %v8184 = vsel %vm2274, %v8182, 0
        %8186 = vmatprep.subr.bf16.mxu0 0
        %8187 = vmatpush1.bf16.msra.mxu0 %v8179
        %8188 = vmatprep.subr.bf16.mxu0 0
        %8189 = vmatpush1.bf16.msra.mxu0 0
        %8190 = vmatprep.subr.bf16.mxu0 0
        %8191 = vmatpush1.bf16.msra.mxu0 0
        %8192 = vmatprep.subr.bf16.mxu0 0
        %8193 = vmatpush1.bf16.msra.mxu0 0
        %8194 = vmatprep.subr.bf16.mxu0 0
        %8195 = vmatpush1.bf16.msra.mxu0 0
        %8196 = vmatprep.subr.bf16.mxu0 0
        %8197 = vmatpush1.bf16.msra.mxu0 0
        %8198 = vmatprep.subr.bf16.mxu0 0
        %8199 = vmatpush1.bf16.msra.mxu0 0
        %8200 = vmatprep.subr.bf16.mxu0 0
        %8201 = vmatpush1.bf16.msra.mxu0 0
        %8202 = vmatprep.subr.bf16.mxu0 0
        %8203 = vmatpush1.bf16.msra.mxu0 0
        %8204 = vmatprep.subr.bf16.mxu0 0
        %8205 = vmatpush1.bf16.msra.mxu0 0
        %8206 = vmatprep.subr.bf16.mxu0 0
        %8207 = vmatpush1.bf16.msra.mxu0 0
        %8208 = vmatprep.subr.bf16.mxu0 0
        %8209 = vmatpush1.bf16.msra.mxu0 0
        %8210 = vmatprep.subr.bf16.mxu0 0
        %8211 = vmatpush1.bf16.msra.mxu0 0
        %8212 = vmatprep.subr.bf16.mxu0 0
        %8213 = vmatpush1.bf16.msra.mxu0 0
        %8214 = vmatprep.subr.bf16.mxu0 0
        %8215 = vmatpush1.bf16.msra.mxu0 0
        %8216 = vmatprep.subr.bf16.mxu0 0
        %8217 = vmatpush1.bf16.msra.mxu0 0
        %8218 = vmatprep.mubr.bf16.mxu0 0
        %8219 = vmatmul.mubr.bf16.gmra.mrb[0].mxu0 %v8184
        %v8220 = vpop.f32.mrb[0].mxu0
        %v8221 = vadd.f32 0.0, %v8220
        %v8222 = vpop.f32.mrb[0].mxu0
        %v8223 = vpop.f32.mrb[0].mxu0
        %v8224 = vpop.f32.mrb[0].mxu0
        %8225 = vdwg.mxu0
        %v8226 = vadd.f32 %v8175, %v8221
        %v8227 = vld [vmem:[%s59] sm:$0x1]
        %v8228 = vadd.f32 %v8226, %v8227
        %v8229 = vmax.f32 %v8228, 0.0
        %v8230 = vpack.c.bf16 %v8229, %v8229
        %v8231 = vld [vmem:[%s61] sm:$0xff]
        %v8232 = vld [vmem:[%s61 + $0x8] sm:$0xff]
        %v8233 = vld [vmem:[%s61 + $0x10] sm:$0xff]
        %v8234 = vld [vmem:[%s61 + $0x18] sm:$0xff]
        %v8235 = vpack.c.bf16 %v8232, %v8231
        %v8236 = vpack.c.bf16 %v8234, %v8233
        %v8237 = vld [vmem:[%s63] sm:$0x1]
        %v8239 = vsel %vm2330, %v8230, 0
        %8241 = vmatprep.subr.bf16.mxu0 0
        %8242 = vmatpush1.bf16.msra.mxu0 %v8235
        %8243 = vmatprep.subr.bf16.mxu0 0
        %8244 = vmatpush1.bf16.msra.mxu0 %v8236
        %8245 = vmatprep.subr.bf16.mxu0 0
        %8246 = vmatpush1.bf16.msra.mxu0 0
        %8247 = vmatprep.subr.bf16.mxu0 0
        %8248 = vmatpush1.bf16.msra.mxu0 0
        %8249 = vmatprep.subr.bf16.mxu0 0
        %8250 = vmatpush1.bf16.msra.mxu0 0
        %8251 = vmatprep.subr.bf16.mxu0 0
        %8252 = vmatpush1.bf16.msra.mxu0 0
        %8253 = vmatprep.subr.bf16.mxu0 0
        %8254 = vmatpush1.bf16.msra.mxu0 0
        %8255 = vmatprep.subr.bf16.mxu0 0
        %8256 = vmatpush1.bf16.msra.mxu0 0
        %8257 = vmatprep.subr.bf16.mxu0 0
        %8258 = vmatpush1.bf16.msra.mxu0 0
        %8259 = vmatprep.subr.bf16.mxu0 0
        %8260 = vmatpush1.bf16.msra.mxu0 0
        %8261 = vmatprep.subr.bf16.mxu0 0
        %8262 = vmatpush1.bf16.msra.mxu0 0
        %8263 = vmatprep.subr.bf16.mxu0 0
        %8264 = vmatpush1.bf16.msra.mxu0 0
        %8265 = vmatprep.subr.bf16.mxu0 0
        %8266 = vmatpush1.bf16.msra.mxu0 0
        %8267 = vmatprep.subr.bf16.mxu0 0
        %8268 = vmatpush1.bf16.msra.mxu0 0
        %8269 = vmatprep.subr.bf16.mxu0 0
        %8270 = vmatpush1.bf16.msra.mxu0 0
        %8271 = vmatprep.subr.bf16.mxu0 0
        %8272 = vmatpush1.bf16.msra.mxu0 0
        %8273 = vmatprep.mubr.bf16.mxu0 0
        %8274 = vmatmul.mubr.bf16.gmra.mrb[0].mxu0 %v8239
        %v8275 = vpop.f32.mrb[0].mxu0
        %v8276 = vadd.f32 %v8237, %v8275
        %v8277 = vpop.f32.mrb[0].mxu0
        %v8278 = vpop.f32.mrb[0].mxu0
        %v8279 = vpop.f32.mrb[0].mxu0
        %8280 = vdwg.mxu0
        %vm8281 = vcmask 24576
        %8282 = vst.msk [vmem:[%s1214] sm:$0x1] %vm8281, %v8276
        %p8283 = scmp.lt.s32.totalorder %s84, 1
        %s8284 = scalar_select %p8283, %s84, 1
        %s8285 = smul.addr %s8284, 13
        %s8286 = smul.addr %s8285, 8
        %s8287 = scalar_lea.vmem %s65, %s8286
        %p8288 = scmp.lt.s32.totalorder %s84, 1
        %s8289 = scalar_select %p8288, %s84, 1
        %s8290 = scalar_lea.vmem %s67, %s8289
        %s8291 = sand.u32 %s886, 1
        %s8292 = scalar_lea.sflag [#allocation5], %s8291
        %s8293 = sand.u32 %s886, 1
        %s8294 = scalar_lea.vmem [#allocation4], %s8293
        // Predicated region
        $region149: #{forward.1} parent=147 // pred_check
          %p8295 = pneg %p844
        $region150: #{forward.1} parent=147 // pred_check_branch
          %8297 = sbr.rel (%p8295) target = $region152
        $region151: #{forward.1} parent=147 // pred_region
          _
        $region152: #{forward.1} parent=147 // pred_fallthru
          _
        // Predicated region
        $region153: #{forward.1} parent=147 // pred_check
          %p8298 = pneg %p870
        $region154: #{forward.1} parent=147 // pred_check_branch
          %8300 = sbr.rel (%p8298) target = $region156
        $region155: #{forward.1} parent=147 // pred_region
          _
        $region156: #{forward.1} parent=147 // pred_fallthru
          _
        // Predicated region
        $region157: #{forward.1} parent=147 // pred_check
          %p8301 = pneg %p896
        $region158: #{forward.1} parent=147 // pred_check_branch
          %8303 = sbr.rel (%p8301) target = $region160
        $region159: #{forward.1} parent=147 // pred_region
          %s8305 = ssub.s32 16, 16
          %8306 = vsyncadd %s8292, %s8305
          %s8307 = smul.addr %s84, 16
          %s8308 = scalar_lea.hbm %s69, %s8307
          %s8310 = sshll.u32 %s8294, 4
          %s8311 = int_to_ptr.vmem [resolvable:$true] %s8310
          %8313 = dma.vmem_to_hbm [thread:$0]  %s8311, 16, %s8308, %s8292
        $region160: #{forward.1} parent=147 // pred_fallthru
          _
      $region148: #{forward.1} parent=5 // pred_fallthru
        _
      %p8314 = scmp.le.s32.totalorder 2, %s79
      // Predicated region
      $region161: #{forward.1} parent=5 // pred_check
        %p8315 = pneg %p8314
      $region162: #{forward.1} parent=5 // pred_check_branch
        %8317 = sbr.rel (%p8315) target = $region164
      $region163: #{forward.1} parent=5 // pred_region
        %s8318 = ssub.s32 %s79, 2
        // Predicated region
        $region165: #{forward.1} parent=163 // pred_check
          %p8319 = pneg %p850
        $region166: #{forward.1} parent=163 // pred_check_branch
          %8321 = sbr.rel (%p8319) target = $region168
        $region167: #{forward.1} parent=163 // pred_region
          %p8322 = scmp.lt.s32.totalorder %s85, 1
          %s8323 = scalar_select %p8322, %s85, 1
          %s8324 = smul.addr %s8323, 13
          %s8325 = smul.addr %s8324, 8
          %s8326 = scalar_lea.vmem %s65, %s8325
        $region168: #{forward.1} parent=163 // pred_fallthru
          _
        // Predicated region
        $region169: #{forward.1} parent=163 // pred_check
          %p8327 = pneg %p876
        $region170: #{forward.1} parent=163 // pred_check_branch
          %8329 = sbr.rel (%p8327) target = $region172
        $region171: #{forward.1} parent=163 // pred_region
          %p8330 = scmp.lt.s32.totalorder %s85, 1
          %s8331 = scalar_select %p8330, %s85, 1
          %s8332 = scalar_lea.vmem %s67, %s8331
        $region172: #{forward.1} parent=163 // pred_fallthru
          _
        // Predicated region
        $region173: #{forward.1} parent=163 // pred_check
          %p8333 = pneg %p902
        $region174: #{forward.1} parent=163 // pred_check_branch
          %8335 = sbr.rel (%p8333) target = $region176
        $region175: #{forward.1} parent=163 // pred_region
          %s8336 = sand.u32 %s887, 1
          %s8337 = scalar_lea.sflag [#allocation5], %s8336
          %s8338 = sand.u32 %s887, 1
          %s8339 = scalar_lea.vmem [#allocation4], %s8338
          %8340 = dma.done %s8337, 16
        $region176: #{forward.1} parent=163 // pred_fallthru
          _
      $region164: #{forward.1} parent=5 // pred_fallthru
        _
    $region6: #{forward.1} parent=1 // loop_footer
      %s83 = sadd.s32 1, %s79
    $region7: #{forward.1} parent=1 // loop_footer_branch
      %78 = sbr.rel target = $region3
    $region8: #{forward.1} parent=1 // loop_exit
      _
    %8341 = vsyncpa [#allocation5], 1
    %s8342 = scalar_lea.sflag [#allocation5], 1
    %8343 = vsyncpa %s8342, 1

</llo_original>
